<compile_context>
chip_gen: v7x
topology: tpu7x:2x2x1
jax: 0.10.0
libtpu: 0.0.40
codegen_flags: <defaults>
</compile_context>

<pallas_src>
import functools

import jax
import jax.numpy as jnp
from jax import lax
from jax.experimental import pallas as pl
from jax.experimental.pallas import tpu as pltpu


def _round_up(x, m):
    return ((x + m - 1) // m) * m


# ----------------------------------------------------------------------------
# Tiled MXU matmul kernel (bf16 in, f32 accumulate, bf16 out, optional tanh)
# ----------------------------------------------------------------------------
def _matmul_kernel(a_ref, b_ref, o_ref, acc_ref, *, activation):
    @pl.when(pl.program_id(2) == 0)
    def _init():
        acc_ref[...] = jnp.zeros_like(acc_ref)

    acc_ref[...] += jnp.dot(a_ref[...], b_ref[...],
                            preferred_element_type=jnp.float32)

    @pl.when(pl.program_id(2) == pl.num_programs(2) - 1)
    def _finalize():
        r = acc_ref[...]
        if activation == "tanh":
            r = jnp.tanh(r)
        o_ref[...] = r.astype(o_ref.dtype)


def pallas_matmul(a, b, activation=None, out_dtype=jnp.bfloat16):
    """(M, K) @ (K, N) -> (M, N) in `out_dtype` (default bf16).

    For the StarGAN conv shapes (K <= 2304, N <= 512) the whole K/N extent of
    B stays VMEM-resident (single K and N block), so the only real grid axis
    is M, tiled at up to 1024 rows (v7x-safe VMEM footprint, and >=2 parallel
    M blocks for megacore whenever M is large).
    """
    M, K = a.shape
    K2, N = b.shape
    assert K == K2
    tm = min(1024, _round_up(M, 16))
    Mp = _round_up(M, tm)
    Kp = _round_up(K, 128)
    tk = Kp if Kp <= 4096 else 2048
    Kp = _round_up(Kp, tk)
    Np = _round_up(N, 128)
    tn = min(512, Np)
    Np = _round_up(Np, tn)

    a_p = a.astype(jnp.bfloat16)
    if (Mp, Kp) != (M, K):
        a_p = jnp.pad(a_p, ((0, Mp - M), (0, Kp - K)))
    b_p = b.astype(jnp.bfloat16)
    if (Kp, Np) != (K, N):
        b_p = jnp.pad(b_p, ((0, Kp - K), (0, Np - N)))

    out = pl.pallas_call(
        functools.partial(_matmul_kernel, activation=activation),
        out_shape=jax.ShapeDtypeStruct((Mp, Np), out_dtype),
        grid=(Mp // tm, Np // tn, Kp // tk),
        in_specs=[pl.BlockSpec((tm, tk), lambda i, j, k: (i, k)),
                  pl.BlockSpec((tk, tn), lambda i, j, k: (k, j))],
        out_specs=pl.BlockSpec((tm, tn), lambda i, j, k: (i, j)),
        scratch_shapes=[pltpu.VMEM((tm, tn), jnp.float32)],
        compiler_params=pltpu.CompilerParams(
            dimension_semantics=("parallel", "parallel", "arbitrary"),
            vmem_limit_bytes=32 * 1024 * 1024),
    )(a_p, b_p)
    if (Mp, Np) != (M, N):
        out = out[:M, :N]          # tanh(0)=0 on padded cols, sliced away
    return out


# ----------------------------------------------------------------------------
# Single-pass fused InstanceNorm (stats + scale/shift + ReLU + residual add)
# ----------------------------------------------------------------------------
def _in_fold(v, reps, cb_w):
    """Fold per-lane sums (1, reps*cb_w) down to per-channel sums (1, cb_w)."""
    if reps == 1:
        return v
    acc = v[:, 0:cb_w]
    for r in range(1, reps):
        acc = acc + v[:, r * cb_w:(r + 1) * cb_w]
    return acc


def _in_body(x_ref, g_ref, b_ref, skip_ref, o_ref, *, relu, eps, reps,
             inv_count):
    x = x_ref[0].astype(jnp.float32)                    # (R, L)
    g = g_ref[...].astype(jnp.float32)                  # (1, Cb)
    b = b_ref[...].astype(jnp.float32)                  # (1, Cb)
    cb_w = g.shape[1]

    s = _in_fold(jnp.sum(x, axis=0, keepdims=True), reps, cb_w)       # (1, Cb)
    sq = _in_fold(jnp.sum(x * x, axis=0, keepdims=True), reps, cb_w)  # (1, Cb)
    mean = s * inv_count
    var = sq * inv_count - mean * mean                  # biased variance
    scale = g * lax.rsqrt(var + eps)                    # folded affine:
    shift = b - mean * scale                            #   y = x*scale + shift
    if reps > 1:                                        # lane l holds channel l%C
        scale = jnp.concatenate([scale] * reps, axis=1)
        shift = jnp.concatenate([shift] * reps, axis=1)

    y = x * scale + shift
    if relu:
        y = jnp.maximum(y, 0.0)
    if skip_ref is not None:
        y = y + skip_ref[0].astype(jnp.float32)         # fused residual add
    o_ref[0] = y.astype(o_ref.dtype)


def _in_kernel(x_ref, g_ref, b_ref, o_ref, **kw):
    _in_body(x_ref, g_ref, b_ref, None, o_ref, **kw)


def _in_skip_kernel(x_ref, g_ref, b_ref, skip_ref, o_ref, **kw):
    _in_body(x_ref, g_ref, b_ref, skip_ref, o_ref, **kw)


def pallas_instance_norm(x, gamma, beta, relu, skip=None, eps=1e-5):
    """InstanceNorm2d (train-mode instance stats, biased var, affine) in ONE
    Pallas pass, with fused ReLU / residual add.  bf16 in/out, f32 math.

    For C < 128 the (HW, C) slab is re-viewed as (HW*C/128, 128) so every
    load/store is lane-dense; for C a multiple of 128 the channel axis is
    split into 128-wide blocks (extra parallel grid blocks for megacore).
    """
    N, H, W, C = x.shape
    HW = H * W
    if C < 128 and 128 % C == 0 and (HW * C) % 128 == 0:
        reps, cb, R, L = 128 // C, 1, HW * C // 128, 128   # lane-packed view
    elif C % 128 == 0:
        reps, cb, R, L = 1, C // 128, HW, 128              # channel-blocked
    else:
        reps, cb, R, L = 1, 1, HW, C                       # generic fallback

    xr = x.reshape(N, R, cb * L)
    g2 = gamma.reshape(1, C).astype(jnp.float32)
    b2 = beta.reshape(1, C).astype(jnp.float32)

    x_spec = pl.BlockSpec((1, R, L), lambda n, j: (n, 0, j))
    p_spec = pl.BlockSpec((1, C // cb), lambda n, j: (0, j))

    kw = dict(relu=relu, eps=eps, reps=reps, inv_count=1.0 / HW)
    if skip is None:
        kern = functools.partial(_in_kernel, **kw)
        inputs = (xr, g2, b2)
        in_specs = [x_spec, p_spec, p_spec]
    else:
        kern = functools.partial(_in_skip_kernel, **kw)
        inputs = (xr, g2, b2, skip.reshape(N, R, cb * L))
        in_specs = [x_spec, p_spec, p_spec, x_spec]

    out = pl.pallas_call(
        kern,
        out_shape=jax.ShapeDtypeStruct((N, R, cb * L), jnp.bfloat16),
        grid=(N, cb),
        in_specs=in_specs,
        out_specs=x_spec,
        compiler_params=pltpu.CompilerParams(
            dimension_semantics=("parallel", "parallel"),
            vmem_limit_bytes=32 * 1024 * 1024),
    )(*inputs)
    return out.reshape(N, H, W, C)


# ----------------------------------------------------------------------------
# Conv glue (bf16 im2col; all matmuls run in Pallas)
# ----------------------------------------------------------------------------
def _im2col(x, kh, kw, stride, pad):
    """x: (N,H,W,C) bf16 -> (N*Ho*Wo, kh*kw*C), patch order (ki, kj, cin)."""
    N, H, W, C = x.shape
    (pt, pb), (pleft, pright) = pad
    xp = jnp.pad(x, ((0, 0), (pt, pb), (pleft, pright), (0, 0)))
    Ho = (H + pt + pb - kh) // stride + 1
    Wo = (W + pleft + pright - kw) // stride + 1
    patches = []
    for i in range(kh):
        for j in range(kw):
            patches.append(xp[:, i:i + stride * Ho:stride,
                               j:j + stride * Wo:stride, :])
    cols = jnp.concatenate(patches, axis=-1)
    return cols.reshape(N * Ho * Wo, kh * kw * C), (N, Ho, Wo)


def conv2d(x, w, stride, pad, activation=None):
    """x: NHWC (bf16).  w: PyTorch layout (Cout, Cin, kh, kw).  bias=False."""
    Cout, Cin, kh, kw = w.shape
    if isinstance(pad, int):
        pad = ((pad, pad), (pad, pad))
    cols, (N, Ho, Wo) = _im2col(x.astype(jnp.bfloat16), kh, kw, stride, pad)
    wm = jnp.transpose(w, (2, 3, 1, 0)).reshape(kh * kw * Cin, Cout)
    out = pallas_matmul(cols, wm, activation=activation)
    return out.reshape(N, Ho, Wo, Cout)


def conv_transpose2d(x, wt, stride, pad):
    """x: NHWC (bf16).  wt: PyTorch ConvTranspose2d layout (Cin, Cout, 4, 4).

    kernel=4, stride=2, padding=1 (StarGAN config) via sub-pixel decomposition
    consolidated into ONE matmul: a 3x3 im2col over the symmetrically padded
    input hits all taps any of the four output phases (ry, rx) needs, and the
    four phase weight matrices are stacked along N (-> 4*Cout lane-dense
    columns).  A single bf16 interleave then produces the 2x-upsampled output.
    """
    Cin, Cout, kh, kw = wt.shape
    assert stride == 2 and kh == 4 and kw == 4 and pad == 1
    N, H, W, _ = x.shape
    tap = ((3, 1), (2, 0))          # kernel row/col used by (phase r, tap d)
    wbig = jnp.zeros((3, 3, Cin, 4, Cout), wt.dtype)
    for ry in (0, 1):
        for rx in (0, 1):
            p = ry * 2 + rx
            for di in (0, 1):
                for dj in (0, 1):
                    wbig = wbig.at[ry + di, rx + dj, :, p, :].set(
                        wt[:, :, tap[ry][di], tap[rx][dj]])
    # -> PyTorch conv layout (4*Cout, Cin, 3, 3) for the shared conv2d path.
    w_pt = jnp.transpose(wbig.reshape(3, 3, Cin, 4 * Cout), (3, 2, 0, 1))
    y = conv2d(x, w_pt, stride=1, pad=1)                # (N, H, W, 4*Cout)
    y = y.reshape(N, H, W, 2, 2, Cout)                  # (..., ry, rx, C)
    y = jnp.transpose(y, (0, 1, 3, 2, 4, 5)).reshape(N, 2 * H, 2 * W, Cout)
    return y


# ----------------------------------------------------------------------------
# Generator: parameters + forward
# ----------------------------------------------------------------------------
def init_params(key, conv_dim, c_dim, repeat_num):
    keys = iter(jax.random.split(key, 128))
    nrm = lambda shape: 0.05 * jax.random.normal(next(keys), shape, jnp.float32)

    params = {}
    params["conv1_w"] = nrm((conv_dim, 3 + c_dim, 7, 7))
    params["in1_g"] = jnp.ones((conv_dim,), jnp.float32)
    params["in1_b"] = jnp.zeros((conv_dim,), jnp.float32)

    curr = conv_dim
    for i in range(2):
        params[f"down{i}_w"] = nrm((curr * 2, curr, 4, 4))
        params[f"down{i}_g"] = jnp.ones((curr * 2,), jnp.float32)
        params[f"down{i}_b"] = jnp.zeros((curr * 2,), jnp.float32)
        curr *= 2

    params["res"] = []
    for _ in range(repeat_num):
        params["res"].append({
            "w1": nrm((curr, curr, 3, 3)),
            "g1": jnp.ones((curr,), jnp.float32),
            "b1": jnp.zeros((curr,), jnp.float32),
            "w2": nrm((curr, curr, 3, 3)),
            "g2": jnp.ones((curr,), jnp.float32),
            "b2": jnp.zeros((curr,), jnp.float32),
        })

    for i in range(2):
        params[f"up{i}_w"] = nrm((curr, curr // 2, 4, 4))   # ConvTranspose layout
        params[f"up{i}_g"] = jnp.ones((curr // 2,), jnp.float32)
        params[f"up{i}_b"] = jnp.zeros((curr // 2,), jnp.float32)
        curr //= 2

    params["conv_out_w"] = nrm((3, curr, 7, 7))
    return params


def residual_block(x, p):
    h = conv2d(x, p["w1"], stride=1, pad=1)
    h = pallas_instance_norm(h, p["g1"], p["b1"], relu=True)
    h = conv2d(h, p["w2"], stride=1, pad=1)
    # Second IN with the residual add fused into the same pass.
    return pallas_instance_norm(h, p["g2"], p["b2"], relu=False, skip=x)


def generator_forward(x_nchw, params, repeat_num):
    # layout: input/output NCHW (PyTorch); internal compute NHWC in bf16.
    h = jnp.transpose(x_nchw, (0, 2, 3, 1)).astype(jnp.bfloat16)

    h = conv2d(h, params["conv1_w"], stride=1, pad=3)
    h = pallas_instance_norm(h, params["in1_g"], params["in1_b"], relu=True)

    for i in range(2):                               # down-sampling
        h = conv2d(h, params[f"down{i}_w"], stride=2, pad=1)
        h = pallas_instance_norm(h, params[f"down{i}_g"], params[f"down{i}_b"],
                                 relu=True)

    for i in range(repeat_num):                      # bottleneck
        h = residual_block(h, params["res"][i])

    for i in range(2):                               # up-sampling
        h = conv_transpose2d(h, params[f"up{i}_w"], stride=2, pad=1)
        h = pallas_instance_norm(h, params[f"up{i}_g"], params[f"up{i}_b"],
                                 relu=True)

    h = conv2d(h, params["conv_out_w"], stride=1, pad=3, activation="tanh")

    return jnp.transpose(h, (0, 3, 1, 2)).astype(jnp.float32)   # back to NCHW


# ----------------------------------------------------------------------------
# Pure-JAX f32 reference (numerical parity check of the Pallas path)
# ----------------------------------------------------------------------------
def _ref_conv(x, w_pt, stride, pad):
    w = jnp.transpose(w_pt, (2, 3, 1, 0))            # HWIO
    return lax.conv_general_dilated(
        x, w, (stride, stride), [(pad, pad), (pad, pad)],
        dimension_numbers=("NHWC", "HWIO", "NHWC"))


def _ref_convT(x, wt, stride, pad):
    Cin, Cout, kh, kw = wt.shape
    w_eq = jnp.transpose(wt, (1, 0, 2, 3))[:, :, ::-1, ::-1]
    w = jnp.transpose(w_eq, (2, 3, 1, 0))
    p = kh - 1 - pad
    return lax.conv_general_dilated(
        x, w, (1, 1), [(p, p), (p, p)], lhs_dilation=(stride, stride),
        dimension_numbers=("NHWC", "HWIO", "NHWC"))


def _ref_in(x, g, b, relu):
    mean = jnp.mean(x, axis=(1, 2), keepdims=True)
    var = jnp.mean((x - mean) ** 2, axis=(1, 2), keepdims=True)
    y = (x - mean) * lax.rsqrt(var + 1e-5)
    y = y * g.reshape(1, 1, 1, -1) + b.reshape(1, 1, 1, -1)
    return jnp.maximum(y, 0.0) if relu else y


def reference_forward(x_nchw, params, repeat_num):
    h = jnp.transpose(x_nchw, (0, 2, 3, 1)).astype(jnp.float32)
    h = _ref_in(_ref_conv(h, params["conv1_w"], 1, 3),
                params["in1_g"], params["in1_b"], True)
    for i in range(2):
        h = _ref_in(_ref_conv(h, params[f"down{i}_w"], 2, 1),
                    params[f"down{i}_g"], params[f"down{i}_b"], True)
    for i in range(repeat_num):
        p = params["res"][i]
        r = _ref_in(_ref_conv(h, p["w1"], 1, 1), p["g1"], p["b1"], True)
        r = _ref_in(_ref_conv(r, p["w2"], 1, 1), p["g2"], p["b2"], False)
        h = h + r
    for i in range(2):
        h = _ref_in(_ref_convT(h, params[f"up{i}_w"], 2, 1),
                    params[f"up{i}_g"], params[f"up{i}_b"], True)
    h = jnp.tanh(_ref_conv(h, params["conv_out_w"], 1, 3))
    return jnp.transpose(h, (0, 3, 1, 2))


if __name__ == "__main__":
    # Small but structurally faithful config: Generator(conv_dim=16, c_dim=5,
    # repeat_num=2).  Input channels = 3 + c_dim = 8.
    CONV_DIM, C_DIM, REPEAT_NUM = 16, 5, 2
    N, H, W = 2, 16, 16

    key = jax.random.PRNGKey(0)
    k_x, k_p = jax.random.split(key)
    x = jax.random.normal(k_x, (N, 3 + C_DIM, H, W), jnp.float32)
    params = init_params(k_p, CONV_DIM, C_DIM, REPEAT_NUM)

    fwd = jax.jit(functools.partial(generator_forward, repeat_num=REPEAT_NUM))
    out = fwd(x, params)
    out = jax.block_until_ready(out)

    assert out.shape == (N, 3, H, W), out.shape
    assert bool(jnp.all(jnp.isfinite(out)))
    assert bool(jnp.all(jnp.abs(out) <= 1.0))        # tanh range

    # Numerical parity vs. pure-JAX f32 reference.  bf16 MXU operands AND bf16
    # activation storage between layers -> loose tolerance.
    ref = jax.jit(functools.partial(reference_forward,
                                    repeat_num=REPEAT_NUM))(x, params)
    max_err = float(jnp.max(jnp.abs(out - ref)))
    assert max_err < 0.25, f"max abs error vs reference = {max_err}"

    print("KERNEL_OK")
</pallas_src>

<mosaic_0001>
module attributes {stable_mosaic.version = 11 : i64} {
  func.func @_matmul_kernel(%arg0: i32, %arg1: i32, %arg2: i32, %arg3: memref<512x512xbf16, #tpu.memory_space<vmem>>, %arg4: memref<512x128xbf16, #tpu.memory_space<vmem>>, %arg5: memref<512x128xbf16, #tpu.memory_space<vmem>>, %arg6: memref<512x128xf32, #tpu.memory_space<vmem>>) attributes {dimension_semantics = [#tpu.dimension_semantics<parallel>, #tpu.dimension_semantics<parallel>, #tpu.dimension_semantics<arbitrary>], iteration_bounds = array<i64: 1, 1, 1>, scalar_prefetch = 0 : i64, scratch_operands = 1 : i64, tpu.core_type = #tpu.core_type<tc>, window_params = [{transform_indices = @transform_0, window_bounds = array<i64: 512, 512>}, {transform_indices = @transform_1, window_bounds = array<i64: 512, 128>}, {transform_indices = @transform_2, window_bounds = array<i64: 512, 128>}]} {
    %c0_i32 = arith.constant 0 : i32
    %0 = arith.cmpi eq, %arg2, %c0_i32 : i32
    %1 = arith.extui %0 : i1 to i32
    %c0_i32_0 = arith.constant 0 : i32
    %2 = arith.cmpi ne, %1, %c0_i32_0 : i32
    scf.if %2 {
      %cst_10 = arith.constant 0.000000e+00 : f32
      %12 = vector.broadcast %cst_10 : f32 to vector<512x128xf32>
      %c0_11 = arith.constant 0 : index
      %c0_12 = arith.constant 0 : index
      %13 = vector.load %arg6[%c0_11, %c0_12] : memref<512x128xf32, #tpu.memory_space<vmem>>, vector<512x128xf32>
      tpu.vector_store %arg6[%c0_11, %c0_12], %12 {strides = array<i32>} : memref<512x128xf32, #tpu.memory_space<vmem>>, vector<512x128xf32>,
    } else {
    }
    %c0 = arith.constant 0 : index
    %c0_1 = arith.constant 0 : index
    %3 = vector.load %arg6[%c0, %c0_1] : memref<512x128xf32, #tpu.memory_space<vmem>>, vector<512x128xf32>
    %c0_2 = arith.constant 0 : index
    %c0_3 = arith.constant 0 : index
    %4 = vector.load %arg3[%c0_2, %c0_3] : memref<512x512xbf16, #tpu.memory_space<vmem>>, vector<512x512xbf16>
    %c0_4 = arith.constant 0 : index
    %c0_5 = arith.constant 0 : index
    %5 = vector.load %arg4[%c0_4, %c0_5] : memref<512x128xbf16, #tpu.memory_space<vmem>>, vector<512x128xbf16>
    %cst = arith.constant dense<0.000000e+00> : vector<512x128xf32>
    %6 = tpu.matmul %4, %5, %cst {dimension_numbers = #tpu.dot_dimension_numbers<[1], [0], [0], [1], [0, 0, 1, 1], [], []>} : vector<512x512xbf16>, vector<512x128xbf16>, vector<512x128xf32> -> vector<512x128xf32>
    %7 = arith.addf %3, %6 : vector<512x128xf32>
    %c0_6 = arith.constant 0 : index
    %c0_7 = arith.constant 0 : index
    %8 = vector.load %arg6[%c0_6, %c0_7] : memref<512x128xf32, #tpu.memory_space<vmem>>, vector<512x128xf32>
    tpu.vector_store %arg6[%c0_6, %c0_7], %7 {strides = array<i32>} : memref<512x128xf32, #tpu.memory_space<vmem>>, vector<512x128xf32>,
    %c0_i32_8 = arith.constant 0 : i32
    %9 = arith.cmpi eq, %arg2, %c0_i32_8 : i32
    %10 = arith.extui %9 : i1 to i32
    %c0_i32_9 = arith.constant 0 : i32
    %11 = arith.cmpi ne, %10, %c0_i32_9 : i32
    scf.if %11 {
      %c0_10 = arith.constant 0 : index
      %c0_11 = arith.constant 0 : index
      %12 = vector.load %arg6[%c0_10, %c0_11] : memref<512x128xf32, #tpu.memory_space<vmem>>, vector<512x128xf32>
      %13 = arith.truncf %12 : vector<512x128xf32> to vector<512x128xbf16>
      %c0_12 = arith.constant 0 : index
      %c0_13 = arith.constant 0 : index
      %14 = vector.load %arg5[%c0_12, %c0_13] : memref<512x128xbf16, #tpu.memory_space<vmem>>, vector<512x128xbf16>
      tpu.vector_store %arg5[%c0_12, %c0_13], %13 {strides = array<i32>} : memref<512x128xbf16, #tpu.memory_space<vmem>>, vector<512x128xbf16>,
    } else {
    }
    return
  }
  func.func @transform_0(%arg0: i32, %arg1: i32, %arg2: i32) -> (i32, i32) {
    %c0_i32 = arith.constant 0 : i32
    return %arg0, %arg2 : i32, i32
  }
  func.func @transform_1(%arg0: i32, %arg1: i32, %arg2: i32) -> (i32, i32) {
    %c0_i32 = arith.constant 0 : i32
    return %arg2, %arg1 : i32, i32
  }
  func.func @transform_2(%arg0: i32, %arg1: i32, %arg2: i32) -> (i32, i32) {
    %c0_i32 = arith.constant 0 : i32
    return %arg0, %arg1 : i32, i32
  }
}

module attributes {stable_mosaic.version = 11 : i64} {
  func.func @_in_kernel(%arg0: i32, %arg1: i32, %arg2: memref<1x32x128xbf16, #tpu.memory_space<vmem>>, %arg3: memref<1x16xf32, #tpu.memory_space<vmem>>, %arg4: memref<1x16xf32, #tpu.memory_space<vmem>>, %arg5: memref<1x32x128xbf16, #tpu.memory_space<vmem>>) attributes {dimension_semantics = [#tpu.dimension_semantics<parallel>, #tpu.dimension_semantics<parallel>], iteration_bounds = array<i64: 2, 1>, scalar_prefetch = 0 : i64, scratch_operands = 0 : i64, tpu.core_type = #tpu.core_type<tc>, window_params = [{transform_indices = @transform_0, window_bounds = array<i64: 1, 32, 128>}, {transform_indices = @transform_1, window_bounds = array<i64: 1, 16>}, {transform_indices = @transform_2, window_bounds = array<i64: 1, 16>}, {transform_indices = @transform_3, window_bounds = array<i64: 1, 32, 128>}]} {
    %c0 = arith.constant 0 : index
    %c0_0 = arith.constant 0 : index
    %c0_1 = arith.constant 0 : index
    %0 = vector.load %arg2[%c0, %c0_0, %c0_1] : memref<1x32x128xbf16, #tpu.memory_space<vmem>>, vector<1x32x128xbf16>
    %1 = vector.shape_cast %0 : vector<1x32x128xbf16> to vector<32x128xbf16>
    %2 = arith.extf %1 : vector<32x128xbf16> to vector<32x128xf32>
    %c0_2 = arith.constant 0 : index
    %c0_3 = arith.constant 0 : index
    %3 = vector.load %arg3[%c0_2, %c0_3] : memref<1x16xf32, #tpu.memory_space<vmem>>, vector<1x16xf32>
    %c0_4 = arith.constant 0 : index
    %c0_5 = arith.constant 0 : index
    %4 = vector.load %arg4[%c0_4, %c0_5] : memref<1x16xf32, #tpu.memory_space<vmem>>, vector<1x16xf32>
    %cst = arith.constant dense<0.000000e+00> : vector<128xf32>
    %5 = vector.multi_reduction <add>, %2, %cst [0] : vector<32x128xf32> to vector<128xf32>
    %6 = vector.shape_cast %5 : vector<128xf32> to vector<1x128xf32>
    %7 = vector.extract_strided_slice %6 {offsets = [0, 0], sizes = [1, 16], strides = [1, 1]} : vector<1x128xf32> to vector<1x16xf32>
    %8 = vector.extract_strided_slice %6 {offsets = [0, 16], sizes = [1, 16], strides = [1, 1]} : vector<1x128xf32> to vector<1x16xf32>
    %9 = arith.addf %7, %8 : vector<1x16xf32>
    %10 = vector.extract_strided_slice %6 {offsets = [0, 32], sizes = [1, 16], strides = [1, 1]} : vector<1x128xf32> to vector<1x16xf32>
    %11 = arith.addf %9, %10 : vector<1x16xf32>
    %12 = vector.extract_strided_slice %6 {offsets = [0, 48], sizes = [1, 16], strides = [1, 1]} : vector<1x128xf32> to vector<1x16xf32>
    %13 = arith.addf %11, %12 : vector<1x16xf32>
    %14 = vector.extract_strided_slice %6 {offsets = [0, 64], sizes = [1, 16], strides = [1, 1]} : vector<1x128xf32> to vector<1x16xf32>
    %15 = arith.addf %13, %14 : vector<1x16xf32>
    %16 = vector.extract_strided_slice %6 {offsets = [0, 80], sizes = [1, 16], strides = [1, 1]} : vector<1x128xf32> to vector<1x16xf32>
    %17 = arith.addf %15, %16 : vector<1x16xf32>
    %18 = vector.extract_strided_slice %6 {offsets = [0, 96], sizes = [1, 16], strides = [1, 1]} : vector<1x128xf32> to vector<1x16xf32>
    %19 = arith.addf %17, %18 : vector<1x16xf32>
    %20 = vector.extract_strided_slice %6 {offsets = [0, 112], sizes = [1, 16], strides = [1, 1]} : vector<1x128xf32> to vector<1x16xf32>
    %21 = arith.addf %19, %20 : vector<1x16xf32>
    %22 = arith.mulf %2, %2 : vector<32x128xf32>
    %cst_6 = arith.constant dense<0.000000e+00> : vector<128xf32>
    %23 = vector.multi_reduction <add>, %22, %cst_6 [0] : vector<32x128xf32> to vector<128xf32>
    %24 = vector.shape_cast %23 : vector<128xf32> to vector<1x128xf32>
    %25 = vector.extract_strided_slice %24 {offsets = [0, 0], sizes = [1, 16], strides = [1, 1]} : vector<1x128xf32> to vector<1x16xf32>
    %26 = vector.extract_strided_slice %24 {offsets = [0, 16], sizes = [1, 16], strides = [1, 1]} : vector<1x128xf32> to vector<1x16xf32>
    %27 = arith.addf %25, %26 : vector<1x16xf32>
    %28 = vector.extract_strided_slice %24 {offsets = [0, 32], sizes = [1, 16], strides = [1, 1]} : vector<1x128xf32> to vector<1x16xf32>
    %29 = arith.addf %27, %28 : vector<1x16xf32>
    %30 = vector.extract_strided_slice %24 {offsets = [0, 48], sizes = [1, 16], strides = [1, 1]} : vector<1x128xf32> to vector<1x16xf32>
    %31 = arith.addf %29, %30 : vector<1x16xf32>
    %32 = vector.extract_strided_slice %24 {offsets = [0, 64], sizes = [1, 16], strides = [1, 1]} : vector<1x128xf32> to vector<1x16xf32>
    %33 = arith.addf %31, %32 : vector<1x16xf32>
    %34 = vector.extract_strided_slice %24 {offsets = [0, 80], sizes = [1, 16], strides = [1, 1]} : vector<1x128xf32> to vector<1x16xf32>
    %35 = arith.addf %33, %34 : vector<1x16xf32>
    %36 = vector.extract_strided_slice %24 {offsets = [0, 96], sizes = [1, 16], strides = [1, 1]} : vector<1x128xf32> to vector<1x16xf32>
    %37 = arith.addf %35, %36 : vector<1x16xf32>
    %38 = vector.extract_strided_slice %24 {offsets = [0, 112], sizes = [1, 16], strides = [1, 1]} : vector<1x128xf32> to vector<1x16xf32>
    %39 = arith.addf %37, %38 : vector<1x16xf32>
    %cst_7 = arith.constant 3.906250e-03 : f32
    %40 = vector.broadcast %cst_7 : f32 to vector<1x16xf32>
    %41 = arith.mulf %21, %40 : vector<1x16xf32>
    %cst_8 = arith.constant 3.906250e-03 : f32
    %42 = vector.broadcast %cst_8 : f32 to vector<1x16xf32>
    %43 = arith.mulf %39, %42 : vector<1x16xf32>
    %44 = arith.mulf %41, %41 : vector<1x16xf32>
    %45 = arith.subf %43, %44 : vector<1x16xf32>
    %cst_9 = arith.constant 9.99999974E-6 : f32
    %46 = vector.broadcast %cst_9 : f32 to vector<1x16xf32>
    %47 = arith.addf %45, %46 : vector<1x16xf32>
    %48 = math.rsqrt %47 : vector<1x16xf32>
    %49 = arith.mulf %3, %48 : vector<1x16xf32>
    %50 = arith.mulf %41, %49 : vector<1x16xf32>
    %51 = arith.subf %4, %50 : vector<1x16xf32>
    %52 = tpu.concatenate %49, %49, %49, %49, %49, %49, %49, %49 in 1 : vector<1x16xf32>, vector<1x16xf32>, vector<1x16xf32>, vector<1x16xf32>, vector<1x16xf32>, vector<1x16xf32>, vector<1x16xf32>, vector<1x16xf32> -> vector<1x128xf32>
    %53 = tpu.concatenate %51, %51, %51, %51, %51, %51, %51, %51 in 1 : vector<1x16xf32>, vector<1x16xf32>, vector<1x16xf32>, vector<1x16xf32>, vector<1x16xf32>, vector<1x16xf32>, vector<1x16xf32>, vector<1x16xf32> -> vector<1x128xf32>
    %54 = vector.broadcast %52 : vector<1x128xf32> to vector<32x128xf32>
    %55 = arith.mulf %2, %54 : vector<32x128xf32>
    %56 = vector.broadcast %53 : vector<1x128xf32> to vector<32x128xf32>
    %57 = arith.addf %55, %56 : vector<32x128xf32>
    %cst_10 = arith.constant 0.000000e+00 : f32
    %58 = vector.broadcast %cst_10 : f32 to vector<32x128xf32>
    %59 = arith.maximumf %57, %58 : vector<32x128xf32>
    %60 = arith.truncf %59 : vector<32x128xf32> to vector<32x128xbf16>
    %c0_11 = arith.constant 0 : index
    %c0_12 = arith.constant 0 : index
    %c0_13 = arith.constant 0 : index
    %61 = vector.load %arg5[%c0_11, %c0_12, %c0_13] : memref<1x32x128xbf16, #tpu.memory_space<vmem>>, vector<1x32x128xbf16>
    %62 = vector.shape_cast %61 : vector<1x32x128xbf16> to vector<32x128xbf16>
    %63 = vector.shape_cast %60 : vector<32x128xbf16> to vector<1x32x128xbf16>
    tpu.vector_store %arg5[%c0_11, %c0_12, %c0_13], %63 {strides = array<i32>} : memref<1x32x128xbf16, #tpu.memory_space<vmem>>, vector<1x32x128xbf16>,
    return
  }
  func.func @transform_0(%arg0: i32, %arg1: i32) -> (i32, i32, i32) {
    %c0_i32 = arith.constant 0 : i32
    %c0_i32_0 = arith.constant 0 : i32
    return %arg0, %c0_i32, %arg1 : i32, i32, i32
  }
  func.func @transform_1(%arg0: i32, %arg1: i32) -> (i32, i32) {
    %c0_i32 = arith.constant 0 : i32
    %c0_i32_0 = arith.constant 0 : i32
    return %c0_i32, %arg1 : i32, i32
  }
  func.func @transform_2(%arg0: i32, %arg1: i32) -> (i32, i32) {
    %c0_i32 = arith.constant 0 : i32
    %c0_i32_0 = arith.constant 0 : i32
    return %c0_i32, %arg1 : i32, i32
  }
  func.func @transform_3(%arg0: i32, %arg1: i32) -> (i32, i32, i32) {
    %c0_i32 = arith.constant 0 : i32
    %c0_i32_0 = arith.constant 0 : i32
    return %arg0, %c0_i32, %arg1 : i32, i32, i32
  }
}

module attributes {stable_mosaic.version = 11 : i64} {
  func.func @_matmul_kernel(%arg0: i32, %arg1: i32, %arg2: i32, %arg3: memref<128x256xbf16, #tpu.memory_space<vmem>>, %arg4: memref<256x128xbf16, #tpu.memory_space<vmem>>, %arg5: memref<128x128xbf16, #tpu.memory_space<vmem>>, %arg6: memref<128x128xf32, #tpu.memory_space<vmem>>) attributes {dimension_semantics = [#tpu.dimension_semantics<parallel>, #tpu.dimension_semantics<parallel>, #tpu.dimension_semantics<arbitrary>], iteration_bounds = array<i64: 1, 1, 1>, scalar_prefetch = 0 : i64, scratch_operands = 1 : i64, tpu.core_type = #tpu.core_type<tc>, window_params = [{transform_indices = @transform_0, window_bounds = array<i64: 128, 256>}, {transform_indices = @transform_1, window_bounds = array<i64: 256, 128>}, {transform_indices = @transform_2, window_bounds = array<i64: 128, 128>}]} {
    %c0_i32 = arith.constant 0 : i32
    %0 = arith.cmpi eq, %arg2, %c0_i32 : i32
    %1 = arith.extui %0 : i1 to i32
    %c0_i32_0 = arith.constant 0 : i32
    %2 = arith.cmpi ne, %1, %c0_i32_0 : i32
    scf.if %2 {
      %cst_10 = arith.constant 0.000000e+00 : f32
      %12 = vector.broadcast %cst_10 : f32 to vector<128x128xf32>
      %c0_11 = arith.constant 0 : index
      %c0_12 = arith.constant 0 : index
      %13 = vector.load %arg6[%c0_11, %c0_12] : memref<128x128xf32, #tpu.memory_space<vmem>>, vector<128x128xf32>
      tpu.vector_store %arg6[%c0_11, %c0_12], %12 {strides = array<i32>} : memref<128x128xf32, #tpu.memory_space<vmem>>, vector<128x128xf32>,
    } else {
    }
    %c0 = arith.constant 0 : index
    %c0_1 = arith.constant 0 : index
    %3 = vector.load %arg6[%c0, %c0_1] : memref<128x128xf32, #tpu.memory_space<vmem>>, vector<128x128xf32>
    %c0_2 = arith.constant 0 : index
    %c0_3 = arith.constant 0 : index
    %4 = vector.load %arg3[%c0_2, %c0_3] : memref<128x256xbf16, #tpu.memory_space<vmem>>, vector<128x256xbf16>
    %c0_4 = arith.constant 0 : index
    %c0_5 = arith.constant 0 : index
    %5 = vector.load %arg4[%c0_4, %c0_5] : memref<256x128xbf16, #tpu.memory_space<vmem>>, vector<256x128xbf16>
    %cst = arith.constant dense<0.000000e+00> : vector<128x128xf32>
    %6 = tpu.matmul %4, %5, %cst {dimension_numbers = #tpu.dot_dimension_numbers<[1], [0], [0], [1], [0, 0, 1, 1], [], []>} : vector<128x256xbf16>, vector<256x128xbf16>, vector<128x128xf32> -> vector<128x128xf32>
    %7 = arith.addf %3, %6 : vector<128x128xf32>
    %c0_6 = arith.constant 0 : index
    %c0_7 = arith.constant 0 : index
    %8 = vector.load %arg6[%c0_6, %c0_7] : memref<128x128xf32, #tpu.memory_space<vmem>>, vector<128x128xf32>
    tpu.vector_store %arg6[%c0_6, %c0_7], %7 {strides = array<i32>} : memref<128x128xf32, #tpu.memory_space<vmem>>, vector<128x128xf32>,
    %c0_i32_8 = arith.constant 0 : i32
    %9 = arith.cmpi eq, %arg2, %c0_i32_8 : i32
    %10 = arith.extui %9 : i1 to i32
    %c0_i32_9 = arith.constant 0 : i32
    %11 = arith.cmpi ne, %10, %c0_i32_9 : i32
    scf.if %11 {
      %c0_10 = arith.constant 0 : index
      %c0_11 = arith.constant 0 : index
      %12 = vector.load %arg6[%c0_10, %c0_11] : memref<128x128xf32, #tpu.memory_space<vmem>>, vector<128x128xf32>
      %13 = arith.truncf %12 : vector<128x128xf32> to vector<128x128xbf16>
      %c0_12 = arith.constant 0 : index
      %c0_13 = arith.constant 0 : index
      %14 = vector.load %arg5[%c0_12, %c0_13] : memref<128x128xbf16, #tpu.memory_space<vmem>>, vector<128x128xbf16>
      tpu.vector_store %arg5[%c0_12, %c0_13], %13 {strides = array<i32>} : memref<128x128xbf16, #tpu.memory_space<vmem>>, vector<128x128xbf16>,
    } else {
    }
    return
  }
  func.func @transform_0(%arg0: i32, %arg1: i32, %arg2: i32) -> (i32, i32) {
    %c0_i32 = arith.constant 0 : i32
    return %arg0, %arg2 : i32, i32
  }
  func.func @transform_1(%arg0: i32, %arg1: i32, %arg2: i32) -> (i32, i32) {
    %c0_i32 = arith.constant 0 : i32
    return %arg2, %arg1 : i32, i32
  }
  func.func @transform_2(%arg0: i32, %arg1: i32, %arg2: i32) -> (i32, i32) {
    %c0_i32 = arith.constant 0 : i32
    return %arg0, %arg1 : i32, i32
  }
}

module attributes {stable_mosaic.version = 11 : i64} {
  func.func @_in_kernel(%arg0: i32, %arg1: i32, %arg2: memref<1x16x128xbf16, #tpu.memory_space<vmem>>, %arg3: memref<1x32xf32, #tpu.memory_space<vmem>>, %arg4: memref<1x32xf32, #tpu.memory_space<vmem>>, %arg5: memref<1x16x128xbf16, #tpu.memory_space<vmem>>) attributes {dimension_semantics = [#tpu.dimension_semantics<parallel>, #tpu.dimension_semantics<parallel>], iteration_bounds = array<i64: 2, 1>, scalar_prefetch = 0 : i64, scratch_operands = 0 : i64, tpu.core_type = #tpu.core_type<tc>, window_params = [{transform_indices = @transform_0, window_bounds = array<i64: 1, 16, 128>}, {transform_indices = @transform_1, window_bounds = array<i64: 1, 32>}, {transform_indices = @transform_2, window_bounds = array<i64: 1, 32>}, {transform_indices = @transform_3, window_bounds = array<i64: 1, 16, 128>}]} {
    %c0 = arith.constant 0 : index
    %c0_0 = arith.constant 0 : index
    %c0_1 = arith.constant 0 : index
    %0 = vector.load %arg2[%c0, %c0_0, %c0_1] : memref<1x16x128xbf16, #tpu.memory_space<vmem>>, vector<1x16x128xbf16>
    %1 = vector.shape_cast %0 : vector<1x16x128xbf16> to vector<16x128xbf16>
    %2 = arith.extf %1 : vector<16x128xbf16> to vector<16x128xf32>
    %c0_2 = arith.constant 0 : index
    %c0_3 = arith.constant 0 : index
    %3 = vector.load %arg3[%c0_2, %c0_3] : memref<1x32xf32, #tpu.memory_space<vmem>>, vector<1x32xf32>
    %c0_4 = arith.constant 0 : index
    %c0_5 = arith.constant 0 : index
    %4 = vector.load %arg4[%c0_4, %c0_5] : memref<1x32xf32, #tpu.memory_space<vmem>>, vector<1x32xf32>
    %cst = arith.constant dense<0.000000e+00> : vector<128xf32>
    %5 = vector.multi_reduction <add>, %2, %cst [0] : vector<16x128xf32> to vector<128xf32>
    %6 = vector.shape_cast %5 : vector<128xf32> to vector<1x128xf32>
    %7 = vector.extract_strided_slice %6 {offsets = [0, 0], sizes = [1, 32], strides = [1, 1]} : vector<1x128xf32> to vector<1x32xf32>
    %8 = vector.extract_strided_slice %6 {offsets = [0, 32], sizes = [1, 32], strides = [1, 1]} : vector<1x128xf32> to vector<1x32xf32>
    %9 = arith.addf %7, %8 : vector<1x32xf32>
    %10 = vector.extract_strided_slice %6 {offsets = [0, 64], sizes = [1, 32], strides = [1, 1]} : vector<1x128xf32> to vector<1x32xf32>
    %11 = arith.addf %9, %10 : vector<1x32xf32>
    %12 = vector.extract_strided_slice %6 {offsets = [0, 96], sizes = [1, 32], strides = [1, 1]} : vector<1x128xf32> to vector<1x32xf32>
    %13 = arith.addf %11, %12 : vector<1x32xf32>
    %14 = arith.mulf %2, %2 : vector<16x128xf32>
    %cst_6 = arith.constant dense<0.000000e+00> : vector<128xf32>
    %15 = vector.multi_reduction <add>, %14, %cst_6 [0] : vector<16x128xf32> to vector<128xf32>
    %16 = vector.shape_cast %15 : vector<128xf32> to vector<1x128xf32>
    %17 = vector.extract_strided_slice %16 {offsets = [0, 0], sizes = [1, 32], strides = [1, 1]} : vector<1x128xf32> to vector<1x32xf32>
    %18 = vector.extract_strided_slice %16 {offsets = [0, 32], sizes = [1, 32], strides = [1, 1]} : vector<1x128xf32> to vector<1x32xf32>
    %19 = arith.addf %17, %18 : vector<1x32xf32>
    %20 = vector.extract_strided_slice %16 {offsets = [0, 64], sizes = [1, 32], strides = [1, 1]} : vector<1x128xf32> to vector<1x32xf32>
    %21 = arith.addf %19, %20 : vector<1x32xf32>
    %22 = vector.extract_strided_slice %16 {offsets = [0, 96], sizes = [1, 32], strides = [1, 1]} : vector<1x128xf32> to vector<1x32xf32>
    %23 = arith.addf %21, %22 : vector<1x32xf32>
    %cst_7 = arith.constant 1.562500e-02 : f32
    %24 = vector.broadcast %cst_7 : f32 to vector<1x32xf32>
    %25 = arith.mulf %13, %24 : vector<1x32xf32>
    %cst_8 = arith.constant 1.562500e-02 : f32
    %26 = vector.broadcast %cst_8 : f32 to vector<1x32xf32>
    %27 = arith.mulf %23, %26 : vector<1x32xf32>
    %28 = arith.mulf %25, %25 : vector<1x32xf32>
    %29 = arith.subf %27, %28 : vector<1x32xf32>
    %cst_9 = arith.constant 9.99999974E-6 : f32
    %30 = vector.broadcast %cst_9 : f32 to vector<1x32xf32>
    %31 = arith.addf %29, %30 : vector<1x32xf32>
    %32 = math.rsqrt %31 : vector<1x32xf32>
    %33 = arith.mulf %3, %32 : vector<1x32xf32>
    %34 = arith.mulf %25, %33 : vector<1x32xf32>
    %35 = arith.subf %4, %34 : vector<1x32xf32>
    %36 = tpu.concatenate %33, %33, %33, %33 in 1 : vector<1x32xf32>, vector<1x32xf32>, vector<1x32xf32>, vector<1x32xf32> -> vector<1x128xf32>
    %37 = tpu.concatenate %35, %35, %35, %35 in 1 : vector<1x32xf32>, vector<1x32xf32>, vector<1x32xf32>, vector<1x32xf32> -> vector<1x128xf32>
    %38 = vector.broadcast %36 : vector<1x128xf32> to vector<16x128xf32>
    %39 = arith.mulf %2, %38 : vector<16x128xf32>
    %40 = vector.broadcast %37 : vector<1x128xf32> to vector<16x128xf32>
    %41 = arith.addf %39, %40 : vector<16x128xf32>
    %cst_10 = arith.constant 0.000000e+00 : f32
    %42 = vector.broadcast %cst_10 : f32 to vector<16x128xf32>
    %43 = arith.maximumf %41, %42 : vector<16x128xf32>
    %44 = arith.truncf %43 : vector<16x128xf32> to vector<16x128xbf16>
    %c0_11 = arith.constant 0 : index
    %c0_12 = arith.constant 0 : index
    %c0_13 = arith.constant 0 : index
    %45 = vector.load %arg5[%c0_11, %c0_12, %c0_13] : memref<1x16x128xbf16, #tpu.memory_space<vmem>>, vector<1x16x128xbf16>
    %46 = vector.shape_cast %45 : vector<1x16x128xbf16> to vector<16x128xbf16>
    %47 = vector.shape_cast %44 : vector<16x128xbf16> to vector<1x16x128xbf16>
    tpu.vector_store %arg5[%c0_11, %c0_12, %c0_13], %47 {strides = array<i32>} : memref<1x16x128xbf16, #tpu.memory_space<vmem>>, vector<1x16x128xbf16>,
    return
  }
  func.func @transform_0(%arg0: i32, %arg1: i32) -> (i32, i32, i32) {
    %c0_i32 = arith.constant 0 : i32
    %c0_i32_0 = arith.constant 0 : i32
    return %arg0, %c0_i32, %arg1 : i32, i32, i32
  }
  func.func @transform_1(%arg0: i32, %arg1: i32) -> (i32, i32) {
    %c0_i32 = arith.constant 0 : i32
    %c0_i32_0 = arith.constant 0 : i32
    return %c0_i32, %arg1 : i32, i32
  }
  func.func @transform_2(%arg0: i32, %arg1: i32) -> (i32, i32) {
    %c0_i32 = arith.constant 0 : i32
    %c0_i32_0 = arith.constant 0 : i32
    return %c0_i32, %arg1 : i32, i32
  }
  func.func @transform_3(%arg0: i32, %arg1: i32) -> (i32, i32, i32) {
    %c0_i32 = arith.constant 0 : i32
    %c0_i32_0 = arith.constant 0 : i32
    return %arg0, %c0_i32, %arg1 : i32, i32, i32
  }
}

module attributes {stable_mosaic.version = 11 : i64} {
  func.func @_matmul_kernel(%arg0: i32, %arg1: i32, %arg2: i32, %arg3: memref<32x512xbf16, #tpu.memory_space<vmem>>, %arg4: memref<512x128xbf16, #tpu.memory_space<vmem>>, %arg5: memref<32x128xbf16, #tpu.memory_space<vmem>>, %arg6: memref<32x128xf32, #tpu.memory_space<vmem>>) attributes {dimension_semantics = [#tpu.dimension_semantics<parallel>, #tpu.dimension_semantics<parallel>, #tpu.dimension_semantics<arbitrary>], iteration_bounds = array<i64: 1, 1, 1>, scalar_prefetch = 0 : i64, scratch_operands = 1 : i64, tpu.core_type = #tpu.core_type<tc>, window_params = [{transform_indices = @transform_0, window_bounds = array<i64: 32, 512>}, {transform_indices = @transform_1, window_bounds = array<i64: 512, 128>}, {transform_indices = @transform_2, window_bounds = array<i64: 32, 128>}]} {
    %c0_i32 = arith.constant 0 : i32
    %0 = arith.cmpi eq, %arg2, %c0_i32 : i32
    %1 = arith.extui %0 : i1 to i32
    %c0_i32_0 = arith.constant 0 : i32
    %2 = arith.cmpi ne, %1, %c0_i32_0 : i32
    scf.if %2 {
      %cst_10 = arith.constant 0.000000e+00 : f32
      %12 = vector.broadcast %cst_10 : f32 to vector<32x128xf32>
      %c0_11 = arith.constant 0 : index
      %c0_12 = arith.constant 0 : index
      %13 = vector.load %arg6[%c0_11, %c0_12] : memref<32x128xf32, #tpu.memory_space<vmem>>, vector<32x128xf32>
      tpu.vector_store %arg6[%c0_11, %c0_12], %12 {strides = array<i32>} : memref<32x128xf32, #tpu.memory_space<vmem>>, vector<32x128xf32>,
    } else {
    }
    %c0 = arith.constant 0 : index
    %c0_1 = arith.constant 0 : index
    %3 = vector.load %arg6[%c0, %c0_1] : memref<32x128xf32, #tpu.memory_space<vmem>>, vector<32x128xf32>
    %c0_2 = arith.constant 0 : index
    %c0_3 = arith.constant 0 : index
    %4 = vector.load %arg3[%c0_2, %c0_3] : memref<32x512xbf16, #tpu.memory_space<vmem>>, vector<32x512xbf16>
    %c0_4 = arith.constant 0 : index
    %c0_5 = arith.constant 0 : index
    %5 = vector.load %arg4[%c0_4, %c0_5] : memref<512x128xbf16, #tpu.memory_space<vmem>>, vector<512x128xbf16>
    %cst = arith.constant dense<0.000000e+00> : vector<32x128xf32>
    %6 = tpu.matmul %4, %5, %cst {dimension_numbers = #tpu.dot_dimension_numbers<[1], [0], [0], [1], [0, 0, 1, 1], [], []>} : vector<32x512xbf16>, vector<512x128xbf16>, vector<32x128xf32> -> vector<32x128xf32>
    %7 = arith.addf %3, %6 : vector<32x128xf32>
    %c0_6 = arith.constant 0 : index
    %c0_7 = arith.constant 0 : index
    %8 = vector.load %arg6[%c0_6, %c0_7] : memref<32x128xf32, #tpu.memory_space<vmem>>, vector<32x128xf32>
    tpu.vector_store %arg6[%c0_6, %c0_7], %7 {strides = array<i32>} : memref<32x128xf32, #tpu.memory_space<vmem>>, vector<32x128xf32>,
    %c0_i32_8 = arith.constant 0 : i32
    %9 = arith.cmpi eq, %arg2, %c0_i32_8 : i32
    %10 = arith.extui %9 : i1 to i32
    %c0_i32_9 = arith.constant 0 : i32
    %11 = arith.cmpi ne, %10, %c0_i32_9 : i32
    scf.if %11 {
      %c0_10 = arith.constant 0 : index
      %c0_11 = arith.constant 0 : index
      %12 = vector.load %arg6[%c0_10, %c0_11] : memref<32x128xf32, #tpu.memory_space<vmem>>, vector<32x128xf32>
      %13 = arith.truncf %12 : vector<32x128xf32> to vector<32x128xbf16>
      %c0_12 = arith.constant 0 : index
      %c0_13 = arith.constant 0 : index
      %14 = vector.load %arg5[%c0_12, %c0_13] : memref<32x128xbf16, #tpu.memory_space<vmem>>, vector<32x128xbf16>
      tpu.vector_store %arg5[%c0_12, %c0_13], %13 {strides = array<i32>} : memref<32x128xbf16, #tpu.memory_space<vmem>>, vector<32x128xbf16>,
    } else {
    }
    return
  }
  func.func @transform_0(%arg0: i32, %arg1: i32, %arg2: i32) -> (i32, i32) {
    %c0_i32 = arith.constant 0 : i32
    return %arg0, %arg2 : i32, i32
  }
  func.func @transform_1(%arg0: i32, %arg1: i32, %arg2: i32) -> (i32, i32) {
    %c0_i32 = arith.constant 0 : i32
    return %arg2, %arg1 : i32, i32
  }
  func.func @transform_2(%arg0: i32, %arg1: i32, %arg2: i32) -> (i32, i32) {
    %c0_i32 = arith.constant 0 : i32
    return %arg0, %arg1 : i32, i32
  }
}

module attributes {stable_mosaic.version = 11 : i64} {
  func.func @_in_kernel(%arg0: i32, %arg1: i32, %arg2: memref<1x8x128xbf16, #tpu.memory_space<vmem>>, %arg3: memref<1x64xf32, #tpu.memory_space<vmem>>, %arg4: memref<1x64xf32, #tpu.memory_space<vmem>>, %arg5: memref<1x8x128xbf16, #tpu.memory_space<vmem>>) attributes {dimension_semantics = [#tpu.dimension_semantics<parallel>, #tpu.dimension_semantics<parallel>], iteration_bounds = array<i64: 2, 1>, scalar_prefetch = 0 : i64, scratch_operands = 0 : i64, tpu.core_type = #tpu.core_type<tc>, window_params = [{transform_indices = @transform_0, window_bounds = array<i64: 1, 8, 128>}, {transform_indices = @transform_1, window_bounds = array<i64: 1, 64>}, {transform_indices = @transform_2, window_bounds = array<i64: 1, 64>}, {transform_indices = @transform_3, window_bounds = array<i64: 1, 8, 128>}]} {
    %c0 = arith.constant 0 : index
    %c0_0 = arith.constant 0 : index
    %c0_1 = arith.constant 0 : index
    %0 = vector.load %arg2[%c0, %c0_0, %c0_1] : memref<1x8x128xbf16, #tpu.memory_space<vmem>>, vector<1x8x128xbf16>
    %1 = vector.shape_cast %0 : vector<1x8x128xbf16> to vector<8x128xbf16>
    %2 = arith.extf %1 : vector<8x128xbf16> to vector<8x128xf32>
    %c0_2 = arith.constant 0 : index
    %c0_3 = arith.constant 0 : index
    %3 = vector.load %arg3[%c0_2, %c0_3] : memref<1x64xf32, #tpu.memory_space<vmem>>, vector<1x64xf32>
    %c0_4 = arith.constant 0 : index
    %c0_5 = arith.constant 0 : index
    %4 = vector.load %arg4[%c0_4, %c0_5] : memref<1x64xf32, #tpu.memory_space<vmem>>, vector<1x64xf32>
    %cst = arith.constant dense<0.000000e+00> : vector<128xf32>
    %5 = vector.multi_reduction <add>, %2, %cst [0] : vector<8x128xf32> to vector<128xf32>
    %6 = vector.shape_cast %5 : vector<128xf32> to vector<1x128xf32>
    %7 = vector.extract_strided_slice %6 {offsets = [0, 0], sizes = [1, 64], strides = [1, 1]} : vector<1x128xf32> to vector<1x64xf32>
    %8 = vector.extract_strided_slice %6 {offsets = [0, 64], sizes = [1, 64], strides = [1, 1]} : vector<1x128xf32> to vector<1x64xf32>
    %9 = arith.addf %7, %8 : vector<1x64xf32>
    %10 = arith.mulf %2, %2 : vector<8x128xf32>
    %cst_6 = arith.constant dense<0.000000e+00> : vector<128xf32>
    %11 = vector.multi_reduction <add>, %10, %cst_6 [0] : vector<8x128xf32> to vector<128xf32>
    %12 = vector.shape_cast %11 : vector<128xf32> to vector<1x128xf32>
    %13 = vector.extract_strided_slice %12 {offsets = [0, 0], sizes = [1, 64], strides = [1, 1]} : vector<1x128xf32> to vector<1x64xf32>
    %14 = vector.extract_strided_slice %12 {offsets = [0, 64], sizes = [1, 64], strides = [1, 1]} : vector<1x128xf32> to vector<1x64xf32>
    %15 = arith.addf %13, %14 : vector<1x64xf32>
    %cst_7 = arith.constant 6.250000e-02 : f32
    %16 = vector.broadcast %cst_7 : f32 to vector<1x64xf32>
    %17 = arith.mulf %9, %16 : vector<1x64xf32>
    %cst_8 = arith.constant 6.250000e-02 : f32
    %18 = vector.broadcast %cst_8 : f32 to vector<1x64xf32>
    %19 = arith.mulf %15, %18 : vector<1x64xf32>
    %20 = arith.mulf %17, %17 : vector<1x64xf32>
    %21 = arith.subf %19, %20 : vector<1x64xf32>
    %cst_9 = arith.constant 9.99999974E-6 : f32
    %22 = vector.broadcast %cst_9 : f32 to vector<1x64xf32>
    %23 = arith.addf %21, %22 : vector<1x64xf32>
    %24 = math.rsqrt %23 : vector<1x64xf32>
    %25 = arith.mulf %3, %24 : vector<1x64xf32>
    %26 = arith.mulf %17, %25 : vector<1x64xf32>
    %27 = arith.subf %4, %26 : vector<1x64xf32>
    %28 = tpu.concatenate %25, %25 in 1 : vector<1x64xf32>, vector<1x64xf32> -> vector<1x128xf32>
    %29 = tpu.concatenate %27, %27 in 1 : vector<1x64xf32>, vector<1x64xf32> -> vector<1x128xf32>
    %30 = vector.broadcast %28 : vector<1x128xf32> to vector<8x128xf32>
    %31 = arith.mulf %2, %30 : vector<8x128xf32>
    %32 = vector.broadcast %29 : vector<1x128xf32> to vector<8x128xf32>
    %33 = arith.addf %31, %32 : vector<8x128xf32>
    %cst_10 = arith.constant 0.000000e+00 : f32
    %34 = vector.broadcast %cst_10 : f32 to vector<8x128xf32>
    %35 = arith.maximumf %33, %34 : vector<8x128xf32>
    %36 = arith.truncf %35 : vector<8x128xf32> to vector<8x128xbf16>
    %c0_11 = arith.constant 0 : index
    %c0_12 = arith.constant 0 : index
    %c0_13 = arith.constant 0 : index
    %37 = vector.load %arg5[%c0_11, %c0_12, %c0_13] : memref<1x8x128xbf16, #tpu.memory_space<vmem>>, vector<1x8x128xbf16>
    %38 = vector.shape_cast %37 : vector<1x8x128xbf16> to vector<8x128xbf16>
    %39 = vector.shape_cast %36 : vector<8x128xbf16> to vector<1x8x128xbf16>
    tpu.vector_store %arg5[%c0_11, %c0_12, %c0_13], %39 {strides = array<i32>} : memref<1x8x128xbf16, #tpu.memory_space<vmem>>, vector<1x8x128xbf16>,
    return
  }
  func.func @transform_0(%arg0: i32, %arg1: i32) -> (i32, i32, i32) {
    %c0_i32 = arith.constant 0 : i32
    %c0_i32_0 = arith.constant 0 : i32
    return %arg0, %c0_i32, %arg1 : i32, i32, i32
  }
  func.func @transform_1(%arg0: i32, %arg1: i32) -> (i32, i32) {
    %c0_i32 = arith.constant 0 : i32
    %c0_i32_0 = arith.constant 0 : i32
    return %c0_i32, %arg1 : i32, i32
  }
  func.func @transform_2(%arg0: i32, %arg1: i32) -> (i32, i32) {
    %c0_i32 = arith.constant 0 : i32
    %c0_i32_0 = arith.constant 0 : i32
    return %c0_i32, %arg1 : i32, i32
  }
  func.func @transform_3(%arg0: i32, %arg1: i32) -> (i32, i32, i32) {
    %c0_i32 = arith.constant 0 : i32
    %c0_i32_0 = arith.constant 0 : i32
    return %arg0, %c0_i32, %arg1 : i32, i32, i32
  }
}

module attributes {stable_mosaic.version = 11 : i64} {
  func.func @_matmul_kernel(%arg0: i32, %arg1: i32, %arg2: i32, %arg3: memref<32x640xbf16, #tpu.memory_space<vmem>>, %arg4: memref<640x128xbf16, #tpu.memory_space<vmem>>, %arg5: memref<32x128xbf16, #tpu.memory_space<vmem>>, %arg6: memref<32x128xf32, #tpu.memory_space<vmem>>) attributes {dimension_semantics = [#tpu.dimension_semantics<parallel>, #tpu.dimension_semantics<parallel>, #tpu.dimension_semantics<arbitrary>], iteration_bounds = array<i64: 1, 1, 1>, scalar_prefetch = 0 : i64, scratch_operands = 1 : i64, tpu.core_type = #tpu.core_type<tc>, window_params = [{transform_indices = @transform_0, window_bounds = array<i64: 32, 640>}, {transform_indices = @transform_1, window_bounds = array<i64: 640, 128>}, {transform_indices = @transform_2, window_bounds = array<i64: 32, 128>}]} {
    %c0_i32 = arith.constant 0 : i32
    %0 = arith.cmpi eq, %arg2, %c0_i32 : i32
    %1 = arith.extui %0 : i1 to i32
    %c0_i32_0 = arith.constant 0 : i32
    %2 = arith.cmpi ne, %1, %c0_i32_0 : i32
    scf.if %2 {
      %cst_10 = arith.constant 0.000000e+00 : f32
      %12 = vector.broadcast %cst_10 : f32 to vector<32x128xf32>
      %c0_11 = arith.constant 0 : index
      %c0_12 = arith.constant 0 : index
      %13 = vector.load %arg6[%c0_11, %c0_12] : memref<32x128xf32, #tpu.memory_space<vmem>>, vector<32x128xf32>
      tpu.vector_store %arg6[%c0_11, %c0_12], %12 {strides = array<i32>} : memref<32x128xf32, #tpu.memory_space<vmem>>, vector<32x128xf32>,
    } else {
    }
    %c0 = arith.constant 0 : index
    %c0_1 = arith.constant 0 : index
    %3 = vector.load %arg6[%c0, %c0_1] : memref<32x128xf32, #tpu.memory_space<vmem>>, vector<32x128xf32>
    %c0_2 = arith.constant 0 : index
    %c0_3 = arith.constant 0 : index
    %4 = vector.load %arg3[%c0_2, %c0_3] : memref<32x640xbf16, #tpu.memory_space<vmem>>, vector<32x640xbf16>
    %c0_4 = arith.constant 0 : index
    %c0_5 = arith.constant 0 : index
    %5 = vector.load %arg4[%c0_4, %c0_5] : memref<640x128xbf16, #tpu.memory_space<vmem>>, vector<640x128xbf16>
    %cst = arith.constant dense<0.000000e+00> : vector<32x128xf32>
    %6 = tpu.matmul %4, %5, %cst {dimension_numbers = #tpu.dot_dimension_numbers<[1], [0], [0], [1], [0, 0, 1, 1], [], []>} : vector<32x640xbf16>, vector<640x128xbf16>, vector<32x128xf32> -> vector<32x128xf32>
    %7 = arith.addf %3, %6 : vector<32x128xf32>
    %c0_6 = arith.constant 0 : index
    %c0_7 = arith.constant 0 : index
    %8 = vector.load %arg6[%c0_6, %c0_7] : memref<32x128xf32, #tpu.memory_space<vmem>>, vector<32x128xf32>
    tpu.vector_store %arg6[%c0_6, %c0_7], %7 {strides = array<i32>} : memref<32x128xf32, #tpu.memory_space<vmem>>, vector<32x128xf32>,
    %c0_i32_8 = arith.constant 0 : i32
    %9 = arith.cmpi eq, %arg2, %c0_i32_8 : i32
    %10 = arith.extui %9 : i1 to i32
    %c0_i32_9 = arith.constant 0 : i32
    %11 = arith.cmpi ne, %10, %c0_i32_9 : i32
    scf.if %11 {
      %c0_10 = arith.constant 0 : index
      %c0_11 = arith.constant 0 : index
      %12 = vector.load %arg6[%c0_10, %c0_11] : memref<32x128xf32, #tpu.memory_space<vmem>>, vector<32x128xf32>
      %13 = arith.truncf %12 : vector<32x128xf32> to vector<32x128xbf16>
      %c0_12 = arith.constant 0 : index
      %c0_13 = arith.constant 0 : index
      %14 = vector.load %arg5[%c0_12, %c0_13] : memref<32x128xbf16, #tpu.memory_space<vmem>>, vector<32x128xbf16>
      tpu.vector_store %arg5[%c0_12, %c0_13], %13 {strides = array<i32>} : memref<32x128xbf16, #tpu.memory_space<vmem>>, vector<32x128xbf16>,
    } else {
    }
    return
  }
  func.func @transform_0(%arg0: i32, %arg1: i32, %arg2: i32) -> (i32, i32) {
    %c0_i32 = arith.constant 0 : i32
    return %arg0, %arg2 : i32, i32
  }
  func.func @transform_1(%arg0: i32, %arg1: i32, %arg2: i32) -> (i32, i32) {
    %c0_i32 = arith.constant 0 : i32
    return %arg2, %arg1 : i32, i32
  }
  func.func @transform_2(%arg0: i32, %arg1: i32, %arg2: i32) -> (i32, i32) {
    %c0_i32 = arith.constant 0 : i32
    return %arg0, %arg1 : i32, i32
  }
}

module attributes {stable_mosaic.version = 11 : i64} {
  func.func @_in_skip_kernel(%arg0: i32, %arg1: i32, %arg2: memref<1x8x128xbf16, #tpu.memory_space<vmem>>, %arg3: memref<1x64xf32, #tpu.memory_space<vmem>>, %arg4: memref<1x64xf32, #tpu.memory_space<vmem>>, %arg5: memref<1x8x128xbf16, #tpu.memory_space<vmem>>, %arg6: memref<1x8x128xbf16, #tpu.memory_space<vmem>>) attributes {dimension_semantics = [#tpu.dimension_semantics<parallel>, #tpu.dimension_semantics<parallel>], iteration_bounds = array<i64: 2, 1>, scalar_prefetch = 0 : i64, scratch_operands = 0 : i64, tpu.core_type = #tpu.core_type<tc>, window_params = [{transform_indices = @transform_0, window_bounds = array<i64: 1, 8, 128>}, {transform_indices = @transform_1, window_bounds = array<i64: 1, 64>}, {transform_indices = @transform_2, window_bounds = array<i64: 1, 64>}, {transform_indices = @transform_3, window_bounds = array<i64: 1, 8, 128>}, {transform_indices = @transform_4, window_bounds = array<i64: 1, 8, 128>}]} {
    %c0 = arith.constant 0 : index
    %c0_0 = arith.constant 0 : index
    %c0_1 = arith.constant 0 : index
    %0 = vector.load %arg2[%c0, %c0_0, %c0_1] : memref<1x8x128xbf16, #tpu.memory_space<vmem>>, vector<1x8x128xbf16>
    %1 = vector.shape_cast %0 : vector<1x8x128xbf16> to vector<8x128xbf16>
    %2 = arith.extf %1 : vector<8x128xbf16> to vector<8x128xf32>
    %c0_2 = arith.constant 0 : index
    %c0_3 = arith.constant 0 : index
    %3 = vector.load %arg3[%c0_2, %c0_3] : memref<1x64xf32, #tpu.memory_space<vmem>>, vector<1x64xf32>
    %c0_4 = arith.constant 0 : index
    %c0_5 = arith.constant 0 : index
    %4 = vector.load %arg4[%c0_4, %c0_5] : memref<1x64xf32, #tpu.memory_space<vmem>>, vector<1x64xf32>
    %cst = arith.constant dense<0.000000e+00> : vector<128xf32>
    %5 = vector.multi_reduction <add>, %2, %cst [0] : vector<8x128xf32> to vector<128xf32>
    %6 = vector.shape_cast %5 : vector<128xf32> to vector<1x128xf32>
    %7 = vector.extract_strided_slice %6 {offsets = [0, 0], sizes = [1, 64], strides = [1, 1]} : vector<1x128xf32> to vector<1x64xf32>
    %8 = vector.extract_strided_slice %6 {offsets = [0, 64], sizes = [1, 64], strides = [1, 1]} : vector<1x128xf32> to vector<1x64xf32>
    %9 = arith.addf %7, %8 : vector<1x64xf32>
    %10 = arith.mulf %2, %2 : vector<8x128xf32>
    %cst_6 = arith.constant dense<0.000000e+00> : vector<128xf32>
    %11 = vector.multi_reduction <add>, %10, %cst_6 [0] : vector<8x128xf32> to vector<128xf32>
    %12 = vector.shape_cast %11 : vector<128xf32> to vector<1x128xf32>
    %13 = vector.extract_strided_slice %12 {offsets = [0, 0], sizes = [1, 64], strides = [1, 1]} : vector<1x128xf32> to vector<1x64xf32>
    %14 = vector.extract_strided_slice %12 {offsets = [0, 64], sizes = [1, 64], strides = [1, 1]} : vector<1x128xf32> to vector<1x64xf32>
    %15 = arith.addf %13, %14 : vector<1x64xf32>
    %cst_7 = arith.constant 6.250000e-02 : f32
    %16 = vector.broadcast %cst_7 : f32 to vector<1x64xf32>
    %17 = arith.mulf %9, %16 : vector<1x64xf32>
    %cst_8 = arith.constant 6.250000e-02 : f32
    %18 = vector.broadcast %cst_8 : f32 to vector<1x64xf32>
    %19 = arith.mulf %15, %18 : vector<1x64xf32>
    %20 = arith.mulf %17, %17 : vector<1x64xf32>
    %21 = arith.subf %19, %20 : vector<1x64xf32>
    %cst_9 = arith.constant 9.99999974E-6 : f32
    %22 = vector.broadcast %cst_9 : f32 to vector<1x64xf32>
    %23 = arith.addf %21, %22 : vector<1x64xf32>
    %24 = math.rsqrt %23 : vector<1x64xf32>
    %25 = arith.mulf %3, %24 : vector<1x64xf32>
    %26 = arith.mulf %17, %25 : vector<1x64xf32>
    %27 = arith.subf %4, %26 : vector<1x64xf32>
    %28 = tpu.concatenate %25, %25 in 1 : vector<1x64xf32>, vector<1x64xf32> -> vector<1x128xf32>
    %29 = tpu.concatenate %27, %27 in 1 : vector<1x64xf32>, vector<1x64xf32> -> vector<1x128xf32>
    %30 = vector.broadcast %28 : vector<1x128xf32> to vector<8x128xf32>
    %31 = arith.mulf %2, %30 : vector<8x128xf32>
    %32 = vector.broadcast %29 : vector<1x128xf32> to vector<8x128xf32>
    %33 = arith.addf %31, %32 : vector<8x128xf32>
    %c0_10 = arith.constant 0 : index
    %c0_11 = arith.constant 0 : index
    %c0_12 = arith.constant 0 : index
    %34 = vector.load %arg5[%c0_10, %c0_11, %c0_12] : memref<1x8x128xbf16, #tpu.memory_space<vmem>>, vector<1x8x128xbf16>
    %35 = vector.shape_cast %34 : vector<1x8x128xbf16> to vector<8x128xbf16>
    %36 = arith.extf %35 : vector<8x128xbf16> to vector<8x128xf32>
    %37 = arith.addf %33, %36 : vector<8x128xf32>
    %38 = arith.truncf %37 : vector<8x128xf32> to vector<8x128xbf16>
    %c0_13 = arith.constant 0 : index
    %c0_14 = arith.constant 0 : index
    %c0_15 = arith.constant 0 : index
    %39 = vector.load %arg6[%c0_13, %c0_14, %c0_15] : memref<1x8x128xbf16, #tpu.memory_space<vmem>>, vector<1x8x128xbf16>
    %40 = vector.shape_cast %39 : vector<1x8x128xbf16> to vector<8x128xbf16>
    %41 = vector.shape_cast %38 : vector<8x128xbf16> to vector<1x8x128xbf16>
    tpu.vector_store %arg6[%c0_13, %c0_14, %c0_15], %41 {strides = array<i32>} : memref<1x8x128xbf16, #tpu.memory_space<vmem>>, vector<1x8x128xbf16>,
    return
  }
  func.func @transform_0(%arg0: i32, %arg1: i32) -> (i32, i32, i32) {
    %c0_i32 = arith.constant 0 : i32
    %c0_i32_0 = arith.constant 0 : i32
    return %arg0, %c0_i32, %arg1 : i32, i32, i32
  }
  func.func @transform_1(%arg0: i32, %arg1: i32) -> (i32, i32) {
    %c0_i32 = arith.constant 0 : i32
    %c0_i32_0 = arith.constant 0 : i32
    return %c0_i32, %arg1 : i32, i32
  }
  func.func @transform_2(%arg0: i32, %arg1: i32) -> (i32, i32) {
    %c0_i32 = arith.constant 0 : i32
    %c0_i32_0 = arith.constant 0 : i32
    return %c0_i32, %arg1 : i32, i32
  }
  func.func @transform_3(%arg0: i32, %arg1: i32) -> (i32, i32, i32) {
    %c0_i32 = arith.constant 0 : i32
    %c0_i32_0 = arith.constant 0 : i32
    return %arg0, %c0_i32, %arg1 : i32, i32, i32
  }
  func.func @transform_4(%arg0: i32, %arg1: i32) -> (i32, i32, i32) {
    %c0_i32 = arith.constant 0 : i32
    %c0_i32_0 = arith.constant 0 : i32
    return %arg0, %c0_i32, %arg1 : i32, i32, i32
  }
}

module attributes {stable_mosaic.version = 11 : i64} {
  func.func @_matmul_kernel(%arg0: i32, %arg1: i32, %arg2: i32, %arg3: memref<128x384xbf16, #tpu.memory_space<vmem>>, %arg4: memref<384x128xbf16, #tpu.memory_space<vmem>>, %arg5: memref<128x128xbf16, #tpu.memory_space<vmem>>, %arg6: memref<128x128xf32, #tpu.memory_space<vmem>>) attributes {dimension_semantics = [#tpu.dimension_semantics<parallel>, #tpu.dimension_semantics<parallel>, #tpu.dimension_semantics<arbitrary>], iteration_bounds = array<i64: 1, 1, 1>, scalar_prefetch = 0 : i64, scratch_operands = 1 : i64, tpu.core_type = #tpu.core_type<tc>, window_params = [{transform_indices = @transform_0, window_bounds = array<i64: 128, 384>}, {transform_indices = @transform_1, window_bounds = array<i64: 384, 128>}, {transform_indices = @transform_2, window_bounds = array<i64: 128, 128>}]} {
    %c0_i32 = arith.constant 0 : i32
    %0 = arith.cmpi eq, %arg2, %c0_i32 : i32
    %1 = arith.extui %0 : i1 to i32
    %c0_i32_0 = arith.constant 0 : i32
    %2 = arith.cmpi ne, %1, %c0_i32_0 : i32
    scf.if %2 {
      %cst_10 = arith.constant 0.000000e+00 : f32
      %12 = vector.broadcast %cst_10 : f32 to vector<128x128xf32>
      %c0_11 = arith.constant 0 : index
      %c0_12 = arith.constant 0 : index
      %13 = vector.load %arg6[%c0_11, %c0_12] : memref<128x128xf32, #tpu.memory_space<vmem>>, vector<128x128xf32>
      tpu.vector_store %arg6[%c0_11, %c0_12], %12 {strides = array<i32>} : memref<128x128xf32, #tpu.memory_space<vmem>>, vector<128x128xf32>,
    } else {
    }
    %c0 = arith.constant 0 : index
    %c0_1 = arith.constant 0 : index
    %3 = vector.load %arg6[%c0, %c0_1] : memref<128x128xf32, #tpu.memory_space<vmem>>, vector<128x128xf32>
    %c0_2 = arith.constant 0 : index
    %c0_3 = arith.constant 0 : index
    %4 = vector.load %arg3[%c0_2, %c0_3] : memref<128x384xbf16, #tpu.memory_space<vmem>>, vector<128x384xbf16>
    %c0_4 = arith.constant 0 : index
    %c0_5 = arith.constant 0 : index
    %5 = vector.load %arg4[%c0_4, %c0_5] : memref<384x128xbf16, #tpu.memory_space<vmem>>, vector<384x128xbf16>
    %cst = arith.constant dense<0.000000e+00> : vector<128x128xf32>
    %6 = tpu.matmul %4, %5, %cst {dimension_numbers = #tpu.dot_dimension_numbers<[1], [0], [0], [1], [0, 0, 1, 1], [], []>} : vector<128x384xbf16>, vector<384x128xbf16>, vector<128x128xf32> -> vector<128x128xf32>
    %7 = arith.addf %3, %6 : vector<128x128xf32>
    %c0_6 = arith.constant 0 : index
    %c0_7 = arith.constant 0 : index
    %8 = vector.load %arg6[%c0_6, %c0_7] : memref<128x128xf32, #tpu.memory_space<vmem>>, vector<128x128xf32>
    tpu.vector_store %arg6[%c0_6, %c0_7], %7 {strides = array<i32>} : memref<128x128xf32, #tpu.memory_space<vmem>>, vector<128x128xf32>,
    %c0_i32_8 = arith.constant 0 : i32
    %9 = arith.cmpi eq, %arg2, %c0_i32_8 : i32
    %10 = arith.extui %9 : i1 to i32
    %c0_i32_9 = arith.constant 0 : i32
    %11 = arith.cmpi ne, %10, %c0_i32_9 : i32
    scf.if %11 {
      %c0_10 = arith.constant 0 : index
      %c0_11 = arith.constant 0 : index
      %12 = vector.load %arg6[%c0_10, %c0_11] : memref<128x128xf32, #tpu.memory_space<vmem>>, vector<128x128xf32>
      %13 = arith.truncf %12 : vector<128x128xf32> to vector<128x128xbf16>
      %c0_12 = arith.constant 0 : index
      %c0_13 = arith.constant 0 : index
      %14 = vector.load %arg5[%c0_12, %c0_13] : memref<128x128xbf16, #tpu.memory_space<vmem>>, vector<128x128xbf16>
      tpu.vector_store %arg5[%c0_12, %c0_13], %13 {strides = array<i32>} : memref<128x128xbf16, #tpu.memory_space<vmem>>, vector<128x128xbf16>,
    } else {
    }
    return
  }
  func.func @transform_0(%arg0: i32, %arg1: i32, %arg2: i32) -> (i32, i32) {
    %c0_i32 = arith.constant 0 : i32
    return %arg0, %arg2 : i32, i32
  }
  func.func @transform_1(%arg0: i32, %arg1: i32, %arg2: i32) -> (i32, i32) {
    %c0_i32 = arith.constant 0 : i32
    return %arg2, %arg1 : i32, i32
  }
  func.func @transform_2(%arg0: i32, %arg1: i32, %arg2: i32) -> (i32, i32) {
    %c0_i32 = arith.constant 0 : i32
    return %arg0, %arg1 : i32, i32
  }
}

module attributes {stable_mosaic.version = 11 : i64} {
  func.func @_matmul_kernel(%arg0: i32, %arg1: i32, %arg2: i32, %arg3: memref<512x896xbf16, #tpu.memory_space<vmem>>, %arg4: memref<896x128xbf16, #tpu.memory_space<vmem>>, %arg5: memref<512x128xbf16, #tpu.memory_space<vmem>>, %arg6: memref<512x128xf32, #tpu.memory_space<vmem>>) attributes {dimension_semantics = [#tpu.dimension_semantics<parallel>, #tpu.dimension_semantics<parallel>, #tpu.dimension_semantics<arbitrary>], iteration_bounds = array<i64: 1, 1, 1>, scalar_prefetch = 0 : i64, scratch_operands = 1 : i64, tpu.core_type = #tpu.core_type<tc>, window_params = [{transform_indices = @transform_0, window_bounds = array<i64: 512, 896>}, {transform_indices = @transform_1, window_bounds = array<i64: 896, 128>}, {transform_indices = @transform_2, window_bounds = array<i64: 512, 128>}]} {
    %c0_i32 = arith.constant 0 : i32
    %0 = arith.cmpi eq, %arg2, %c0_i32 : i32
    %1 = arith.extui %0 : i1 to i32
    %c0_i32_0 = arith.constant 0 : i32
    %2 = arith.cmpi ne, %1, %c0_i32_0 : i32
    scf.if %2 {
      %cst_10 = arith.constant 0.000000e+00 : f32
      %12 = vector.broadcast %cst_10 : f32 to vector<512x128xf32>
      %c0_11 = arith.constant 0 : index
      %c0_12 = arith.constant 0 : index
      %13 = vector.load %arg6[%c0_11, %c0_12] : memref<512x128xf32, #tpu.memory_space<vmem>>, vector<512x128xf32>
      tpu.vector_store %arg6[%c0_11, %c0_12], %12 {strides = array<i32>} : memref<512x128xf32, #tpu.memory_space<vmem>>, vector<512x128xf32>,
    } else {
    }
    %c0 = arith.constant 0 : index
    %c0_1 = arith.constant 0 : index
    %3 = vector.load %arg6[%c0, %c0_1] : memref<512x128xf32, #tpu.memory_space<vmem>>, vector<512x128xf32>
    %c0_2 = arith.constant 0 : index
    %c0_3 = arith.constant 0 : index
    %4 = vector.load %arg3[%c0_2, %c0_3] : memref<512x896xbf16, #tpu.memory_space<vmem>>, vector<512x896xbf16>
    %c0_4 = arith.constant 0 : index
    %c0_5 = arith.constant 0 : index
    %5 = vector.load %arg4[%c0_4, %c0_5] : memref<896x128xbf16, #tpu.memory_space<vmem>>, vector<896x128xbf16>
    %cst = arith.constant dense<0.000000e+00> : vector<512x128xf32>
    %6 = tpu.matmul %4, %5, %cst {dimension_numbers = #tpu.dot_dimension_numbers<[1], [0], [0], [1], [0, 0, 1, 1], [], []>} : vector<512x896xbf16>, vector<896x128xbf16>, vector<512x128xf32> -> vector<512x128xf32>
    %7 = arith.addf %3, %6 : vector<512x128xf32>
    %c0_6 = arith.constant 0 : index
    %c0_7 = arith.constant 0 : index
    %8 = vector.load %arg6[%c0_6, %c0_7] : memref<512x128xf32, #tpu.memory_space<vmem>>, vector<512x128xf32>
    tpu.vector_store %arg6[%c0_6, %c0_7], %7 {strides = array<i32>} : memref<512x128xf32, #tpu.memory_space<vmem>>, vector<512x128xf32>,
    %c0_i32_8 = arith.constant 0 : i32
    %9 = arith.cmpi eq, %arg2, %c0_i32_8 : i32
    %10 = arith.extui %9 : i1 to i32
    %c0_i32_9 = arith.constant 0 : i32
    %11 = arith.cmpi ne, %10, %c0_i32_9 : i32
    scf.if %11 {
      %c0_10 = arith.constant 0 : index
      %c0_11 = arith.constant 0 : index
      %12 = vector.load %arg6[%c0_10, %c0_11] : memref<512x128xf32, #tpu.memory_space<vmem>>, vector<512x128xf32>
      %13 = math.tanh %12 : vector<512x128xf32>
      %14 = arith.truncf %13 : vector<512x128xf32> to vector<512x128xbf16>
      %c0_12 = arith.constant 0 : index
      %c0_13 = arith.constant 0 : index
      %15 = vector.load %arg5[%c0_12, %c0_13] : memref<512x128xbf16, #tpu.memory_space<vmem>>, vector<512x128xbf16>
      tpu.vector_store %arg5[%c0_12, %c0_13], %14 {strides = array<i32>} : memref<512x128xbf16, #tpu.memory_space<vmem>>, vector<512x128xbf16>,
    } else {
    }
    return
  }
  func.func @transform_0(%arg0: i32, %arg1: i32, %arg2: i32) -> (i32, i32) {
    %c0_i32 = arith.constant 0 : i32
    return %arg0, %arg2 : i32, i32
  }
  func.func @transform_1(%arg0: i32, %arg1: i32, %arg2: i32) -> (i32, i32) {
    %c0_i32 = arith.constant 0 : i32
    return %arg2, %arg1 : i32, i32
  }
  func.func @transform_2(%arg0: i32, %arg1: i32, %arg2: i32) -> (i32, i32) {
    %c0_i32 = arith.constant 0 : i32
    return %arg0, %arg1 : i32, i32
  }
}

</mosaic_0001>

<llo_original>
// kernel: generator_forward.19
$region0: #{generator_forward.19}
  #allocation0 [shape = 'u32[]', space=smem, size = 0x4, offset = 0x4, fixed_abs, tag = 'smem constant byte address 0x4 - core index']
  #allocation1 [shape = 'u32[144,128]{1,0:T(1,128)}', space=vmem, size = 0x12000, scoped, tag = 'internal scratch']
  #allocation2 [shape = 'f32[512,128]{1,0:T(8,128)}', space=vmem, size = 0x40000, scoped, tag = 'scratch operand']
  %s0 = inlined_call_operand.vmem [shape: bf16[512,512], index: 0, kind: input, shape index: {}]
  %s1 = inlined_call_operand.vmem [shape: bf16[512,128], index: 1, kind: input, shape index: {}]
  %s2 = inlined_call_operand.vmem [shape: bf16[512,128], index: 2, kind: output, shape index: {}]
  %s3 = sld [smem:[#allocation0]]
  $region26: #{generator_forward.19} parent=0
    _
  %s5 = ssub.s32 1, %s3
  %s6 = scalar_select 0, %s5, %s3
  // Predicated region
  $region2: #{generator_forward.19} parent=0 // pred_check
    _
  $region3: #{generator_forward.19} parent=0 // pred_check_branch
    %8 = sbr.rel (0) target = $region5
  $region4: #{generator_forward.19} parent=0 // pred_region
    _
  $region5: #{generator_forward.19} parent=0 // pred_fallthru
    _
  // Predicated region
  $region6: #{generator_forward.19} parent=0 // pred_check
    _
  $region7: #{generator_forward.19} parent=0 // pred_check_branch
    %10 = sbr.rel (0) target = $region9
  $region8: #{generator_forward.19} parent=0 // pred_region
    _
  $region9: #{generator_forward.19} parent=0 // pred_fallthru
    _
  %p12 = scmp.eq.s32.totalorder 0, 0
  // Predicated region
  $region10: #{generator_forward.19} parent=0 // pred_check
    %p13 = pneg %p12
  $region11: #{generator_forward.19} parent=0 // pred_check_branch
    %15 = sbr.rel (%p13) target = $region13
  $region12: #{generator_forward.19} parent=0 // pred_region
    %16 = vst [vmem:[#allocation2] sm:$0xff] 0.0
    %17 = vst [vmem:[#allocation2 + $0x8] sm:$0xff] 0.0
    %18 = vst [vmem:[#allocation2 + $0x10] sm:$0xff] 0.0
    %19 = vst [vmem:[#allocation2 + $0x18] sm:$0xff] 0.0
    %20 = vst [vmem:[#allocation2 + $0x20] sm:$0xff] 0.0
    %21 = vst [vmem:[#allocation2 + $0x28] sm:$0xff] 0.0
    %22 = vst [vmem:[#allocation2 + $0x30] sm:$0xff] 0.0
    %23 = vst [vmem:[#allocation2 + $0x38] sm:$0xff] 0.0
    %24 = vst [vmem:[#allocation2 + $0x40] sm:$0xff] 0.0
    %25 = vst [vmem:[#allocation2 + $0x48] sm:$0xff] 0.0
    %26 = vst [vmem:[#allocation2 + $0x50] sm:$0xff] 0.0
    %27 = vst [vmem:[#allocation2 + $0x58] sm:$0xff] 0.0
    %28 = vst [vmem:[#allocation2 + $0x60] sm:$0xff] 0.0
    %29 = vst [vmem:[#allocation2 + $0x68] sm:$0xff] 0.0
    %30 = vst [vmem:[#allocation2 + $0x70] sm:$0xff] 0.0
    %31 = vst [vmem:[#allocation2 + $0x78] sm:$0xff] 0.0
    %32 = vst [vmem:[#allocation2 + $0x80] sm:$0xff] 0.0
    %33 = vst [vmem:[#allocation2 + $0x88] sm:$0xff] 0.0
    %34 = vst [vmem:[#allocation2 + $0x90] sm:$0xff] 0.0
    %35 = vst [vmem:[#allocation2 + $0x98] sm:$0xff] 0.0
    %36 = vst [vmem:[#allocation2 + $0xa0] sm:$0xff] 0.0
    %37 = vst [vmem:[#allocation2 + $0xa8] sm:$0xff] 0.0
    %38 = vst [vmem:[#allocation2 + $0xb0] sm:$0xff] 0.0
    %39 = vst [vmem:[#allocation2 + $0xb8] sm:$0xff] 0.0
    %40 = vst [vmem:[#allocation2 + $0xc0] sm:$0xff] 0.0
    %41 = vst [vmem:[#allocation2 + $0xc8] sm:$0xff] 0.0
    %42 = vst [vmem:[#allocation2 + $0xd0] sm:$0xff] 0.0
    %43 = vst [vmem:[#allocation2 + $0xd8] sm:$0xff] 0.0
    %44 = vst [vmem:[#allocation2 + $0xe0] sm:$0xff] 0.0
    %45 = vst [vmem:[#allocation2 + $0xe8] sm:$0xff] 0.0
    %46 = vst [vmem:[#allocation2 + $0xf0] sm:$0xff] 0.0
    %47 = vst [vmem:[#allocation2 + $0xf8] sm:$0xff] 0.0
    %48 = vst [vmem:[#allocation2 + $0x100] sm:$0xff] 0.0
    %49 = vst [vmem:[#allocation2 + $0x108] sm:$0xff] 0.0
    %50 = vst [vmem:[#allocation2 + $0x110] sm:$0xff] 0.0
    %51 = vst [vmem:[#allocation2 + $0x118] sm:$0xff] 0.0
    %52 = vst [vmem:[#allocation2 + $0x120] sm:$0xff] 0.0
    %53 = vst [vmem:[#allocation2 + $0x128] sm:$0xff] 0.0
    %54 = vst [vmem:[#allocation2 + $0x130] sm:$0xff] 0.0
    %55 = vst [vmem:[#allocation2 + $0x138] sm:$0xff] 0.0
    %56 = vst [vmem:[#allocation2 + $0x140] sm:$0xff] 0.0
    %57 = vst [vmem:[#allocation2 + $0x148] sm:$0xff] 0.0
    %58 = vst [vmem:[#allocation2 + $0x150] sm:$0xff] 0.0
    %59 = vst [vmem:[#allocation2 + $0x158] sm:$0xff] 0.0
    %60 = vst [vmem:[#allocation2 + $0x160] sm:$0xff] 0.0
    %61 = vst [vmem:[#allocation2 + $0x168] sm:$0xff] 0.0
    %62 = vst [vmem:[#allocation2 + $0x170] sm:$0xff] 0.0
    %63 = vst [vmem:[#allocation2 + $0x178] sm:$0xff] 0.0
    %64 = vst [vmem:[#allocation2 + $0x180] sm:$0xff] 0.0
    %65 = vst [vmem:[#allocation2 + $0x188] sm:$0xff] 0.0
    %66 = vst [vmem:[#allocation2 + $0x190] sm:$0xff] 0.0
    %67 = vst [vmem:[#allocation2 + $0x198] sm:$0xff] 0.0
    %68 = vst [vmem:[#allocation2 + $0x1a0] sm:$0xff] 0.0
    %69 = vst [vmem:[#allocation2 + $0x1a8] sm:$0xff] 0.0
    %70 = vst [vmem:[#allocation2 + $0x1b0] sm:$0xff] 0.0
    %71 = vst [vmem:[#allocation2 + $0x1b8] sm:$0xff] 0.0
    %72 = vst [vmem:[#allocation2 + $0x1c0] sm:$0xff] 0.0
    %73 = vst [vmem:[#allocation2 + $0x1c8] sm:$0xff] 0.0
    %74 = vst [vmem:[#allocation2 + $0x1d0] sm:$0xff] 0.0
    %75 = vst [vmem:[#allocation2 + $0x1d8] sm:$0xff] 0.0
    %76 = vst [vmem:[#allocation2 + $0x1e0] sm:$0xff] 0.0
    %77 = vst [vmem:[#allocation2 + $0x1e8] sm:$0xff] 0.0
    %78 = vst [vmem:[#allocation2 + $0x1f0] sm:$0xff] 0.0
    %79 = vst [vmem:[#allocation2 + $0x1f8] sm:$0xff] 0.0
  $region13: #{generator_forward.19} parent=0 // pred_fallthru
    _
  %v80 = vld [vmem:[#allocation2] sm:$0xff]
  %v81 = vld [vmem:[#allocation2 + $0x8] sm:$0xff]
  %v82 = vld [vmem:[#allocation2 + $0x10] sm:$0xff]
  %v83 = vld [vmem:[#allocation2 + $0x18] sm:$0xff]
  %v84 = vld [vmem:[#allocation2 + $0x20] sm:$0xff]
  %v85 = vld [vmem:[#allocation2 + $0x28] sm:$0xff]
  %v86 = vld [vmem:[#allocation2 + $0x30] sm:$0xff]
  %v87 = vld [vmem:[#allocation2 + $0x38] sm:$0xff]
  %v88 = vld [vmem:[#allocation2 + $0x40] sm:$0xff]
  %v89 = vld [vmem:[#allocation2 + $0x48] sm:$0xff]
  %v90 = vld [vmem:[#allocation2 + $0x50] sm:$0xff]
  %v91 = vld [vmem:[#allocation2 + $0x58] sm:$0xff]
  %v92 = vld [vmem:[#allocation2 + $0x60] sm:$0xff]
  %v93 = vld [vmem:[#allocation2 + $0x68] sm:$0xff]
  %v94 = vld [vmem:[#allocation2 + $0x70] sm:$0xff]
  %v95 = vld [vmem:[#allocation2 + $0x78] sm:$0xff]
  %v96 = vld [vmem:[#allocation2 + $0x80] sm:$0xff]
  %v97 = vld [vmem:[#allocation2 + $0x88] sm:$0xff]
  %v98 = vld [vmem:[#allocation2 + $0x90] sm:$0xff]
  %v99 = vld [vmem:[#allocation2 + $0x98] sm:$0xff]
  %v100 = vld [vmem:[#allocation2 + $0xa0] sm:$0xff]
  %v101 = vld [vmem:[#allocation2 + $0xa8] sm:$0xff]
  %v102 = vld [vmem:[#allocation2 + $0xb0] sm:$0xff]
  %v103 = vld [vmem:[#allocation2 + $0xb8] sm:$0xff]
  %v104 = vld [vmem:[#allocation2 + $0xc0] sm:$0xff]
  %v105 = vld [vmem:[#allocation2 + $0xc8] sm:$0xff]
  %v106 = vld [vmem:[#allocation2 + $0xd0] sm:$0xff]
  %v107 = vld [vmem:[#allocation2 + $0xd8] sm:$0xff]
  %v108 = vld [vmem:[#allocation2 + $0xe0] sm:$0xff]
  %v109 = vld [vmem:[#allocation2 + $0xe8] sm:$0xff]
  %v110 = vld [vmem:[#allocation2 + $0xf0] sm:$0xff]
  %v111 = vld [vmem:[#allocation2 + $0xf8] sm:$0xff]
  %v112 = vld [vmem:[#allocation2 + $0x100] sm:$0xff]
  %v113 = vld [vmem:[#allocation2 + $0x108] sm:$0xff]
  %v114 = vld [vmem:[#allocation2 + $0x110] sm:$0xff]
  %v115 = vld [vmem:[#allocation2 + $0x118] sm:$0xff]
  %v116 = vld [vmem:[#allocation2 + $0x120] sm:$0xff]
  %v117 = vld [vmem:[#allocation2 + $0x128] sm:$0xff]
  %v118 = vld [vmem:[#allocation2 + $0x130] sm:$0xff]
  %v119 = vld [vmem:[#allocation2 + $0x138] sm:$0xff]
  %v120 = vld [vmem:[#allocation2 + $0x140] sm:$0xff]
  %v121 = vld [vmem:[#allocation2 + $0x148] sm:$0xff]
  %v122 = vld [vmem:[#allocation2 + $0x150] sm:$0xff]
  %v123 = vld [vmem:[#allocation2 + $0x158] sm:$0xff]
  %v124 = vld [vmem:[#allocation2 + $0x160] sm:$0xff]
  %v125 = vld [vmem:[#allocation2 + $0x168] sm:$0xff]
  %v126 = vld [vmem:[#allocation2 + $0x170] sm:$0xff]
  %v127 = vld [vmem:[#allocation2 + $0x178] sm:$0xff]
  %v128 = vld [vmem:[#allocation2 + $0x180] sm:$0xff]
  %v129 = vld [vmem:[#allocation2 + $0x188] sm:$0xff]
  %v130 = vld [vmem:[#allocation2 + $0x190] sm:$0xff]
  %v131 = vld [vmem:[#allocation2 + $0x198] sm:$0xff]
  %v132 = vld [vmem:[#allocation2 + $0x1a0] sm:$0xff]
  %v133 = vld [vmem:[#allocation2 + $0x1a8] sm:$0xff]
  %v134 = vld [vmem:[#allocation2 + $0x1b0] sm:$0xff]
  %v135 = vld [vmem:[#allocation2 + $0x1b8] sm:$0xff]
  %v136 = vld [vmem:[#allocation2 + $0x1c0] sm:$0xff]
  %v137 = vld [vmem:[#allocation2 + $0x1c8] sm:$0xff]
  %v138 = vld [vmem:[#allocation2 + $0x1d0] sm:$0xff]
  %v139 = vld [vmem:[#allocation2 + $0x1d8] sm:$0xff]
  %v140 = vld [vmem:[#allocation2 + $0x1e0] sm:$0xff]
  %v141 = vld [vmem:[#allocation2 + $0x1e8] sm:$0xff]
  %v142 = vld [vmem:[#allocation2 + $0x1f0] sm:$0xff]
  %v143 = vld [vmem:[#allocation2 + $0x1f8] sm:$0xff]
  %v144 = vld [vmem:[%s0] sm:$0xff]
  %v145 = vld [vmem:[%s0 + $0x8] sm:$0xff]
  %v146 = vld [vmem:[%s0 + $0x10] sm:$0xff]
  %v147 = vld [vmem:[%s0 + $0x18] sm:$0xff]
  %v148 = vld [vmem:[%s0 + $0x20] sm:$0xff]
  %v149 = vld [vmem:[%s0 + $0x28] sm:$0xff]
  %v150 = vld [vmem:[%s0 + $0x30] sm:$0xff]
  %v151 = vld [vmem:[%s0 + $0x38] sm:$0xff]
  %v152 = vld [vmem:[%s0 + $0x40] sm:$0xff]
  %v153 = vld [vmem:[%s0 + $0x48] sm:$0xff]
  %v154 = vld [vmem:[%s0 + $0x50] sm:$0xff]
  %v155 = vld [vmem:[%s0 + $0x58] sm:$0xff]
  %v156 = vld [vmem:[%s0 + $0x60] sm:$0xff]
  %v157 = vld [vmem:[%s0 + $0x68] sm:$0xff]
  %v158 = vld [vmem:[%s0 + $0x70] sm:$0xff]
  %v159 = vld [vmem:[%s0 + $0x78] sm:$0xff]
  %v160 = vld [vmem:[%s0 + $0x80] sm:$0xff]
  %v161 = vld [vmem:[%s0 + $0x88] sm:$0xff]
  %v162 = vld [vmem:[%s0 + $0x90] sm:$0xff]
  %v163 = vld [vmem:[%s0 + $0x98] sm:$0xff]
  %v164 = vld [vmem:[%s0 + $0xa0] sm:$0xff]
  %v165 = vld [vmem:[%s0 + $0xa8] sm:$0xff]
  %v166 = vld [vmem:[%s0 + $0xb0] sm:$0xff]
  %v167 = vld [vmem:[%s0 + $0xb8] sm:$0xff]
  %v168 = vld [vmem:[%s0 + $0xc0] sm:$0xff]
  %v169 = vld [vmem:[%s0 + $0xc8] sm:$0xff]
  %v170 = vld [vmem:[%s0 + $0xd0] sm:$0xff]
  %v171 = vld [vmem:[%s0 + $0xd8] sm:$0xff]
  %v172 = vld [vmem:[%s0 + $0xe0] sm:$0xff]
  %v173 = vld [vmem:[%s0 + $0xe8] sm:$0xff]
  %v174 = vld [vmem:[%s0 + $0xf0] sm:$0xff]
  %v175 = vld [vmem:[%s0 + $0xf8] sm:$0xff]
  %v176 = vld [vmem:[%s0 + $0x100] sm:$0xff]
  %v177 = vld [vmem:[%s0 + $0x108] sm:$0xff]
  %v178 = vld [vmem:[%s0 + $0x110] sm:$0xff]
  %v179 = vld [vmem:[%s0 + $0x118] sm:$0xff]
  %v180 = vld [vmem:[%s0 + $0x120] sm:$0xff]
  %v181 = vld [vmem:[%s0 + $0x128] sm:$0xff]
  %v182 = vld [vmem:[%s0 + $0x130] sm:$0xff]
  %v183 = vld [vmem:[%s0 + $0x138] sm:$0xff]
  %v184 = vld [vmem:[%s0 + $0x140] sm:$0xff]
  %v185 = vld [vmem:[%s0 + $0x148] sm:$0xff]
  %v186 = vld [vmem:[%s0 + $0x150] sm:$0xff]
  %v187 = vld [vmem:[%s0 + $0x158] sm:$0xff]
  %v188 = vld [vmem:[%s0 + $0x160] sm:$0xff]
  %v189 = vld [vmem:[%s0 + $0x168] sm:$0xff]
  %v190 = vld [vmem:[%s0 + $0x170] sm:$0xff]
  %v191 = vld [vmem:[%s0 + $0x178] sm:$0xff]
  %v192 = vld [vmem:[%s0 + $0x180] sm:$0xff]
  %v193 = vld [vmem:[%s0 + $0x188] sm:$0xff]
  %v194 = vld [vmem:[%s0 + $0x190] sm:$0xff]
  %v195 = vld [vmem:[%s0 + $0x198] sm:$0xff]
  %v196 = vld [vmem:[%s0 + $0x1a0] sm:$0xff]
  %v197 = vld [vmem:[%s0 + $0x1a8] sm:$0xff]
  %v198 = vld [vmem:[%s0 + $0x1b0] sm:$0xff]
  %v199 = vld [vmem:[%s0 + $0x1b8] sm:$0xff]
  %v200 = vld [vmem:[%s0 + $0x1c0] sm:$0xff]
  %v201 = vld [vmem:[%s0 + $0x1c8] sm:$0xff]
  %v202 = vld [vmem:[%s0 + $0x1d0] sm:$0xff]
  %v203 = vld [vmem:[%s0 + $0x1d8] sm:$0xff]
  %v204 = vld [vmem:[%s0 + $0x1e0] sm:$0xff]
  %v205 = vld [vmem:[%s0 + $0x1e8] sm:$0xff]
  %v206 = vld [vmem:[%s0 + $0x1f0] sm:$0xff]
  %v207 = vld [vmem:[%s0 + $0x1f8] sm:$0xff]
  %v208 = vld [vmem:[%s0 + $0x200] sm:$0xff]
  %v209 = vld [vmem:[%s0 + $0x208] sm:$0xff]
  %v210 = vld [vmem:[%s0 + $0x210] sm:$0xff]
  %v211 = vld [vmem:[%s0 + $0x218] sm:$0xff]
  %v212 = vld [vmem:[%s0 + $0x220] sm:$0xff]
  %v213 = vld [vmem:[%s0 + $0x228] sm:$0xff]
  %v214 = vld [vmem:[%s0 + $0x230] sm:$0xff]
  %v215 = vld [vmem:[%s0 + $0x238] sm:$0xff]
  %v216 = vld [vmem:[%s0 + $0x240] sm:$0xff]
  %v217 = vld [vmem:[%s0 + $0x248] sm:$0xff]
  %v218 = vld [vmem:[%s0 + $0x250] sm:$0xff]
  %v219 = vld [vmem:[%s0 + $0x258] sm:$0xff]
  %v220 = vld [vmem:[%s0 + $0x260] sm:$0xff]
  %v221 = vld [vmem:[%s0 + $0x268] sm:$0xff]
  %v222 = vld [vmem:[%s0 + $0x270] sm:$0xff]
  %v223 = vld [vmem:[%s0 + $0x278] sm:$0xff]
  %v224 = vld [vmem:[%s0 + $0x280] sm:$0xff]
  %v225 = vld [vmem:[%s0 + $0x288] sm:$0xff]
  %v226 = vld [vmem:[%s0 + $0x290] sm:$0xff]
  %v227 = vld [vmem:[%s0 + $0x298] sm:$0xff]
  %v228 = vld [vmem:[%s0 + $0x2a0] sm:$0xff]
  %v229 = vld [vmem:[%s0 + $0x2a8] sm:$0xff]
  %v230 = vld [vmem:[%s0 + $0x2b0] sm:$0xff]
  %v231 = vld [vmem:[%s0 + $0x2b8] sm:$0xff]
  %v232 = vld [vmem:[%s0 + $0x2c0] sm:$0xff]
  %v233 = vld [vmem:[%s0 + $0x2c8] sm:$0xff]
  %v234 = vld [vmem:[%s0 + $0x2d0] sm:$0xff]
  %v235 = vld [vmem:[%s0 + $0x2d8] sm:$0xff]
  %v236 = vld [vmem:[%s0 + $0x2e0] sm:$0xff]
  %v237 = vld [vmem:[%s0 + $0x2e8] sm:$0xff]
  %v238 = vld [vmem:[%s0 + $0x2f0] sm:$0xff]
  %v239 = vld [vmem:[%s0 + $0x2f8] sm:$0xff]
  %v240 = vld [vmem:[%s0 + $0x300] sm:$0xff]
  %v241 = vld [vmem:[%s0 + $0x308] sm:$0xff]
  %v242 = vld [vmem:[%s0 + $0x310] sm:$0xff]
  %v243 = vld [vmem:[%s0 + $0x318] sm:$0xff]
  %v244 = vld [vmem:[%s0 + $0x320] sm:$0xff]
  %v245 = vld [vmem:[%s0 + $0x328] sm:$0xff]
  %v246 = vld [vmem:[%s0 + $0x330] sm:$0xff]
  %v247 = vld [vmem:[%s0 + $0x338] sm:$0xff]
  %v248 = vld [vmem:[%s0 + $0x340] sm:$0xff]
  %v249 = vld [vmem:[%s0 + $0x348] sm:$0xff]
  %v250 = vld [vmem:[%s0 + $0x350] sm:$0xff]
  %v251 = vld [vmem:[%s0 + $0x358] sm:$0xff]
  %v252 = vld [vmem:[%s0 + $0x360] sm:$0xff]
  %v253 = vld [vmem:[%s0 + $0x368] sm:$0xff]
  %v254 = vld [vmem:[%s0 + $0x370] sm:$0xff]
  %v255 = vld [vmem:[%s0 + $0x378] sm:$0xff]
  %v256 = vld [vmem:[%s0 + $0x380] sm:$0xff]
  %v257 = vld [vmem:[%s0 + $0x388] sm:$0xff]
  %v258 = vld [vmem:[%s0 + $0x390] sm:$0xff]
  %v259 = vld [vmem:[%s0 + $0x398] sm:$0xff]
  %v260 = vld [vmem:[%s0 + $0x3a0] sm:$0xff]
  %v261 = vld [vmem:[%s0 + $0x3a8] sm:$0xff]
  %v262 = vld [vmem:[%s0 + $0x3b0] sm:$0xff]
  %v263 = vld [vmem:[%s0 + $0x3b8] sm:$0xff]
  %v264 = vld [vmem:[%s0 + $0x3c0] sm:$0xff]
  %v265 = vld [vmem:[%s0 + $0x3c8] sm:$0xff]
  %v266 = vld [vmem:[%s0 + $0x3d0] sm:$0xff]
  %v267 = vld [vmem:[%s0 + $0x3d8] sm:$0xff]
  %v268 = vld [vmem:[%s0 + $0x3e0] sm:$0xff]
  %v269 = vld [vmem:[%s0 + $0x3e8] sm:$0xff]
  %v270 = vld [vmem:[%s0 + $0x3f0] sm:$0xff]
  %v271 = vld [vmem:[%s0 + $0x3f8] sm:$0xff]
  %v272 = vld [vmem:[%s1] sm:$0xf]
  %v273 = vld [vmem:[%s1 + $0x4] sm:$0xf]
  %v274 = vld [vmem:[%s1 + $0x8] sm:$0xf]
  %v275 = vld [vmem:[%s1 + $0xc] sm:$0xf]
  %v276 = vld [vmem:[%s1 + $0x10] sm:$0xf]
  %v277 = vld [vmem:[%s1 + $0x14] sm:$0xf]
  %v278 = vld [vmem:[%s1 + $0x18] sm:$0xf]
  %v279 = vld [vmem:[%s1 + $0x1c] sm:$0xf]
  %v280 = vld [vmem:[%s1 + $0x20] sm:$0xf]
  %v281 = vld [vmem:[%s1 + $0x24] sm:$0xf]
  %v282 = vld [vmem:[%s1 + $0x28] sm:$0xf]
  %v283 = vld [vmem:[%s1 + $0x2c] sm:$0xf]
  %v284 = vld [vmem:[%s1 + $0x30] sm:$0xf]
  %v285 = vld [vmem:[%s1 + $0x34] sm:$0xf]
  %v286 = vld [vmem:[%s1 + $0x38] sm:$0xf]
  %v287 = vld [vmem:[%s1 + $0x3c] sm:$0xf]
  %v288 = vld [vmem:[%s1 + $0x40] sm:$0xf]
  %v289 = vld [vmem:[%s1 + $0x44] sm:$0xf]
  %v290 = vld [vmem:[%s1 + $0x48] sm:$0xf]
  %v291 = vld [vmem:[%s1 + $0x4c] sm:$0xf]
  %v292 = vld [vmem:[%s1 + $0x50] sm:$0xf]
  %v293 = vld [vmem:[%s1 + $0x54] sm:$0xf]
  %v294 = vld [vmem:[%s1 + $0x58] sm:$0xf]
  %v295 = vld [vmem:[%s1 + $0x5c] sm:$0xf]
  %v296 = vld [vmem:[%s1 + $0x60] sm:$0xf]
  %v297 = vld [vmem:[%s1 + $0x64] sm:$0xf]
  %v298 = vld [vmem:[%s1 + $0x68] sm:$0xf]
  %v299 = vld [vmem:[%s1 + $0x6c] sm:$0xf]
  %v300 = vld [vmem:[%s1 + $0x70] sm:$0xf]
  %v301 = vld [vmem:[%s1 + $0x74] sm:$0xf]
  %v302 = vld [vmem:[%s1 + $0x78] sm:$0xf]
  %v303 = vld [vmem:[%s1 + $0x7c] sm:$0xf]
  %v304 = vld [vmem:[%s1 + $0x80] sm:$0xf]
  %v305 = vld [vmem:[%s1 + $0x84] sm:$0xf]
  %v306 = vld [vmem:[%s1 + $0x88] sm:$0xf]
  %v307 = vld [vmem:[%s1 + $0x8c] sm:$0xf]
  %v308 = vld [vmem:[%s1 + $0x90] sm:$0xf]
  %v309 = vld [vmem:[%s1 + $0x94] sm:$0xf]
  %v310 = vld [vmem:[%s1 + $0x98] sm:$0xf]
  %v311 = vld [vmem:[%s1 + $0x9c] sm:$0xf]
  %v312 = vld [vmem:[%s1 + $0xa0] sm:$0xf]
  %v313 = vld [vmem:[%s1 + $0xa4] sm:$0xf]
  %v314 = vld [vmem:[%s1 + $0xa8] sm:$0xf]
  %v315 = vld [vmem:[%s1 + $0xac] sm:$0xf]
  %v316 = vld [vmem:[%s1 + $0xb0] sm:$0xf]
  %v317 = vld [vmem:[%s1 + $0xb4] sm:$0xf]
  %v318 = vld [vmem:[%s1 + $0xb8] sm:$0xf]
  %v319 = vld [vmem:[%s1 + $0xbc] sm:$0xf]
  %v320 = vld [vmem:[%s1 + $0xc0] sm:$0xf]
  %v321 = vld [vmem:[%s1 + $0xc4] sm:$0xf]
  %v322 = vld [vmem:[%s1 + $0xc8] sm:$0xf]
  %v323 = vld [vmem:[%s1 + $0xcc] sm:$0xf]
  %v324 = vld [vmem:[%s1 + $0xd0] sm:$0xf]
  %v325 = vld [vmem:[%s1 + $0xd4] sm:$0xf]
  %v326 = vld [vmem:[%s1 + $0xd8] sm:$0xf]
  %v327 = vld [vmem:[%s1 + $0xdc] sm:$0xf]
  %v328 = vld [vmem:[%s1 + $0xe0] sm:$0xf]
  %v329 = vld [vmem:[%s1 + $0xe4] sm:$0xf]
  %v330 = vld [vmem:[%s1 + $0xe8] sm:$0xf]
  %v331 = vld [vmem:[%s1 + $0xec] sm:$0xf]
  %v332 = vld [vmem:[%s1 + $0xf0] sm:$0xf]
  %v333 = vld [vmem:[%s1 + $0xf4] sm:$0xf]
  %v334 = vld [vmem:[%s1 + $0xf8] sm:$0xf]
  %v335 = vld [vmem:[%s1 + $0xfc] sm:$0xf]
  %v464 = vunpack.c.l.b16 %v144
  %v465 = vunpack.c.h.b16 %v144
  %v466 = vunpack.c.l.b16 %v145
  %v467 = vunpack.c.h.b16 %v145
  %v468 = vunpack.c.l.b16 %v146
  %v469 = vunpack.c.h.b16 %v146
  %v470 = vunpack.c.l.b16 %v147
  %v471 = vunpack.c.h.b16 %v147
  %v472 = vunpack.c.l.b16 %v148
  %v473 = vunpack.c.h.b16 %v148
  %v474 = vunpack.c.l.b16 %v149
  %v475 = vunpack.c.h.b16 %v149
  %v476 = vunpack.c.l.b16 %v150
  %v477 = vunpack.c.h.b16 %v150
  %v478 = vunpack.c.l.b16 %v151
  %v479 = vunpack.c.h.b16 %v151
  %v480 = vunpack.c.l.b16 %v152
  %v481 = vunpack.c.h.b16 %v152
  %v482 = vunpack.c.l.b16 %v153
  %v483 = vunpack.c.h.b16 %v153
  %v484 = vunpack.c.l.b16 %v154
  %v485 = vunpack.c.h.b16 %v154
  %v486 = vunpack.c.l.b16 %v155
  %v487 = vunpack.c.h.b16 %v155
  %v488 = vunpack.c.l.b16 %v156
  %v489 = vunpack.c.h.b16 %v156
  %v490 = vunpack.c.l.b16 %v157
  %v491 = vunpack.c.h.b16 %v157
  %v492 = vunpack.c.l.b16 %v158
  %v493 = vunpack.c.h.b16 %v158
  %v494 = vunpack.c.l.b16 %v159
  %v495 = vunpack.c.h.b16 %v159
  %v496 = vunpack.c.l.b16 %v160
  %v497 = vunpack.c.h.b16 %v160
  %v498 = vunpack.c.l.b16 %v161
  %v499 = vunpack.c.h.b16 %v161
  %v500 = vunpack.c.l.b16 %v162
  %v501 = vunpack.c.h.b16 %v162
  %v502 = vunpack.c.l.b16 %v163
  %v503 = vunpack.c.h.b16 %v163
  %v504 = vunpack.c.l.b16 %v164
  %v505 = vunpack.c.h.b16 %v164
  %v506 = vunpack.c.l.b16 %v165
  %v507 = vunpack.c.h.b16 %v165
  %v508 = vunpack.c.l.b16 %v166
  %v509 = vunpack.c.h.b16 %v166
  %v510 = vunpack.c.l.b16 %v167
  %v511 = vunpack.c.h.b16 %v167
  %v512 = vunpack.c.l.b16 %v168
  %v513 = vunpack.c.h.b16 %v168
  %v514 = vunpack.c.l.b16 %v169
  %v515 = vunpack.c.h.b16 %v169
  %v516 = vunpack.c.l.b16 %v170
  %v517 = vunpack.c.h.b16 %v170
  %v518 = vunpack.c.l.b16 %v171
  %v519 = vunpack.c.h.b16 %v171
  %v520 = vunpack.c.l.b16 %v172
  %v521 = vunpack.c.h.b16 %v172
  %v522 = vunpack.c.l.b16 %v173
  %v523 = vunpack.c.h.b16 %v173
  %v524 = vunpack.c.l.b16 %v174
  %v525 = vunpack.c.h.b16 %v174
  %v526 = vunpack.c.l.b16 %v175
  %v527 = vunpack.c.h.b16 %v175
  %v528 = vunpack.c.l.b16 %v176
  %v529 = vunpack.c.h.b16 %v176
  %v530 = vunpack.c.l.b16 %v177
  %v531 = vunpack.c.h.b16 %v177
  %v532 = vunpack.c.l.b16 %v178
  %v533 = vunpack.c.h.b16 %v178
  %v534 = vunpack.c.l.b16 %v179
  %v535 = vunpack.c.h.b16 %v179
  %v536 = vunpack.c.l.b16 %v180
  %v537 = vunpack.c.h.b16 %v180
  %v538 = vunpack.c.l.b16 %v181
  %v539 = vunpack.c.h.b16 %v181
  %v540 = vunpack.c.l.b16 %v182
  %v541 = vunpack.c.h.b16 %v182
  %v542 = vunpack.c.l.b16 %v183
  %v543 = vunpack.c.h.b16 %v183
  %v544 = vunpack.c.l.b16 %v184
  %v545 = vunpack.c.h.b16 %v184
  %v546 = vunpack.c.l.b16 %v185
  %v547 = vunpack.c.h.b16 %v185
  %v548 = vunpack.c.l.b16 %v186
  %v549 = vunpack.c.h.b16 %v186
  %v550 = vunpack.c.l.b16 %v187
  %v551 = vunpack.c.h.b16 %v187
  %v552 = vunpack.c.l.b16 %v188
  %v553 = vunpack.c.h.b16 %v188
  %v554 = vunpack.c.l.b16 %v189
  %v555 = vunpack.c.h.b16 %v189
  %v556 = vunpack.c.l.b16 %v190
  %v557 = vunpack.c.h.b16 %v190
  %v558 = vunpack.c.l.b16 %v191
  %v559 = vunpack.c.h.b16 %v191
  %v560 = vunpack.c.l.b16 %v192
  %v561 = vunpack.c.h.b16 %v192
  %v562 = vunpack.c.l.b16 %v193
  %v563 = vunpack.c.h.b16 %v193
  %v564 = vunpack.c.l.b16 %v194
  %v565 = vunpack.c.h.b16 %v194
  %v566 = vunpack.c.l.b16 %v195
  %v567 = vunpack.c.h.b16 %v195
  %v568 = vunpack.c.l.b16 %v196
  %v569 = vunpack.c.h.b16 %v196
  %v570 = vunpack.c.l.b16 %v197
  %v571 = vunpack.c.h.b16 %v197
  %v572 = vunpack.c.l.b16 %v198
  %v573 = vunpack.c.h.b16 %v198
  %v574 = vunpack.c.l.b16 %v199
  %v575 = vunpack.c.h.b16 %v199
  %v576 = vunpack.c.l.b16 %v200
  %v577 = vunpack.c.h.b16 %v200
  %v578 = vunpack.c.l.b16 %v201
  %v579 = vunpack.c.h.b16 %v201
  %v580 = vunpack.c.l.b16 %v202
  %v581 = vunpack.c.h.b16 %v202
  %v582 = vunpack.c.l.b16 %v203
  %v583 = vunpack.c.h.b16 %v203
  %v584 = vunpack.c.l.b16 %v204
  %v585 = vunpack.c.h.b16 %v204
  %v586 = vunpack.c.l.b16 %v205
  %v587 = vunpack.c.h.b16 %v205
  %v588 = vunpack.c.l.b16 %v206
  %v589 = vunpack.c.h.b16 %v206
  %v590 = vunpack.c.l.b16 %v207
  %v591 = vunpack.c.h.b16 %v207
  %v592 = vunpack.c.l.b16 %v208
  %v593 = vunpack.c.h.b16 %v208
  %v594 = vunpack.c.l.b16 %v209
  %v595 = vunpack.c.h.b16 %v209
  %v596 = vunpack.c.l.b16 %v210
  %v597 = vunpack.c.h.b16 %v210
  %v598 = vunpack.c.l.b16 %v211
  %v599 = vunpack.c.h.b16 %v211
  %v600 = vunpack.c.l.b16 %v212
  %v601 = vunpack.c.h.b16 %v212
  %v602 = vunpack.c.l.b16 %v213
  %v603 = vunpack.c.h.b16 %v213
  %v604 = vunpack.c.l.b16 %v214
  %v605 = vunpack.c.h.b16 %v214
  %v606 = vunpack.c.l.b16 %v215
  %v607 = vunpack.c.h.b16 %v215
  %v608 = vunpack.c.l.b16 %v216
  %v609 = vunpack.c.h.b16 %v216
  %v610 = vunpack.c.l.b16 %v217
  %v611 = vunpack.c.h.b16 %v217
  %v612 = vunpack.c.l.b16 %v218
  %v613 = vunpack.c.h.b16 %v218
  %v614 = vunpack.c.l.b16 %v219
  %v615 = vunpack.c.h.b16 %v219
  %v616 = vunpack.c.l.b16 %v220
  %v617 = vunpack.c.h.b16 %v220
  %v618 = vunpack.c.l.b16 %v221
  %v619 = vunpack.c.h.b16 %v221
  %v620 = vunpack.c.l.b16 %v222
  %v621 = vunpack.c.h.b16 %v222
  %v622 = vunpack.c.l.b16 %v223
  %v623 = vunpack.c.h.b16 %v223
  %v624 = vunpack.c.l.b16 %v224
  %v625 = vunpack.c.h.b16 %v224
  %v626 = vunpack.c.l.b16 %v225
  %v627 = vunpack.c.h.b16 %v225
  %v628 = vunpack.c.l.b16 %v226
  %v629 = vunpack.c.h.b16 %v226
  %v630 = vunpack.c.l.b16 %v227
  %v631 = vunpack.c.h.b16 %v227
  %v632 = vunpack.c.l.b16 %v228
  %v633 = vunpack.c.h.b16 %v228
  %v634 = vunpack.c.l.b16 %v229
  %v635 = vunpack.c.h.b16 %v229
  %v636 = vunpack.c.l.b16 %v230
  %v637 = vunpack.c.h.b16 %v230
  %v638 = vunpack.c.l.b16 %v231
  %v639 = vunpack.c.h.b16 %v231
  %v640 = vunpack.c.l.b16 %v232
  %v641 = vunpack.c.h.b16 %v232
  %v642 = vunpack.c.l.b16 %v233
  %v643 = vunpack.c.h.b16 %v233
  %v644 = vunpack.c.l.b16 %v234
  %v645 = vunpack.c.h.b16 %v234
  %v646 = vunpack.c.l.b16 %v235
  %v647 = vunpack.c.h.b16 %v235
  %v648 = vunpack.c.l.b16 %v236
  %v649 = vunpack.c.h.b16 %v236
  %v650 = vunpack.c.l.b16 %v237
  %v651 = vunpack.c.h.b16 %v237
  %v652 = vunpack.c.l.b16 %v238
  %v653 = vunpack.c.h.b16 %v238
  %v654 = vunpack.c.l.b16 %v239
  %v655 = vunpack.c.h.b16 %v239
  %v656 = vunpack.c.l.b16 %v240
  %v657 = vunpack.c.h.b16 %v240
  %v658 = vunpack.c.l.b16 %v241
  %v659 = vunpack.c.h.b16 %v241
  %v660 = vunpack.c.l.b16 %v242
  %v661 = vunpack.c.h.b16 %v242
  %v662 = vunpack.c.l.b16 %v243
  %v663 = vunpack.c.h.b16 %v243
  %v664 = vunpack.c.l.b16 %v244
  %v665 = vunpack.c.h.b16 %v244
  %v666 = vunpack.c.l.b16 %v245
  %v667 = vunpack.c.h.b16 %v245
  %v668 = vunpack.c.l.b16 %v246
  %v669 = vunpack.c.h.b16 %v246
  %v670 = vunpack.c.l.b16 %v247
  %v671 = vunpack.c.h.b16 %v247
  %v672 = vunpack.c.l.b16 %v248
  %v673 = vunpack.c.h.b16 %v248
  %v674 = vunpack.c.l.b16 %v249
  %v675 = vunpack.c.h.b16 %v249
  %v676 = vunpack.c.l.b16 %v250
  %v677 = vunpack.c.h.b16 %v250
  %v678 = vunpack.c.l.b16 %v251
  %v679 = vunpack.c.h.b16 %v251
  %v680 = vunpack.c.l.b16 %v252
  %v681 = vunpack.c.h.b16 %v252
  %v682 = vunpack.c.l.b16 %v253
  %v683 = vunpack.c.h.b16 %v253
  %v684 = vunpack.c.l.b16 %v254
  %v685 = vunpack.c.h.b16 %v254
  %v686 = vunpack.c.l.b16 %v255
  %v687 = vunpack.c.h.b16 %v255
  %v688 = vunpack.c.l.b16 %v256
  %v689 = vunpack.c.h.b16 %v256
  %v690 = vunpack.c.l.b16 %v257
  %v691 = vunpack.c.h.b16 %v257
  %v692 = vunpack.c.l.b16 %v258
  %v693 = vunpack.c.h.b16 %v258
  %v694 = vunpack.c.l.b16 %v259
  %v695 = vunpack.c.h.b16 %v259
  %v696 = vunpack.c.l.b16 %v260
  %v697 = vunpack.c.h.b16 %v260
  %v698 = vunpack.c.l.b16 %v261
  %v699 = vunpack.c.h.b16 %v261
  %v700 = vunpack.c.l.b16 %v262
  %v701 = vunpack.c.h.b16 %v262
  %v702 = vunpack.c.l.b16 %v263
  %v703 = vunpack.c.h.b16 %v263
  %v704 = vunpack.c.l.b16 %v264
  %v705 = vunpack.c.h.b16 %v264
  %v706 = vunpack.c.l.b16 %v265
  %v707 = vunpack.c.h.b16 %v265
  %v708 = vunpack.c.l.b16 %v266
  %v709 = vunpack.c.h.b16 %v266
  %v710 = vunpack.c.l.b16 %v267
  %v711 = vunpack.c.h.b16 %v267
  %v712 = vunpack.c.l.b16 %v268
  %v713 = vunpack.c.h.b16 %v268
  %v714 = vunpack.c.l.b16 %v269
  %v715 = vunpack.c.h.b16 %v269
  %v716 = vunpack.c.l.b16 %v270
  %v717 = vunpack.c.h.b16 %v270
  %v718 = vunpack.c.l.b16 %v271
  %v719 = vunpack.c.h.b16 %v271
  %v720 = vpack.c.b16 %v468, %v464
  %v721 = vpack.c.b16 %v469, %v465
  %v722 = vpack.c.b16 %v470, %v466
  %v723 = vpack.c.b16 %v471, %v467
  %v724 = vpack.c.b16 %v476, %v472
  %v725 = vpack.c.b16 %v477, %v473
  %v726 = vpack.c.b16 %v478, %v474
  %v727 = vpack.c.b16 %v479, %v475
  %v728 = vpack.c.b16 %v484, %v480
  %v729 = vpack.c.b16 %v485, %v481
  %v730 = vpack.c.b16 %v486, %v482
  %v731 = vpack.c.b16 %v487, %v483
  %v732 = vpack.c.b16 %v492, %v488
  %v733 = vpack.c.b16 %v493, %v489
  %v734 = vpack.c.b16 %v494, %v490
  %v735 = vpack.c.b16 %v495, %v491
  %v736 = vpack.c.b16 %v500, %v496
  %v737 = vpack.c.b16 %v501, %v497
  %v738 = vpack.c.b16 %v502, %v498
  %v739 = vpack.c.b16 %v503, %v499
  %v740 = vpack.c.b16 %v508, %v504
  %v741 = vpack.c.b16 %v509, %v505
  %v742 = vpack.c.b16 %v510, %v506
  %v743 = vpack.c.b16 %v511, %v507
  %v744 = vpack.c.b16 %v516, %v512
  %v745 = vpack.c.b16 %v517, %v513
  %v746 = vpack.c.b16 %v518, %v514
  %v747 = vpack.c.b16 %v519, %v515
  %v748 = vpack.c.b16 %v524, %v520
  %v749 = vpack.c.b16 %v525, %v521
  %v750 = vpack.c.b16 %v526, %v522
  %v751 = vpack.c.b16 %v527, %v523
  %v752 = vpack.c.b16 %v532, %v528
  %v753 = vpack.c.b16 %v533, %v529
  %v754 = vpack.c.b16 %v534, %v530
  %v755 = vpack.c.b16 %v535, %v531
  %v756 = vpack.c.b16 %v540, %v536
  %v757 = vpack.c.b16 %v541, %v537
  %v758 = vpack.c.b16 %v542, %v538
  %v759 = vpack.c.b16 %v543, %v539
  %v760 = vpack.c.b16 %v548, %v544
  %v761 = vpack.c.b16 %v549, %v545
  %v762 = vpack.c.b16 %v550, %v546
  %v763 = vpack.c.b16 %v551, %v547
  %v764 = vpack.c.b16 %v556, %v552
  %v765 = vpack.c.b16 %v557, %v553
  %v766 = vpack.c.b16 %v558, %v554
  %v767 = vpack.c.b16 %v559, %v555
  %v768 = vpack.c.b16 %v564, %v560
  %v769 = vpack.c.b16 %v565, %v561
  %v770 = vpack.c.b16 %v566, %v562
  %v771 = vpack.c.b16 %v567, %v563
  %v772 = vpack.c.b16 %v572, %v568
  %v773 = vpack.c.b16 %v573, %v569
  %v774 = vpack.c.b16 %v574, %v570
  %v775 = vpack.c.b16 %v575, %v571
  %v776 = vpack.c.b16 %v580, %v576
  %v777 = vpack.c.b16 %v581, %v577
  %v778 = vpack.c.b16 %v582, %v578
  %v779 = vpack.c.b16 %v583, %v579
  %v780 = vpack.c.b16 %v588, %v584
  %v781 = vpack.c.b16 %v589, %v585
  %v782 = vpack.c.b16 %v590, %v586
  %v783 = vpack.c.b16 %v591, %v587
  %v784 = vpack.c.b16 %v596, %v592
  %v785 = vpack.c.b16 %v597, %v593
  %v786 = vpack.c.b16 %v598, %v594
  %v787 = vpack.c.b16 %v599, %v595
  %v788 = vpack.c.b16 %v604, %v600
  %v789 = vpack.c.b16 %v605, %v601
  %v790 = vpack.c.b16 %v606, %v602
  %v791 = vpack.c.b16 %v607, %v603
  %v792 = vpack.c.b16 %v612, %v608
  %v793 = vpack.c.b16 %v613, %v609
  %v794 = vpack.c.b16 %v614, %v610
  %v795 = vpack.c.b16 %v615, %v611
  %v796 = vpack.c.b16 %v620, %v616
  %v797 = vpack.c.b16 %v621, %v617
  %v798 = vpack.c.b16 %v622, %v618
  %v799 = vpack.c.b16 %v623, %v619
  %v800 = vpack.c.b16 %v628, %v624
  %v801 = vpack.c.b16 %v629, %v625
  %v802 = vpack.c.b16 %v630, %v626
  %v803 = vpack.c.b16 %v631, %v627
  %v804 = vpack.c.b16 %v636, %v632
  %v805 = vpack.c.b16 %v637, %v633
  %v806 = vpack.c.b16 %v638, %v634
  %v807 = vpack.c.b16 %v639, %v635
  %v808 = vpack.c.b16 %v644, %v640
  %v809 = vpack.c.b16 %v645, %v641
  %v810 = vpack.c.b16 %v646, %v642
  %v811 = vpack.c.b16 %v647, %v643
  %v812 = vpack.c.b16 %v652, %v648
  %v813 = vpack.c.b16 %v653, %v649
  %v814 = vpack.c.b16 %v654, %v650
  %v815 = vpack.c.b16 %v655, %v651
  %v816 = vpack.c.b16 %v660, %v656
  %v817 = vpack.c.b16 %v661, %v657
  %v818 = vpack.c.b16 %v662, %v658
  %v819 = vpack.c.b16 %v663, %v659
  %v820 = vpack.c.b16 %v668, %v664
  %v821 = vpack.c.b16 %v669, %v665
  %v822 = vpack.c.b16 %v670, %v666
  %v823 = vpack.c.b16 %v671, %v667
  %v824 = vpack.c.b16 %v676, %v672
  %v825 = vpack.c.b16 %v677, %v673
  %v826 = vpack.c.b16 %v678, %v674
  %v827 = vpack.c.b16 %v679, %v675
  %v828 = vpack.c.b16 %v684, %v680
  %v829 = vpack.c.b16 %v685, %v681
  %v830 = vpack.c.b16 %v686, %v682
  %v831 = vpack.c.b16 %v687, %v683
  %v832 = vpack.c.b16 %v692, %v688
  %v833 = vpack.c.b16 %v693, %v689
  %v834 = vpack.c.b16 %v694, %v690
  %v835 = vpack.c.b16 %v695, %v691
  %v836 = vpack.c.b16 %v700, %v696
  %v837 = vpack.c.b16 %v701, %v697
  %v838 = vpack.c.b16 %v702, %v698
  %v839 = vpack.c.b16 %v703, %v699
  %v840 = vpack.c.b16 %v708, %v704
  %v841 = vpack.c.b16 %v709, %v705
  %v842 = vpack.c.b16 %v710, %v706
  %v843 = vpack.c.b16 %v711, %v707
  %v844 = vpack.c.b16 %v716, %v712
  %v845 = vpack.c.b16 %v717, %v713
  %v846 = vpack.c.b16 %v718, %v714
  %v847 = vpack.c.b16 %v719, %v715
  %v1040 = vunpack.c.l.b16 %v272
  %v1041 = vunpack.c.l.b16 %v273
  %v1042 = vunpack.c.l.b16 %v274
  %v1043 = vunpack.c.l.b16 %v275
  %v1044 = vunpack.c.l.b16 %v276
  %v1045 = vunpack.c.l.b16 %v277
  %v1046 = vunpack.c.l.b16 %v278
  %v1047 = vunpack.c.l.b16 %v279
  %v1048 = vunpack.c.l.b16 %v280
  %v1049 = vunpack.c.l.b16 %v281
  %v1050 = vunpack.c.l.b16 %v282
  %v1051 = vunpack.c.l.b16 %v283
  %v1052 = vunpack.c.l.b16 %v284
  %v1053 = vunpack.c.l.b16 %v285
  %v1054 = vunpack.c.l.b16 %v286
  %v1055 = vunpack.c.l.b16 %v287
  %v1056 = vunpack.c.l.b16 %v288
  %v1057 = vunpack.c.l.b16 %v289
  %v1058 = vunpack.c.l.b16 %v290
  %v1059 = vunpack.c.l.b16 %v291
  %v1060 = vunpack.c.l.b16 %v292
  %v1061 = vunpack.c.l.b16 %v293
  %v1062 = vunpack.c.l.b16 %v294
  %v1063 = vunpack.c.l.b16 %v295
  %v1064 = vunpack.c.l.b16 %v296
  %v1065 = vunpack.c.l.b16 %v297
  %v1066 = vunpack.c.l.b16 %v298
  %v1067 = vunpack.c.l.b16 %v299
  %v1068 = vunpack.c.l.b16 %v300
  %v1069 = vunpack.c.l.b16 %v301
  %v1070 = vunpack.c.l.b16 %v302
  %v1071 = vunpack.c.l.b16 %v303
  %v1072 = vunpack.c.l.b16 %v304
  %v1073 = vunpack.c.l.b16 %v305
  %v1074 = vunpack.c.l.b16 %v306
  %v1075 = vunpack.c.l.b16 %v307
  %v1076 = vunpack.c.l.b16 %v308
  %v1077 = vunpack.c.l.b16 %v309
  %v1078 = vunpack.c.l.b16 %v310
  %v1079 = vunpack.c.l.b16 %v311
  %v1080 = vunpack.c.l.b16 %v312
  %v1081 = vunpack.c.l.b16 %v313
  %v1082 = vunpack.c.l.b16 %v314
  %v1083 = vunpack.c.l.b16 %v315
  %v1084 = vunpack.c.l.b16 %v316
  %v1085 = vunpack.c.l.b16 %v317
  %v1086 = vunpack.c.l.b16 %v318
  %v1087 = vunpack.c.l.b16 %v319
  %v1088 = vunpack.c.l.b16 %v320
  %v1089 = vunpack.c.l.b16 %v321
  %v1090 = vunpack.c.l.b16 %v322
  %v1091 = vunpack.c.l.b16 %v323
  %v1092 = vunpack.c.l.b16 %v324
  %v1093 = vunpack.c.l.b16 %v325
  %v1094 = vunpack.c.l.b16 %v326
  %v1095 = vunpack.c.l.b16 %v327
  %v1096 = vunpack.c.l.b16 %v328
  %v1097 = vunpack.c.l.b16 %v329
  %v1098 = vunpack.c.l.b16 %v330
  %v1099 = vunpack.c.l.b16 %v331
  %v1100 = vunpack.c.l.b16 %v332
  %v1101 = vunpack.c.l.b16 %v333
  %v1102 = vunpack.c.l.b16 %v334
  %v1103 = vunpack.c.l.b16 %v335
  %v1104 = vpack.c.b16 %v1041, %v1040
  %v1105 = vpack.c.b16 %v1043, %v1042
  %v1106 = vpack.c.b16 %v1045, %v1044
  %v1107 = vpack.c.b16 %v1047, %v1046
  %v1108 = vpack.c.b16 %v1049, %v1048
  %v1109 = vpack.c.b16 %v1051, %v1050
  %v1110 = vpack.c.b16 %v1053, %v1052
  %v1111 = vpack.c.b16 %v1055, %v1054
  %v1112 = vpack.c.b16 %v1057, %v1056
  %v1113 = vpack.c.b16 %v1059, %v1058
  %v1114 = vpack.c.b16 %v1061, %v1060
  %v1115 = vpack.c.b16 %v1063, %v1062
  %v1116 = vpack.c.b16 %v1065, %v1064
  %v1117 = vpack.c.b16 %v1067, %v1066
  %v1118 = vpack.c.b16 %v1069, %v1068
  %v1119 = vpack.c.b16 %v1071, %v1070
  %v1120 = vpack.c.b16 %v1073, %v1072
  %v1121 = vpack.c.b16 %v1075, %v1074
  %v1122 = vpack.c.b16 %v1077, %v1076
  %v1123 = vpack.c.b16 %v1079, %v1078
  %v1124 = vpack.c.b16 %v1081, %v1080
  %v1125 = vpack.c.b16 %v1083, %v1082
  %v1126 = vpack.c.b16 %v1085, %v1084
  %v1127 = vpack.c.b16 %v1087, %v1086
  %v1128 = vpack.c.b16 %v1089, %v1088
  %v1129 = vpack.c.b16 %v1091, %v1090
  %v1130 = vpack.c.b16 %v1093, %v1092
  %v1131 = vpack.c.b16 %v1095, %v1094
  %v1132 = vpack.c.b16 %v1097, %v1096
  %v1133 = vpack.c.b16 %v1099, %v1098
  %v1134 = vpack.c.b16 %v1101, %v1100
  %v1135 = vpack.c.b16 %v1103, %v1102
  %1168 = vmatprep.subr.bf16.mxu0 0
  %1169 = vmatpush1.bf16.msra.mxu0 %v1104
  %1170 = vmatprep.subr.bf16.mxu0 0
  %1171 = vmatpush1.bf16.msra.mxu0 %v1105
  %1172 = vmatprep.subr.bf16.mxu0 0
  %1173 = vmatpush1.bf16.msra.mxu0 %v1106
  %1174 = vmatprep.subr.bf16.mxu0 0
  %1175 = vmatpush1.bf16.msra.mxu0 %v1107
  %1176 = vmatprep.subr.bf16.mxu0 0
  %1177 = vmatpush1.bf16.msra.mxu0 %v1108
  %1178 = vmatprep.subr.bf16.mxu0 0
  %1179 = vmatpush1.bf16.msra.mxu0 %v1109
  %1180 = vmatprep.subr.bf16.mxu0 0
  %1181 = vmatpush1.bf16.msra.mxu0 %v1110
  %1182 = vmatprep.subr.bf16.mxu0 0
  %1183 = vmatpush1.bf16.msra.mxu0 %v1111
  %1184 = vmatprep.subr.bf16.mxu0 0
  %1185 = vmatpush1.bf16.msra.mxu0 %v1112
  %1186 = vmatprep.subr.bf16.mxu0 0
  %1187 = vmatpush1.bf16.msra.mxu0 %v1113
  %1188 = vmatprep.subr.bf16.mxu0 0
  %1189 = vmatpush1.bf16.msra.mxu0 %v1114
  %1190 = vmatprep.subr.bf16.mxu0 0
  %1191 = vmatpush1.bf16.msra.mxu0 %v1115
  %1192 = vmatprep.subr.bf16.mxu0 0
  %1193 = vmatpush1.bf16.msra.mxu0 %v1116
  %1194 = vmatprep.subr.bf16.mxu0 0
  %1195 = vmatpush1.bf16.msra.mxu0 %v1117
  %1196 = vmatprep.subr.bf16.mxu0 0
  %1197 = vmatpush1.bf16.msra.mxu0 %v1118
  %1198 = vmatprep.subr.bf16.mxu0 0
  %1199 = vmatpush1.bf16.msra.mxu0 %v1119
  %1200 = vmatprep.mubr.bf16.mxu0 %v721
  %1201 = vmatmul.mubr.bf16.gmra.mrb[0].mxu0 %v720
  %v1202 = vpop.f32.mrb[0].mxu0
  %v1203 = vadd.f32 0.0, %v1202
  %v1204 = vpop.f32.mrb[0].mxu0
  %v1205 = vpop.f32.mrb[0].mxu0
  %v1206 = vadd.f32 0.0, %v1205
  %v1207 = vpop.f32.mrb[0].mxu0
  %1208 = vmatprep.mubr.bf16.mxu0 %v725
  %1209 = vmatmul.mubr.bf16.gmra.mrb[0].mxu0 %v724
  %v1210 = vpop.f32.mrb[0].mxu0
  %v1211 = vadd.f32 0.0, %v1210
  %v1212 = vpop.f32.mrb[0].mxu0
  %v1213 = vpop.f32.mrb[0].mxu0
  %v1214 = vadd.f32 0.0, %v1213
  %v1215 = vpop.f32.mrb[0].mxu0
  %1216 = vmatprep.mubr.bf16.mxu0 %v729
  %1217 = vmatmul.mubr.bf16.gmra.mrb[0].mxu0 %v728
  %v1218 = vpop.f32.mrb[0].mxu0
  %v1219 = vadd.f32 0.0, %v1218
  %v1220 = vpop.f32.mrb[0].mxu0
  %v1221 = vpop.f32.mrb[0].mxu0
  %v1222 = vadd.f32 0.0, %v1221
  %v1223 = vpop.f32.mrb[0].mxu0
  %1224 = vmatprep.mubr.bf16.mxu0 %v733
  %1225 = vmatmul.mubr.bf16.gmra.mrb[0].mxu0 %v732
  %v1226 = vpop.f32.mrb[0].mxu0
  %v1227 = vadd.f32 0.0, %v1226
  %v1228 = vpop.f32.mrb[0].mxu0
  %v1229 = vpop.f32.mrb[0].mxu0
  %v1230 = vadd.f32 0.0, %v1229
  %v1231 = vpop.f32.mrb[0].mxu0
  %1232 = vmatprep.mubr.bf16.mxu0 %v737
  %1233 = vmatmul.mubr.bf16.gmra.mrb[0].mxu0 %v736
  %v1234 = vpop.f32.mrb[0].mxu0
  %v1235 = vadd.f32 0.0, %v1234
  %v1236 = vpop.f32.mrb[0].mxu0
  %v1237 = vpop.f32.mrb[0].mxu0
  %v1238 = vadd.f32 0.0, %v1237
  %v1239 = vpop.f32.mrb[0].mxu0
  %1240 = vmatprep.mubr.bf16.mxu0 %v741
  %1241 = vmatmul.mubr.bf16.gmra.mrb[0].mxu0 %v740
  %v1242 = vpop.f32.mrb[0].mxu0
  %v1243 = vadd.f32 0.0, %v1242
  %v1244 = vpop.f32.mrb[0].mxu0
  %v1245 = vpop.f32.mrb[0].mxu0
  %v1246 = vadd.f32 0.0, %v1245
  %v1247 = vpop.f32.mrb[0].mxu0
  %1248 = vmatprep.mubr.bf16.mxu0 %v745
  %1249 = vmatmul.mubr.bf16.gmra.mrb[0].mxu0 %v744
  %v1250 = vpop.f32.mrb[0].mxu0
  %v1251 = vadd.f32 0.0, %v1250
  %v1252 = vpop.f32.mrb[0].mxu0
  %v1253 = vpop.f32.mrb[0].mxu0
  %v1254 = vadd.f32 0.0, %v1253
  %v1255 = vpop.f32.mrb[0].mxu0
  %1256 = vmatprep.mubr.bf16.mxu0 %v749
  %1257 = vmatmul.mubr.bf16.gmra.mrb[0].mxu0 %v748
  %v1258 = vpop.f32.mrb[0].mxu0
  %v1259 = vadd.f32 0.0, %v1258
  %v1260 = vpop.f32.mrb[0].mxu0
  %v1261 = vpop.f32.mrb[0].mxu0
  %v1262 = vadd.f32 0.0, %v1261
  %v1263 = vpop.f32.mrb[0].mxu0
  %1264 = vmatprep.mubr.bf16.mxu0 %v753
  %1265 = vmatmul.mubr.bf16.gmra.mrb[0].mxu0 %v752
  %v1266 = vpop.f32.mrb[0].mxu0
  %v1267 = vadd.f32 0.0, %v1266
  %v1268 = vpop.f32.mrb[0].mxu0
  %v1269 = vpop.f32.mrb[0].mxu0
  %v1270 = vadd.f32 0.0, %v1269
  %v1271 = vpop.f32.mrb[0].mxu0
  %1272 = vmatprep.mubr.bf16.mxu0 %v757
  %1273 = vmatmul.mubr.bf16.gmra.mrb[0].mxu0 %v756
  %v1274 = vpop.f32.mrb[0].mxu0
  %v1275 = vadd.f32 0.0, %v1274
  %v1276 = vpop.f32.mrb[0].mxu0
  %v1277 = vpop.f32.mrb[0].mxu0
  %v1278 = vadd.f32 0.0, %v1277
  %v1279 = vpop.f32.mrb[0].mxu0
  %1280 = vmatprep.mubr.bf16.mxu0 %v761
  %1281 = vmatmul.mubr.bf16.gmra.mrb[0].mxu0 %v760
  %v1282 = vpop.f32.mrb[0].mxu0
  %v1283 = vadd.f32 0.0, %v1282
  %v1284 = vpop.f32.mrb[0].mxu0
  %v1285 = vpop.f32.mrb[0].mxu0
  %v1286 = vadd.f32 0.0, %v1285
  %v1287 = vpop.f32.mrb[0].mxu0
  %1288 = vmatprep.mubr.bf16.mxu0 %v765
  %1289 = vmatmul.mubr.bf16.gmra.mrb[0].mxu0 %v764
  %v1290 = vpop.f32.mrb[0].mxu0
  %v1291 = vadd.f32 0.0, %v1290
  %v1292 = vpop.f32.mrb[0].mxu0
  %v1293 = vpop.f32.mrb[0].mxu0
  %v1294 = vadd.f32 0.0, %v1293
  %v1295 = vpop.f32.mrb[0].mxu0
  %1296 = vmatprep.mubr.bf16.mxu0 %v769
  %1297 = vmatmul.mubr.bf16.gmra.mrb[0].mxu0 %v768
  %v1298 = vpop.f32.mrb[0].mxu0
  %v1299 = vadd.f32 0.0, %v1298
  %v1300 = vpop.f32.mrb[0].mxu0
  %v1301 = vpop.f32.mrb[0].mxu0
  %v1302 = vadd.f32 0.0, %v1301
  %v1303 = vpop.f32.mrb[0].mxu0
  %1304 = vmatprep.mubr.bf16.mxu0 %v773
  %1305 = vmatmul.mubr.bf16.gmra.mrb[0].mxu0 %v772
  %v1306 = vpop.f32.mrb[0].mxu0
  %v1307 = vadd.f32 0.0, %v1306
  %v1308 = vpop.f32.mrb[0].mxu0
  %v1309 = vpop.f32.mrb[0].mxu0
  %v1310 = vadd.f32 0.0, %v1309
  %v1311 = vpop.f32.mrb[0].mxu0
  %1312 = vmatprep.mubr.bf16.mxu0 %v777
  %1313 = vmatmul.mubr.bf16.gmra.mrb[0].mxu0 %v776
  %v1314 = vpop.f32.mrb[0].mxu0
  %v1315 = vadd.f32 0.0, %v1314
  %v1316 = vpop.f32.mrb[0].mxu0
  %v1317 = vpop.f32.mrb[0].mxu0
  %v1318 = vadd.f32 0.0, %v1317
  %v1319 = vpop.f32.mrb[0].mxu0
  %1320 = vmatprep.mubr.bf16.mxu0 %v781
  %1321 = vmatmul.mubr.bf16.gmra.mrb[0].mxu0 %v780
  %v1322 = vpop.f32.mrb[0].mxu0
  %v1323 = vadd.f32 0.0, %v1322
  %v1324 = vpop.f32.mrb[0].mxu0
  %v1325 = vpop.f32.mrb[0].mxu0
  %v1326 = vadd.f32 0.0, %v1325
  %v1327 = vpop.f32.mrb[0].mxu0
  %1328 = vmatprep.mubr.bf16.mxu0 %v785
  %1329 = vmatmul.mubr.bf16.gmra.mrb[0].mxu0 %v784
  %v1330 = vpop.f32.mrb[0].mxu0
  %v1331 = vadd.f32 0.0, %v1330
  %v1332 = vpop.f32.mrb[0].mxu0
  %v1333 = vpop.f32.mrb[0].mxu0
  %v1334 = vadd.f32 0.0, %v1333
  %v1335 = vpop.f32.mrb[0].mxu0
  %1336 = vmatprep.mubr.bf16.mxu0 %v789
  %1337 = vmatmul.mubr.bf16.gmra.mrb[0].mxu0 %v788
  %v1338 = vpop.f32.mrb[0].mxu0
  %v1339 = vadd.f32 0.0, %v1338
  %v1340 = vpop.f32.mrb[0].mxu0
  %v1341 = vpop.f32.mrb[0].mxu0
  %v1342 = vadd.f32 0.0, %v1341
  %v1343 = vpop.f32.mrb[0].mxu0
  %1344 = vmatprep.mubr.bf16.mxu0 %v793
  %1345 = vmatmul.mubr.bf16.gmra.mrb[0].mxu0 %v792
  %v1346 = vpop.f32.mrb[0].mxu0
  %v1347 = vadd.f32 0.0, %v1346
  %v1348 = vpop.f32.mrb[0].mxu0
  %v1349 = vpop.f32.mrb[0].mxu0
  %v1350 = vadd.f32 0.0, %v1349
  %v1351 = vpop.f32.mrb[0].mxu0
  %1352 = vmatprep.mubr.bf16.mxu0 %v797
  %1353 = vmatmul.mubr.bf16.gmra.mrb[0].mxu0 %v796
  %v1354 = vpop.f32.mrb[0].mxu0
  %v1355 = vadd.f32 0.0, %v1354
  %v1356 = vpop.f32.mrb[0].mxu0
  %v1357 = vpop.f32.mrb[0].mxu0
  %v1358 = vadd.f32 0.0, %v1357
  %v1359 = vpop.f32.mrb[0].mxu0
  %1360 = vmatprep.mubr.bf16.mxu0 %v801
  %1361 = vmatmul.mubr.bf16.gmra.mrb[0].mxu0 %v800
  %v1362 = vpop.f32.mrb[0].mxu0
  %v1363 = vadd.f32 0.0, %v1362
  %v1364 = vpop.f32.mrb[0].mxu0
  %v1365 = vpop.f32.mrb[0].mxu0
  %v1366 = vadd.f32 0.0, %v1365
  %v1367 = vpop.f32.mrb[0].mxu0
  %1368 = vmatprep.mubr.bf16.mxu0 %v805
  %1369 = vmatmul.mubr.bf16.gmra.mrb[0].mxu0 %v804
  %v1370 = vpop.f32.mrb[0].mxu0
  %v1371 = vadd.f32 0.0, %v1370
  %v1372 = vpop.f32.mrb[0].mxu0
  %v1373 = vpop.f32.mrb[0].mxu0
  %v1374 = vadd.f32 0.0, %v1373
  %v1375 = vpop.f32.mrb[0].mxu0
  %1376 = vmatprep.mubr.bf16.mxu0 %v809
  %1377 = vmatmul.mubr.bf16.gmra.mrb[0].mxu0 %v808
  %v1378 = vpop.f32.mrb[0].mxu0
  %v1379 = vadd.f32 0.0, %v1378
  %v1380 = vpop.f32.mrb[0].mxu0
  %v1381 = vpop.f32.mrb[0].mxu0
  %v1382 = vadd.f32 0.0, %v1381
  %v1383 = vpop.f32.mrb[0].mxu0
  %1384 = vmatprep.mubr.bf16.mxu0 %v813
  %1385 = vmatmul.mubr.bf16.gmra.mrb[0].mxu0 %v812
  %v1386 = vpop.f32.mrb[0].mxu0
  %v1387 = vadd.f32 0.0, %v1386
  %v1388 = vpop.f32.mrb[0].mxu0
  %v1389 = vpop.f32.mrb[0].mxu0
  %v1390 = vadd.f32 0.0, %v1389
  %v1391 = vpop.f32.mrb[0].mxu0
  %1392 = vmatprep.mubr.bf16.mxu0 %v817
  %1393 = vmatmul.mubr.bf16.gmra.mrb[0].mxu0 %v816
  %v1394 = vpop.f32.mrb[0].mxu0
  %v1395 = vadd.f32 0.0, %v1394
  %v1396 = vpop.f32.mrb[0].mxu0
  %v1397 = vpop.f32.mrb[0].mxu0
  %v1398 = vadd.f32 0.0, %v1397
  %v1399 = vpop.f32.mrb[0].mxu0
  %1400 = vmatprep.mubr.bf16.mxu0 %v821
  %1401 = vmatmul.mubr.bf16.gmra.mrb[0].mxu0 %v820
  %v1402 = vpop.f32.mrb[0].mxu0
  %v1403 = vadd.f32 0.0, %v1402
  %v1404 = vpop.f32.mrb[0].mxu0
  %v1405 = vpop.f32.mrb[0].mxu0
  %v1406 = vadd.f32 0.0, %v1405
  %v1407 = vpop.f32.mrb[0].mxu0
  %1408 = vmatprep.mubr.bf16.mxu0 %v825
  %1409 = vmatmul.mubr.bf16.gmra.mrb[0].mxu0 %v824
  %v1410 = vpop.f32.mrb[0].mxu0
  %v1411 = vadd.f32 0.0, %v1410
  %v1412 = vpop.f32.mrb[0].mxu0
  %v1413 = vpop.f32.mrb[0].mxu0
  %v1414 = vadd.f32 0.0, %v1413
  %v1415 = vpop.f32.mrb[0].mxu0
  %1416 = vmatprep.mubr.bf16.mxu0 %v829
  %1417 = vmatmul.mubr.bf16.gmra.mrb[0].mxu0 %v828
  %v1418 = vpop.f32.mrb[0].mxu0
  %v1419 = vadd.f32 0.0, %v1418
  %v1420 = vpop.f32.mrb[0].mxu0
  %v1421 = vpop.f32.mrb[0].mxu0
  %v1422 = vadd.f32 0.0, %v1421
  %v1423 = vpop.f32.mrb[0].mxu0
  %1424 = vmatprep.mubr.bf16.mxu0 %v833
  %1425 = vmatmul.mubr.bf16.gmra.mrb[0].mxu0 %v832
  %v1426 = vpop.f32.mrb[0].mxu0
  %v1427 = vadd.f32 0.0, %v1426
  %v1428 = vpop.f32.mrb[0].mxu0
  %v1429 = vpop.f32.mrb[0].mxu0
  %v1430 = vadd.f32 0.0, %v1429
  %v1431 = vpop.f32.mrb[0].mxu0
  %1432 = vmatprep.mubr.bf16.mxu0 %v837
  %1433 = vmatmul.mubr.bf16.gmra.mrb[0].mxu0 %v836
  %v1434 = vpop.f32.mrb[0].mxu0
  %v1435 = vadd.f32 0.0, %v1434
  %v1436 = vpop.f32.mrb[0].mxu0
  %v1437 = vpop.f32.mrb[0].mxu0
  %v1438 = vadd.f32 0.0, %v1437
  %v1439 = vpop.f32.mrb[0].mxu0
  %1440 = vmatprep.mubr.bf16.mxu0 %v841
  %1441 = vmatmul.mubr.bf16.gmra.mrb[0].mxu0 %v840
  %v1442 = vpop.f32.mrb[0].mxu0
  %v1443 = vadd.f32 0.0, %v1442
  %v1444 = vpop.f32.mrb[0].mxu0
  %v1445 = vpop.f32.mrb[0].mxu0
  %v1446 = vadd.f32 0.0, %v1445
  %v1447 = vpop.f32.mrb[0].mxu0
  %1448 = vmatprep.mubr.bf16.mxu0 %v845
  %1449 = vmatmul.mubr.bf16.gmra.mrb[0].mxu0 %v844
  %v1450 = vpop.f32.mrb[0].mxu0
  %v1451 = vadd.f32 0.0, %v1450
  %v1452 = vpop.f32.mrb[0].mxu0
  %v1453 = vpop.f32.mrb[0].mxu0
  %v1454 = vadd.f32 0.0, %v1453
  %v1455 = vpop.f32.mrb[0].mxu0
  %1456 = vdwg.mxu0
  %1457 = vmatprep.subr.bf16.mxu0 0
  %1458 = vmatpush1.bf16.msra.mxu0 %v1120
  %1459 = vmatprep.subr.bf16.mxu0 0
  %1460 = vmatpush1.bf16.msra.mxu0 %v1121
  %1461 = vmatprep.subr.bf16.mxu0 0
  %1462 = vmatpush1.bf16.msra.mxu0 %v1122
  %1463 = vmatprep.subr.bf16.mxu0 0
  %1464 = vmatpush1.bf16.msra.mxu0 %v1123
  %1465 = vmatprep.subr.bf16.mxu0 0
  %1466 = vmatpush1.bf16.msra.mxu0 %v1124
  %1467 = vmatprep.subr.bf16.mxu0 0
  %1468 = vmatpush1.bf16.msra.mxu0 %v1125
  %1469 = vmatprep.subr.bf16.mxu0 0
  %1470 = vmatpush1.bf16.msra.mxu0 %v1126
  %1471 = vmatprep.subr.bf16.mxu0 0
  %1472 = vmatpush1.bf16.msra.mxu0 %v1127
  %1473 = vmatprep.subr.bf16.mxu0 0
  %1474 = vmatpush1.bf16.msra.mxu0 %v1128
  %1475 = vmatprep.subr.bf16.mxu0 0
  %1476 = vmatpush1.bf16.msra.mxu0 %v1129
  %1477 = vmatprep.subr.bf16.mxu0 0
  %1478 = vmatpush1.bf16.msra.mxu0 %v1130
  %1479 = vmatprep.subr.bf16.mxu0 0
  %1480 = vmatpush1.bf16.msra.mxu0 %v1131
  %1481 = vmatprep.subr.bf16.mxu0 0
  %1482 = vmatpush1.bf16.msra.mxu0 %v1132
  %1483 = vmatprep.subr.bf16.mxu0 0
  %1484 = vmatpush1.bf16.msra.mxu0 %v1133
  %1485 = vmatprep.subr.bf16.mxu0 0
  %1486 = vmatpush1.bf16.msra.mxu0 %v1134
  %1487 = vmatprep.subr.bf16.mxu0 0
  %1488 = vmatpush1.bf16.msra.mxu0 %v1135
  %1489 = vmatprep.mubr.bf16.mxu0 %v723
  %1490 = vmatmul.mubr.bf16.gmra.mrb[0].mxu0 %v722
  %v1491 = vpop.f32.mrb[0].mxu0
  %v1492 = vadd.f32 %v1203, %v1491
  %v1493 = vpop.f32.mrb[0].mxu0
  %v1494 = vpop.f32.mrb[0].mxu0
  %v1495 = vadd.f32 %v1206, %v1494
  %v1496 = vpop.f32.mrb[0].mxu0
  %1497 = vmatprep.mubr.bf16.mxu0 %v727
  %1498 = vmatmul.mubr.bf16.gmra.mrb[0].mxu0 %v726
  %v1499 = vpop.f32.mrb[0].mxu0
  %v1500 = vadd.f32 %v1211, %v1499
  %v1501 = vpop.f32.mrb[0].mxu0
  %v1502 = vpop.f32.mrb[0].mxu0
  %v1503 = vadd.f32 %v1214, %v1502
  %v1504 = vpop.f32.mrb[0].mxu0
  %1505 = vmatprep.mubr.bf16.mxu0 %v731
  %1506 = vmatmul.mubr.bf16.gmra.mrb[0].mxu0 %v730
  %v1507 = vpop.f32.mrb[0].mxu0
  %v1508 = vadd.f32 %v1219, %v1507
  %v1509 = vpop.f32.mrb[0].mxu0
  %v1510 = vpop.f32.mrb[0].mxu0
  %v1511 = vadd.f32 %v1222, %v1510
  %v1512 = vpop.f32.mrb[0].mxu0
  %1513 = vmatprep.mubr.bf16.mxu0 %v735
  %1514 = vmatmul.mubr.bf16.gmra.mrb[0].mxu0 %v734
  %v1515 = vpop.f32.mrb[0].mxu0
  %v1516 = vadd.f32 %v1227, %v1515
  %v1517 = vpop.f32.mrb[0].mxu0
  %v1518 = vpop.f32.mrb[0].mxu0
  %v1519 = vadd.f32 %v1230, %v1518
  %v1520 = vpop.f32.mrb[0].mxu0
  %1521 = vmatprep.mubr.bf16.mxu0 %v739
  %1522 = vmatmul.mubr.bf16.gmra.mrb[0].mxu0 %v738
  %v1523 = vpop.f32.mrb[0].mxu0
  %v1524 = vadd.f32 %v1235, %v1523
  %v1525 = vpop.f32.mrb[0].mxu0
  %v1526 = vpop.f32.mrb[0].mxu0
  %v1527 = vadd.f32 %v1238, %v1526
  %v1528 = vpop.f32.mrb[0].mxu0
  %1529 = vmatprep.mubr.bf16.mxu0 %v743
  %1530 = vmatmul.mubr.bf16.gmra.mrb[0].mxu0 %v742
  %v1531 = vpop.f32.mrb[0].mxu0
  %v1532 = vadd.f32 %v1243, %v1531
  %v1533 = vpop.f32.mrb[0].mxu0
  %v1534 = vpop.f32.mrb[0].mxu0
  %v1535 = vadd.f32 %v1246, %v1534
  %v1536 = vpop.f32.mrb[0].mxu0
  %1537 = vmatprep.mubr.bf16.mxu0 %v747
  %1538 = vmatmul.mubr.bf16.gmra.mrb[0].mxu0 %v746
  %v1539 = vpop.f32.mrb[0].mxu0
  %v1540 = vadd.f32 %v1251, %v1539
  %v1541 = vpop.f32.mrb[0].mxu0
  %v1542 = vpop.f32.mrb[0].mxu0
  %v1543 = vadd.f32 %v1254, %v1542
  %v1544 = vpop.f32.mrb[0].mxu0
  %1545 = vmatprep.mubr.bf16.mxu0 %v751
  %1546 = vmatmul.mubr.bf16.gmra.mrb[0].mxu0 %v750
  %v1547 = vpop.f32.mrb[0].mxu0
  %v1548 = vadd.f32 %v1259, %v1547
  %v1549 = vpop.f32.mrb[0].mxu0
  %v1550 = vpop.f32.mrb[0].mxu0
  %v1551 = vadd.f32 %v1262, %v1550
  %v1552 = vpop.f32.mrb[0].mxu0
  %1553 = vmatprep.mubr.bf16.mxu0 %v755
  %1554 = vmatmul.mubr.bf16.gmra.mrb[0].mxu0 %v754
  %v1555 = vpop.f32.mrb[0].mxu0
  %v1556 = vadd.f32 %v1267, %v1555
  %v1557 = vpop.f32.mrb[0].mxu0
  %v1558 = vpop.f32.mrb[0].mxu0
  %v1559 = vadd.f32 %v1270, %v1558
  %v1560 = vpop.f32.mrb[0].mxu0
  %1561 = vmatprep.mubr.bf16.mxu0 %v759
  %1562 = vmatmul.mubr.bf16.gmra.mrb[0].mxu0 %v758
  %v1563 = vpop.f32.mrb[0].mxu0
  %v1564 = vadd.f32 %v1275, %v1563
  %v1565 = vpop.f32.mrb[0].mxu0
  %v1566 = vpop.f32.mrb[0].mxu0
  %v1567 = vadd.f32 %v1278, %v1566
  %v1568 = vpop.f32.mrb[0].mxu0
  %1569 = vmatprep.mubr.bf16.mxu0 %v763
  %1570 = vmatmul.mubr.bf16.gmra.mrb[0].mxu0 %v762
  %v1571 = vpop.f32.mrb[0].mxu0
  %v1572 = vadd.f32 %v1283, %v1571
  %v1573 = vpop.f32.mrb[0].mxu0
  %v1574 = vpop.f32.mrb[0].mxu0
  %v1575 = vadd.f32 %v1286, %v1574
  %v1576 = vpop.f32.mrb[0].mxu0
  %1577 = vmatprep.mubr.bf16.mxu0 %v767
  %1578 = vmatmul.mubr.bf16.gmra.mrb[0].mxu0 %v766
  %v1579 = vpop.f32.mrb[0].mxu0
  %v1580 = vadd.f32 %v1291, %v1579
  %v1581 = vpop.f32.mrb[0].mxu0
  %v1582 = vpop.f32.mrb[0].mxu0
  %v1583 = vadd.f32 %v1294, %v1582
  %v1584 = vpop.f32.mrb[0].mxu0
  %1585 = vmatprep.mubr.bf16.mxu0 %v771
  %1586 = vmatmul.mubr.bf16.gmra.mrb[0].mxu0 %v770
  %v1587 = vpop.f32.mrb[0].mxu0
  %v1588 = vadd.f32 %v1299, %v1587
  %v1589 = vpop.f32.mrb[0].mxu0
  %v1590 = vpop.f32.mrb[0].mxu0
  %v1591 = vadd.f32 %v1302, %v1590
  %v1592 = vpop.f32.mrb[0].mxu0
  %1593 = vmatprep.mubr.bf16.mxu0 %v775
  %1594 = vmatmul.mubr.bf16.gmra.mrb[0].mxu0 %v774
  %v1595 = vpop.f32.mrb[0].mxu0
  %v1596 = vadd.f32 %v1307, %v1595
  %v1597 = vpop.f32.mrb[0].mxu0
  %v1598 = vpop.f32.mrb[0].mxu0
  %v1599 = vadd.f32 %v1310, %v1598
  %v1600 = vpop.f32.mrb[0].mxu0
  %1601 = vmatprep.mubr.bf16.mxu0 %v779
  %1602 = vmatmul.mubr.bf16.gmra.mrb[0].mxu0 %v778
  %v1603 = vpop.f32.mrb[0].mxu0
  %v1604 = vadd.f32 %v1315, %v1603
  %v1605 = vpop.f32.mrb[0].mxu0
  %v1606 = vpop.f32.mrb[0].mxu0
  %v1607 = vadd.f32 %v1318, %v1606
  %v1608 = vpop.f32.mrb[0].mxu0
  %1609 = vmatprep.mubr.bf16.mxu0 %v783
  %1610 = vmatmul.mubr.bf16.gmra.mrb[0].mxu0 %v782
  %v1611 = vpop.f32.mrb[0].mxu0
  %v1612 = vadd.f32 %v1323, %v1611
  %v1613 = vpop.f32.mrb[0].mxu0
  %v1614 = vpop.f32.mrb[0].mxu0
  %v1615 = vadd.f32 %v1326, %v1614
  %v1616 = vpop.f32.mrb[0].mxu0
  %1617 = vmatprep.mubr.bf16.mxu0 %v787
  %1618 = vmatmul.mubr.bf16.gmra.mrb[0].mxu0 %v786
  %v1619 = vpop.f32.mrb[0].mxu0
  %v1620 = vadd.f32 %v1331, %v1619
  %v1621 = vpop.f32.mrb[0].mxu0
  %v1622 = vpop.f32.mrb[0].mxu0
  %v1623 = vadd.f32 %v1334, %v1622
  %v1624 = vpop.f32.mrb[0].mxu0
  %1625 = vmatprep.mubr.bf16.mxu0 %v791
  %1626 = vmatmul.mubr.bf16.gmra.mrb[0].mxu0 %v790
  %v1627 = vpop.f32.mrb[0].mxu0
  %v1628 = vadd.f32 %v1339, %v1627
  %v1629 = vpop.f32.mrb[0].mxu0
  %v1630 = vpop.f32.mrb[0].mxu0
  %v1631 = vadd.f32 %v1342, %v1630
  %v1632 = vpop.f32.mrb[0].mxu0
  %1633 = vmatprep.mubr.bf16.mxu0 %v795
  %1634 = vmatmul.mubr.bf16.gmra.mrb[0].mxu0 %v794
  %v1635 = vpop.f32.mrb[0].mxu0
  %v1636 = vadd.f32 %v1347, %v1635
  %v1637 = vpop.f32.mrb[0].mxu0
  %v1638 = vpop.f32.mrb[0].mxu0
  %v1639 = vadd.f32 %v1350, %v1638
  %v1640 = vpop.f32.mrb[0].mxu0
  %1641 = vmatprep.mubr.bf16.mxu0 %v799
  %1642 = vmatmul.mubr.bf16.gmra.mrb[0].mxu0 %v798
  %v1643 = vpop.f32.mrb[0].mxu0
  %v1644 = vadd.f32 %v1355, %v1643
  %v1645 = vpop.f32.mrb[0].mxu0
  %v1646 = vpop.f32.mrb[0].mxu0
  %v1647 = vadd.f32 %v1358, %v1646
  %v1648 = vpop.f32.mrb[0].mxu0
  %1649 = vmatprep.mubr.bf16.mxu0 %v803
  %1650 = vmatmul.mubr.bf16.gmra.mrb[0].mxu0 %v802
  %v1651 = vpop.f32.mrb[0].mxu0
  %v1652 = vadd.f32 %v1363, %v1651
  %v1653 = vpop.f32.mrb[0].mxu0
  %v1654 = vpop.f32.mrb[0].mxu0
  %v1655 = vadd.f32 %v1366, %v1654
  %v1656 = vpop.f32.mrb[0].mxu0
  %1657 = vmatprep.mubr.bf16.mxu0 %v807
  %1658 = vmatmul.mubr.bf16.gmra.mrb[0].mxu0 %v806
  %v1659 = vpop.f32.mrb[0].mxu0
  %v1660 = vadd.f32 %v1371, %v1659
  %v1661 = vpop.f32.mrb[0].mxu0
  %v1662 = vpop.f32.mrb[0].mxu0
  %v1663 = vadd.f32 %v1374, %v1662
  %v1664 = vpop.f32.mrb[0].mxu0
  %1665 = vmatprep.mubr.bf16.mxu0 %v811
  %1666 = vmatmul.mubr.bf16.gmra.mrb[0].mxu0 %v810
  %v1667 = vpop.f32.mrb[0].mxu0
  %v1668 = vadd.f32 %v1379, %v1667
  %v1669 = vpop.f32.mrb[0].mxu0
  %v1670 = vpop.f32.mrb[0].mxu0
  %v1671 = vadd.f32 %v1382, %v1670
  %v1672 = vpop.f32.mrb[0].mxu0
  %1673 = vmatprep.mubr.bf16.mxu0 %v815
  %1674 = vmatmul.mubr.bf16.gmra.mrb[0].mxu0 %v814
  %v1675 = vpop.f32.mrb[0].mxu0
  %v1676 = vadd.f32 %v1387, %v1675
  %v1677 = vpop.f32.mrb[0].mxu0
  %v1678 = vpop.f32.mrb[0].mxu0
  %v1679 = vadd.f32 %v1390, %v1678
  %v1680 = vpop.f32.mrb[0].mxu0
  %1681 = vmatprep.mubr.bf16.mxu0 %v819
  %1682 = vmatmul.mubr.bf16.gmra.mrb[0].mxu0 %v818
  %v1683 = vpop.f32.mrb[0].mxu0
  %v1684 = vadd.f32 %v1395, %v1683
  %v1685 = vpop.f32.mrb[0].mxu0
  %v1686 = vpop.f32.mrb[0].mxu0
  %v1687 = vadd.f32 %v1398, %v1686
  %v1688 = vpop.f32.mrb[0].mxu0
  %1689 = vmatprep.mubr.bf16.mxu0 %v823
  %1690 = vmatmul.mubr.bf16.gmra.mrb[0].mxu0 %v822
  %v1691 = vpop.f32.mrb[0].mxu0
  %v1692 = vadd.f32 %v1403, %v1691
  %v1693 = vpop.f32.mrb[0].mxu0
  %v1694 = vpop.f32.mrb[0].mxu0
  %v1695 = vadd.f32 %v1406, %v1694
  %v1696 = vpop.f32.mrb[0].mxu0
  %1697 = vmatprep.mubr.bf16.mxu0 %v827
  %1698 = vmatmul.mubr.bf16.gmra.mrb[0].mxu0 %v826
  %v1699 = vpop.f32.mrb[0].mxu0
  %v1700 = vadd.f32 %v1411, %v1699
  %v1701 = vpop.f32.mrb[0].mxu0
  %v1702 = vpop.f32.mrb[0].mxu0
  %v1703 = vadd.f32 %v1414, %v1702
  %v1704 = vpop.f32.mrb[0].mxu0
  %1705 = vmatprep.mubr.bf16.mxu0 %v831
  %1706 = vmatmul.mubr.bf16.gmra.mrb[0].mxu0 %v830
  %v1707 = vpop.f32.mrb[0].mxu0
  %v1708 = vadd.f32 %v1419, %v1707
  %v1709 = vpop.f32.mrb[0].mxu0
  %v1710 = vpop.f32.mrb[0].mxu0
  %v1711 = vadd.f32 %v1422, %v1710
  %v1712 = vpop.f32.mrb[0].mxu0
  %1713 = vmatprep.mubr.bf16.mxu0 %v835
  %1714 = vmatmul.mubr.bf16.gmra.mrb[0].mxu0 %v834
  %v1715 = vpop.f32.mrb[0].mxu0
  %v1716 = vadd.f32 %v1427, %v1715
  %v1717 = vpop.f32.mrb[0].mxu0
  %v1718 = vpop.f32.mrb[0].mxu0
  %v1719 = vadd.f32 %v1430, %v1718
  %v1720 = vpop.f32.mrb[0].mxu0
  %1721 = vmatprep.mubr.bf16.mxu0 %v839
  %1722 = vmatmul.mubr.bf16.gmra.mrb[0].mxu0 %v838
  %v1723 = vpop.f32.mrb[0].mxu0
  %v1724 = vadd.f32 %v1435, %v1723
  %v1725 = vpop.f32.mrb[0].mxu0
  %v1726 = vpop.f32.mrb[0].mxu0
  %v1727 = vadd.f32 %v1438, %v1726
  %v1728 = vpop.f32.mrb[0].mxu0
  %1729 = vmatprep.mubr.bf16.mxu0 %v843
  %1730 = vmatmul.mubr.bf16.gmra.mrb[0].mxu0 %v842
  %v1731 = vpop.f32.mrb[0].mxu0
  %v1732 = vadd.f32 %v1443, %v1731
  %v1733 = vpop.f32.mrb[0].mxu0
  %v1734 = vpop.f32.mrb[0].mxu0
  %v1735 = vadd.f32 %v1446, %v1734
  %v1736 = vpop.f32.mrb[0].mxu0
  %1737 = vmatprep.mubr.bf16.mxu0 %v847
  %1738 = vmatmul.mubr.bf16.gmra.mrb[0].mxu0 %v846
  %v1739 = vpop.f32.mrb[0].mxu0
  %v1740 = vadd.f32 %v1451, %v1739
  %v1741 = vpop.f32.mrb[0].mxu0
  %v1742 = vpop.f32.mrb[0].mxu0
  %v1743 = vadd.f32 %v1454, %v1742
  %v1744 = vpop.f32.mrb[0].mxu0
  %1745 = vdwg.mxu0
  %v1746 = vadd.f32 %v80, %v1492
  %v1747 = vadd.f32 %v81, %v1495
  %v1748 = vadd.f32 %v82, %v1500
  %v1749 = vadd.f32 %v83, %v1503
  %v1750 = vadd.f32 %v84, %v1508
  %v1751 = vadd.f32 %v85, %v1511
  %v1752 = vadd.f32 %v86, %v1516
  %v1753 = vadd.f32 %v87, %v1519
  %v1754 = vadd.f32 %v88, %v1524
  %v1755 = vadd.f32 %v89, %v1527
  %v1756 = vadd.f32 %v90, %v1532
  %v1757 = vadd.f32 %v91, %v1535
  %v1758 = vadd.f32 %v92, %v1540
  %v1759 = vadd.f32 %v93, %v1543
  %v1760 = vadd.f32 %v94, %v1548
  %v1761 = vadd.f32 %v95, %v1551
  %v1762 = vadd.f32 %v96, %v1556
  %v1763 = vadd.f32 %v97, %v1559
  %v1764 = vadd.f32 %v98, %v1564
  %v1765 = vadd.f32 %v99, %v1567
  %v1766 = vadd.f32 %v100, %v1572
  %v1767 = vadd.f32 %v101, %v1575
  %v1768 = vadd.f32 %v102, %v1580
  %v1769 = vadd.f32 %v103, %v1583
  %v1770 = vadd.f32 %v104, %v1588
  %v1771 = vadd.f32 %v105, %v1591
  %v1772 = vadd.f32 %v106, %v1596
  %v1773 = vadd.f32 %v107, %v1599
  %v1774 = vadd.f32 %v108, %v1604
  %v1775 = vadd.f32 %v109, %v1607
  %v1776 = vadd.f32 %v110, %v1612
  %v1777 = vadd.f32 %v111, %v1615
  %v1778 = vadd.f32 %v112, %v1620
  %v1779 = vadd.f32 %v113, %v1623
  %v1780 = vadd.f32 %v114, %v1628
  %v1781 = vadd.f32 %v115, %v1631
  %v1782 = vadd.f32 %v116, %v1636
  %v1783 = vadd.f32 %v117, %v1639
  %v1784 = vadd.f32 %v118, %v1644
  %v1785 = vadd.f32 %v119, %v1647
  %v1786 = vadd.f32 %v120, %v1652
  %v1787 = vadd.f32 %v121, %v1655
  %v1788 = vadd.f32 %v122, %v1660
  %v1789 = vadd.f32 %v123, %v1663
  %v1790 = vadd.f32 %v124, %v1668
  %v1791 = vadd.f32 %v125, %v1671
  %v1792 = vadd.f32 %v126, %v1676
  %v1793 = vadd.f32 %v127, %v1679
  %v1794 = vadd.f32 %v128, %v1684
  %v1795 = vadd.f32 %v129, %v1687
  %v1796 = vadd.f32 %v130, %v1692
  %v1797 = vadd.f32 %v131, %v1695
  %v1798 = vadd.f32 %v132, %v1700
  %v1799 = vadd.f32 %v133, %v1703
  %v1800 = vadd.f32 %v134, %v1708
  %v1801 = vadd.f32 %v135, %v1711
  %v1802 = vadd.f32 %v136, %v1716
  %v1803 = vadd.f32 %v137, %v1719
  %v1804 = vadd.f32 %v138, %v1724
  %v1805 = vadd.f32 %v139, %v1727
  %v1806 = vadd.f32 %v140, %v1732
  %v1807 = vadd.f32 %v141, %v1735
  %v1808 = vadd.f32 %v142, %v1740
  %v1809 = vadd.f32 %v143, %v1743
  %1810 = vst [vmem:[#allocation2] sm:$0xff] %v1746
  %1811 = vst [vmem:[#allocation2 + $0x8] sm:$0xff] %v1747
  %1812 = vst [vmem:[#allocation2 + $0x10] sm:$0xff] %v1748
  %1813 = vst [vmem:[#allocation2 + $0x18] sm:$0xff] %v1749
  %1814 = vst [vmem:[#allocation2 + $0x20] sm:$0xff] %v1750
  %1815 = vst [vmem:[#allocation2 + $0x28] sm:$0xff] %v1751
  %1816 = vst [vmem:[#allocation2 + $0x30] sm:$0xff] %v1752
  %1817 = vst [vmem:[#allocation2 + $0x38] sm:$0xff] %v1753
  %1818 = vst [vmem:[#allocation2 + $0x40] sm:$0xff] %v1754
  %1819 = vst [vmem:[#allocation2 + $0x48] sm:$0xff] %v1755
  %1820 = vst [vmem:[#allocation2 + $0x50] sm:$0xff] %v1756
  %1821 = vst [vmem:[#allocation2 + $0x58] sm:$0xff] %v1757
  %1822 = vst [vmem:[#allocation2 + $0x60] sm:$0xff] %v1758
  %1823 = vst [vmem:[#allocation2 + $0x68] sm:$0xff] %v1759
  %1824 = vst [vmem:[#allocation2 + $0x70] sm:$0xff] %v1760
  %1825 = vst [vmem:[#allocation2 + $0x78] sm:$0xff] %v1761
  %1826 = vst [vmem:[#allocation2 + $0x80] sm:$0xff] %v1762
  %1827 = vst [vmem:[#allocation2 + $0x88] sm:$0xff] %v1763
  %1828 = vst [vmem:[#allocation2 + $0x90] sm:$0xff] %v1764
  %1829 = vst [vmem:[#allocation2 + $0x98] sm:$0xff] %v1765
  %1830 = vst [vmem:[#allocation2 + $0xa0] sm:$0xff] %v1766
  %1831 = vst [vmem:[#allocation2 + $0xa8] sm:$0xff] %v1767
  %1832 = vst [vmem:[#allocation2 + $0xb0] sm:$0xff] %v1768
  %1833 = vst [vmem:[#allocation2 + $0xb8] sm:$0xff] %v1769
  %1834 = vst [vmem:[#allocation2 + $0xc0] sm:$0xff] %v1770
  %1835 = vst [vmem:[#allocation2 + $0xc8] sm:$0xff] %v1771
  %1836 = vst [vmem:[#allocation2 + $0xd0] sm:$0xff] %v1772
  %1837 = vst [vmem:[#allocation2 + $0xd8] sm:$0xff] %v1773
  %1838 = vst [vmem:[#allocation2 + $0xe0] sm:$0xff] %v1774
  %1839 = vst [vmem:[#allocation2 + $0xe8] sm:$0xff] %v1775
  %1840 = vst [vmem:[#allocation2 + $0xf0] sm:$0xff] %v1776
  %1841 = vst [vmem:[#allocation2 + $0xf8] sm:$0xff] %v1777
  %1842 = vst [vmem:[#allocation2 + $0x100] sm:$0xff] %v1778
  %1843 = vst [vmem:[#allocation2 + $0x108] sm:$0xff] %v1779
  %1844 = vst [vmem:[#allocation2 + $0x110] sm:$0xff] %v1780
  %1845 = vst [vmem:[#allocation2 + $0x118] sm:$0xff] %v1781
  %1846 = vst [vmem:[#allocation2 + $0x120] sm:$0xff] %v1782
  %1847 = vst [vmem:[#allocation2 + $0x128] sm:$0xff] %v1783
  %1848 = vst [vmem:[#allocation2 + $0x130] sm:$0xff] %v1784
  %1849 = vst [vmem:[#allocation2 + $0x138] sm:$0xff] %v1785
  %1850 = vst [vmem:[#allocation2 + $0x140] sm:$0xff] %v1786
  %1851 = vst [vmem:[#allocation2 + $0x148] sm:$0xff] %v1787
  %1852 = vst [vmem:[#allocation2 + $0x150] sm:$0xff] %v1788
  %1853 = vst [vmem:[#allocation2 + $0x158] sm:$0xff] %v1789
  %1854 = vst [vmem:[#allocation2 + $0x160] sm:$0xff] %v1790
  %1855 = vst [vmem:[#allocation2 + $0x168] sm:$0xff] %v1791
  %1856 = vst [vmem:[#allocation2 + $0x170] sm:$0xff] %v1792
  %1857 = vst [vmem:[#allocation2 + $0x178] sm:$0xff] %v1793
  %1858 = vst [vmem:[#allocation2 + $0x180] sm:$0xff] %v1794
  %1859 = vst [vmem:[#allocation2 + $0x188] sm:$0xff] %v1795
  %1860 = vst [vmem:[#allocation2 + $0x190] sm:$0xff] %v1796
  %1861 = vst [vmem:[#allocation2 + $0x198] sm:$0xff] %v1797
  %1862 = vst [vmem:[#allocation2 + $0x1a0] sm:$0xff] %v1798
  %1863 = vst [vmem:[#allocation2 + $0x1a8] sm:$0xff] %v1799
  %1864 = vst [vmem:[#allocation2 + $0x1b0] sm:$0xff] %v1800
  %1865 = vst [vmem:[#allocation2 + $0x1b8] sm:$0xff] %v1801
  %1866 = vst [vmem:[#allocation2 + $0x1c0] sm:$0xff] %v1802
  %1867 = vst [vmem:[#allocation2 + $0x1c8] sm:$0xff] %v1803
  %1868 = vst [vmem:[#allocation2 + $0x1d0] sm:$0xff] %v1804
  %1869 = vst [vmem:[#allocation2 + $0x1d8] sm:$0xff] %v1805
  %1870 = vst [vmem:[#allocation2 + $0x1e0] sm:$0xff] %v1806
  %1871 = vst [vmem:[#allocation2 + $0x1e8] sm:$0xff] %v1807
  %1872 = vst [vmem:[#allocation2 + $0x1f0] sm:$0xff] %v1808
  %1873 = vst [vmem:[#allocation2 + $0x1f8] sm:$0xff] %v1809
  // Predicated region
  $region14: #{generator_forward.19} parent=0 // pred_check
    %p1874 = pneg %p12
  $region15: #{generator_forward.19} parent=0 // pred_check_branch
    %1876 = sbr.rel (%p1874) target = $region17
  $region16: #{generator_forward.19} parent=0 // pred_region
    %v1877 = vld [vmem:[#allocation2] sm:$0xff]
    %v1878 = vld [vmem:[#allocation2 + $0x8] sm:$0xff]
    %v1879 = vld [vmem:[#allocation2 + $0x10] sm:$0xff]
    %v1880 = vld [vmem:[#allocation2 + $0x18] sm:$0xff]
    %v1881 = vld [vmem:[#allocation2 + $0x20] sm:$0xff]
    %v1882 = vld [vmem:[#allocation2 + $0x28] sm:$0xff]
    %v1883 = vld [vmem:[#allocation2 + $0x30] sm:$0xff]
    %v1884 = vld [vmem:[#allocation2 + $0x38] sm:$0xff]
    %v1885 = vld [vmem:[#allocation2 + $0x40] sm:$0xff]
    %v1886 = vld [vmem:[#allocation2 + $0x48] sm:$0xff]
    %v1887 = vld [vmem:[#allocation2 + $0x50] sm:$0xff]
    %v1888 = vld [vmem:[#allocation2 + $0x58] sm:$0xff]
    %v1889 = vld [vmem:[#allocation2 + $0x60] sm:$0xff]
    %v1890 = vld [vmem:[#allocation2 + $0x68] sm:$0xff]
    %v1891 = vld [vmem:[#allocation2 + $0x70] sm:$0xff]
    %v1892 = vld [vmem:[#allocation2 + $0x78] sm:$0xff]
    %v1893 = vld [vmem:[#allocation2 + $0x80] sm:$0xff]
    %v1894 = vld [vmem:[#allocation2 + $0x88] sm:$0xff]
    %v1895 = vld [vmem:[#allocation2 + $0x90] sm:$0xff]
    %v1896 = vld [vmem:[#allocation2 + $0x98] sm:$0xff]
    %v1897 = vld [vmem:[#allocation2 + $0xa0] sm:$0xff]
    %v1898 = vld [vmem:[#allocation2 + $0xa8] sm:$0xff]
    %v1899 = vld [vmem:[#allocation2 + $0xb0] sm:$0xff]
    %v1900 = vld [vmem:[#allocation2 + $0xb8] sm:$0xff]
    %v1901 = vld [vmem:[#allocation2 + $0xc0] sm:$0xff]
    %v1902 = vld [vmem:[#allocation2 + $0xc8] sm:$0xff]
    %v1903 = vld [vmem:[#allocation2 + $0xd0] sm:$0xff]
    %v1904 = vld [vmem:[#allocation2 + $0xd8] sm:$0xff]
    %v1905 = vld [vmem:[#allocation2 + $0xe0] sm:$0xff]
    %v1906 = vld [vmem:[#allocation2 + $0xe8] sm:$0xff]
    %v1907 = vld [vmem:[#allocation2 + $0xf0] sm:$0xff]
    %v1908 = vld [vmem:[#allocation2 + $0xf8] sm:$0xff]
    %v1909 = vld [vmem:[#allocation2 + $0x100] sm:$0xff]
    %v1910 = vld [vmem:[#allocation2 + $0x108] sm:$0xff]
    %v1911 = vld [vmem:[#allocation2 + $0x110] sm:$0xff]
    %v1912 = vld [vmem:[#allocation2 + $0x118] sm:$0xff]
    %v1913 = vld [vmem:[#allocation2 + $0x120] sm:$0xff]
    %v1914 = vld [vmem:[#allocation2 + $0x128] sm:$0xff]
    %v1915 = vld [vmem:[#allocation2 + $0x130] sm:$0xff]
    %v1916 = vld [vmem:[#allocation2 + $0x138] sm:$0xff]
    %v1917 = vld [vmem:[#allocation2 + $0x140] sm:$0xff]
    %v1918 = vld [vmem:[#allocation2 + $0x148] sm:$0xff]
    %v1919 = vld [vmem:[#allocation2 + $0x150] sm:$0xff]
    %v1920 = vld [vmem:[#allocation2 + $0x158] sm:$0xff]
    %v1921 = vld [vmem:[#allocation2 + $0x160] sm:$0xff]
    %v1922 = vld [vmem:[#allocation2 + $0x168] sm:$0xff]
    %v1923 = vld [vmem:[#allocation2 + $0x170] sm:$0xff]
    %v1924 = vld [vmem:[#allocation2 + $0x178] sm:$0xff]
    %v1925 = vld [vmem:[#allocation2 + $0x180] sm:$0xff]
    %v1926 = vld [vmem:[#allocation2 + $0x188] sm:$0xff]
    %v1927 = vld [vmem:[#allocation2 + $0x190] sm:$0xff]
    %v1928 = vld [vmem:[#allocation2 + $0x198] sm:$0xff]
    %v1929 = vld [vmem:[#allocation2 + $0x1a0] sm:$0xff]
    %v1930 = vld [vmem:[#allocation2 + $0x1a8] sm:$0xff]
    %v1931 = vld [vmem:[#allocation2 + $0x1b0] sm:$0xff]
    %v1932 = vld [vmem:[#allocation2 + $0x1b8] sm:$0xff]
    %v1933 = vld [vmem:[#allocation2 + $0x1c0] sm:$0xff]
    %v1934 = vld [vmem:[#allocation2 + $0x1c8] sm:$0xff]
    %v1935 = vld [vmem:[#allocation2 + $0x1d0] sm:$0xff]
    %v1936 = vld [vmem:[#allocation2 + $0x1d8] sm:$0xff]
    %v1937 = vld [vmem:[#allocation2 + $0x1e0] sm:$0xff]
    %v1938 = vld [vmem:[#allocation2 + $0x1e8] sm:$0xff]
    %v1939 = vld [vmem:[#allocation2 + $0x1f0] sm:$0xff]
    %v1940 = vld [vmem:[#allocation2 + $0x1f8] sm:$0xff]
    %v1941 = vpack.c.bf16 %v1878, %v1877
    %v1942 = vpack.c.bf16 %v1880, %v1879
    %v1943 = vpack.c.bf16 %v1882, %v1881
    %v1944 = vpack.c.bf16 %v1884, %v1883
    %v1945 = vpack.c.bf16 %v1886, %v1885
    %v1946 = vpack.c.bf16 %v1888, %v1887
    %v1947 = vpack.c.bf16 %v1890, %v1889
    %v1948 = vpack.c.bf16 %v1892, %v1891
    %v1949 = vpack.c.bf16 %v1894, %v1893
    %v1950 = vpack.c.bf16 %v1896, %v1895
    %v1951 = vpack.c.bf16 %v1898, %v1897
    %v1952 = vpack.c.bf16 %v1900, %v1899
    %v1953 = vpack.c.bf16 %v1902, %v1901
    %v1954 = vpack.c.bf16 %v1904, %v1903
    %v1955 = vpack.c.bf16 %v1906, %v1905
    %v1956 = vpack.c.bf16 %v1908, %v1907
    %v1957 = vpack.c.bf16 %v1910, %v1909
    %v1958 = vpack.c.bf16 %v1912, %v1911
    %v1959 = vpack.c.bf16 %v1914, %v1913
    %v1960 = vpack.c.bf16 %v1916, %v1915
    %v1961 = vpack.c.bf16 %v1918, %v1917
    %v1962 = vpack.c.bf16 %v1920, %v1919
    %v1963 = vpack.c.bf16 %v1922, %v1921
    %v1964 = vpack.c.bf16 %v1924, %v1923
    %v1965 = vpack.c.bf16 %v1926, %v1925
    %v1966 = vpack.c.bf16 %v1928, %v1927
    %v1967 = vpack.c.bf16 %v1930, %v1929
    %v1968 = vpack.c.bf16 %v1932, %v1931
    %v1969 = vpack.c.bf16 %v1934, %v1933
    %v1970 = vpack.c.bf16 %v1936, %v1935
    %v1971 = vpack.c.bf16 %v1938, %v1937
    %v1972 = vpack.c.bf16 %v1940, %v1939
    %v2005 = vunpack.c.l.b16 %v1941
    %v2006 = vunpack.c.h.b16 %v1941
    %v2007 = vunpack.c.l.b16 %v1942
    %v2008 = vunpack.c.h.b16 %v1942
    %v2009 = vunpack.c.l.b16 %v1943
    %v2010 = vunpack.c.h.b16 %v1943
    %v2011 = vunpack.c.l.b16 %v1944
    %v2012 = vunpack.c.h.b16 %v1944
    %v2013 = vunpack.c.l.b16 %v1945
    %v2014 = vunpack.c.h.b16 %v1945
    %v2015 = vunpack.c.l.b16 %v1946
    %v2016 = vunpack.c.h.b16 %v1946
    %v2017 = vunpack.c.l.b16 %v1947
    %v2018 = vunpack.c.h.b16 %v1947
    %v2019 = vunpack.c.l.b16 %v1948
    %v2020 = vunpack.c.h.b16 %v1948
    %v2021 = vunpack.c.l.b16 %v1949
    %v2022 = vunpack.c.h.b16 %v1949
    %v2023 = vunpack.c.l.b16 %v1950
    %v2024 = vunpack.c.h.b16 %v1950
    %v2025 = vunpack.c.l.b16 %v1951
    %v2026 = vunpack.c.h.b16 %v1951
    %v2027 = vunpack.c.l.b16 %v1952
    %v2028 = vunpack.c.h.b16 %v1952
    %v2029 = vunpack.c.l.b16 %v1953
    %v2030 = vunpack.c.h.b16 %v1953
    %v2031 = vunpack.c.l.b16 %v1954
    %v2032 = vunpack.c.h.b16 %v1954
    %v2033 = vunpack.c.l.b16 %v1955
    %v2034 = vunpack.c.h.b16 %v1955
    %v2035 = vunpack.c.l.b16 %v1956
    %v2036 = vunpack.c.h.b16 %v1956
    %v2037 = vunpack.c.l.b16 %v1957
    %v2038 = vunpack.c.h.b16 %v1957
    %v2039 = vunpack.c.l.b16 %v1958
    %v2040 = vunpack.c.h.b16 %v1958
    %v2041 = vunpack.c.l.b16 %v1959
    %v2042 = vunpack.c.h.b16 %v1959
    %v2043 = vunpack.c.l.b16 %v1960
    %v2044 = vunpack.c.h.b16 %v1960
    %v2045 = vunpack.c.l.b16 %v1961
    %v2046 = vunpack.c.h.b16 %v1961
    %v2047 = vunpack.c.l.b16 %v1962
    %v2048 = vunpack.c.h.b16 %v1962
    %v2049 = vunpack.c.l.b16 %v1963
    %v2050 = vunpack.c.h.b16 %v1963
    %v2051 = vunpack.c.l.b16 %v1964
    %v2052 = vunpack.c.h.b16 %v1964
    %v2053 = vunpack.c.l.b16 %v1965
    %v2054 = vunpack.c.h.b16 %v1965
    %v2055 = vunpack.c.l.b16 %v1966
    %v2056 = vunpack.c.h.b16 %v1966
    %v2057 = vunpack.c.l.b16 %v1967
    %v2058 = vunpack.c.h.b16 %v1967
    %v2059 = vunpack.c.l.b16 %v1968
    %v2060 = vunpack.c.h.b16 %v1968
    %v2061 = vunpack.c.l.b16 %v1969
    %v2062 = vunpack.c.h.b16 %v1969
    %v2063 = vunpack.c.l.b16 %v1970
    %v2064 = vunpack.c.h.b16 %v1970
    %v2065 = vunpack.c.l.b16 %v1971
    %v2066 = vunpack.c.h.b16 %v1971
    %v2067 = vunpack.c.l.b16 %v1972
    %v2068 = vunpack.c.h.b16 %v1972
    %v2069 = vpack.c.b16 %v2005, %v2005
    %v2070 = vpack.c.b16 %v2006, %v2006
    %v2071 = vpack.c.b16 %v2007, %v2007
    %v2072 = vpack.c.b16 %v2008, %v2008
    %v2073 = vpack.c.b16 %v2009, %v2009
    %v2074 = vpack.c.b16 %v2010, %v2010
    %v2075 = vpack.c.b16 %v2011, %v2011
    %v2076 = vpack.c.b16 %v2012, %v2012
    %v2077 = vpack.c.b16 %v2013, %v2013
    %v2078 = vpack.c.b16 %v2014, %v2014
    %v2079 = vpack.c.b16 %v2015, %v2015
    %v2080 = vpack.c.b16 %v2016, %v2016
    %v2081 = vpack.c.b16 %v2017, %v2017
    %v2082 = vpack.c.b16 %v2018, %v2018
    %v2083 = vpack.c.b16 %v2019, %v2019
    %v2084 = vpack.c.b16 %v2020, %v2020
    %v2085 = vpack.c.b16 %v2021, %v2021
    %v2086 = vpack.c.b16 %v2022, %v2022
    %v2087 = vpack.c.b16 %v2023, %v2023
    %v2088 = vpack.c.b16 %v2024, %v2024
    %v2089 = vpack.c.b16 %v2025, %v2025
    %v2090 = vpack.c.b16 %v2026, %v2026
    %v2091 = vpack.c.b16 %v2027, %v2027
    %v2092 = vpack.c.b16 %v2028, %v2028
    %v2093 = vpack.c.b16 %v2029, %v2029
    %v2094 = vpack.c.b16 %v2030, %v2030
    %v2095 = vpack.c.b16 %v2031, %v2031
    %v2096 = vpack.c.b16 %v2032, %v2032
    %v2097 = vpack.c.b16 %v2033, %v2033
    %v2098 = vpack.c.b16 %v2034, %v2034
    %v2099 = vpack.c.b16 %v2035, %v2035
    %v2100 = vpack.c.b16 %v2036, %v2036
    %v2101 = vpack.c.b16 %v2037, %v2037
    %v2102 = vpack.c.b16 %v2038, %v2038
    %v2103 = vpack.c.b16 %v2039, %v2039
    %v2104 = vpack.c.b16 %v2040, %v2040
    %v2105 = vpack.c.b16 %v2041, %v2041
    %v2106 = vpack.c.b16 %v2042, %v2042
    %v2107 = vpack.c.b16 %v2043, %v2043
    %v2108 = vpack.c.b16 %v2044, %v2044
    %v2109 = vpack.c.b16 %v2045, %v2045
    %v2110 = vpack.c.b16 %v2046, %v2046
    %v2111 = vpack.c.b16 %v2047, %v2047
    %v2112 = vpack.c.b16 %v2048, %v2048
    %v2113 = vpack.c.b16 %v2049, %v2049
    %v2114 = vpack.c.b16 %v2050, %v2050
    %v2115 = vpack.c.b16 %v2051, %v2051
    %v2116 = vpack.c.b16 %v2052, %v2052
    %v2117 = vpack.c.b16 %v2053, %v2053
    %v2118 = vpack.c.b16 %v2054, %v2054
    %v2119 = vpack.c.b16 %v2055, %v2055
    %v2120 = vpack.c.b16 %v2056, %v2056
    %v2121 = vpack.c.b16 %v2057, %v2057
    %v2122 = vpack.c.b16 %v2058, %v2058
    %v2123 = vpack.c.b16 %v2059, %v2059
    %v2124 = vpack.c.b16 %v2060, %v2060
    %v2125 = vpack.c.b16 %v2061, %v2061
    %v2126 = vpack.c.b16 %v2062, %v2062
    %v2127 = vpack.c.b16 %v2063, %v2063
    %v2128 = vpack.c.b16 %v2064, %v2064
    %v2129 = vpack.c.b16 %v2065, %v2065
    %v2130 = vpack.c.b16 %v2066, %v2066
    %v2131 = vpack.c.b16 %v2067, %v2067
    %v2132 = vpack.c.b16 %v2068, %v2068
    %2197 = vst [vmem:[%s2] sm:$0xf] %v2069
    %2198 = vst [vmem:[%s2 + $0x4] sm:$0xf] %v2070
    %2199 = vst [vmem:[%s2 + $0x8] sm:$0xf] %v2071
    %2200 = vst [vmem:[%s2 + $0xc] sm:$0xf] %v2072
    %2201 = vst [vmem:[%s2 + $0x10] sm:$0xf] %v2073
    %2202 = vst [vmem:[%s2 + $0x14] sm:$0xf] %v2074
    %2203 = vst [vmem:[%s2 + $0x18] sm:$0xf] %v2075
    %2204 = vst [vmem:[%s2 + $0x1c] sm:$0xf] %v2076
    %2205 = vst [vmem:[%s2 + $0x20] sm:$0xf] %v2077
    %2206 = vst [vmem:[%s2 + $0x24] sm:$0xf] %v2078
    %2207 = vst [vmem:[%s2 + $0x28] sm:$0xf] %v2079
    %2208 = vst [vmem:[%s2 + $0x2c] sm:$0xf] %v2080
    %2209 = vst [vmem:[%s2 + $0x30] sm:$0xf] %v2081
    %2210 = vst [vmem:[%s2 + $0x34] sm:$0xf] %v2082
    %2211 = vst [vmem:[%s2 + $0x38] sm:$0xf] %v2083
    %2212 = vst [vmem:[%s2 + $0x3c] sm:$0xf] %v2084
    %2213 = vst [vmem:[%s2 + $0x40] sm:$0xf] %v2085
    %2214 = vst [vmem:[%s2 + $0x44] sm:$0xf] %v2086
    %2215 = vst [vmem:[%s2 + $0x48] sm:$0xf] %v2087
    %2216 = vst [vmem:[%s2 + $0x4c] sm:$0xf] %v2088
    %2217 = vst [vmem:[%s2 + $0x50] sm:$0xf] %v2089
    %2218 = vst [vmem:[%s2 + $0x54] sm:$0xf] %v2090
    %2219 = vst [vmem:[%s2 + $0x58] sm:$0xf] %v2091
    %2220 = vst [vmem:[%s2 + $0x5c] sm:$0xf] %v2092
    %2221 = vst [vmem:[%s2 + $0x60] sm:$0xf] %v2093
    %2222 = vst [vmem:[%s2 + $0x64] sm:$0xf] %v2094
    %2223 = vst [vmem:[%s2 + $0x68] sm:$0xf] %v2095
    %2224 = vst [vmem:[%s2 + $0x6c] sm:$0xf] %v2096
    %2225 = vst [vmem:[%s2 + $0x70] sm:$0xf] %v2097
    %2226 = vst [vmem:[%s2 + $0x74] sm:$0xf] %v2098
    %2227 = vst [vmem:[%s2 + $0x78] sm:$0xf] %v2099
    %2228 = vst [vmem:[%s2 + $0x7c] sm:$0xf] %v2100
    %2229 = vst [vmem:[%s2 + $0x80] sm:$0xf] %v2101
    %2230 = vst [vmem:[%s2 + $0x84] sm:$0xf] %v2102
    %2231 = vst [vmem:[%s2 + $0x88] sm:$0xf] %v2103
    %2232 = vst [vmem:[%s2 + $0x8c] sm:$0xf] %v2104
    %2233 = vst [vmem:[%s2 + $0x90] sm:$0xf] %v2105
    %2234 = vst [vmem:[%s2 + $0x94] sm:$0xf] %v2106
    %2235 = vst [vmem:[%s2 + $0x98] sm:$0xf] %v2107
    %2236 = vst [vmem:[%s2 + $0x9c] sm:$0xf] %v2108
    %2237 = vst [vmem:[%s2 + $0xa0] sm:$0xf] %v2109
    %2238 = vst [vmem:[%s2 + $0xa4] sm:$0xf] %v2110
    %2239 = vst [vmem:[%s2 + $0xa8] sm:$0xf] %v2111
    %2240 = vst [vmem:[%s2 + $0xac] sm:$0xf] %v2112
    %2241 = vst [vmem:[%s2 + $0xb0] sm:$0xf] %v2113
    %2242 = vst [vmem:[%s2 + $0xb4] sm:$0xf] %v2114
    %2243 = vst [vmem:[%s2 + $0xb8] sm:$0xf] %v2115
    %2244 = vst [vmem:[%s2 + $0xbc] sm:$0xf] %v2116
    %2245 = vst [vmem:[%s2 + $0xc0] sm:$0xf] %v2117
    %2246 = vst [vmem:[%s2 + $0xc4] sm:$0xf] %v2118
    %2247 = vst [vmem:[%s2 + $0xc8] sm:$0xf] %v2119
    %2248 = vst [vmem:[%s2 + $0xcc] sm:$0xf] %v2120
    %2249 = vst [vmem:[%s2 + $0xd0] sm:$0xf] %v2121
    %2250 = vst [vmem:[%s2 + $0xd4] sm:$0xf] %v2122
    %2251 = vst [vmem:[%s2 + $0xd8] sm:$0xf] %v2123
    %2252 = vst [vmem:[%s2 + $0xdc] sm:$0xf] %v2124
    %2253 = vst [vmem:[%s2 + $0xe0] sm:$0xf] %v2125
    %2254 = vst [vmem:[%s2 + $0xe4] sm:$0xf] %v2126
    %2255 = vst [vmem:[%s2 + $0xe8] sm:$0xf] %v2127
    %2256 = vst [vmem:[%s2 + $0xec] sm:$0xf] %v2128
    %2257 = vst [vmem:[%s2 + $0xf0] sm:$0xf] %v2129
    %2258 = vst [vmem:[%s2 + $0xf4] sm:$0xf] %v2130
    %2259 = vst [vmem:[%s2 + $0xf8] sm:$0xf] %v2131
    %2260 = vst [vmem:[%s2 + $0xfc] sm:$0xf] %v2132
  $region17: #{generator_forward.19} parent=0 // pred_fallthru
    _
  // Predicated region
  $region18: #{generator_forward.19} parent=0 // pred_check
    _
  $region19: #{generator_forward.19} parent=0 // pred_check_branch
    %2262 = sbr.rel (0) target = $region21
  $region20: #{generator_forward.19} parent=0 // pred_region
    _
  $region21: #{generator_forward.19} parent=0 // pred_fallthru
    _
  // Predicated region
  $region22: #{generator_forward.19} parent=0 // pred_check
    _
  $region23: #{generator_forward.19} parent=0 // pred_check_branch
    %2264 = sbr.rel (0) target = $region25
  $region24: #{generator_forward.19} parent=0 // pred_region
    _
  $region25: #{generator_forward.19} parent=0 // pred_fallthru
    _

// kernel: generator_forward.20
$region0: #{generator_forward.20}
  #allocation0 [shape = 'u32[]', space=smem, size = 0x4, offset = 0x4, fixed_abs, tag = 'smem constant byte address 0x4 - core index']
  #allocation1 [shape = 'u32[144,128]{1,0:T(1,128)}', space=vmem, size = 0x12000, scoped, tag = 'internal scratch']
  %s0 = inlined_call_operand.vmem [shape: bf16[2,32,128], index: 0, kind: input, shape index: {}]
  %s1 = inlined_call_operand.vmem [shape: f32[1,16], index: 1, kind: input, shape index: {}]
  %s2 = inlined_call_operand.vmem [shape: f32[1,16], index: 2, kind: input, shape index: {}]
  %s3 = inlined_call_operand.vmem [shape: bf16[2,32,128], index: 3, kind: output, shape index: {}]
  %s4 = sld [smem:[#allocation0]]
  $region45: #{generator_forward.20} parent=0
    _
  %s6 = ssub.s32 1, %s4
  %s7 = scalar_select 0, %s6, %s4
  loop: start=0, step=1, limit=4
  $region2: #{generator_forward.20} parent=0 // loop_pre_header
    _
  $region3: #{generator_forward.20} parent=0 // loop_header
    %s9 = sphi 0, %s13
    %p10 = scmp.ge.s32.totalorder %s9, 4
    %s16 = sphi 0, %s28
    %s17 = sphi 0, %s24
    %s18 = sphi 0, %s16
    %s19 = sphi 0, %s17
    %s20 = sphi 0, %s18
    %s21 = sphi 0, %s19
    %s33 = sphi 0, %s35
    %s36 = sphi 0, %s33
    %s37 = sphi 0, %s36
    %s53 = sphi 0, %s37
    %s59 = sphi 0, %s61
    %s62 = sphi 0, %s59
    %s63 = sphi 0, %s62
    %s79 = sphi 0, %s63
    %s85 = sphi 0, %s87
    %s88 = sphi 0, %s85
    %s89 = sphi 0, %s88
    %s105 = sphi 0, %s89
    %s113 = sphi 0, %s115
    %s116 = sphi 0, %s113
    %s117 = sphi 0, %s116
    %s133 = sphi 0, %s117
  $region4: #{generator_forward.20} parent=0 // loop_header_branch
    %12 = sbr.rel (%p10) target = $region8
  $region5: #{generator_forward.20} parent=0 // loop_body
    %s14 = ssub.s32 %s9, 1
    %s15 = ssub.s32 %s9, 2
    %s22 = sadd.s32 1, %s17
    %p23 = scmp.ge.s32.totalorder %s22, 1
    %s24 = scalar_select %p23, 0, %s22
    %s25 = sadd.s32 1, %s16
    %s26 = scalar_select %p23, %s25, %s16
    %p27 = scmp.ge.s32.totalorder %s26, 2
    %s28 = scalar_select %p27, 0, %s26
    %s29 = ssub.s32 %s16, %s28
    %s30 = ssub.s32 %s17, %s24
    %s31 = sor.u32 %s29, %s30
    %p32 = scmp.eq.s32.totalorder %s31, 0
    %s34 = sadd.s32 %s33, 1
    %s35 = scalar_select %p32, %s33, %s34
    %p38 = pneg %p32
    %p39 = scmp.eq.s32.totalorder %s9, 1
    %p40 = por %p38, %p39
    %p41 = scmp.ne.s32.totalorder %s33, %s36
    %p42 = scmp.eq.s32.totalorder %s9, 0
    %p43 = por %p41, %p42
    %p44 = scmp.ne.s32.totalorder %s33, %s36
    %p45 = scmp.eq.s32.totalorder %s14, 1
    %p46 = por %p44, %p45
    %p47 = scmp.ne.s32.totalorder %s36, %s37
    %p48 = scmp.eq.s32.totalorder %s14, 0
    %p49 = por %p47, %p48
    %p50 = scmp.ne.s32.totalorder %s36, %s37
    %p51 = scmp.eq.s32.totalorder %s15, 1
    %p52 = por %p50, %p51
    %p54 = scmp.ne.s32.totalorder %s37, %s53
    %p55 = scmp.eq.s32.totalorder %s15, 0
    %p56 = por %p54, %p55
    %s57 = ssub.s32 %s17, %s24
    %p58 = scmp.eq.s32.totalorder %s57, 0
    %s60 = sadd.s32 %s59, 1
    %s61 = scalar_select %p58, %s59, %s60
    %p64 = pneg %p58
    %p65 = scmp.eq.s32.totalorder %s9, 1
    %p66 = por %p64, %p65
    %p67 = scmp.ne.s32.totalorder %s59, %s62
    %p68 = scmp.eq.s32.totalorder %s9, 0
    %p69 = por %p67, %p68
    %p70 = scmp.ne.s32.totalorder %s59, %s62
    %p71 = scmp.eq.s32.totalorder %s14, 1
    %p72 = por %p70, %p71
    %p73 = scmp.ne.s32.totalorder %s62, %s63
    %p74 = scmp.eq.s32.totalorder %s14, 0
    %p75 = por %p73, %p74
    %p76 = scmp.ne.s32.totalorder %s62, %s63
    %p77 = scmp.eq.s32.totalorder %s15, 1
    %p78 = por %p76, %p77
    %p80 = scmp.ne.s32.totalorder %s63, %s79
    %p81 = scmp.eq.s32.totalorder %s15, 0
    %p82 = por %p80, %p81
    %s83 = ssub.s32 %s17, %s24
    %p84 = scmp.eq.s32.totalorder %s83, 0
    %s86 = sadd.s32 %s85, 1
    %s87 = scalar_select %p84, %s85, %s86
    %p90 = pneg %p84
    %p91 = scmp.eq.s32.totalorder %s9, 1
    %p92 = por %p90, %p91
    %p93 = scmp.ne.s32.totalorder %s85, %s88
    %p94 = scmp.eq.s32.totalorder %s9, 0
    %p95 = por %p93, %p94
    %p96 = scmp.ne.s32.totalorder %s85, %s88
    %p97 = scmp.eq.s32.totalorder %s14, 1
    %p98 = por %p96, %p97
    %p99 = scmp.ne.s32.totalorder %s88, %s89
    %p100 = scmp.eq.s32.totalorder %s14, 0
    %p101 = por %p99, %p100
    %p102 = scmp.ne.s32.totalorder %s88, %s89
    %p103 = scmp.eq.s32.totalorder %s15, 1
    %p104 = por %p102, %p103
    %p106 = scmp.ne.s32.totalorder %s89, %s105
    %p107 = scmp.eq.s32.totalorder %s15, 0
    %p108 = por %p106, %p107
    %s109 = ssub.s32 %s16, %s28
    %s110 = ssub.s32 %s17, %s24
    %s111 = sor.u32 %s109, %s110
    %p112 = scmp.eq.s32.totalorder %s111, 0
    %s114 = sadd.s32 %s113, 1
    %s115 = scalar_select %p112, %s113, %s114
    %p118 = pneg %p112
    %p119 = scmp.eq.s32.totalorder %s9, 1
    %p120 = por %p118, %p119
    %p121 = scmp.ne.s32.totalorder %s113, %s116
    %p122 = scmp.eq.s32.totalorder %s9, 0
    %p123 = por %p121, %p122
    %p124 = scmp.ne.s32.totalorder %s113, %s116
    %p125 = scmp.eq.s32.totalorder %s14, 1
    %p126 = por %p124, %p125
    %p127 = scmp.ne.s32.totalorder %s116, %s117
    %p128 = scmp.eq.s32.totalorder %s14, 0
    %p129 = por %p127, %p128
    %p130 = scmp.ne.s32.totalorder %s116, %s117
    %p131 = scmp.eq.s32.totalorder %s15, 1
    %p132 = por %p130, %p131
    %p134 = scmp.ne.s32.totalorder %s117, %s133
    %p135 = scmp.eq.s32.totalorder %s15, 0
    %p136 = por %p134, %p135
    %p137 = scmp.le.s32.totalorder 1, %s9
    %p138 = scmp.lt.s32.totalorder %s9, 3
    %p139 = pnand %p137, %p138
    %p140 = pneg %p139
    // Predicated region
    $region9: #{generator_forward.20} parent=5 // pred_check
      _
    $region10: #{generator_forward.20} parent=5 // pred_check_branch
      %142 = sbr.rel (%p139) target = $region12
    $region11: #{generator_forward.20} parent=5 // pred_region
      %s143 = ssub.s32 %s9, 1
      // Predicated region
      $region13: #{generator_forward.20} parent=11 // pred_check
        %p144 = pneg %p75
      $region14: #{generator_forward.20} parent=11 // pred_check_branch
        %146 = sbr.rel (%p144) target = $region16
      $region15: #{generator_forward.20} parent=11 // pred_region
        %p147 = scmp.lt.s32.totalorder %s19, 0
        %s148 = scalar_select %p147, %s19, 0
        %s149 = scalar_lea.vmem %s1, %s148
      $region16: #{generator_forward.20} parent=11 // pred_fallthru
        _
      // Predicated region
      $region17: #{generator_forward.20} parent=11 // pred_check
        %p150 = pneg %p101
      $region18: #{generator_forward.20} parent=11 // pred_check_branch
        %152 = sbr.rel (%p150) target = $region20
      $region19: #{generator_forward.20} parent=11 // pred_region
        %p153 = scmp.lt.s32.totalorder %s19, 0
        %s154 = scalar_select %p153, %s19, 0
        %s155 = scalar_lea.vmem %s2, %s154
      $region20: #{generator_forward.20} parent=11 // pred_fallthru
        _
    $region12: #{generator_forward.20} parent=5 // pred_fallthru
      _
    %p156 = scmp.lt.s32.totalorder %s9, 2
    // Predicated region
    $region21: #{generator_forward.20} parent=5 // pred_check
      %p157 = pneg %p156
    $region22: #{generator_forward.20} parent=5 // pred_check_branch
      %159 = sbr.rel (%p157) target = $region24
    $region23: #{generator_forward.20} parent=5 // pred_region
      // Predicated region
      $region25: #{generator_forward.20} parent=23 // pred_check
        %p160 = pneg %p43
      $region26: #{generator_forward.20} parent=23 // pred_check_branch
        %162 = sbr.rel (%p160) target = $region28
      $region27: #{generator_forward.20} parent=23 // pred_region
        %p163 = scmp.lt.s32.totalorder %s16, 1
        %s164 = scalar_select %p163, %s16, 1
        %p165 = scmp.lt.s32.totalorder %s17, 0
        %s166 = scalar_select %p165, %s17, 0
        %s167 = smul.addr %s164, 4
        %s168 = sadd.s32 %s166, %s167
        %s169 = smul.addr %s168, 4
        %s170 = scalar_lea.vmem %s0, %s169
      $region28: #{generator_forward.20} parent=23 // pred_fallthru
        _
    $region24: #{generator_forward.20} parent=5 // pred_fallthru
      _
    %p171 = scmp.le.s32.totalorder 1, %s9
    %p172 = scmp.lt.s32.totalorder %s9, 3
    %p173 = pnand %p171, %p172
    %p174 = pneg %p173
    // Predicated region
    $region29: #{generator_forward.20} parent=5 // pred_check
      _
    $region30: #{generator_forward.20} parent=5 // pred_check_branch
      %176 = sbr.rel (%p173) target = $region32
    $region31: #{generator_forward.20} parent=5 // pred_region
      %s177 = ssub.s32 %s9, 1
      %p178 = scmp.lt.s32.totalorder %s18, 1
      %s179 = scalar_select %p178, %s18, 1
      %p180 = scmp.lt.s32.totalorder %s19, 0
      %s181 = scalar_select %p180, %s19, 0
      %s182 = smul.addr %s179, 4
      %s183 = sadd.s32 %s181, %s182
      %s184 = smul.addr %s183, 4
      %s185 = scalar_lea.vmem %s0, %s184
      %p186 = pneg %p49
      %p187 = pneg %p46
      %p188 = scmp.lt.s32.totalorder %s19, 0
      %s189 = scalar_select %p188, %s19, 0
      %s190 = scalar_lea.vmem %s1, %s189
      %p191 = pneg %p75
      %p192 = pneg %p72
      %p193 = scmp.lt.s32.totalorder %s19, 0
      %s194 = scalar_select %p193, %s19, 0
      %s195 = scalar_lea.vmem %s2, %s194
      %p196 = pneg %p101
      %p197 = pneg %p98
      %p198 = pneg %p129
      %p199 = pneg %p126
      %p200 = scmp.lt.s32.totalorder %s18, 1
      %s201 = scalar_select %p200, %s18, 1
      %p202 = scmp.lt.s32.totalorder %s19, 0
      %s203 = scalar_select %p202, %s19, 0
      %s204 = smul.addr %s201, 4
      %s205 = sadd.s32 %s203, %s204
      %s206 = smul.addr %s205, 4
      %s207 = scalar_lea.vmem %s3, %s206
      %p208 = scmp.lt.s32.totalorder %s18, 1
      %s209 = scalar_select %p208, %s18, 1
      %p210 = scmp.lt.s32.totalorder %s19, 0
      %s211 = scalar_select %p210, %s19, 0
      %s212 = smul.addr %s209, 4
      %s213 = sadd.s32 %s211, %s212
      %s214 = smul.addr %s213, 4
      %s215 = scalar_lea.vmem %s0, %s214
      %p216 = scmp.lt.s32.totalorder %s19, 0
      %s217 = scalar_select %p216, %s19, 0
      %s218 = scalar_lea.vmem %s1, %s217
      %p219 = scmp.lt.s32.totalorder %s19, 0
      %s220 = scalar_select %p219, %s19, 0
      %s221 = scalar_lea.vmem %s2, %s220
      %p222 = scmp.lt.s32.totalorder %s18, 1
      %s223 = scalar_select %p222, %s18, 1
      %p224 = scmp.lt.s32.totalorder %s19, 0
      %s225 = scalar_select %p224, %s19, 0
      %s226 = smul.addr %s223, 4
      %s227 = sadd.s32 %s225, %s226
      %s228 = smul.addr %s227, 4
      %s229 = scalar_lea.vmem %s3, %s228
      %v230 = vld [vmem:[%s215] sm:$0xf]
      %v231 = vld [vmem:[%s215 + $0x4] sm:$0xf]
      %v232 = vld [vmem:[%s215 + $0x8] sm:$0xf]
      %v233 = vld [vmem:[%s215 + $0xc] sm:$0xf]
      %v234 = vunpack.c.l.bf16 %v230
      %v235 = vunpack.c.l.bf16 %v231
      %v236 = vunpack.c.l.bf16 %v232
      %v237 = vunpack.c.l.bf16 %v233
      %v238 = vld [vmem:[%s218] sm:$0x1]
      %v239 = vld [vmem:[%s221] sm:$0x1]
      %v240 = vadd.f32 %v234, %v235
      %v241 = vadd.f32 %v240, %v236
      %v242 = vadd.f32 %v241, %v237
      %v243 = vrot.slane %v242, 4
      %v244 = vadd.f32 %v242, %v243
      %v245 = vrot.slane %v244, 2
      %v246 = vadd.f32 %v244, %v245
      %v247 = vrot.slane %v246, 1
      %v248 = vadd.f32 %v246, %v247
      %250 = vrot.lane.b32.xlu0 %v248, 112
      %v251 = vpop.permute.xlu0 %250
      %v253 = vadd.f32 %v248, %v251
      %254 = vrot.lane.b32.xlu0 %v248, 96
      %v255 = vpop.permute.xlu0 %254
      %v257 = vadd.f32 %v253, %v255
      %258 = vrot.lane.b32.xlu0 %v248, 80
      %v259 = vpop.permute.xlu0 %258
      %v261 = vadd.f32 %v257, %v259
      %262 = vrot.lane.b32.xlu0 %v248, 64
      %v263 = vpop.permute.xlu0 %262
      %v265 = vadd.f32 %v261, %v263
      %266 = vrot.lane.b32.xlu0 %v248, 48
      %v267 = vpop.permute.xlu0 %266
      %v269 = vadd.f32 %v265, %v267
      %270 = vrot.lane.b32.xlu0 %v248, 32
      %v271 = vpop.permute.xlu0 %270
      %v273 = vadd.f32 %v269, %v271
      %274 = vrot.lane.b32.xlu0 %v248, 16
      %v275 = vpop.permute.xlu0 %274
      %v277 = vadd.f32 %v273, %v275
      %v278 = vmul.f32 %v234, %v234
      %v279 = vmul.f32 %v235, %v235
      %v280 = vmul.f32 %v236, %v236
      %v281 = vmul.f32 %v237, %v237
      %v282 = vadd.f32 %v278, %v279
      %v283 = vadd.f32 %v282, %v280
      %v284 = vadd.f32 %v283, %v281
      %v285 = vrot.slane %v284, 4
      %v286 = vadd.f32 %v284, %v285
      %v287 = vrot.slane %v286, 2
      %v288 = vadd.f32 %v286, %v287
      %v289 = vrot.slane %v288, 1
      %v290 = vadd.f32 %v288, %v289
      %292 = vrot.lane.b32.xlu0 %v290, 112
      %v293 = vpop.permute.xlu0 %292
      %v295 = vadd.f32 %v290, %v293
      %296 = vrot.lane.b32.xlu0 %v290, 96
      %v297 = vpop.permute.xlu0 %296
      %v299 = vadd.f32 %v295, %v297
      %300 = vrot.lane.b32.xlu0 %v290, 80
      %v301 = vpop.permute.xlu0 %300
      %v303 = vadd.f32 %v299, %v301
      %304 = vrot.lane.b32.xlu0 %v290, 64
      %v305 = vpop.permute.xlu0 %304
      %v307 = vadd.f32 %v303, %v305
      %308 = vrot.lane.b32.xlu0 %v290, 48
      %v309 = vpop.permute.xlu0 %308
      %v311 = vadd.f32 %v307, %v309
      %312 = vrot.lane.b32.xlu0 %v290, 32
      %v313 = vpop.permute.xlu0 %312
      %v315 = vadd.f32 %v311, %v313
      %316 = vrot.lane.b32.xlu0 %v290, 16
      %v317 = vpop.permute.xlu0 %316
      %v319 = vadd.f32 %v315, %v317
      %v320 = vmul.f32 %v277, 0.00390625
      %v321 = vmul.f32 %v319, 0.00390625
      %v322 = vmul.f32 %v320, %v320
      %v323 = vsub.f32 %v321, %v322
      %v324 = vadd.f32 %v323, 1e-05
      %v325 = vrsqrt.pop %v324
      %v326 = vmul.f32 %v238, %v325
      %v327 = vmul.f32 %v320, %v326
      %v328 = vsub.f32 %v239, %v327
      %v330 = vlaneseq
      %v331 = vshrl.u32 %v330, 7
      %v332 = vsub.s32 0, %v331
      %v333 = vrot.slane %v326, %v332
      %334 = vrot.lane.b32.xlu0 %v333, 16
      %v335 = vpop.permute.xlu0 %334
      %337 = vrot.lane.b32.xlu0 %v333, 32
      %v338 = vpop.permute.xlu0 %337
      %340 = vrot.lane.b32.xlu0 %v333, 48
      %v341 = vpop.permute.xlu0 %340
      %343 = vrot.lane.b32.xlu0 %v333, 64
      %v344 = vpop.permute.xlu0 %343
      %346 = vrot.lane.b32.xlu0 %v333, 80
      %v347 = vpop.permute.xlu0 %346
      %349 = vrot.lane.b32.xlu0 %v333, 96
      %v350 = vpop.permute.xlu0 %349
      %352 = vrot.lane.b32.xlu0 %v333, 112
      %v353 = vpop.permute.xlu0 %352
      %vm355 = vcmask 130048
      %v356 = vsel %vm355, %v326, %v335
      %vm357 = vcmask 261120
      %v358 = vsel %vm357, %v356, %v338
      %vm359 = vcmask 392192
      %v360 = vsel %vm359, %v358, %v341
      %vm361 = vcmask 523264
      %v362 = vsel %vm361, %v360, %v344
      %vm363 = vcmask 654336
      %v364 = vsel %vm363, %v362, %v347
      %vm365 = vcmask 785408
      %v366 = vsel %vm365, %v364, %v350
      %vm367 = vcmask 916480
      %v368 = vsel %vm367, %v366, %v353
      %v370 = vlaneseq
      %v371 = vshrl.u32 %v370, 7
      %v372 = vsub.s32 0, %v371
      %v373 = vrot.slane %v328, %v372
      %374 = vrot.lane.b32.xlu0 %v373, 16
      %v375 = vpop.permute.xlu0 %374
      %377 = vrot.lane.b32.xlu0 %v373, 32
      %v378 = vpop.permute.xlu0 %377
      %380 = vrot.lane.b32.xlu0 %v373, 48
      %v381 = vpop.permute.xlu0 %380
      %383 = vrot.lane.b32.xlu0 %v373, 64
      %v384 = vpop.permute.xlu0 %383
      %386 = vrot.lane.b32.xlu0 %v373, 80
      %v387 = vpop.permute.xlu0 %386
      %389 = vrot.lane.b32.xlu0 %v373, 96
      %v390 = vpop.permute.xlu0 %389
      %392 = vrot.lane.b32.xlu0 %v373, 112
      %v393 = vpop.permute.xlu0 %392
      %v395 = vsel %vm355, %v328, %v375
      %v396 = vsel %vm357, %v395, %v378
      %v397 = vsel %vm359, %v396, %v381
      %v398 = vsel %vm361, %v397, %v384
      %v399 = vsel %vm363, %v398, %v387
      %v400 = vsel %vm365, %v399, %v390
      %v401 = vsel %vm367, %v400, %v393
      %v402 = vlaneseq
      %v403 = vshrl.u32 %v402, 7
      %v404 = vsub.s32 0, %v403
      %v405 = vrot.slane %v368, %v404
      %v406 = vmul.f32 %v234, %v405
      %v407 = vmul.f32 %v235, %v405
      %v408 = vmul.f32 %v236, %v405
      %v409 = vmul.f32 %v237, %v405
      %v410 = vlaneseq
      %v411 = vshrl.u32 %v410, 7
      %v412 = vsub.s32 0, %v411
      %v413 = vrot.slane %v401, %v412
      %v414 = vadd.f32 %v406, %v413
      %v415 = vadd.f32 %v407, %v413
      %v416 = vadd.f32 %v408, %v413
      %v417 = vadd.f32 %v409, %v413
      %v418 = vmax.f32 %v414, 0.0
      %v419 = vmax.f32 %v415, 0.0
      %v420 = vmax.f32 %v416, 0.0
      %v421 = vmax.f32 %v417, 0.0
      %v422 = vpack.c.bf16 %v419, %v418
      %v423 = vpack.c.bf16 %v421, %v420
      %v426 = vunpack.c.l.b16 %v422
      %v427 = vunpack.c.h.b16 %v422
      %v428 = vunpack.c.l.b16 %v423
      %v429 = vunpack.c.h.b16 %v423
      %v430 = vpack.c.b16 %v426, %v426
      %v431 = vpack.c.b16 %v427, %v427
      %v432 = vpack.c.b16 %v428, %v428
      %v433 = vpack.c.b16 %v429, %v429
      %438 = vst [vmem:[%s229] sm:$0xf] %v430
      %439 = vst [vmem:[%s229 + $0x4] sm:$0xf] %v431
      %440 = vst [vmem:[%s229 + $0x8] sm:$0xf] %v432
      %441 = vst [vmem:[%s229 + $0xc] sm:$0xf] %v433
      %p442 = scmp.lt.s32.totalorder %s18, 1
      %s443 = scalar_select %p442, %s18, 1
      %p444 = scmp.lt.s32.totalorder %s19, 0
      %s445 = scalar_select %p444, %s19, 0
      %s446 = smul.addr %s443, 4
      %s447 = sadd.s32 %s445, %s446
      %s448 = smul.addr %s447, 4
      %s449 = scalar_lea.vmem %s3, %s448
      // Predicated region
      $region33: #{generator_forward.20} parent=31 // pred_check
        %p450 = pneg %p126
      $region34: #{generator_forward.20} parent=31 // pred_check_branch
        %452 = sbr.rel (%p450) target = $region36
      $region35: #{generator_forward.20} parent=31 // pred_region
        _
      $region36: #{generator_forward.20} parent=31 // pred_fallthru
        _
    $region32: #{generator_forward.20} parent=5 // pred_fallthru
      _
    %p453 = scmp.le.s32.totalorder 2, %s9
    // Predicated region
    $region37: #{generator_forward.20} parent=5 // pred_check
      %p454 = pneg %p453
    $region38: #{generator_forward.20} parent=5 // pred_check_branch
      %456 = sbr.rel (%p454) target = $region40
    $region39: #{generator_forward.20} parent=5 // pred_region
      %s457 = ssub.s32 %s9, 2
      // Predicated region
      $region41: #{generator_forward.20} parent=39 // pred_check
        %p458 = pneg %p132
      $region42: #{generator_forward.20} parent=39 // pred_check_branch
        %460 = sbr.rel (%p458) target = $region44
      $region43: #{generator_forward.20} parent=39 // pred_region
        %p461 = scmp.lt.s32.totalorder %s20, 1
        %s462 = scalar_select %p461, %s20, 1
        %p463 = scmp.lt.s32.totalorder %s21, 0
        %s464 = scalar_select %p463, %s21, 0
        %s465 = smul.addr %s462, 4
        %s466 = sadd.s32 %s464, %s465
        %s467 = smul.addr %s466, 4
        %s468 = scalar_lea.vmem %s3, %s467
      $region44: #{generator_forward.20} parent=39 // pred_fallthru
        _
    $region40: #{generator_forward.20} parent=5 // pred_fallthru
      _
  $region6: #{generator_forward.20} parent=0 // loop_footer
    %s13 = sadd.s32 1, %s9
  $region7: #{generator_forward.20} parent=0 // loop_footer_branch
    %8 = sbr.rel target = $region3
  $region8: #{generator_forward.20} parent=0 // loop_exit
    _

// kernel: generator_forward.22
$region0: #{generator_forward.22}
  #allocation0 [shape = 'u32[]', space=smem, size = 0x4, offset = 0x4, fixed_abs, tag = 'smem constant byte address 0x4 - core index']
  #allocation1 [shape = 'u32[144,128]{1,0:T(1,128)}', space=vmem, size = 0x12000, scoped, tag = 'internal scratch']
  %s0 = inlined_call_operand.vmem [shape: bf16[2,16,128], index: 0, kind: input, shape index: {}]
  %s1 = inlined_call_operand.vmem [shape: f32[1,32], index: 1, kind: input, shape index: {}]
  %s2 = inlined_call_operand.vmem [shape: f32[1,32], index: 2, kind: input, shape index: {}]
  %s3 = inlined_call_operand.vmem [shape: bf16[2,16,128], index: 3, kind: output, shape index: {}]
  %s4 = sld [smem:[#allocation0]]
  $region45: #{generator_forward.22} parent=0
    _
  %s6 = ssub.s32 1, %s4
  %s7 = scalar_select 0, %s6, %s4
  loop: start=0, step=1, limit=4
  $region2: #{generator_forward.22} parent=0 // loop_pre_header
    _
  $region3: #{generator_forward.22} parent=0 // loop_header
    %s9 = sphi 0, %s13
    %p10 = scmp.ge.s32.totalorder %s9, 4
    %s16 = sphi 0, %s28
    %s17 = sphi 0, %s24
    %s18 = sphi 0, %s16
    %s19 = sphi 0, %s17
    %s20 = sphi 0, %s18
    %s21 = sphi 0, %s19
    %s33 = sphi 0, %s35
    %s36 = sphi 0, %s33
    %s37 = sphi 0, %s36
    %s53 = sphi 0, %s37
    %s59 = sphi 0, %s61
    %s62 = sphi 0, %s59
    %s63 = sphi 0, %s62
    %s79 = sphi 0, %s63
    %s85 = sphi 0, %s87
    %s88 = sphi 0, %s85
    %s89 = sphi 0, %s88
    %s105 = sphi 0, %s89
    %s113 = sphi 0, %s115
    %s116 = sphi 0, %s113
    %s117 = sphi 0, %s116
    %s133 = sphi 0, %s117
  $region4: #{generator_forward.22} parent=0 // loop_header_branch
    %12 = sbr.rel (%p10) target = $region8
  $region5: #{generator_forward.22} parent=0 // loop_body
    %s14 = ssub.s32 %s9, 1
    %s15 = ssub.s32 %s9, 2
    %s22 = sadd.s32 1, %s17
    %p23 = scmp.ge.s32.totalorder %s22, 1
    %s24 = scalar_select %p23, 0, %s22
    %s25 = sadd.s32 1, %s16
    %s26 = scalar_select %p23, %s25, %s16
    %p27 = scmp.ge.s32.totalorder %s26, 2
    %s28 = scalar_select %p27, 0, %s26
    %s29 = ssub.s32 %s16, %s28
    %s30 = ssub.s32 %s17, %s24
    %s31 = sor.u32 %s29, %s30
    %p32 = scmp.eq.s32.totalorder %s31, 0
    %s34 = sadd.s32 %s33, 1
    %s35 = scalar_select %p32, %s33, %s34
    %p38 = pneg %p32
    %p39 = scmp.eq.s32.totalorder %s9, 1
    %p40 = por %p38, %p39
    %p41 = scmp.ne.s32.totalorder %s33, %s36
    %p42 = scmp.eq.s32.totalorder %s9, 0
    %p43 = por %p41, %p42
    %p44 = scmp.ne.s32.totalorder %s33, %s36
    %p45 = scmp.eq.s32.totalorder %s14, 1
    %p46 = por %p44, %p45
    %p47 = scmp.ne.s32.totalorder %s36, %s37
    %p48 = scmp.eq.s32.totalorder %s14, 0
    %p49 = por %p47, %p48
    %p50 = scmp.ne.s32.totalorder %s36, %s37
    %p51 = scmp.eq.s32.totalorder %s15, 1
    %p52 = por %p50, %p51
    %p54 = scmp.ne.s32.totalorder %s37, %s53
    %p55 = scmp.eq.s32.totalorder %s15, 0
    %p56 = por %p54, %p55
    %s57 = ssub.s32 %s17, %s24
    %p58 = scmp.eq.s32.totalorder %s57, 0
    %s60 = sadd.s32 %s59, 1
    %s61 = scalar_select %p58, %s59, %s60
    %p64 = pneg %p58
    %p65 = scmp.eq.s32.totalorder %s9, 1
    %p66 = por %p64, %p65
    %p67 = scmp.ne.s32.totalorder %s59, %s62
    %p68 = scmp.eq.s32.totalorder %s9, 0
    %p69 = por %p67, %p68
    %p70 = scmp.ne.s32.totalorder %s59, %s62
    %p71 = scmp.eq.s32.totalorder %s14, 1
    %p72 = por %p70, %p71
    %p73 = scmp.ne.s32.totalorder %s62, %s63
    %p74 = scmp.eq.s32.totalorder %s14, 0
    %p75 = por %p73, %p74
    %p76 = scmp.ne.s32.totalorder %s62, %s63
    %p77 = scmp.eq.s32.totalorder %s15, 1
    %p78 = por %p76, %p77
    %p80 = scmp.ne.s32.totalorder %s63, %s79
    %p81 = scmp.eq.s32.totalorder %s15, 0
    %p82 = por %p80, %p81
    %s83 = ssub.s32 %s17, %s24
    %p84 = scmp.eq.s32.totalorder %s83, 0
    %s86 = sadd.s32 %s85, 1
    %s87 = scalar_select %p84, %s85, %s86
    %p90 = pneg %p84
    %p91 = scmp.eq.s32.totalorder %s9, 1
    %p92 = por %p90, %p91
    %p93 = scmp.ne.s32.totalorder %s85, %s88
    %p94 = scmp.eq.s32.totalorder %s9, 0
    %p95 = por %p93, %p94
    %p96 = scmp.ne.s32.totalorder %s85, %s88
    %p97 = scmp.eq.s32.totalorder %s14, 1
    %p98 = por %p96, %p97
    %p99 = scmp.ne.s32.totalorder %s88, %s89
    %p100 = scmp.eq.s32.totalorder %s14, 0
    %p101 = por %p99, %p100
    %p102 = scmp.ne.s32.totalorder %s88, %s89
    %p103 = scmp.eq.s32.totalorder %s15, 1
    %p104 = por %p102, %p103
    %p106 = scmp.ne.s32.totalorder %s89, %s105
    %p107 = scmp.eq.s32.totalorder %s15, 0
    %p108 = por %p106, %p107
    %s109 = ssub.s32 %s16, %s28
    %s110 = ssub.s32 %s17, %s24
    %s111 = sor.u32 %s109, %s110
    %p112 = scmp.eq.s32.totalorder %s111, 0
    %s114 = sadd.s32 %s113, 1
    %s115 = scalar_select %p112, %s113, %s114
    %p118 = pneg %p112
    %p119 = scmp.eq.s32.totalorder %s9, 1
    %p120 = por %p118, %p119
    %p121 = scmp.ne.s32.totalorder %s113, %s116
    %p122 = scmp.eq.s32.totalorder %s9, 0
    %p123 = por %p121, %p122
    %p124 = scmp.ne.s32.totalorder %s113, %s116
    %p125 = scmp.eq.s32.totalorder %s14, 1
    %p126 = por %p124, %p125
    %p127 = scmp.ne.s32.totalorder %s116, %s117
    %p128 = scmp.eq.s32.totalorder %s14, 0
    %p129 = por %p127, %p128
    %p130 = scmp.ne.s32.totalorder %s116, %s117
    %p131 = scmp.eq.s32.totalorder %s15, 1
    %p132 = por %p130, %p131
    %p134 = scmp.ne.s32.totalorder %s117, %s133
    %p135 = scmp.eq.s32.totalorder %s15, 0
    %p136 = por %p134, %p135
    %p137 = scmp.le.s32.totalorder 1, %s9
    %p138 = scmp.lt.s32.totalorder %s9, 3
    %p139 = pnand %p137, %p138
    %p140 = pneg %p139
    // Predicated region
    $region9: #{generator_forward.22} parent=5 // pred_check
      _
    $region10: #{generator_forward.22} parent=5 // pred_check_branch
      %142 = sbr.rel (%p139) target = $region12
    $region11: #{generator_forward.22} parent=5 // pred_region
      %s143 = ssub.s32 %s9, 1
      // Predicated region
      $region13: #{generator_forward.22} parent=11 // pred_check
        %p144 = pneg %p75
      $region14: #{generator_forward.22} parent=11 // pred_check_branch
        %146 = sbr.rel (%p144) target = $region16
      $region15: #{generator_forward.22} parent=11 // pred_region
        %p147 = scmp.lt.s32.totalorder %s19, 0
        %s148 = scalar_select %p147, %s19, 0
        %s149 = scalar_lea.vmem %s1, %s148
      $region16: #{generator_forward.22} parent=11 // pred_fallthru
        _
      // Predicated region
      $region17: #{generator_forward.22} parent=11 // pred_check
        %p150 = pneg %p101
      $region18: #{generator_forward.22} parent=11 // pred_check_branch
        %152 = sbr.rel (%p150) target = $region20
      $region19: #{generator_forward.22} parent=11 // pred_region
        %p153 = scmp.lt.s32.totalorder %s19, 0
        %s154 = scalar_select %p153, %s19, 0
        %s155 = scalar_lea.vmem %s2, %s154
      $region20: #{generator_forward.22} parent=11 // pred_fallthru
        _
    $region12: #{generator_forward.22} parent=5 // pred_fallthru
      _
    %p156 = scmp.lt.s32.totalorder %s9, 2
    // Predicated region
    $region21: #{generator_forward.22} parent=5 // pred_check
      %p157 = pneg %p156
    $region22: #{generator_forward.22} parent=5 // pred_check_branch
      %159 = sbr.rel (%p157) target = $region24
    $region23: #{generator_forward.22} parent=5 // pred_region
      // Predicated region
      $region25: #{generator_forward.22} parent=23 // pred_check
        %p160 = pneg %p43
      $region26: #{generator_forward.22} parent=23 // pred_check_branch
        %162 = sbr.rel (%p160) target = $region28
      $region27: #{generator_forward.22} parent=23 // pred_region
        %p163 = scmp.lt.s32.totalorder %s16, 1
        %s164 = scalar_select %p163, %s16, 1
        %p165 = scmp.lt.s32.totalorder %s17, 0
        %s166 = scalar_select %p165, %s17, 0
        %s167 = smul.addr %s164, 2
        %s168 = sadd.s32 %s166, %s167
        %s169 = smul.addr %s168, 4
        %s170 = scalar_lea.vmem %s0, %s169
      $region28: #{generator_forward.22} parent=23 // pred_fallthru
        _
    $region24: #{generator_forward.22} parent=5 // pred_fallthru
      _
    %p171 = scmp.le.s32.totalorder 1, %s9
    %p172 = scmp.lt.s32.totalorder %s9, 3
    %p173 = pnand %p171, %p172
    %p174 = pneg %p173
    // Predicated region
    $region29: #{generator_forward.22} parent=5 // pred_check
      _
    $region30: #{generator_forward.22} parent=5 // pred_check_branch
      %176 = sbr.rel (%p173) target = $region32
    $region31: #{generator_forward.22} parent=5 // pred_region
      %s177 = ssub.s32 %s9, 1
      %p178 = scmp.lt.s32.totalorder %s18, 1
      %s179 = scalar_select %p178, %s18, 1
      %p180 = scmp.lt.s32.totalorder %s19, 0
      %s181 = scalar_select %p180, %s19, 0
      %s182 = smul.addr %s179, 2
      %s183 = sadd.s32 %s181, %s182
      %s184 = smul.addr %s183, 4
      %s185 = scalar_lea.vmem %s0, %s184
      %p186 = pneg %p49
      %p187 = pneg %p46
      %p188 = scmp.lt.s32.totalorder %s19, 0
      %s189 = scalar_select %p188, %s19, 0
      %s190 = scalar_lea.vmem %s1, %s189
      %p191 = pneg %p75
      %p192 = pneg %p72
      %p193 = scmp.lt.s32.totalorder %s19, 0
      %s194 = scalar_select %p193, %s19, 0
      %s195 = scalar_lea.vmem %s2, %s194
      %p196 = pneg %p101
      %p197 = pneg %p98
      %p198 = pneg %p129
      %p199 = pneg %p126
      %p200 = scmp.lt.s32.totalorder %s18, 1
      %s201 = scalar_select %p200, %s18, 1
      %p202 = scmp.lt.s32.totalorder %s19, 0
      %s203 = scalar_select %p202, %s19, 0
      %s204 = smul.addr %s201, 2
      %s205 = sadd.s32 %s203, %s204
      %s206 = smul.addr %s205, 4
      %s207 = scalar_lea.vmem %s3, %s206
      %p208 = scmp.lt.s32.totalorder %s18, 1
      %s209 = scalar_select %p208, %s18, 1
      %p210 = scmp.lt.s32.totalorder %s19, 0
      %s211 = scalar_select %p210, %s19, 0
      %s212 = smul.addr %s209, 2
      %s213 = sadd.s32 %s211, %s212
      %s214 = smul.addr %s213, 4
      %s215 = scalar_lea.vmem %s0, %s214
      %p216 = scmp.lt.s32.totalorder %s19, 0
      %s217 = scalar_select %p216, %s19, 0
      %s218 = scalar_lea.vmem %s1, %s217
      %p219 = scmp.lt.s32.totalorder %s19, 0
      %s220 = scalar_select %p219, %s19, 0
      %s221 = scalar_lea.vmem %s2, %s220
      %p222 = scmp.lt.s32.totalorder %s18, 1
      %s223 = scalar_select %p222, %s18, 1
      %p224 = scmp.lt.s32.totalorder %s19, 0
      %s225 = scalar_select %p224, %s19, 0
      %s226 = smul.addr %s223, 2
      %s227 = sadd.s32 %s225, %s226
      %s228 = smul.addr %s227, 4
      %s229 = scalar_lea.vmem %s3, %s228
      %v230 = vld [vmem:[%s215] sm:$0xf]
      %v231 = vld [vmem:[%s215 + $0x4] sm:$0xf]
      %v232 = vunpack.c.l.bf16 %v230
      %v233 = vunpack.c.l.bf16 %v231
      %v234 = vld [vmem:[%s218] sm:$0x1]
      %v235 = vld [vmem:[%s221] sm:$0x1]
      %v236 = vadd.f32 %v232, %v233
      %v237 = vrot.slane %v236, 4
      %v238 = vadd.f32 %v236, %v237
      %v239 = vrot.slane %v238, 2
      %v240 = vadd.f32 %v238, %v239
      %v241 = vrot.slane %v240, 1
      %v242 = vadd.f32 %v240, %v241
      %244 = vrot.lane.b32.xlu0 %v242, 96
      %v245 = vpop.permute.xlu0 %244
      %v247 = vadd.f32 %v242, %v245
      %248 = vrot.lane.b32.xlu0 %v242, 64
      %v249 = vpop.permute.xlu0 %248
      %v251 = vadd.f32 %v247, %v249
      %252 = vrot.lane.b32.xlu0 %v242, 32
      %v253 = vpop.permute.xlu0 %252
      %v255 = vadd.f32 %v251, %v253
      %v256 = vmul.f32 %v232, %v232
      %v257 = vmul.f32 %v233, %v233
      %v258 = vadd.f32 %v256, %v257
      %v259 = vrot.slane %v258, 4
      %v260 = vadd.f32 %v258, %v259
      %v261 = vrot.slane %v260, 2
      %v262 = vadd.f32 %v260, %v261
      %v263 = vrot.slane %v262, 1
      %v264 = vadd.f32 %v262, %v263
      %266 = vrot.lane.b32.xlu0 %v264, 96
      %v267 = vpop.permute.xlu0 %266
      %v269 = vadd.f32 %v264, %v267
      %270 = vrot.lane.b32.xlu0 %v264, 64
      %v271 = vpop.permute.xlu0 %270
      %v273 = vadd.f32 %v269, %v271
      %274 = vrot.lane.b32.xlu0 %v264, 32
      %v275 = vpop.permute.xlu0 %274
      %v277 = vadd.f32 %v273, %v275
      %v278 = vmul.f32 %v255, 0.015625
      %v279 = vmul.f32 %v277, 0.015625
      %v280 = vmul.f32 %v278, %v278
      %v281 = vsub.f32 %v279, %v280
      %v282 = vadd.f32 %v281, 1e-05
      %v283 = vrsqrt.pop %v282
      %v284 = vmul.f32 %v234, %v283
      %v285 = vmul.f32 %v278, %v284
      %v286 = vsub.f32 %v235, %v285
      %v288 = vlaneseq
      %v289 = vshrl.u32 %v288, 7
      %v290 = vsub.s32 0, %v289
      %v291 = vrot.slane %v284, %v290
      %292 = vrot.lane.b32.xlu0 %v291, 32
      %v293 = vpop.permute.xlu0 %292
      %295 = vrot.lane.b32.xlu0 %v291, 64
      %v296 = vpop.permute.xlu0 %295
      %298 = vrot.lane.b32.xlu0 %v291, 96
      %v299 = vpop.permute.xlu0 %298
      %vm301 = vcmask 261120
      %v302 = vsel %vm301, %v284, %v293
      %vm303 = vcmask 523264
      %v304 = vsel %vm303, %v302, %v296
      %vm305 = vcmask 785408
      %v306 = vsel %vm305, %v304, %v299
      %v308 = vlaneseq
      %v309 = vshrl.u32 %v308, 7
      %v310 = vsub.s32 0, %v309
      %v311 = vrot.slane %v286, %v310
      %312 = vrot.lane.b32.xlu0 %v311, 32
      %v313 = vpop.permute.xlu0 %312
      %315 = vrot.lane.b32.xlu0 %v311, 64
      %v316 = vpop.permute.xlu0 %315
      %318 = vrot.lane.b32.xlu0 %v311, 96
      %v319 = vpop.permute.xlu0 %318
      %v321 = vsel %vm301, %v286, %v313
      %v322 = vsel %vm303, %v321, %v316
      %v323 = vsel %vm305, %v322, %v319
      %v324 = vlaneseq
      %v325 = vshrl.u32 %v324, 7
      %v326 = vsub.s32 0, %v325
      %v327 = vrot.slane %v306, %v326
      %v328 = vmul.f32 %v232, %v327
      %v329 = vmul.f32 %v233, %v327
      %v330 = vlaneseq
      %v331 = vshrl.u32 %v330, 7
      %v332 = vsub.s32 0, %v331
      %v333 = vrot.slane %v323, %v332
      %v334 = vadd.f32 %v328, %v333
      %v335 = vadd.f32 %v329, %v333
      %v336 = vmax.f32 %v334, 0.0
      %v337 = vmax.f32 %v335, 0.0
      %v338 = vpack.c.bf16 %v337, %v336
      %v340 = vunpack.c.l.b16 %v338
      %v341 = vunpack.c.h.b16 %v338
      %v342 = vpack.c.b16 %v340, %v340
      %v343 = vpack.c.b16 %v341, %v341
      %346 = vst [vmem:[%s229] sm:$0xf] %v342
      %347 = vst [vmem:[%s229 + $0x4] sm:$0xf] %v343
      %p348 = scmp.lt.s32.totalorder %s18, 1
      %s349 = scalar_select %p348, %s18, 1
      %p350 = scmp.lt.s32.totalorder %s19, 0
      %s351 = scalar_select %p350, %s19, 0
      %s352 = smul.addr %s349, 2
      %s353 = sadd.s32 %s351, %s352
      %s354 = smul.addr %s353, 4
      %s355 = scalar_lea.vmem %s3, %s354
      // Predicated region
      $region33: #{generator_forward.22} parent=31 // pred_check
        %p356 = pneg %p126
      $region34: #{generator_forward.22} parent=31 // pred_check_branch
        %358 = sbr.rel (%p356) target = $region36
      $region35: #{generator_forward.22} parent=31 // pred_region
        _
      $region36: #{generator_forward.22} parent=31 // pred_fallthru
        _
    $region32: #{generator_forward.22} parent=5 // pred_fallthru
      _
    %p359 = scmp.le.s32.totalorder 2, %s9
    // Predicated region
    $region37: #{generator_forward.22} parent=5 // pred_check
      %p360 = pneg %p359
    $region38: #{generator_forward.22} parent=5 // pred_check_branch
      %362 = sbr.rel (%p360) target = $region40
    $region39: #{generator_forward.22} parent=5 // pred_region
      %s363 = ssub.s32 %s9, 2
      // Predicated region
      $region41: #{generator_forward.22} parent=39 // pred_check
        %p364 = pneg %p132
      $region42: #{generator_forward.22} parent=39 // pred_check_branch
        %366 = sbr.rel (%p364) target = $region44
      $region43: #{generator_forward.22} parent=39 // pred_region
        %p367 = scmp.lt.s32.totalorder %s20, 1
        %s368 = scalar_select %p367, %s20, 1
        %p369 = scmp.lt.s32.totalorder %s21, 0
        %s370 = scalar_select %p369, %s21, 0
        %s371 = smul.addr %s368, 2
        %s372 = sadd.s32 %s370, %s371
        %s373 = smul.addr %s372, 4
        %s374 = scalar_lea.vmem %s3, %s373
      $region44: #{generator_forward.22} parent=39 // pred_fallthru
        _
    $region40: #{generator_forward.22} parent=5 // pred_fallthru
      _
  $region6: #{generator_forward.22} parent=0 // loop_footer
    %s13 = sadd.s32 1, %s9
  $region7: #{generator_forward.22} parent=0 // loop_footer_branch
    %8 = sbr.rel target = $region3
  $region8: #{generator_forward.22} parent=0 // loop_exit
    _

// kernel: generator_forward.21
$region0: #{generator_forward.21}
  #allocation0 [shape = 'u32[]', space=smem, size = 0x4, offset = 0x4, fixed_abs, tag = 'smem constant byte address 0x4 - core index']
  #allocation1 [shape = 'u32[144,128]{1,0:T(1,128)}', space=vmem, size = 0x12000, scoped, tag = 'internal scratch']
  #allocation2 [shape = 'f32[128,128]{1,0:T(8,128)}', space=vmem, size = 0x10000, scoped, tag = 'scratch operand']
  %s0 = inlined_call_operand.vmem [shape: bf16[128,256], index: 0, kind: input, shape index: {}]
  %s1 = inlined_call_operand.vmem [shape: bf16[256,128], index: 1, kind: input, shape index: {}]
  %s2 = inlined_call_operand.vmem [shape: bf16[128,128], index: 2, kind: output, shape index: {}]
  %s3 = sld [smem:[#allocation0]]
  $region26: #{generator_forward.21} parent=0
    _
  %s5 = ssub.s32 1, %s3
  %s6 = scalar_select 0, %s5, %s3
  // Predicated region
  $region2: #{generator_forward.21} parent=0 // pred_check
    _
  $region3: #{generator_forward.21} parent=0 // pred_check_branch
    %8 = sbr.rel (0) target = $region5
  $region4: #{generator_forward.21} parent=0 // pred_region
    _
  $region5: #{generator_forward.21} parent=0 // pred_fallthru
    _
  // Predicated region
  $region6: #{generator_forward.21} parent=0 // pred_check
    _
  $region7: #{generator_forward.21} parent=0 // pred_check_branch
    %10 = sbr.rel (0) target = $region9
  $region8: #{generator_forward.21} parent=0 // pred_region
    _
  $region9: #{generator_forward.21} parent=0 // pred_fallthru
    _
  %p12 = scmp.eq.s32.totalorder 0, 0
  // Predicated region
  $region10: #{generator_forward.21} parent=0 // pred_check
    %p13 = pneg %p12
  $region11: #{generator_forward.21} parent=0 // pred_check_branch
    %15 = sbr.rel (%p13) target = $region13
  $region12: #{generator_forward.21} parent=0 // pred_region
    %16 = vst [vmem:[#allocation2] sm:$0xff] 0.0
    %17 = vst [vmem:[#allocation2 + $0x8] sm:$0xff] 0.0
    %18 = vst [vmem:[#allocation2 + $0x10] sm:$0xff] 0.0
    %19 = vst [vmem:[#allocation2 + $0x18] sm:$0xff] 0.0
    %20 = vst [vmem:[#allocation2 + $0x20] sm:$0xff] 0.0
    %21 = vst [vmem:[#allocation2 + $0x28] sm:$0xff] 0.0
    %22 = vst [vmem:[#allocation2 + $0x30] sm:$0xff] 0.0
    %23 = vst [vmem:[#allocation2 + $0x38] sm:$0xff] 0.0
    %24 = vst [vmem:[#allocation2 + $0x40] sm:$0xff] 0.0
    %25 = vst [vmem:[#allocation2 + $0x48] sm:$0xff] 0.0
    %26 = vst [vmem:[#allocation2 + $0x50] sm:$0xff] 0.0
    %27 = vst [vmem:[#allocation2 + $0x58] sm:$0xff] 0.0
    %28 = vst [vmem:[#allocation2 + $0x60] sm:$0xff] 0.0
    %29 = vst [vmem:[#allocation2 + $0x68] sm:$0xff] 0.0
    %30 = vst [vmem:[#allocation2 + $0x70] sm:$0xff] 0.0
    %31 = vst [vmem:[#allocation2 + $0x78] sm:$0xff] 0.0
  $region13: #{generator_forward.21} parent=0 // pred_fallthru
    _
  %v32 = vld [vmem:[#allocation2] sm:$0xff]
  %v33 = vld [vmem:[#allocation2 + $0x8] sm:$0xff]
  %v34 = vld [vmem:[#allocation2 + $0x10] sm:$0xff]
  %v35 = vld [vmem:[#allocation2 + $0x18] sm:$0xff]
  %v36 = vld [vmem:[#allocation2 + $0x20] sm:$0xff]
  %v37 = vld [vmem:[#allocation2 + $0x28] sm:$0xff]
  %v38 = vld [vmem:[#allocation2 + $0x30] sm:$0xff]
  %v39 = vld [vmem:[#allocation2 + $0x38] sm:$0xff]
  %v40 = vld [vmem:[#allocation2 + $0x40] sm:$0xff]
  %v41 = vld [vmem:[#allocation2 + $0x48] sm:$0xff]
  %v42 = vld [vmem:[#allocation2 + $0x50] sm:$0xff]
  %v43 = vld [vmem:[#allocation2 + $0x58] sm:$0xff]
  %v44 = vld [vmem:[#allocation2 + $0x60] sm:$0xff]
  %v45 = vld [vmem:[#allocation2 + $0x68] sm:$0xff]
  %v46 = vld [vmem:[#allocation2 + $0x70] sm:$0xff]
  %v47 = vld [vmem:[#allocation2 + $0x78] sm:$0xff]
  %v48 = vld [vmem:[%s0] sm:$0xff]
  %v49 = vld [vmem:[%s0 + $0x8] sm:$0xff]
  %v50 = vld [vmem:[%s0 + $0x10] sm:$0xff]
  %v51 = vld [vmem:[%s0 + $0x18] sm:$0xff]
  %v52 = vld [vmem:[%s0 + $0x20] sm:$0xff]
  %v53 = vld [vmem:[%s0 + $0x28] sm:$0xff]
  %v54 = vld [vmem:[%s0 + $0x30] sm:$0xff]
  %v55 = vld [vmem:[%s0 + $0x38] sm:$0xff]
  %v56 = vld [vmem:[%s0 + $0x40] sm:$0xff]
  %v57 = vld [vmem:[%s0 + $0x48] sm:$0xff]
  %v58 = vld [vmem:[%s0 + $0x50] sm:$0xff]
  %v59 = vld [vmem:[%s0 + $0x58] sm:$0xff]
  %v60 = vld [vmem:[%s0 + $0x60] sm:$0xff]
  %v61 = vld [vmem:[%s0 + $0x68] sm:$0xff]
  %v62 = vld [vmem:[%s0 + $0x70] sm:$0xff]
  %v63 = vld [vmem:[%s0 + $0x78] sm:$0xff]
  %v64 = vld [vmem:[%s1] sm:$0xf]
  %v65 = vld [vmem:[%s1 + $0x4] sm:$0xf]
  %v66 = vld [vmem:[%s1 + $0x8] sm:$0xf]
  %v67 = vld [vmem:[%s1 + $0xc] sm:$0xf]
  %v68 = vld [vmem:[%s1 + $0x10] sm:$0xf]
  %v69 = vld [vmem:[%s1 + $0x14] sm:$0xf]
  %v70 = vld [vmem:[%s1 + $0x18] sm:$0xf]
  %v71 = vld [vmem:[%s1 + $0x1c] sm:$0xf]
  %v72 = vld [vmem:[%s1 + $0x20] sm:$0xf]
  %v73 = vld [vmem:[%s1 + $0x24] sm:$0xf]
  %v74 = vld [vmem:[%s1 + $0x28] sm:$0xf]
  %v75 = vld [vmem:[%s1 + $0x2c] sm:$0xf]
  %v76 = vld [vmem:[%s1 + $0x30] sm:$0xf]
  %v77 = vld [vmem:[%s1 + $0x34] sm:$0xf]
  %v78 = vld [vmem:[%s1 + $0x38] sm:$0xf]
  %v79 = vld [vmem:[%s1 + $0x3c] sm:$0xf]
  %v80 = vld [vmem:[%s1 + $0x40] sm:$0xf]
  %v81 = vld [vmem:[%s1 + $0x44] sm:$0xf]
  %v82 = vld [vmem:[%s1 + $0x48] sm:$0xf]
  %v83 = vld [vmem:[%s1 + $0x4c] sm:$0xf]
  %v84 = vld [vmem:[%s1 + $0x50] sm:$0xf]
  %v85 = vld [vmem:[%s1 + $0x54] sm:$0xf]
  %v86 = vld [vmem:[%s1 + $0x58] sm:$0xf]
  %v87 = vld [vmem:[%s1 + $0x5c] sm:$0xf]
  %v88 = vld [vmem:[%s1 + $0x60] sm:$0xf]
  %v89 = vld [vmem:[%s1 + $0x64] sm:$0xf]
  %v90 = vld [vmem:[%s1 + $0x68] sm:$0xf]
  %v91 = vld [vmem:[%s1 + $0x6c] sm:$0xf]
  %v92 = vld [vmem:[%s1 + $0x70] sm:$0xf]
  %v93 = vld [vmem:[%s1 + $0x74] sm:$0xf]
  %v94 = vld [vmem:[%s1 + $0x78] sm:$0xf]
  %v95 = vld [vmem:[%s1 + $0x7c] sm:$0xf]
  %v112 = vunpack.c.l.b16 %v48
  %v113 = vunpack.c.h.b16 %v48
  %v114 = vunpack.c.l.b16 %v49
  %v115 = vunpack.c.h.b16 %v49
  %v116 = vunpack.c.l.b16 %v50
  %v117 = vunpack.c.h.b16 %v50
  %v118 = vunpack.c.l.b16 %v51
  %v119 = vunpack.c.h.b16 %v51
  %v120 = vunpack.c.l.b16 %v52
  %v121 = vunpack.c.h.b16 %v52
  %v122 = vunpack.c.l.b16 %v53
  %v123 = vunpack.c.h.b16 %v53
  %v124 = vunpack.c.l.b16 %v54
  %v125 = vunpack.c.h.b16 %v54
  %v126 = vunpack.c.l.b16 %v55
  %v127 = vunpack.c.h.b16 %v55
  %v128 = vunpack.c.l.b16 %v56
  %v129 = vunpack.c.h.b16 %v56
  %v130 = vunpack.c.l.b16 %v57
  %v131 = vunpack.c.h.b16 %v57
  %v132 = vunpack.c.l.b16 %v58
  %v133 = vunpack.c.h.b16 %v58
  %v134 = vunpack.c.l.b16 %v59
  %v135 = vunpack.c.h.b16 %v59
  %v136 = vunpack.c.l.b16 %v60
  %v137 = vunpack.c.h.b16 %v60
  %v138 = vunpack.c.l.b16 %v61
  %v139 = vunpack.c.h.b16 %v61
  %v140 = vunpack.c.l.b16 %v62
  %v141 = vunpack.c.h.b16 %v62
  %v142 = vunpack.c.l.b16 %v63
  %v143 = vunpack.c.h.b16 %v63
  %v144 = vpack.c.b16 %v114, %v112
  %v145 = vpack.c.b16 %v115, %v113
  %v146 = vpack.c.b16 %v118, %v116
  %v147 = vpack.c.b16 %v119, %v117
  %v148 = vpack.c.b16 %v122, %v120
  %v149 = vpack.c.b16 %v123, %v121
  %v150 = vpack.c.b16 %v126, %v124
  %v151 = vpack.c.b16 %v127, %v125
  %v152 = vpack.c.b16 %v130, %v128
  %v153 = vpack.c.b16 %v131, %v129
  %v154 = vpack.c.b16 %v134, %v132
  %v155 = vpack.c.b16 %v135, %v133
  %v156 = vpack.c.b16 %v138, %v136
  %v157 = vpack.c.b16 %v139, %v137
  %v158 = vpack.c.b16 %v142, %v140
  %v159 = vpack.c.b16 %v143, %v141
  %v208 = vunpack.c.l.b16 %v64
  %v209 = vunpack.c.l.b16 %v65
  %v210 = vunpack.c.l.b16 %v66
  %v211 = vunpack.c.l.b16 %v67
  %v212 = vunpack.c.l.b16 %v68
  %v213 = vunpack.c.l.b16 %v69
  %v214 = vunpack.c.l.b16 %v70
  %v215 = vunpack.c.l.b16 %v71
  %v216 = vunpack.c.l.b16 %v72
  %v217 = vunpack.c.l.b16 %v73
  %v218 = vunpack.c.l.b16 %v74
  %v219 = vunpack.c.l.b16 %v75
  %v220 = vunpack.c.l.b16 %v76
  %v221 = vunpack.c.l.b16 %v77
  %v222 = vunpack.c.l.b16 %v78
  %v223 = vunpack.c.l.b16 %v79
  %v224 = vunpack.c.l.b16 %v80
  %v225 = vunpack.c.l.b16 %v81
  %v226 = vunpack.c.l.b16 %v82
  %v227 = vunpack.c.l.b16 %v83
  %v228 = vunpack.c.l.b16 %v84
  %v229 = vunpack.c.l.b16 %v85
  %v230 = vunpack.c.l.b16 %v86
  %v231 = vunpack.c.l.b16 %v87
  %v232 = vunpack.c.l.b16 %v88
  %v233 = vunpack.c.l.b16 %v89
  %v234 = vunpack.c.l.b16 %v90
  %v235 = vunpack.c.l.b16 %v91
  %v236 = vunpack.c.l.b16 %v92
  %v237 = vunpack.c.l.b16 %v93
  %v238 = vunpack.c.l.b16 %v94
  %v239 = vunpack.c.l.b16 %v95
  %v240 = vpack.c.b16 %v209, %v208
  %v241 = vpack.c.b16 %v211, %v210
  %v242 = vpack.c.b16 %v213, %v212
  %v243 = vpack.c.b16 %v215, %v214
  %v244 = vpack.c.b16 %v217, %v216
  %v245 = vpack.c.b16 %v219, %v218
  %v246 = vpack.c.b16 %v221, %v220
  %v247 = vpack.c.b16 %v223, %v222
  %v248 = vpack.c.b16 %v225, %v224
  %v249 = vpack.c.b16 %v227, %v226
  %v250 = vpack.c.b16 %v229, %v228
  %v251 = vpack.c.b16 %v231, %v230
  %v252 = vpack.c.b16 %v233, %v232
  %v253 = vpack.c.b16 %v235, %v234
  %v254 = vpack.c.b16 %v237, %v236
  %v255 = vpack.c.b16 %v239, %v238
  %272 = vmatprep.subr.bf16.mxu0 0
  %273 = vmatpush1.bf16.msra.mxu0 %v240
  %274 = vmatprep.subr.bf16.mxu0 0
  %275 = vmatpush1.bf16.msra.mxu0 %v241
  %276 = vmatprep.subr.bf16.mxu0 0
  %277 = vmatpush1.bf16.msra.mxu0 %v242
  %278 = vmatprep.subr.bf16.mxu0 0
  %279 = vmatpush1.bf16.msra.mxu0 %v243
  %280 = vmatprep.subr.bf16.mxu0 0
  %281 = vmatpush1.bf16.msra.mxu0 %v244
  %282 = vmatprep.subr.bf16.mxu0 0
  %283 = vmatpush1.bf16.msra.mxu0 %v245
  %284 = vmatprep.subr.bf16.mxu0 0
  %285 = vmatpush1.bf16.msra.mxu0 %v246
  %286 = vmatprep.subr.bf16.mxu0 0
  %287 = vmatpush1.bf16.msra.mxu0 %v247
  %288 = vmatprep.subr.bf16.mxu0 0
  %289 = vmatpush1.bf16.msra.mxu0 %v248
  %290 = vmatprep.subr.bf16.mxu0 0
  %291 = vmatpush1.bf16.msra.mxu0 %v249
  %292 = vmatprep.subr.bf16.mxu0 0
  %293 = vmatpush1.bf16.msra.mxu0 %v250
  %294 = vmatprep.subr.bf16.mxu0 0
  %295 = vmatpush1.bf16.msra.mxu0 %v251
  %296 = vmatprep.subr.bf16.mxu0 0
  %297 = vmatpush1.bf16.msra.mxu0 %v252
  %298 = vmatprep.subr.bf16.mxu0 0
  %299 = vmatpush1.bf16.msra.mxu0 %v253
  %300 = vmatprep.subr.bf16.mxu0 0
  %301 = vmatpush1.bf16.msra.mxu0 %v254
  %302 = vmatprep.subr.bf16.mxu0 0
  %303 = vmatpush1.bf16.msra.mxu0 %v255
  %304 = vmatprep.mubr.bf16.mxu0 %v145
  %305 = vmatmul.mubr.bf16.gmra.mrb[0].mxu0 %v144
  %v306 = vpop.f32.mrb[0].mxu0
  %v307 = vadd.f32 0.0, %v306
  %v308 = vpop.f32.mrb[0].mxu0
  %v309 = vpop.f32.mrb[0].mxu0
  %v310 = vadd.f32 0.0, %v309
  %v311 = vpop.f32.mrb[0].mxu0
  %312 = vmatprep.mubr.bf16.mxu0 %v147
  %313 = vmatmul.mubr.bf16.gmra.mrb[0].mxu0 %v146
  %v314 = vpop.f32.mrb[0].mxu0
  %v315 = vadd.f32 0.0, %v314
  %v316 = vpop.f32.mrb[0].mxu0
  %v317 = vpop.f32.mrb[0].mxu0
  %v318 = vadd.f32 0.0, %v317
  %v319 = vpop.f32.mrb[0].mxu0
  %320 = vmatprep.mubr.bf16.mxu0 %v149
  %321 = vmatmul.mubr.bf16.gmra.mrb[0].mxu0 %v148
  %v322 = vpop.f32.mrb[0].mxu0
  %v323 = vadd.f32 0.0, %v322
  %v324 = vpop.f32.mrb[0].mxu0
  %v325 = vpop.f32.mrb[0].mxu0
  %v326 = vadd.f32 0.0, %v325
  %v327 = vpop.f32.mrb[0].mxu0
  %328 = vmatprep.mubr.bf16.mxu0 %v151
  %329 = vmatmul.mubr.bf16.gmra.mrb[0].mxu0 %v150
  %v330 = vpop.f32.mrb[0].mxu0
  %v331 = vadd.f32 0.0, %v330
  %v332 = vpop.f32.mrb[0].mxu0
  %v333 = vpop.f32.mrb[0].mxu0
  %v334 = vadd.f32 0.0, %v333
  %v335 = vpop.f32.mrb[0].mxu0
  %336 = vmatprep.mubr.bf16.mxu0 %v153
  %337 = vmatmul.mubr.bf16.gmra.mrb[0].mxu0 %v152
  %v338 = vpop.f32.mrb[0].mxu0
  %v339 = vadd.f32 0.0, %v338
  %v340 = vpop.f32.mrb[0].mxu0
  %v341 = vpop.f32.mrb[0].mxu0
  %v342 = vadd.f32 0.0, %v341
  %v343 = vpop.f32.mrb[0].mxu0
  %344 = vmatprep.mubr.bf16.mxu0 %v155
  %345 = vmatmul.mubr.bf16.gmra.mrb[0].mxu0 %v154
  %v346 = vpop.f32.mrb[0].mxu0
  %v347 = vadd.f32 0.0, %v346
  %v348 = vpop.f32.mrb[0].mxu0
  %v349 = vpop.f32.mrb[0].mxu0
  %v350 = vadd.f32 0.0, %v349
  %v351 = vpop.f32.mrb[0].mxu0
  %352 = vmatprep.mubr.bf16.mxu0 %v157
  %353 = vmatmul.mubr.bf16.gmra.mrb[0].mxu0 %v156
  %v354 = vpop.f32.mrb[0].mxu0
  %v355 = vadd.f32 0.0, %v354
  %v356 = vpop.f32.mrb[0].mxu0
  %v357 = vpop.f32.mrb[0].mxu0
  %v358 = vadd.f32 0.0, %v357
  %v359 = vpop.f32.mrb[0].mxu0
  %360 = vmatprep.mubr.bf16.mxu0 %v159
  %361 = vmatmul.mubr.bf16.gmra.mrb[0].mxu0 %v158
  %v362 = vpop.f32.mrb[0].mxu0
  %v363 = vadd.f32 0.0, %v362
  %v364 = vpop.f32.mrb[0].mxu0
  %v365 = vpop.f32.mrb[0].mxu0
  %v366 = vadd.f32 0.0, %v365
  %v367 = vpop.f32.mrb[0].mxu0
  %368 = vdwg.mxu0
  %v369 = vadd.f32 %v32, %v307
  %v370 = vadd.f32 %v33, %v310
  %v371 = vadd.f32 %v34, %v315
  %v372 = vadd.f32 %v35, %v318
  %v373 = vadd.f32 %v36, %v323
  %v374 = vadd.f32 %v37, %v326
  %v375 = vadd.f32 %v38, %v331
  %v376 = vadd.f32 %v39, %v334
  %v377 = vadd.f32 %v40, %v339
  %v378 = vadd.f32 %v41, %v342
  %v379 = vadd.f32 %v42, %v347
  %v380 = vadd.f32 %v43, %v350
  %v381 = vadd.f32 %v44, %v355
  %v382 = vadd.f32 %v45, %v358
  %v383 = vadd.f32 %v46, %v363
  %v384 = vadd.f32 %v47, %v366
  %385 = vst [vmem:[#allocation2] sm:$0xff] %v369
  %386 = vst [vmem:[#allocation2 + $0x8] sm:$0xff] %v370
  %387 = vst [vmem:[#allocation2 + $0x10] sm:$0xff] %v371
  %388 = vst [vmem:[#allocation2 + $0x18] sm:$0xff] %v372
  %389 = vst [vmem:[#allocation2 + $0x20] sm:$0xff] %v373
  %390 = vst [vmem:[#allocation2 + $0x28] sm:$0xff] %v374
  %391 = vst [vmem:[#allocation2 + $0x30] sm:$0xff] %v375
  %392 = vst [vmem:[#allocation2 + $0x38] sm:$0xff] %v376
  %393 = vst [vmem:[#allocation2 + $0x40] sm:$0xff] %v377
  %394 = vst [vmem:[#allocation2 + $0x48] sm:$0xff] %v378
  %395 = vst [vmem:[#allocation2 + $0x50] sm:$0xff] %v379
  %396 = vst [vmem:[#allocation2 + $0x58] sm:$0xff] %v380
  %397 = vst [vmem:[#allocation2 + $0x60] sm:$0xff] %v381
  %398 = vst [vmem:[#allocation2 + $0x68] sm:$0xff] %v382
  %399 = vst [vmem:[#allocation2 + $0x70] sm:$0xff] %v383
  %400 = vst [vmem:[#allocation2 + $0x78] sm:$0xff] %v384
  // Predicated region
  $region14: #{generator_forward.21} parent=0 // pred_check
    %p401 = pneg %p12
  $region15: #{generator_forward.21} parent=0 // pred_check_branch
    %403 = sbr.rel (%p401) target = $region17
  $region16: #{generator_forward.21} parent=0 // pred_region
    %v404 = vld [vmem:[#allocation2] sm:$0xff]
    %v405 = vld [vmem:[#allocation2 + $0x8] sm:$0xff]
    %v406 = vld [vmem:[#allocation2 + $0x10] sm:$0xff]
    %v407 = vld [vmem:[#allocation2 + $0x18] sm:$0xff]
    %v408 = vld [vmem:[#allocation2 + $0x20] sm:$0xff]
    %v409 = vld [vmem:[#allocation2 + $0x28] sm:$0xff]
    %v410 = vld [vmem:[#allocation2 + $0x30] sm:$0xff]
    %v411 = vld [vmem:[#allocation2 + $0x38] sm:$0xff]
    %v412 = vld [vmem:[#allocation2 + $0x40] sm:$0xff]
    %v413 = vld [vmem:[#allocation2 + $0x48] sm:$0xff]
    %v414 = vld [vmem:[#allocation2 + $0x50] sm:$0xff]
    %v415 = vld [vmem:[#allocation2 + $0x58] sm:$0xff]
    %v416 = vld [vmem:[#allocation2 + $0x60] sm:$0xff]
    %v417 = vld [vmem:[#allocation2 + $0x68] sm:$0xff]
    %v418 = vld [vmem:[#allocation2 + $0x70] sm:$0xff]
    %v419 = vld [vmem:[#allocation2 + $0x78] sm:$0xff]
    %v420 = vpack.c.bf16 %v405, %v404
    %v421 = vpack.c.bf16 %v407, %v406
    %v422 = vpack.c.bf16 %v409, %v408
    %v423 = vpack.c.bf16 %v411, %v410
    %v424 = vpack.c.bf16 %v413, %v412
    %v425 = vpack.c.bf16 %v415, %v414
    %v426 = vpack.c.bf16 %v417, %v416
    %v427 = vpack.c.bf16 %v419, %v418
    %v436 = vunpack.c.l.b16 %v420
    %v437 = vunpack.c.h.b16 %v420
    %v438 = vunpack.c.l.b16 %v421
    %v439 = vunpack.c.h.b16 %v421
    %v440 = vunpack.c.l.b16 %v422
    %v441 = vunpack.c.h.b16 %v422
    %v442 = vunpack.c.l.b16 %v423
    %v443 = vunpack.c.h.b16 %v423
    %v444 = vunpack.c.l.b16 %v424
    %v445 = vunpack.c.h.b16 %v424
    %v446 = vunpack.c.l.b16 %v425
    %v447 = vunpack.c.h.b16 %v425
    %v448 = vunpack.c.l.b16 %v426
    %v449 = vunpack.c.h.b16 %v426
    %v450 = vunpack.c.l.b16 %v427
    %v451 = vunpack.c.h.b16 %v427
    %v452 = vpack.c.b16 %v436, %v436
    %v453 = vpack.c.b16 %v437, %v437
    %v454 = vpack.c.b16 %v438, %v438
    %v455 = vpack.c.b16 %v439, %v439
    %v456 = vpack.c.b16 %v440, %v440
    %v457 = vpack.c.b16 %v441, %v441
    %v458 = vpack.c.b16 %v442, %v442
    %v459 = vpack.c.b16 %v443, %v443
    %v460 = vpack.c.b16 %v444, %v444
    %v461 = vpack.c.b16 %v445, %v445
    %v462 = vpack.c.b16 %v446, %v446
    %v463 = vpack.c.b16 %v447, %v447
    %v464 = vpack.c.b16 %v448, %v448
    %v465 = vpack.c.b16 %v449, %v449
    %v466 = vpack.c.b16 %v450, %v450
    %v467 = vpack.c.b16 %v451, %v451
    %484 = vst [vmem:[%s2] sm:$0xf] %v452
    %485 = vst [vmem:[%s2 + $0x4] sm:$0xf] %v453
    %486 = vst [vmem:[%s2 + $0x8] sm:$0xf] %v454
    %487 = vst [vmem:[%s2 + $0xc] sm:$0xf] %v455
    %488 = vst [vmem:[%s2 + $0x10] sm:$0xf] %v456
    %489 = vst [vmem:[%s2 + $0x14] sm:$0xf] %v457
    %490 = vst [vmem:[%s2 + $0x18] sm:$0xf] %v458
    %491 = vst [vmem:[%s2 + $0x1c] sm:$0xf] %v459
    %492 = vst [vmem:[%s2 + $0x20] sm:$0xf] %v460
    %493 = vst [vmem:[%s2 + $0x24] sm:$0xf] %v461
    %494 = vst [vmem:[%s2 + $0x28] sm:$0xf] %v462
    %495 = vst [vmem:[%s2 + $0x2c] sm:$0xf] %v463
    %496 = vst [vmem:[%s2 + $0x30] sm:$0xf] %v464
    %497 = vst [vmem:[%s2 + $0x34] sm:$0xf] %v465
    %498 = vst [vmem:[%s2 + $0x38] sm:$0xf] %v466
    %499 = vst [vmem:[%s2 + $0x3c] sm:$0xf] %v467
  $region17: #{generator_forward.21} parent=0 // pred_fallthru
    _
  // Predicated region
  $region18: #{generator_forward.21} parent=0 // pred_check
    _
  $region19: #{generator_forward.21} parent=0 // pred_check_branch
    %501 = sbr.rel (0) target = $region21
  $region20: #{generator_forward.21} parent=0 // pred_region
    _
  $region21: #{generator_forward.21} parent=0 // pred_fallthru
    _
  // Predicated region
  $region22: #{generator_forward.21} parent=0 // pred_check
    _
  $region23: #{generator_forward.21} parent=0 // pred_check_branch
    %503 = sbr.rel (0) target = $region25
  $region24: #{generator_forward.21} parent=0 // pred_region
    _
  $region25: #{generator_forward.21} parent=0 // pred_fallthru
    _

// kernel: generator_forward.23
$region0: #{generator_forward.23}
  #allocation0 [shape = 'u32[]', space=smem, size = 0x4, offset = 0x4, fixed_abs, tag = 'smem constant byte address 0x4 - core index']
  #allocation1 [shape = 'u32[144,128]{1,0:T(1,128)}', space=vmem, size = 0x12000, scoped, tag = 'internal scratch']
  #allocation2 [shape = 'f32[32,128]{1,0:T(8,128)}', space=vmem, size = 0x4000, scoped, tag = 'scratch operand']
  %s0 = inlined_call_operand.vmem [shape: bf16[32,512], index: 0, kind: input, shape index: {}]
  %s1 = inlined_call_operand.vmem [shape: bf16[512,128], index: 1, kind: input, shape index: {}]
  %s2 = inlined_call_operand.vmem [shape: bf16[32,128], index: 2, kind: output, shape index: {}]
  %s3 = sld [smem:[#allocation0]]
  $region26: #{generator_forward.23} parent=0
    _
  %s5 = ssub.s32 1, %s3
  %s6 = scalar_select 0, %s5, %s3
  // Predicated region
  $region2: #{generator_forward.23} parent=0 // pred_check
    _
  $region3: #{generator_forward.23} parent=0 // pred_check_branch
    %8 = sbr.rel (0) target = $region5
  $region4: #{generator_forward.23} parent=0 // pred_region
    _
  $region5: #{generator_forward.23} parent=0 // pred_fallthru
    _
  // Predicated region
  $region6: #{generator_forward.23} parent=0 // pred_check
    _
  $region7: #{generator_forward.23} parent=0 // pred_check_branch
    %10 = sbr.rel (0) target = $region9
  $region8: #{generator_forward.23} parent=0 // pred_region
    _
  $region9: #{generator_forward.23} parent=0 // pred_fallthru
    _
  %p12 = scmp.eq.s32.totalorder 0, 0
  // Predicated region
  $region10: #{generator_forward.23} parent=0 // pred_check
    %p13 = pneg %p12
  $region11: #{generator_forward.23} parent=0 // pred_check_branch
    %15 = sbr.rel (%p13) target = $region13
  $region12: #{generator_forward.23} parent=0 // pred_region
    %16 = vst [vmem:[#allocation2] sm:$0xff] 0.0
    %17 = vst [vmem:[#allocation2 + $0x8] sm:$0xff] 0.0
    %18 = vst [vmem:[#allocation2 + $0x10] sm:$0xff] 0.0
    %19 = vst [vmem:[#allocation2 + $0x18] sm:$0xff] 0.0
  $region13: #{generator_forward.23} parent=0 // pred_fallthru
    _
  %v20 = vld [vmem:[#allocation2] sm:$0xff]
  %v21 = vld [vmem:[#allocation2 + $0x8] sm:$0xff]
  %v22 = vld [vmem:[#allocation2 + $0x10] sm:$0xff]
  %v23 = vld [vmem:[#allocation2 + $0x18] sm:$0xff]
  %v24 = vld [vmem:[%s0] sm:$0xff]
  %v25 = vld [vmem:[%s0 + $0x8] sm:$0xff]
  %v26 = vld [vmem:[%s0 + $0x10] sm:$0xff]
  %v27 = vld [vmem:[%s0 + $0x18] sm:$0xff]
  %v28 = vld [vmem:[%s0 + $0x20] sm:$0xff]
  %v29 = vld [vmem:[%s0 + $0x28] sm:$0xff]
  %v30 = vld [vmem:[%s0 + $0x30] sm:$0xff]
  %v31 = vld [vmem:[%s0 + $0x38] sm:$0xff]
  %v32 = vld [vmem:[%s1] sm:$0xf]
  %v33 = vld [vmem:[%s1 + $0x4] sm:$0xf]
  %v34 = vld [vmem:[%s1 + $0x8] sm:$0xf]
  %v35 = vld [vmem:[%s1 + $0xc] sm:$0xf]
  %v36 = vld [vmem:[%s1 + $0x10] sm:$0xf]
  %v37 = vld [vmem:[%s1 + $0x14] sm:$0xf]
  %v38 = vld [vmem:[%s1 + $0x18] sm:$0xf]
  %v39 = vld [vmem:[%s1 + $0x1c] sm:$0xf]
  %v40 = vld [vmem:[%s1 + $0x20] sm:$0xf]
  %v41 = vld [vmem:[%s1 + $0x24] sm:$0xf]
  %v42 = vld [vmem:[%s1 + $0x28] sm:$0xf]
  %v43 = vld [vmem:[%s1 + $0x2c] sm:$0xf]
  %v44 = vld [vmem:[%s1 + $0x30] sm:$0xf]
  %v45 = vld [vmem:[%s1 + $0x34] sm:$0xf]
  %v46 = vld [vmem:[%s1 + $0x38] sm:$0xf]
  %v47 = vld [vmem:[%s1 + $0x3c] sm:$0xf]
  %v48 = vld [vmem:[%s1 + $0x40] sm:$0xf]
  %v49 = vld [vmem:[%s1 + $0x44] sm:$0xf]
  %v50 = vld [vmem:[%s1 + $0x48] sm:$0xf]
  %v51 = vld [vmem:[%s1 + $0x4c] sm:$0xf]
  %v52 = vld [vmem:[%s1 + $0x50] sm:$0xf]
  %v53 = vld [vmem:[%s1 + $0x54] sm:$0xf]
  %v54 = vld [vmem:[%s1 + $0x58] sm:$0xf]
  %v55 = vld [vmem:[%s1 + $0x5c] sm:$0xf]
  %v56 = vld [vmem:[%s1 + $0x60] sm:$0xf]
  %v57 = vld [vmem:[%s1 + $0x64] sm:$0xf]
  %v58 = vld [vmem:[%s1 + $0x68] sm:$0xf]
  %v59 = vld [vmem:[%s1 + $0x6c] sm:$0xf]
  %v60 = vld [vmem:[%s1 + $0x70] sm:$0xf]
  %v61 = vld [vmem:[%s1 + $0x74] sm:$0xf]
  %v62 = vld [vmem:[%s1 + $0x78] sm:$0xf]
  %v63 = vld [vmem:[%s1 + $0x7c] sm:$0xf]
  %v64 = vld [vmem:[%s1 + $0x80] sm:$0xf]
  %v65 = vld [vmem:[%s1 + $0x84] sm:$0xf]
  %v66 = vld [vmem:[%s1 + $0x88] sm:$0xf]
  %v67 = vld [vmem:[%s1 + $0x8c] sm:$0xf]
  %v68 = vld [vmem:[%s1 + $0x90] sm:$0xf]
  %v69 = vld [vmem:[%s1 + $0x94] sm:$0xf]
  %v70 = vld [vmem:[%s1 + $0x98] sm:$0xf]
  %v71 = vld [vmem:[%s1 + $0x9c] sm:$0xf]
  %v72 = vld [vmem:[%s1 + $0xa0] sm:$0xf]
  %v73 = vld [vmem:[%s1 + $0xa4] sm:$0xf]
  %v74 = vld [vmem:[%s1 + $0xa8] sm:$0xf]
  %v75 = vld [vmem:[%s1 + $0xac] sm:$0xf]
  %v76 = vld [vmem:[%s1 + $0xb0] sm:$0xf]
  %v77 = vld [vmem:[%s1 + $0xb4] sm:$0xf]
  %v78 = vld [vmem:[%s1 + $0xb8] sm:$0xf]
  %v79 = vld [vmem:[%s1 + $0xbc] sm:$0xf]
  %v80 = vld [vmem:[%s1 + $0xc0] sm:$0xf]
  %v81 = vld [vmem:[%s1 + $0xc4] sm:$0xf]
  %v82 = vld [vmem:[%s1 + $0xc8] sm:$0xf]
  %v83 = vld [vmem:[%s1 + $0xcc] sm:$0xf]
  %v84 = vld [vmem:[%s1 + $0xd0] sm:$0xf]
  %v85 = vld [vmem:[%s1 + $0xd4] sm:$0xf]
  %v86 = vld [vmem:[%s1 + $0xd8] sm:$0xf]
  %v87 = vld [vmem:[%s1 + $0xdc] sm:$0xf]
  %v88 = vld [vmem:[%s1 + $0xe0] sm:$0xf]
  %v89 = vld [vmem:[%s1 + $0xe4] sm:$0xf]
  %v90 = vld [vmem:[%s1 + $0xe8] sm:$0xf]
  %v91 = vld [vmem:[%s1 + $0xec] sm:$0xf]
  %v92 = vld [vmem:[%s1 + $0xf0] sm:$0xf]
  %v93 = vld [vmem:[%s1 + $0xf4] sm:$0xf]
  %v94 = vld [vmem:[%s1 + $0xf8] sm:$0xf]
  %v95 = vld [vmem:[%s1 + $0xfc] sm:$0xf]
  %v104 = vunpack.c.l.b16 %v24
  %v105 = vunpack.c.h.b16 %v24
  %v106 = vunpack.c.l.b16 %v25
  %v107 = vunpack.c.h.b16 %v25
  %v108 = vunpack.c.l.b16 %v26
  %v109 = vunpack.c.h.b16 %v26
  %v110 = vunpack.c.l.b16 %v27
  %v111 = vunpack.c.h.b16 %v27
  %v112 = vunpack.c.l.b16 %v28
  %v113 = vunpack.c.h.b16 %v28
  %v114 = vunpack.c.l.b16 %v29
  %v115 = vunpack.c.h.b16 %v29
  %v116 = vunpack.c.l.b16 %v30
  %v117 = vunpack.c.h.b16 %v30
  %v118 = vunpack.c.l.b16 %v31
  %v119 = vunpack.c.h.b16 %v31
  %v120 = vpack.c.b16 %v108, %v104
  %v121 = vpack.c.b16 %v109, %v105
  %v122 = vpack.c.b16 %v110, %v106
  %v123 = vpack.c.b16 %v111, %v107
  %v124 = vpack.c.b16 %v116, %v112
  %v125 = vpack.c.b16 %v117, %v113
  %v126 = vpack.c.b16 %v118, %v114
  %v127 = vpack.c.b16 %v119, %v115
  %v200 = vunpack.c.l.b16 %v32
  %v201 = vunpack.c.l.b16 %v33
  %v202 = vunpack.c.l.b16 %v34
  %v203 = vunpack.c.l.b16 %v35
  %v204 = vunpack.c.l.b16 %v36
  %v205 = vunpack.c.l.b16 %v37
  %v206 = vunpack.c.l.b16 %v38
  %v207 = vunpack.c.l.b16 %v39
  %v208 = vunpack.c.l.b16 %v40
  %v209 = vunpack.c.l.b16 %v41
  %v210 = vunpack.c.l.b16 %v42
  %v211 = vunpack.c.l.b16 %v43
  %v212 = vunpack.c.l.b16 %v44
  %v213 = vunpack.c.l.b16 %v45
  %v214 = vunpack.c.l.b16 %v46
  %v215 = vunpack.c.l.b16 %v47
  %v216 = vunpack.c.l.b16 %v48
  %v217 = vunpack.c.l.b16 %v49
  %v218 = vunpack.c.l.b16 %v50
  %v219 = vunpack.c.l.b16 %v51
  %v220 = vunpack.c.l.b16 %v52
  %v221 = vunpack.c.l.b16 %v53
  %v222 = vunpack.c.l.b16 %v54
  %v223 = vunpack.c.l.b16 %v55
  %v224 = vunpack.c.l.b16 %v56
  %v225 = vunpack.c.l.b16 %v57
  %v226 = vunpack.c.l.b16 %v58
  %v227 = vunpack.c.l.b16 %v59
  %v228 = vunpack.c.l.b16 %v60
  %v229 = vunpack.c.l.b16 %v61
  %v230 = vunpack.c.l.b16 %v62
  %v231 = vunpack.c.l.b16 %v63
  %v232 = vunpack.c.l.b16 %v64
  %v233 = vunpack.c.l.b16 %v65
  %v234 = vunpack.c.l.b16 %v66
  %v235 = vunpack.c.l.b16 %v67
  %v236 = vunpack.c.l.b16 %v68
  %v237 = vunpack.c.l.b16 %v69
  %v238 = vunpack.c.l.b16 %v70
  %v239 = vunpack.c.l.b16 %v71
  %v240 = vunpack.c.l.b16 %v72
  %v241 = vunpack.c.l.b16 %v73
  %v242 = vunpack.c.l.b16 %v74
  %v243 = vunpack.c.l.b16 %v75
  %v244 = vunpack.c.l.b16 %v76
  %v245 = vunpack.c.l.b16 %v77
  %v246 = vunpack.c.l.b16 %v78
  %v247 = vunpack.c.l.b16 %v79
  %v248 = vunpack.c.l.b16 %v80
  %v249 = vunpack.c.l.b16 %v81
  %v250 = vunpack.c.l.b16 %v82
  %v251 = vunpack.c.l.b16 %v83
  %v252 = vunpack.c.l.b16 %v84
  %v253 = vunpack.c.l.b16 %v85
  %v254 = vunpack.c.l.b16 %v86
  %v255 = vunpack.c.l.b16 %v87
  %v256 = vunpack.c.l.b16 %v88
  %v257 = vunpack.c.l.b16 %v89
  %v258 = vunpack.c.l.b16 %v90
  %v259 = vunpack.c.l.b16 %v91
  %v260 = vunpack.c.l.b16 %v92
  %v261 = vunpack.c.l.b16 %v93
  %v262 = vunpack.c.l.b16 %v94
  %v263 = vunpack.c.l.b16 %v95
  %v264 = vpack.c.b16 %v201, %v200
  %v265 = vpack.c.b16 %v203, %v202
  %v266 = vpack.c.b16 %v205, %v204
  %v267 = vpack.c.b16 %v207, %v206
  %v268 = vpack.c.b16 %v209, %v208
  %v269 = vpack.c.b16 %v211, %v210
  %v270 = vpack.c.b16 %v213, %v212
  %v271 = vpack.c.b16 %v215, %v214
  %v272 = vpack.c.b16 %v217, %v216
  %v273 = vpack.c.b16 %v219, %v218
  %v274 = vpack.c.b16 %v221, %v220
  %v275 = vpack.c.b16 %v223, %v222
  %v276 = vpack.c.b16 %v225, %v224
  %v277 = vpack.c.b16 %v227, %v226
  %v278 = vpack.c.b16 %v229, %v228
  %v279 = vpack.c.b16 %v231, %v230
  %v280 = vpack.c.b16 %v233, %v232
  %v281 = vpack.c.b16 %v235, %v234
  %v282 = vpack.c.b16 %v237, %v236
  %v283 = vpack.c.b16 %v239, %v238
  %v284 = vpack.c.b16 %v241, %v240
  %v285 = vpack.c.b16 %v243, %v242
  %v286 = vpack.c.b16 %v245, %v244
  %v287 = vpack.c.b16 %v247, %v246
  %v288 = vpack.c.b16 %v249, %v248
  %v289 = vpack.c.b16 %v251, %v250
  %v290 = vpack.c.b16 %v253, %v252
  %v291 = vpack.c.b16 %v255, %v254
  %v292 = vpack.c.b16 %v257, %v256
  %v293 = vpack.c.b16 %v259, %v258
  %v294 = vpack.c.b16 %v261, %v260
  %v295 = vpack.c.b16 %v263, %v262
  %328 = vmatprep.subr.bf16.mxu0 0
  %329 = vmatpush1.bf16.msra.mxu0 %v264
  %330 = vmatprep.subr.bf16.mxu0 0
  %331 = vmatpush1.bf16.msra.mxu0 %v265
  %332 = vmatprep.subr.bf16.mxu0 0
  %333 = vmatpush1.bf16.msra.mxu0 %v266
  %334 = vmatprep.subr.bf16.mxu0 0
  %335 = vmatpush1.bf16.msra.mxu0 %v267
  %336 = vmatprep.subr.bf16.mxu0 0
  %337 = vmatpush1.bf16.msra.mxu0 %v268
  %338 = vmatprep.subr.bf16.mxu0 0
  %339 = vmatpush1.bf16.msra.mxu0 %v269
  %340 = vmatprep.subr.bf16.mxu0 0
  %341 = vmatpush1.bf16.msra.mxu0 %v270
  %342 = vmatprep.subr.bf16.mxu0 0
  %343 = vmatpush1.bf16.msra.mxu0 %v271
  %344 = vmatprep.subr.bf16.mxu0 0
  %345 = vmatpush1.bf16.msra.mxu0 %v272
  %346 = vmatprep.subr.bf16.mxu0 0
  %347 = vmatpush1.bf16.msra.mxu0 %v273
  %348 = vmatprep.subr.bf16.mxu0 0
  %349 = vmatpush1.bf16.msra.mxu0 %v274
  %350 = vmatprep.subr.bf16.mxu0 0
  %351 = vmatpush1.bf16.msra.mxu0 %v275
  %352 = vmatprep.subr.bf16.mxu0 0
  %353 = vmatpush1.bf16.msra.mxu0 %v276
  %354 = vmatprep.subr.bf16.mxu0 0
  %355 = vmatpush1.bf16.msra.mxu0 %v277
  %356 = vmatprep.subr.bf16.mxu0 0
  %357 = vmatpush1.bf16.msra.mxu0 %v278
  %358 = vmatprep.subr.bf16.mxu0 0
  %359 = vmatpush1.bf16.msra.mxu0 %v279
  %360 = vmatprep.mubr.bf16.mxu0 %v121
  %361 = vmatmul.mubr.bf16.gmra.mrb[0].mxu0 %v120
  %v362 = vpop.f32.mrb[0].mxu0
  %v363 = vadd.f32 0.0, %v362
  %v364 = vpop.f32.mrb[0].mxu0
  %v365 = vpop.f32.mrb[0].mxu0
  %v366 = vadd.f32 0.0, %v365
  %v367 = vpop.f32.mrb[0].mxu0
  %368 = vmatprep.mubr.bf16.mxu0 %v125
  %369 = vmatmul.mubr.bf16.gmra.mrb[0].mxu0 %v124
  %v370 = vpop.f32.mrb[0].mxu0
  %v371 = vadd.f32 0.0, %v370
  %v372 = vpop.f32.mrb[0].mxu0
  %v373 = vpop.f32.mrb[0].mxu0
  %v374 = vadd.f32 0.0, %v373
  %v375 = vpop.f32.mrb[0].mxu0
  %376 = vdwg.mxu0
  %377 = vmatprep.subr.bf16.mxu0 0
  %378 = vmatpush1.bf16.msra.mxu0 %v280
  %379 = vmatprep.subr.bf16.mxu0 0
  %380 = vmatpush1.bf16.msra.mxu0 %v281
  %381 = vmatprep.subr.bf16.mxu0 0
  %382 = vmatpush1.bf16.msra.mxu0 %v282
  %383 = vmatprep.subr.bf16.mxu0 0
  %384 = vmatpush1.bf16.msra.mxu0 %v283
  %385 = vmatprep.subr.bf16.mxu0 0
  %386 = vmatpush1.bf16.msra.mxu0 %v284
  %387 = vmatprep.subr.bf16.mxu0 0
  %388 = vmatpush1.bf16.msra.mxu0 %v285
  %389 = vmatprep.subr.bf16.mxu0 0
  %390 = vmatpush1.bf16.msra.mxu0 %v286
  %391 = vmatprep.subr.bf16.mxu0 0
  %392 = vmatpush1.bf16.msra.mxu0 %v287
  %393 = vmatprep.subr.bf16.mxu0 0
  %394 = vmatpush1.bf16.msra.mxu0 %v288
  %395 = vmatprep.subr.bf16.mxu0 0
  %396 = vmatpush1.bf16.msra.mxu0 %v289
  %397 = vmatprep.subr.bf16.mxu0 0
  %398 = vmatpush1.bf16.msra.mxu0 %v290
  %399 = vmatprep.subr.bf16.mxu0 0
  %400 = vmatpush1.bf16.msra.mxu0 %v291
  %401 = vmatprep.subr.bf16.mxu0 0
  %402 = vmatpush1.bf16.msra.mxu0 %v292
  %403 = vmatprep.subr.bf16.mxu0 0
  %404 = vmatpush1.bf16.msra.mxu0 %v293
  %405 = vmatprep.subr.bf16.mxu0 0
  %406 = vmatpush1.bf16.msra.mxu0 %v294
  %407 = vmatprep.subr.bf16.mxu0 0
  %408 = vmatpush1.bf16.msra.mxu0 %v295
  %409 = vmatprep.mubr.bf16.mxu0 %v123
  %410 = vmatmul.mubr.bf16.gmra.mrb[0].mxu0 %v122
  %v411 = vpop.f32.mrb[0].mxu0
  %v412 = vadd.f32 %v363, %v411
  %v413 = vpop.f32.mrb[0].mxu0
  %v414 = vpop.f32.mrb[0].mxu0
  %v415 = vadd.f32 %v366, %v414
  %v416 = vpop.f32.mrb[0].mxu0
  %417 = vmatprep.mubr.bf16.mxu0 %v127
  %418 = vmatmul.mubr.bf16.gmra.mrb[0].mxu0 %v126
  %v419 = vpop.f32.mrb[0].mxu0
  %v420 = vadd.f32 %v371, %v419
  %v421 = vpop.f32.mrb[0].mxu0
  %v422 = vpop.f32.mrb[0].mxu0
  %v423 = vadd.f32 %v374, %v422
  %v424 = vpop.f32.mrb[0].mxu0
  %425 = vdwg.mxu0
  %v426 = vadd.f32 %v20, %v412
  %v427 = vadd.f32 %v21, %v415
  %v428 = vadd.f32 %v22, %v420
  %v429 = vadd.f32 %v23, %v423
  %430 = vst [vmem:[#allocation2] sm:$0xff] %v426
  %431 = vst [vmem:[#allocation2 + $0x8] sm:$0xff] %v427
  %432 = vst [vmem:[#allocation2 + $0x10] sm:$0xff] %v428
  %433 = vst [vmem:[#allocation2 + $0x18] sm:$0xff] %v429
  // Predicated region
  $region14: #{generator_forward.23} parent=0 // pred_check
    %p434 = pneg %p12
  $region15: #{generator_forward.23} parent=0 // pred_check_branch
    %436 = sbr.rel (%p434) target = $region17
  $region16: #{generator_forward.23} parent=0 // pred_region
    %v437 = vld [vmem:[#allocation2] sm:$0xff]
    %v438 = vld [vmem:[#allocation2 + $0x8] sm:$0xff]
    %v439 = vld [vmem:[#allocation2 + $0x10] sm:$0xff]
    %v440 = vld [vmem:[#allocation2 + $0x18] sm:$0xff]
    %v441 = vpack.c.bf16 %v438, %v437
    %v442 = vpack.c.bf16 %v440, %v439
    %v445 = vunpack.c.l.b16 %v441
    %v446 = vunpack.c.h.b16 %v441
    %v447 = vunpack.c.l.b16 %v442
    %v448 = vunpack.c.h.b16 %v442
    %v449 = vpack.c.b16 %v445, %v445
    %v450 = vpack.c.b16 %v446, %v446
    %v451 = vpack.c.b16 %v447, %v447
    %v452 = vpack.c.b16 %v448, %v448
    %457 = vst [vmem:[%s2] sm:$0xf] %v449
    %458 = vst [vmem:[%s2 + $0x4] sm:$0xf] %v450
    %459 = vst [vmem:[%s2 + $0x8] sm:$0xf] %v451
    %460 = vst [vmem:[%s2 + $0xc] sm:$0xf] %v452
  $region17: #{generator_forward.23} parent=0 // pred_fallthru
    _
  // Predicated region
  $region18: #{generator_forward.23} parent=0 // pred_check
    _
  $region19: #{generator_forward.23} parent=0 // pred_check_branch
    %462 = sbr.rel (0) target = $region21
  $region20: #{generator_forward.23} parent=0 // pred_region
    _
  $region21: #{generator_forward.23} parent=0 // pred_fallthru
    _
  // Predicated region
  $region22: #{generator_forward.23} parent=0 // pred_check
    _
  $region23: #{generator_forward.23} parent=0 // pred_check_branch
    %464 = sbr.rel (0) target = $region25
  $region24: #{generator_forward.23} parent=0 // pred_region
    _
  $region25: #{generator_forward.23} parent=0 // pred_fallthru
    _

// kernel: generator_forward.24
$region0: #{generator_forward.24}
  #allocation0 [shape = 'u32[]', space=smem, size = 0x4, offset = 0x4, fixed_abs, tag = 'smem constant byte address 0x4 - core index']
  #allocation1 [shape = 'u32[144,128]{1,0:T(1,128)}', space=vmem, size = 0x12000, scoped, tag = 'internal scratch']
  %s0 = inlined_call_operand.vmem [shape: bf16[2,8,128], index: 0, kind: input, shape index: {}]
  %s1 = inlined_call_operand.vmem [shape: f32[1,64], index: 1, kind: input, shape index: {}]
  %s2 = inlined_call_operand.vmem [shape: f32[1,64], index: 2, kind: input, shape index: {}]
  %s3 = inlined_call_operand.vmem [shape: bf16[2,8,128], index: 3, kind: output, shape index: {}]
  %s4 = sld [smem:[#allocation0]]
  $region45: #{generator_forward.24} parent=0
    _
  %s6 = ssub.s32 1, %s4
  %s7 = scalar_select 0, %s6, %s4
  loop: start=0, step=1, limit=4
  $region2: #{generator_forward.24} parent=0 // loop_pre_header
    _
  $region3: #{generator_forward.24} parent=0 // loop_header
    %s9 = sphi 0, %s13
    %p10 = scmp.ge.s32.totalorder %s9, 4
    %s16 = sphi 0, %s28
    %s17 = sphi 0, %s24
    %s18 = sphi 0, %s16
    %s19 = sphi 0, %s17
    %s20 = sphi 0, %s18
    %s21 = sphi 0, %s19
    %s33 = sphi 0, %s35
    %s36 = sphi 0, %s33
    %s37 = sphi 0, %s36
    %s53 = sphi 0, %s37
    %s59 = sphi 0, %s61
    %s62 = sphi 0, %s59
    %s63 = sphi 0, %s62
    %s79 = sphi 0, %s63
    %s85 = sphi 0, %s87
    %s88 = sphi 0, %s85
    %s89 = sphi 0, %s88
    %s105 = sphi 0, %s89
    %s113 = sphi 0, %s115
    %s116 = sphi 0, %s113
    %s117 = sphi 0, %s116
    %s133 = sphi 0, %s117
  $region4: #{generator_forward.24} parent=0 // loop_header_branch
    %12 = sbr.rel (%p10) target = $region8
  $region5: #{generator_forward.24} parent=0 // loop_body
    %s14 = ssub.s32 %s9, 1
    %s15 = ssub.s32 %s9, 2
    %s22 = sadd.s32 1, %s17
    %p23 = scmp.ge.s32.totalorder %s22, 1
    %s24 = scalar_select %p23, 0, %s22
    %s25 = sadd.s32 1, %s16
    %s26 = scalar_select %p23, %s25, %s16
    %p27 = scmp.ge.s32.totalorder %s26, 2
    %s28 = scalar_select %p27, 0, %s26
    %s29 = ssub.s32 %s16, %s28
    %s30 = ssub.s32 %s17, %s24
    %s31 = sor.u32 %s29, %s30
    %p32 = scmp.eq.s32.totalorder %s31, 0
    %s34 = sadd.s32 %s33, 1
    %s35 = scalar_select %p32, %s33, %s34
    %p38 = pneg %p32
    %p39 = scmp.eq.s32.totalorder %s9, 1
    %p40 = por %p38, %p39
    %p41 = scmp.ne.s32.totalorder %s33, %s36
    %p42 = scmp.eq.s32.totalorder %s9, 0
    %p43 = por %p41, %p42
    %p44 = scmp.ne.s32.totalorder %s33, %s36
    %p45 = scmp.eq.s32.totalorder %s14, 1
    %p46 = por %p44, %p45
    %p47 = scmp.ne.s32.totalorder %s36, %s37
    %p48 = scmp.eq.s32.totalorder %s14, 0
    %p49 = por %p47, %p48
    %p50 = scmp.ne.s32.totalorder %s36, %s37
    %p51 = scmp.eq.s32.totalorder %s15, 1
    %p52 = por %p50, %p51
    %p54 = scmp.ne.s32.totalorder %s37, %s53
    %p55 = scmp.eq.s32.totalorder %s15, 0
    %p56 = por %p54, %p55
    %s57 = ssub.s32 %s17, %s24
    %p58 = scmp.eq.s32.totalorder %s57, 0
    %s60 = sadd.s32 %s59, 1
    %s61 = scalar_select %p58, %s59, %s60
    %p64 = pneg %p58
    %p65 = scmp.eq.s32.totalorder %s9, 1
    %p66 = por %p64, %p65
    %p67 = scmp.ne.s32.totalorder %s59, %s62
    %p68 = scmp.eq.s32.totalorder %s9, 0
    %p69 = por %p67, %p68
    %p70 = scmp.ne.s32.totalorder %s59, %s62
    %p71 = scmp.eq.s32.totalorder %s14, 1
    %p72 = por %p70, %p71
    %p73 = scmp.ne.s32.totalorder %s62, %s63
    %p74 = scmp.eq.s32.totalorder %s14, 0
    %p75 = por %p73, %p74
    %p76 = scmp.ne.s32.totalorder %s62, %s63
    %p77 = scmp.eq.s32.totalorder %s15, 1
    %p78 = por %p76, %p77
    %p80 = scmp.ne.s32.totalorder %s63, %s79
    %p81 = scmp.eq.s32.totalorder %s15, 0
    %p82 = por %p80, %p81
    %s83 = ssub.s32 %s17, %s24
    %p84 = scmp.eq.s32.totalorder %s83, 0
    %s86 = sadd.s32 %s85, 1
    %s87 = scalar_select %p84, %s85, %s86
    %p90 = pneg %p84
    %p91 = scmp.eq.s32.totalorder %s9, 1
    %p92 = por %p90, %p91
    %p93 = scmp.ne.s32.totalorder %s85, %s88
    %p94 = scmp.eq.s32.totalorder %s9, 0
    %p95 = por %p93, %p94
    %p96 = scmp.ne.s32.totalorder %s85, %s88
    %p97 = scmp.eq.s32.totalorder %s14, 1
    %p98 = por %p96, %p97
    %p99 = scmp.ne.s32.totalorder %s88, %s89
    %p100 = scmp.eq.s32.totalorder %s14, 0
    %p101 = por %p99, %p100
    %p102 = scmp.ne.s32.totalorder %s88, %s89
    %p103 = scmp.eq.s32.totalorder %s15, 1
    %p104 = por %p102, %p103
    %p106 = scmp.ne.s32.totalorder %s89, %s105
    %p107 = scmp.eq.s32.totalorder %s15, 0
    %p108 = por %p106, %p107
    %s109 = ssub.s32 %s16, %s28
    %s110 = ssub.s32 %s17, %s24
    %s111 = sor.u32 %s109, %s110
    %p112 = scmp.eq.s32.totalorder %s111, 0
    %s114 = sadd.s32 %s113, 1
    %s115 = scalar_select %p112, %s113, %s114
    %p118 = pneg %p112
    %p119 = scmp.eq.s32.totalorder %s9, 1
    %p120 = por %p118, %p119
    %p121 = scmp.ne.s32.totalorder %s113, %s116
    %p122 = scmp.eq.s32.totalorder %s9, 0
    %p123 = por %p121, %p122
    %p124 = scmp.ne.s32.totalorder %s113, %s116
    %p125 = scmp.eq.s32.totalorder %s14, 1
    %p126 = por %p124, %p125
    %p127 = scmp.ne.s32.totalorder %s116, %s117
    %p128 = scmp.eq.s32.totalorder %s14, 0
    %p129 = por %p127, %p128
    %p130 = scmp.ne.s32.totalorder %s116, %s117
    %p131 = scmp.eq.s32.totalorder %s15, 1
    %p132 = por %p130, %p131
    %p134 = scmp.ne.s32.totalorder %s117, %s133
    %p135 = scmp.eq.s32.totalorder %s15, 0
    %p136 = por %p134, %p135
    %p137 = scmp.le.s32.totalorder 1, %s9
    %p138 = scmp.lt.s32.totalorder %s9, 3
    %p139 = pnand %p137, %p138
    %p140 = pneg %p139
    // Predicated region
    $region9: #{generator_forward.24} parent=5 // pred_check
      _
    $region10: #{generator_forward.24} parent=5 // pred_check_branch
      %142 = sbr.rel (%p139) target = $region12
    $region11: #{generator_forward.24} parent=5 // pred_region
      %s143 = ssub.s32 %s9, 1
      // Predicated region
      $region13: #{generator_forward.24} parent=11 // pred_check
        %p144 = pneg %p75
      $region14: #{generator_forward.24} parent=11 // pred_check_branch
        %146 = sbr.rel (%p144) target = $region16
      $region15: #{generator_forward.24} parent=11 // pred_region
        %p147 = scmp.lt.s32.totalorder %s19, 0
        %s148 = scalar_select %p147, %s19, 0
        %s149 = scalar_lea.vmem %s1, %s148
      $region16: #{generator_forward.24} parent=11 // pred_fallthru
        _
      // Predicated region
      $region17: #{generator_forward.24} parent=11 // pred_check
        %p150 = pneg %p101
      $region18: #{generator_forward.24} parent=11 // pred_check_branch
        %152 = sbr.rel (%p150) target = $region20
      $region19: #{generator_forward.24} parent=11 // pred_region
        %p153 = scmp.lt.s32.totalorder %s19, 0
        %s154 = scalar_select %p153, %s19, 0
        %s155 = scalar_lea.vmem %s2, %s154
      $region20: #{generator_forward.24} parent=11 // pred_fallthru
        _
    $region12: #{generator_forward.24} parent=5 // pred_fallthru
      _
    %p156 = scmp.lt.s32.totalorder %s9, 2
    // Predicated region
    $region21: #{generator_forward.24} parent=5 // pred_check
      %p157 = pneg %p156
    $region22: #{generator_forward.24} parent=5 // pred_check_branch
      %159 = sbr.rel (%p157) target = $region24
    $region23: #{generator_forward.24} parent=5 // pred_region
      // Predicated region
      $region25: #{generator_forward.24} parent=23 // pred_check
        %p160 = pneg %p43
      $region26: #{generator_forward.24} parent=23 // pred_check_branch
        %162 = sbr.rel (%p160) target = $region28
      $region27: #{generator_forward.24} parent=23 // pred_region
        %p163 = scmp.lt.s32.totalorder %s16, 1
        %s164 = scalar_select %p163, %s16, 1
        %p165 = scmp.lt.s32.totalorder %s17, 0
        %s166 = scalar_select %p165, %s17, 0
        %s167 = sadd.s32 %s166, %s164
        %s168 = smul.addr %s167, 4
        %s169 = scalar_lea.vmem %s0, %s168
      $region28: #{generator_forward.24} parent=23 // pred_fallthru
        _
    $region24: #{generator_forward.24} parent=5 // pred_fallthru
      _
    %p170 = scmp.le.s32.totalorder 1, %s9
    %p171 = scmp.lt.s32.totalorder %s9, 3
    %p172 = pnand %p170, %p171
    %p173 = pneg %p172
    // Predicated region
    $region29: #{generator_forward.24} parent=5 // pred_check
      _
    $region30: #{generator_forward.24} parent=5 // pred_check_branch
      %175 = sbr.rel (%p172) target = $region32
    $region31: #{generator_forward.24} parent=5 // pred_region
      %s176 = ssub.s32 %s9, 1
      %p177 = scmp.lt.s32.totalorder %s18, 1
      %s178 = scalar_select %p177, %s18, 1
      %p179 = scmp.lt.s32.totalorder %s19, 0
      %s180 = scalar_select %p179, %s19, 0
      %s181 = sadd.s32 %s180, %s178
      %s182 = smul.addr %s181, 4
      %s183 = scalar_lea.vmem %s0, %s182
      %p184 = pneg %p49
      %p185 = pneg %p46
      %p186 = scmp.lt.s32.totalorder %s19, 0
      %s187 = scalar_select %p186, %s19, 0
      %s188 = scalar_lea.vmem %s1, %s187
      %p189 = pneg %p75
      %p190 = pneg %p72
      %p191 = scmp.lt.s32.totalorder %s19, 0
      %s192 = scalar_select %p191, %s19, 0
      %s193 = scalar_lea.vmem %s2, %s192
      %p194 = pneg %p101
      %p195 = pneg %p98
      %p196 = pneg %p129
      %p197 = pneg %p126
      %p198 = scmp.lt.s32.totalorder %s18, 1
      %s199 = scalar_select %p198, %s18, 1
      %p200 = scmp.lt.s32.totalorder %s19, 0
      %s201 = scalar_select %p200, %s19, 0
      %s202 = sadd.s32 %s201, %s199
      %s203 = smul.addr %s202, 4
      %s204 = scalar_lea.vmem %s3, %s203
      %p205 = scmp.lt.s32.totalorder %s18, 1
      %s206 = scalar_select %p205, %s18, 1
      %p207 = scmp.lt.s32.totalorder %s19, 0
      %s208 = scalar_select %p207, %s19, 0
      %s209 = sadd.s32 %s208, %s206
      %s210 = smul.addr %s209, 4
      %s211 = scalar_lea.vmem %s0, %s210
      %p212 = scmp.lt.s32.totalorder %s19, 0
      %s213 = scalar_select %p212, %s19, 0
      %s214 = scalar_lea.vmem %s1, %s213
      %p215 = scmp.lt.s32.totalorder %s19, 0
      %s216 = scalar_select %p215, %s19, 0
      %s217 = scalar_lea.vmem %s2, %s216
      %p218 = scmp.lt.s32.totalorder %s18, 1
      %s219 = scalar_select %p218, %s18, 1
      %p220 = scmp.lt.s32.totalorder %s19, 0
      %s221 = scalar_select %p220, %s19, 0
      %s222 = sadd.s32 %s221, %s219
      %s223 = smul.addr %s222, 4
      %s224 = scalar_lea.vmem %s3, %s223
      %v225 = vld [vmem:[%s211] sm:$0xf]
      %v226 = vunpack.c.l.bf16 %v225
      %v227 = vld [vmem:[%s214] sm:$0x1]
      %v228 = vld [vmem:[%s217] sm:$0x1]
      %v229 = vrot.slane %v226, 4
      %v230 = vadd.f32 %v226, %v229
      %v231 = vrot.slane %v230, 2
      %v232 = vadd.f32 %v230, %v231
      %v233 = vrot.slane %v232, 1
      %v234 = vadd.f32 %v232, %v233
      %236 = vrot.lane.b32.xlu0 %v234, 64
      %v237 = vpop.permute.xlu0 %236
      %v239 = vadd.f32 %v234, %v237
      %v240 = vmul.f32 %v226, %v226
      %v241 = vrot.slane %v240, 4
      %v242 = vadd.f32 %v240, %v241
      %v243 = vrot.slane %v242, 2
      %v244 = vadd.f32 %v242, %v243
      %v245 = vrot.slane %v244, 1
      %v246 = vadd.f32 %v244, %v245
      %248 = vrot.lane.b32.xlu0 %v246, 64
      %v249 = vpop.permute.xlu0 %248
      %v251 = vadd.f32 %v246, %v249
      %v252 = vmul.f32 %v239, 0.0625
      %v253 = vmul.f32 %v251, 0.0625
      %v254 = vmul.f32 %v252, %v252
      %v255 = vsub.f32 %v253, %v254
      %v256 = vadd.f32 %v255, 1e-05
      %v257 = vrsqrt.pop %v256
      %v258 = vmul.f32 %v227, %v257
      %v259 = vmul.f32 %v252, %v258
      %v260 = vsub.f32 %v228, %v259
      %v262 = vlaneseq
      %v263 = vshrl.u32 %v262, 7
      %v264 = vsub.s32 0, %v263
      %v265 = vrot.slane %v258, %v264
      %266 = vrot.lane.b32.xlu0 %v265, 64
      %v267 = vpop.permute.xlu0 %266
      %vm269 = vcmask 523264
      %v270 = vsel %vm269, %v258, %v267
      %v272 = vlaneseq
      %v273 = vshrl.u32 %v272, 7
      %v274 = vsub.s32 0, %v273
      %v275 = vrot.slane %v260, %v274
      %276 = vrot.lane.b32.xlu0 %v275, 64
      %v277 = vpop.permute.xlu0 %276
      %v279 = vsel %vm269, %v260, %v277
      %v280 = vlaneseq
      %v281 = vshrl.u32 %v280, 7
      %v282 = vsub.s32 0, %v281
      %v283 = vrot.slane %v270, %v282
      %v284 = vmul.f32 %v226, %v283
      %v285 = vlaneseq
      %v286 = vshrl.u32 %v285, 7
      %v287 = vsub.s32 0, %v286
      %v288 = vrot.slane %v279, %v287
      %v289 = vadd.f32 %v284, %v288
      %v290 = vmax.f32 %v289, 0.0
      %v291 = vpack.c.bf16 %v290, %v290
      %292 = vst [vmem:[%s224] sm:$0xf] %v291
      %p293 = scmp.lt.s32.totalorder %s18, 1
      %s294 = scalar_select %p293, %s18, 1
      %p295 = scmp.lt.s32.totalorder %s19, 0
      %s296 = scalar_select %p295, %s19, 0
      %s297 = sadd.s32 %s296, %s294
      %s298 = smul.addr %s297, 4
      %s299 = scalar_lea.vmem %s3, %s298
      // Predicated region
      $region33: #{generator_forward.24} parent=31 // pred_check
        %p300 = pneg %p126
      $region34: #{generator_forward.24} parent=31 // pred_check_branch
        %302 = sbr.rel (%p300) target = $region36
      $region35: #{generator_forward.24} parent=31 // pred_region
        _
      $region36: #{generator_forward.24} parent=31 // pred_fallthru
        _
    $region32: #{generator_forward.24} parent=5 // pred_fallthru
      _
    %p303 = scmp.le.s32.totalorder 2, %s9
    // Predicated region
    $region37: #{generator_forward.24} parent=5 // pred_check
      %p304 = pneg %p303
    $region38: #{generator_forward.24} parent=5 // pred_check_branch
      %306 = sbr.rel (%p304) target = $region40
    $region39: #{generator_forward.24} parent=5 // pred_region
      %s307 = ssub.s32 %s9, 2
      // Predicated region
      $region41: #{generator_forward.24} parent=39 // pred_check
        %p308 = pneg %p132
      $region42: #{generator_forward.24} parent=39 // pred_check_branch
        %310 = sbr.rel (%p308) target = $region44
      $region43: #{generator_forward.24} parent=39 // pred_region
        %p311 = scmp.lt.s32.totalorder %s20, 1
        %s312 = scalar_select %p311, %s20, 1
        %p313 = scmp.lt.s32.totalorder %s21, 0
        %s314 = scalar_select %p313, %s21, 0
        %s315 = sadd.s32 %s314, %s312
        %s316 = smul.addr %s315, 4
        %s317 = scalar_lea.vmem %s3, %s316
      $region44: #{generator_forward.24} parent=39 // pred_fallthru
        _
    $region40: #{generator_forward.24} parent=5 // pred_fallthru
      _
  $region6: #{generator_forward.24} parent=0 // loop_footer
    %s13 = sadd.s32 1, %s9
  $region7: #{generator_forward.24} parent=0 // loop_footer_branch
    %8 = sbr.rel target = $region3
  $region8: #{generator_forward.24} parent=0 // loop_exit
    _

// kernel: generator_forward.28
$region0: #{generator_forward.28}
  #allocation0 [shape = 'u32[]', space=smem, size = 0x4, offset = 0x4, fixed_abs, tag = 'smem constant byte address 0x4 - core index']
  #allocation1 [shape = 'u32[144,128]{1,0:T(1,128)}', space=vmem, size = 0x12000, scoped, tag = 'internal scratch']
  %s0 = inlined_call_operand.vmem [shape: bf16[2,8,128], index: 0, kind: input, shape index: {}]
  %s1 = inlined_call_operand.vmem [shape: f32[1,64], index: 1, kind: input, shape index: {}]
  %s2 = inlined_call_operand.vmem [shape: f32[1,64], index: 2, kind: input, shape index: {}]
  %s3 = inlined_call_operand.vmem [shape: bf16[2,8,128], index: 3, kind: input, shape index: {}]
  %s4 = inlined_call_operand.vmem [shape: bf16[2,8,128], index: 4, kind: output, shape index: {}]
  %s5 = sld [smem:[#allocation0]]
  $region49: #{generator_forward.28} parent=0
    _
  %s7 = ssub.s32 1, %s5
  %s8 = scalar_select 0, %s7, %s5
  loop: start=0, step=1, limit=4
  $region2: #{generator_forward.28} parent=0 // loop_pre_header
    _
  $region3: #{generator_forward.28} parent=0 // loop_header
    %s10 = sphi 0, %s14
    %p11 = scmp.ge.s32.totalorder %s10, 4
    %s17 = sphi 0, %s29
    %s18 = sphi 0, %s25
    %s19 = sphi 0, %s17
    %s20 = sphi 0, %s18
    %s21 = sphi 0, %s19
    %s22 = sphi 0, %s20
    %s34 = sphi 0, %s36
    %s37 = sphi 0, %s34
    %s38 = sphi 0, %s37
    %s54 = sphi 0, %s38
    %s60 = sphi 0, %s62
    %s63 = sphi 0, %s60
    %s64 = sphi 0, %s63
    %s80 = sphi 0, %s64
    %s86 = sphi 0, %s88
    %s89 = sphi 0, %s86
    %s90 = sphi 0, %s89
    %s106 = sphi 0, %s90
    %s114 = sphi 0, %s116
    %s117 = sphi 0, %s114
    %s118 = sphi 0, %s117
    %s134 = sphi 0, %s118
    %s142 = sphi 0, %s144
    %s145 = sphi 0, %s142
    %s146 = sphi 0, %s145
    %s162 = sphi 0, %s146
  $region4: #{generator_forward.28} parent=0 // loop_header_branch
    %13 = sbr.rel (%p11) target = $region8
  $region5: #{generator_forward.28} parent=0 // loop_body
    %s15 = ssub.s32 %s10, 1
    %s16 = ssub.s32 %s10, 2
    %s23 = sadd.s32 1, %s18
    %p24 = scmp.ge.s32.totalorder %s23, 1
    %s25 = scalar_select %p24, 0, %s23
    %s26 = sadd.s32 1, %s17
    %s27 = scalar_select %p24, %s26, %s17
    %p28 = scmp.ge.s32.totalorder %s27, 2
    %s29 = scalar_select %p28, 0, %s27
    %s30 = ssub.s32 %s17, %s29
    %s31 = ssub.s32 %s18, %s25
    %s32 = sor.u32 %s30, %s31
    %p33 = scmp.eq.s32.totalorder %s32, 0
    %s35 = sadd.s32 %s34, 1
    %s36 = scalar_select %p33, %s34, %s35
    %p39 = pneg %p33
    %p40 = scmp.eq.s32.totalorder %s10, 1
    %p41 = por %p39, %p40
    %p42 = scmp.ne.s32.totalorder %s34, %s37
    %p43 = scmp.eq.s32.totalorder %s10, 0
    %p44 = por %p42, %p43
    %p45 = scmp.ne.s32.totalorder %s34, %s37
    %p46 = scmp.eq.s32.totalorder %s15, 1
    %p47 = por %p45, %p46
    %p48 = scmp.ne.s32.totalorder %s37, %s38
    %p49 = scmp.eq.s32.totalorder %s15, 0
    %p50 = por %p48, %p49
    %p51 = scmp.ne.s32.totalorder %s37, %s38
    %p52 = scmp.eq.s32.totalorder %s16, 1
    %p53 = por %p51, %p52
    %p55 = scmp.ne.s32.totalorder %s38, %s54
    %p56 = scmp.eq.s32.totalorder %s16, 0
    %p57 = por %p55, %p56
    %s58 = ssub.s32 %s18, %s25
    %p59 = scmp.eq.s32.totalorder %s58, 0
    %s61 = sadd.s32 %s60, 1
    %s62 = scalar_select %p59, %s60, %s61
    %p65 = pneg %p59
    %p66 = scmp.eq.s32.totalorder %s10, 1
    %p67 = por %p65, %p66
    %p68 = scmp.ne.s32.totalorder %s60, %s63
    %p69 = scmp.eq.s32.totalorder %s10, 0
    %p70 = por %p68, %p69
    %p71 = scmp.ne.s32.totalorder %s60, %s63
    %p72 = scmp.eq.s32.totalorder %s15, 1
    %p73 = por %p71, %p72
    %p74 = scmp.ne.s32.totalorder %s63, %s64
    %p75 = scmp.eq.s32.totalorder %s15, 0
    %p76 = por %p74, %p75
    %p77 = scmp.ne.s32.totalorder %s63, %s64
    %p78 = scmp.eq.s32.totalorder %s16, 1
    %p79 = por %p77, %p78
    %p81 = scmp.ne.s32.totalorder %s64, %s80
    %p82 = scmp.eq.s32.totalorder %s16, 0
    %p83 = por %p81, %p82
    %s84 = ssub.s32 %s18, %s25
    %p85 = scmp.eq.s32.totalorder %s84, 0
    %s87 = sadd.s32 %s86, 1
    %s88 = scalar_select %p85, %s86, %s87
    %p91 = pneg %p85
    %p92 = scmp.eq.s32.totalorder %s10, 1
    %p93 = por %p91, %p92
    %p94 = scmp.ne.s32.totalorder %s86, %s89
    %p95 = scmp.eq.s32.totalorder %s10, 0
    %p96 = por %p94, %p95
    %p97 = scmp.ne.s32.totalorder %s86, %s89
    %p98 = scmp.eq.s32.totalorder %s15, 1
    %p99 = por %p97, %p98
    %p100 = scmp.ne.s32.totalorder %s89, %s90
    %p101 = scmp.eq.s32.totalorder %s15, 0
    %p102 = por %p100, %p101
    %p103 = scmp.ne.s32.totalorder %s89, %s90
    %p104 = scmp.eq.s32.totalorder %s16, 1
    %p105 = por %p103, %p104
    %p107 = scmp.ne.s32.totalorder %s90, %s106
    %p108 = scmp.eq.s32.totalorder %s16, 0
    %p109 = por %p107, %p108
    %s110 = ssub.s32 %s17, %s29
    %s111 = ssub.s32 %s18, %s25
    %s112 = sor.u32 %s110, %s111
    %p113 = scmp.eq.s32.totalorder %s112, 0
    %s115 = sadd.s32 %s114, 1
    %s116 = scalar_select %p113, %s114, %s115
    %p119 = pneg %p113
    %p120 = scmp.eq.s32.totalorder %s10, 1
    %p121 = por %p119, %p120
    %p122 = scmp.ne.s32.totalorder %s114, %s117
    %p123 = scmp.eq.s32.totalorder %s10, 0
    %p124 = por %p122, %p123
    %p125 = scmp.ne.s32.totalorder %s114, %s117
    %p126 = scmp.eq.s32.totalorder %s15, 1
    %p127 = por %p125, %p126
    %p128 = scmp.ne.s32.totalorder %s117, %s118
    %p129 = scmp.eq.s32.totalorder %s15, 0
    %p130 = por %p128, %p129
    %p131 = scmp.ne.s32.totalorder %s117, %s118
    %p132 = scmp.eq.s32.totalorder %s16, 1
    %p133 = por %p131, %p132
    %p135 = scmp.ne.s32.totalorder %s118, %s134
    %p136 = scmp.eq.s32.totalorder %s16, 0
    %p137 = por %p135, %p136
    %s138 = ssub.s32 %s17, %s29
    %s139 = ssub.s32 %s18, %s25
    %s140 = sor.u32 %s138, %s139
    %p141 = scmp.eq.s32.totalorder %s140, 0
    %s143 = sadd.s32 %s142, 1
    %s144 = scalar_select %p141, %s142, %s143
    %p147 = pneg %p141
    %p148 = scmp.eq.s32.totalorder %s10, 1
    %p149 = por %p147, %p148
    %p150 = scmp.ne.s32.totalorder %s142, %s145
    %p151 = scmp.eq.s32.totalorder %s10, 0
    %p152 = por %p150, %p151
    %p153 = scmp.ne.s32.totalorder %s142, %s145
    %p154 = scmp.eq.s32.totalorder %s15, 1
    %p155 = por %p153, %p154
    %p156 = scmp.ne.s32.totalorder %s145, %s146
    %p157 = scmp.eq.s32.totalorder %s15, 0
    %p158 = por %p156, %p157
    %p159 = scmp.ne.s32.totalorder %s145, %s146
    %p160 = scmp.eq.s32.totalorder %s16, 1
    %p161 = por %p159, %p160
    %p163 = scmp.ne.s32.totalorder %s146, %s162
    %p164 = scmp.eq.s32.totalorder %s16, 0
    %p165 = por %p163, %p164
    %p166 = scmp.le.s32.totalorder 1, %s10
    %p167 = scmp.lt.s32.totalorder %s10, 3
    %p168 = pnand %p166, %p167
    %p169 = pneg %p168
    // Predicated region
    $region9: #{generator_forward.28} parent=5 // pred_check
      _
    $region10: #{generator_forward.28} parent=5 // pred_check_branch
      %171 = sbr.rel (%p168) target = $region12
    $region11: #{generator_forward.28} parent=5 // pred_region
      %s172 = ssub.s32 %s10, 1
      // Predicated region
      $region13: #{generator_forward.28} parent=11 // pred_check
        %p173 = pneg %p76
      $region14: #{generator_forward.28} parent=11 // pred_check_branch
        %175 = sbr.rel (%p173) target = $region16
      $region15: #{generator_forward.28} parent=11 // pred_region
        %p176 = scmp.lt.s32.totalorder %s20, 0
        %s177 = scalar_select %p176, %s20, 0
        %s178 = scalar_lea.vmem %s1, %s177
      $region16: #{generator_forward.28} parent=11 // pred_fallthru
        _
      // Predicated region
      $region17: #{generator_forward.28} parent=11 // pred_check
        %p179 = pneg %p102
      $region18: #{generator_forward.28} parent=11 // pred_check_branch
        %181 = sbr.rel (%p179) target = $region20
      $region19: #{generator_forward.28} parent=11 // pred_region
        %p182 = scmp.lt.s32.totalorder %s20, 0
        %s183 = scalar_select %p182, %s20, 0
        %s184 = scalar_lea.vmem %s2, %s183
      $region20: #{generator_forward.28} parent=11 // pred_fallthru
        _
    $region12: #{generator_forward.28} parent=5 // pred_fallthru
      _
    %p185 = scmp.lt.s32.totalorder %s10, 2
    // Predicated region
    $region21: #{generator_forward.28} parent=5 // pred_check
      %p186 = pneg %p185
    $region22: #{generator_forward.28} parent=5 // pred_check_branch
      %188 = sbr.rel (%p186) target = $region24
    $region23: #{generator_forward.28} parent=5 // pred_region
      // Predicated region
      $region25: #{generator_forward.28} parent=23 // pred_check
        %p189 = pneg %p44
      $region26: #{generator_forward.28} parent=23 // pred_check_branch
        %191 = sbr.rel (%p189) target = $region28
      $region27: #{generator_forward.28} parent=23 // pred_region
        %p192 = scmp.lt.s32.totalorder %s17, 1
        %s193 = scalar_select %p192, %s17, 1
        %p194 = scmp.lt.s32.totalorder %s18, 0
        %s195 = scalar_select %p194, %s18, 0
        %s196 = sadd.s32 %s195, %s193
        %s197 = smul.addr %s196, 4
        %s198 = scalar_lea.vmem %s0, %s197
      $region28: #{generator_forward.28} parent=23 // pred_fallthru
        _
      // Predicated region
      $region29: #{generator_forward.28} parent=23 // pred_check
        %p199 = pneg %p124
      $region30: #{generator_forward.28} parent=23 // pred_check_branch
        %201 = sbr.rel (%p199) target = $region32
      $region31: #{generator_forward.28} parent=23 // pred_region
        %p202 = scmp.lt.s32.totalorder %s17, 1
        %s203 = scalar_select %p202, %s17, 1
        %p204 = scmp.lt.s32.totalorder %s18, 0
        %s205 = scalar_select %p204, %s18, 0
        %s206 = sadd.s32 %s205, %s203
        %s207 = smul.addr %s206, 4
        %s208 = scalar_lea.vmem %s3, %s207
      $region32: #{generator_forward.28} parent=23 // pred_fallthru
        _
    $region24: #{generator_forward.28} parent=5 // pred_fallthru
      _
    %p209 = scmp.le.s32.totalorder 1, %s10
    %p210 = scmp.lt.s32.totalorder %s10, 3
    %p211 = pnand %p209, %p210
    %p212 = pneg %p211
    // Predicated region
    $region33: #{generator_forward.28} parent=5 // pred_check
      _
    $region34: #{generator_forward.28} parent=5 // pred_check_branch
      %214 = sbr.rel (%p211) target = $region36
    $region35: #{generator_forward.28} parent=5 // pred_region
      %s215 = ssub.s32 %s10, 1
      %p216 = scmp.lt.s32.totalorder %s19, 1
      %s217 = scalar_select %p216, %s19, 1
      %p218 = scmp.lt.s32.totalorder %s20, 0
      %s219 = scalar_select %p218, %s20, 0
      %s220 = sadd.s32 %s219, %s217
      %s221 = smul.addr %s220, 4
      %s222 = scalar_lea.vmem %s0, %s221
      %p223 = pneg %p50
      %p224 = pneg %p47
      %p225 = scmp.lt.s32.totalorder %s20, 0
      %s226 = scalar_select %p225, %s20, 0
      %s227 = scalar_lea.vmem %s1, %s226
      %p228 = pneg %p76
      %p229 = pneg %p73
      %p230 = scmp.lt.s32.totalorder %s20, 0
      %s231 = scalar_select %p230, %s20, 0
      %s232 = scalar_lea.vmem %s2, %s231
      %p233 = pneg %p102
      %p234 = pneg %p99
      %p235 = scmp.lt.s32.totalorder %s19, 1
      %s236 = scalar_select %p235, %s19, 1
      %p237 = scmp.lt.s32.totalorder %s20, 0
      %s238 = scalar_select %p237, %s20, 0
      %s239 = sadd.s32 %s238, %s236
      %s240 = smul.addr %s239, 4
      %s241 = scalar_lea.vmem %s3, %s240
      %p242 = pneg %p130
      %p243 = pneg %p127
      %p244 = pneg %p158
      %p245 = pneg %p155
      %p246 = scmp.lt.s32.totalorder %s19, 1
      %s247 = scalar_select %p246, %s19, 1
      %p248 = scmp.lt.s32.totalorder %s20, 0
      %s249 = scalar_select %p248, %s20, 0
      %s250 = sadd.s32 %s249, %s247
      %s251 = smul.addr %s250, 4
      %s252 = scalar_lea.vmem %s4, %s251
      %p253 = scmp.lt.s32.totalorder %s19, 1
      %s254 = scalar_select %p253, %s19, 1
      %p255 = scmp.lt.s32.totalorder %s20, 0
      %s256 = scalar_select %p255, %s20, 0
      %s257 = sadd.s32 %s256, %s254
      %s258 = smul.addr %s257, 4
      %s259 = scalar_lea.vmem %s0, %s258
      %p260 = scmp.lt.s32.totalorder %s20, 0
      %s261 = scalar_select %p260, %s20, 0
      %s262 = scalar_lea.vmem %s1, %s261
      %p263 = scmp.lt.s32.totalorder %s20, 0
      %s264 = scalar_select %p263, %s20, 0
      %s265 = scalar_lea.vmem %s2, %s264
      %p266 = scmp.lt.s32.totalorder %s19, 1
      %s267 = scalar_select %p266, %s19, 1
      %p268 = scmp.lt.s32.totalorder %s20, 0
      %s269 = scalar_select %p268, %s20, 0
      %s270 = sadd.s32 %s269, %s267
      %s271 = smul.addr %s270, 4
      %s272 = scalar_lea.vmem %s3, %s271
      %p273 = scmp.lt.s32.totalorder %s19, 1
      %s274 = scalar_select %p273, %s19, 1
      %p275 = scmp.lt.s32.totalorder %s20, 0
      %s276 = scalar_select %p275, %s20, 0
      %s277 = sadd.s32 %s276, %s274
      %s278 = smul.addr %s277, 4
      %s279 = scalar_lea.vmem %s4, %s278
      %v280 = vld [vmem:[%s259] sm:$0xf]
      %v281 = vunpack.c.l.bf16 %v280
      %v282 = vld [vmem:[%s262] sm:$0x1]
      %v283 = vld [vmem:[%s265] sm:$0x1]
      %v284 = vrot.slane %v281, 4
      %v285 = vadd.f32 %v281, %v284
      %v286 = vrot.slane %v285, 2
      %v287 = vadd.f32 %v285, %v286
      %v288 = vrot.slane %v287, 1
      %v289 = vadd.f32 %v287, %v288
      %291 = vrot.lane.b32.xlu0 %v289, 64
      %v292 = vpop.permute.xlu0 %291
      %v294 = vadd.f32 %v289, %v292
      %v295 = vmul.f32 %v281, %v281
      %v296 = vrot.slane %v295, 4
      %v297 = vadd.f32 %v295, %v296
      %v298 = vrot.slane %v297, 2
      %v299 = vadd.f32 %v297, %v298
      %v300 = vrot.slane %v299, 1
      %v301 = vadd.f32 %v299, %v300
      %303 = vrot.lane.b32.xlu0 %v301, 64
      %v304 = vpop.permute.xlu0 %303
      %v306 = vadd.f32 %v301, %v304
      %v307 = vmul.f32 %v294, 0.0625
      %v308 = vmul.f32 %v306, 0.0625
      %v309 = vmul.f32 %v307, %v307
      %v310 = vsub.f32 %v308, %v309
      %v311 = vadd.f32 %v310, 1e-05
      %v312 = vrsqrt.pop %v311
      %v313 = vmul.f32 %v282, %v312
      %v314 = vmul.f32 %v307, %v313
      %v315 = vsub.f32 %v283, %v314
      %v317 = vlaneseq
      %v318 = vshrl.u32 %v317, 7
      %v319 = vsub.s32 0, %v318
      %v320 = vrot.slane %v313, %v319
      %321 = vrot.lane.b32.xlu0 %v320, 64
      %v322 = vpop.permute.xlu0 %321
      %vm324 = vcmask 523264
      %v325 = vsel %vm324, %v313, %v322
      %v327 = vlaneseq
      %v328 = vshrl.u32 %v327, 7
      %v329 = vsub.s32 0, %v328
      %v330 = vrot.slane %v315, %v329
      %331 = vrot.lane.b32.xlu0 %v330, 64
      %v332 = vpop.permute.xlu0 %331
      %v334 = vsel %vm324, %v315, %v332
      %v335 = vlaneseq
      %v336 = vshrl.u32 %v335, 7
      %v337 = vsub.s32 0, %v336
      %v338 = vrot.slane %v325, %v337
      %v339 = vmul.f32 %v281, %v338
      %v340 = vlaneseq
      %v341 = vshrl.u32 %v340, 7
      %v342 = vsub.s32 0, %v341
      %v343 = vrot.slane %v334, %v342
      %v344 = vadd.f32 %v339, %v343
      %v345 = vld [vmem:[%s272] sm:$0xf]
      %v346 = vunpack.c.l.bf16 %v345
      %v347 = vadd.f32 %v344, %v346
      %v348 = vpack.c.bf16 %v347, %v347
      %349 = vst [vmem:[%s279] sm:$0xf] %v348
      %p350 = scmp.lt.s32.totalorder %s19, 1
      %s351 = scalar_select %p350, %s19, 1
      %p352 = scmp.lt.s32.totalorder %s20, 0
      %s353 = scalar_select %p352, %s20, 0
      %s354 = sadd.s32 %s353, %s351
      %s355 = smul.addr %s354, 4
      %s356 = scalar_lea.vmem %s4, %s355
      // Predicated region
      $region37: #{generator_forward.28} parent=35 // pred_check
        %p357 = pneg %p155
      $region38: #{generator_forward.28} parent=35 // pred_check_branch
        %359 = sbr.rel (%p357) target = $region40
      $region39: #{generator_forward.28} parent=35 // pred_region
        _
      $region40: #{generator_forward.28} parent=35 // pred_fallthru
        _
    $region36: #{generator_forward.28} parent=5 // pred_fallthru
      _
    %p360 = scmp.le.s32.totalorder 2, %s10
    // Predicated region
    $region41: #{generator_forward.28} parent=5 // pred_check
      %p361 = pneg %p360
    $region42: #{generator_forward.28} parent=5 // pred_check_branch
      %363 = sbr.rel (%p361) target = $region44
    $region43: #{generator_forward.28} parent=5 // pred_region
      %s364 = ssub.s32 %s10, 2
      // Predicated region
      $region45: #{generator_forward.28} parent=43 // pred_check
        %p365 = pneg %p161
      $region46: #{generator_forward.28} parent=43 // pred_check_branch
        %367 = sbr.rel (%p365) target = $region48
      $region47: #{generator_forward.28} parent=43 // pred_region
        %p368 = scmp.lt.s32.totalorder %s21, 1
        %s369 = scalar_select %p368, %s21, 1
        %p370 = scmp.lt.s32.totalorder %s22, 0
        %s371 = scalar_select %p370, %s22, 0
        %s372 = sadd.s32 %s371, %s369
        %s373 = smul.addr %s372, 4
        %s374 = scalar_lea.vmem %s4, %s373
      $region48: #{generator_forward.28} parent=43 // pred_fallthru
        _
    $region44: #{generator_forward.28} parent=5 // pred_fallthru
      _
  $region6: #{generator_forward.28} parent=0 // loop_footer
    %s14 = sadd.s32 1, %s10
  $region7: #{generator_forward.28} parent=0 // loop_footer_branch
    %9 = sbr.rel target = $region3
  $region8: #{generator_forward.28} parent=0 // loop_exit
    _

// kernel: generator_forward.25
$region0: #{generator_forward.25}
  #allocation0 [shape = 'u32[]', space=smem, size = 0x4, offset = 0x4, fixed_abs, tag = 'smem constant byte address 0x4 - core index']
  #allocation1 [shape = 'u32[144,128]{1,0:T(1,128)}', space=vmem, size = 0x12000, scoped, tag = 'internal scratch']
  #allocation2 [shape = 'f32[32,128]{1,0:T(8,128)}', space=vmem, size = 0x4000, scoped, tag = 'scratch operand']
  %s0 = inlined_call_operand.vmem [shape: bf16[32,640], index: 0, kind: input, shape index: {}]
  %s1 = inlined_call_operand.vmem [shape: bf16[640,128], index: 1, kind: input, shape index: {}]
  %s2 = inlined_call_operand.vmem [shape: bf16[32,128], index: 2, kind: output, shape index: {}]
  %s3 = sld [smem:[#allocation0]]
  $region26: #{generator_forward.25} parent=0
    _
  %s5 = ssub.s32 1, %s3
  %s6 = scalar_select 0, %s5, %s3
  // Predicated region
  $region2: #{generator_forward.25} parent=0 // pred_check
    _
  $region3: #{generator_forward.25} parent=0 // pred_check_branch
    %8 = sbr.rel (0) target = $region5
  $region4: #{generator_forward.25} parent=0 // pred_region
    _
  $region5: #{generator_forward.25} parent=0 // pred_fallthru
    _
  // Predicated region
  $region6: #{generator_forward.25} parent=0 // pred_check
    _
  $region7: #{generator_forward.25} parent=0 // pred_check_branch
    %10 = sbr.rel (0) target = $region9
  $region8: #{generator_forward.25} parent=0 // pred_region
    _
  $region9: #{generator_forward.25} parent=0 // pred_fallthru
    _
  %p12 = scmp.eq.s32.totalorder 0, 0
  // Predicated region
  $region10: #{generator_forward.25} parent=0 // pred_check
    %p13 = pneg %p12
  $region11: #{generator_forward.25} parent=0 // pred_check_branch
    %15 = sbr.rel (%p13) target = $region13
  $region12: #{generator_forward.25} parent=0 // pred_region
    %16 = vst [vmem:[#allocation2] sm:$0xff] 0.0
    %17 = vst [vmem:[#allocation2 + $0x8] sm:$0xff] 0.0
    %18 = vst [vmem:[#allocation2 + $0x10] sm:$0xff] 0.0
    %19 = vst [vmem:[#allocation2 + $0x18] sm:$0xff] 0.0
  $region13: #{generator_forward.25} parent=0 // pred_fallthru
    _
  %v20 = vld [vmem:[#allocation2] sm:$0xff]
  %v21 = vld [vmem:[#allocation2 + $0x8] sm:$0xff]
  %v22 = vld [vmem:[#allocation2 + $0x10] sm:$0xff]
  %v23 = vld [vmem:[#allocation2 + $0x18] sm:$0xff]
  %v24 = vld [vmem:[%s0] sm:$0xff]
  %v25 = vld [vmem:[%s0 + $0x8] sm:$0xff]
  %v26 = vld [vmem:[%s0 + $0x10] sm:$0xf]
  %v27 = vld [vmem:[%s0 + $0x14] sm:$0xff]
  %v28 = vld [vmem:[%s0 + $0x1c] sm:$0xff]
  %v29 = vld [vmem:[%s0 + $0x24] sm:$0xf]
  %v30 = vld [vmem:[%s0 + $0x28] sm:$0xff]
  %v31 = vld [vmem:[%s0 + $0x30] sm:$0xff]
  %v32 = vld [vmem:[%s0 + $0x38] sm:$0xf]
  %v33 = vld [vmem:[%s0 + $0x3c] sm:$0xff]
  %v34 = vld [vmem:[%s0 + $0x44] sm:$0xff]
  %v35 = vld [vmem:[%s0 + $0x4c] sm:$0xf]
  %v36 = vld [vmem:[%s1] sm:$0xf]
  %v37 = vld [vmem:[%s1 + $0x4] sm:$0xf]
  %v38 = vld [vmem:[%s1 + $0x8] sm:$0xf]
  %v39 = vld [vmem:[%s1 + $0xc] sm:$0xf]
  %v40 = vld [vmem:[%s1 + $0x10] sm:$0xf]
  %v41 = vld [vmem:[%s1 + $0x14] sm:$0xf]
  %v42 = vld [vmem:[%s1 + $0x18] sm:$0xf]
  %v43 = vld [vmem:[%s1 + $0x1c] sm:$0xf]
  %v44 = vld [vmem:[%s1 + $0x20] sm:$0xf]
  %v45 = vld [vmem:[%s1 + $0x24] sm:$0xf]
  %v46 = vld [vmem:[%s1 + $0x28] sm:$0xf]
  %v47 = vld [vmem:[%s1 + $0x2c] sm:$0xf]
  %v48 = vld [vmem:[%s1 + $0x30] sm:$0xf]
  %v49 = vld [vmem:[%s1 + $0x34] sm:$0xf]
  %v50 = vld [vmem:[%s1 + $0x38] sm:$0xf]
  %v51 = vld [vmem:[%s1 + $0x3c] sm:$0xf]
  %v52 = vld [vmem:[%s1 + $0x40] sm:$0xf]
  %v53 = vld [vmem:[%s1 + $0x44] sm:$0xf]
  %v54 = vld [vmem:[%s1 + $0x48] sm:$0xf]
  %v55 = vld [vmem:[%s1 + $0x4c] sm:$0xf]
  %v56 = vld [vmem:[%s1 + $0x50] sm:$0xf]
  %v57 = vld [vmem:[%s1 + $0x54] sm:$0xf]
  %v58 = vld [vmem:[%s1 + $0x58] sm:$0xf]
  %v59 = vld [vmem:[%s1 + $0x5c] sm:$0xf]
  %v60 = vld [vmem:[%s1 + $0x60] sm:$0xf]
  %v61 = vld [vmem:[%s1 + $0x64] sm:$0xf]
  %v62 = vld [vmem:[%s1 + $0x68] sm:$0xf]
  %v63 = vld [vmem:[%s1 + $0x6c] sm:$0xf]
  %v64 = vld [vmem:[%s1 + $0x70] sm:$0xf]
  %v65 = vld [vmem:[%s1 + $0x74] sm:$0xf]
  %v66 = vld [vmem:[%s1 + $0x78] sm:$0xf]
  %v67 = vld [vmem:[%s1 + $0x7c] sm:$0xf]
  %v68 = vld [vmem:[%s1 + $0x80] sm:$0xf]
  %v69 = vld [vmem:[%s1 + $0x84] sm:$0xf]
  %v70 = vld [vmem:[%s1 + $0x88] sm:$0xf]
  %v71 = vld [vmem:[%s1 + $0x8c] sm:$0xf]
  %v72 = vld [vmem:[%s1 + $0x90] sm:$0xf]
  %v73 = vld [vmem:[%s1 + $0x94] sm:$0xf]
  %v74 = vld [vmem:[%s1 + $0x98] sm:$0xf]
  %v75 = vld [vmem:[%s1 + $0x9c] sm:$0xf]
  %v76 = vld [vmem:[%s1 + $0xa0] sm:$0xf]
  %v77 = vld [vmem:[%s1 + $0xa4] sm:$0xf]
  %v78 = vld [vmem:[%s1 + $0xa8] sm:$0xf]
  %v79 = vld [vmem:[%s1 + $0xac] sm:$0xf]
  %v80 = vld [vmem:[%s1 + $0xb0] sm:$0xf]
  %v81 = vld [vmem:[%s1 + $0xb4] sm:$0xf]
  %v82 = vld [vmem:[%s1 + $0xb8] sm:$0xf]
  %v83 = vld [vmem:[%s1 + $0xbc] sm:$0xf]
  %v84 = vld [vmem:[%s1 + $0xc0] sm:$0xf]
  %v85 = vld [vmem:[%s1 + $0xc4] sm:$0xf]
  %v86 = vld [vmem:[%s1 + $0xc8] sm:$0xf]
  %v87 = vld [vmem:[%s1 + $0xcc] sm:$0xf]
  %v88 = vld [vmem:[%s1 + $0xd0] sm:$0xf]
  %v89 = vld [vmem:[%s1 + $0xd4] sm:$0xf]
  %v90 = vld [vmem:[%s1 + $0xd8] sm:$0xf]
  %v91 = vld [vmem:[%s1 + $0xdc] sm:$0xf]
  %v92 = vld [vmem:[%s1 + $0xe0] sm:$0xf]
  %v93 = vld [vmem:[%s1 + $0xe4] sm:$0xf]
  %v94 = vld [vmem:[%s1 + $0xe8] sm:$0xf]
  %v95 = vld [vmem:[%s1 + $0xec] sm:$0xf]
  %v96 = vld [vmem:[%s1 + $0xf0] sm:$0xf]
  %v97 = vld [vmem:[%s1 + $0xf4] sm:$0xf]
  %v98 = vld [vmem:[%s1 + $0xf8] sm:$0xf]
  %v99 = vld [vmem:[%s1 + $0xfc] sm:$0xf]
  %v100 = vld [vmem:[%s1 + $0x100] sm:$0xf]
  %v101 = vld [vmem:[%s1 + $0x104] sm:$0xf]
  %v102 = vld [vmem:[%s1 + $0x108] sm:$0xf]
  %v103 = vld [vmem:[%s1 + $0x10c] sm:$0xf]
  %v104 = vld [vmem:[%s1 + $0x110] sm:$0xf]
  %v105 = vld [vmem:[%s1 + $0x114] sm:$0xf]
  %v106 = vld [vmem:[%s1 + $0x118] sm:$0xf]
  %v107 = vld [vmem:[%s1 + $0x11c] sm:$0xf]
  %v108 = vld [vmem:[%s1 + $0x120] sm:$0xf]
  %v109 = vld [vmem:[%s1 + $0x124] sm:$0xf]
  %v110 = vld [vmem:[%s1 + $0x128] sm:$0xf]
  %v111 = vld [vmem:[%s1 + $0x12c] sm:$0xf]
  %v112 = vld [vmem:[%s1 + $0x130] sm:$0xf]
  %v113 = vld [vmem:[%s1 + $0x134] sm:$0xf]
  %v114 = vld [vmem:[%s1 + $0x138] sm:$0xf]
  %v115 = vld [vmem:[%s1 + $0x13c] sm:$0xf]
  %v128 = vunpack.c.l.b16 %v24
  %v129 = vunpack.c.h.b16 %v24
  %v130 = vunpack.c.l.b16 %v25
  %v131 = vunpack.c.h.b16 %v25
  %v132 = vunpack.c.l.b16 %v26
  %v133 = vunpack.c.l.b16 %v27
  %v134 = vunpack.c.h.b16 %v27
  %v135 = vunpack.c.l.b16 %v28
  %v136 = vunpack.c.h.b16 %v28
  %v137 = vunpack.c.l.b16 %v29
  %v138 = vunpack.c.l.b16 %v30
  %v139 = vunpack.c.h.b16 %v30
  %v140 = vunpack.c.l.b16 %v31
  %v141 = vunpack.c.h.b16 %v31
  %v142 = vunpack.c.l.b16 %v32
  %v143 = vunpack.c.l.b16 %v33
  %v144 = vunpack.c.h.b16 %v33
  %v145 = vunpack.c.l.b16 %v34
  %v146 = vunpack.c.h.b16 %v34
  %v147 = vunpack.c.l.b16 %v35
  %v148 = vpack.c.b16 %v133, %v128
  %v149 = vpack.c.b16 %v134, %v129
  %v150 = vpack.c.b16 %v135, %v130
  %v151 = vpack.c.b16 %v136, %v131
  %v152 = vpack.c.b16 %v137, %v132
  %v153 = vpack.c.b16 %v143, %v138
  %v154 = vpack.c.b16 %v144, %v139
  %v155 = vpack.c.b16 %v145, %v140
  %v156 = vpack.c.b16 %v146, %v141
  %v157 = vpack.c.b16 %v147, %v142
  %v248 = vunpack.c.l.b16 %v36
  %v249 = vunpack.c.l.b16 %v37
  %v250 = vunpack.c.l.b16 %v38
  %v251 = vunpack.c.l.b16 %v39
  %v252 = vunpack.c.l.b16 %v40
  %v253 = vunpack.c.l.b16 %v41
  %v254 = vunpack.c.l.b16 %v42
  %v255 = vunpack.c.l.b16 %v43
  %v256 = vunpack.c.l.b16 %v44
  %v257 = vunpack.c.l.b16 %v45
  %v258 = vunpack.c.l.b16 %v46
  %v259 = vunpack.c.l.b16 %v47
  %v260 = vunpack.c.l.b16 %v48
  %v261 = vunpack.c.l.b16 %v49
  %v262 = vunpack.c.l.b16 %v50
  %v263 = vunpack.c.l.b16 %v51
  %v264 = vunpack.c.l.b16 %v52
  %v265 = vunpack.c.l.b16 %v53
  %v266 = vunpack.c.l.b16 %v54
  %v267 = vunpack.c.l.b16 %v55
  %v268 = vunpack.c.l.b16 %v56
  %v269 = vunpack.c.l.b16 %v57
  %v270 = vunpack.c.l.b16 %v58
  %v271 = vunpack.c.l.b16 %v59
  %v272 = vunpack.c.l.b16 %v60
  %v273 = vunpack.c.l.b16 %v61
  %v274 = vunpack.c.l.b16 %v62
  %v275 = vunpack.c.l.b16 %v63
  %v276 = vunpack.c.l.b16 %v64
  %v277 = vunpack.c.l.b16 %v65
  %v278 = vunpack.c.l.b16 %v66
  %v279 = vunpack.c.l.b16 %v67
  %v280 = vunpack.c.l.b16 %v68
  %v281 = vunpack.c.l.b16 %v69
  %v282 = vunpack.c.l.b16 %v70
  %v283 = vunpack.c.l.b16 %v71
  %v284 = vunpack.c.l.b16 %v72
  %v285 = vunpack.c.l.b16 %v73
  %v286 = vunpack.c.l.b16 %v74
  %v287 = vunpack.c.l.b16 %v75
  %v288 = vunpack.c.l.b16 %v76
  %v289 = vunpack.c.l.b16 %v77
  %v290 = vunpack.c.l.b16 %v78
  %v291 = vunpack.c.l.b16 %v79
  %v292 = vunpack.c.l.b16 %v80
  %v293 = vunpack.c.l.b16 %v81
  %v294 = vunpack.c.l.b16 %v82
  %v295 = vunpack.c.l.b16 %v83
  %v296 = vunpack.c.l.b16 %v84
  %v297 = vunpack.c.l.b16 %v85
  %v298 = vunpack.c.l.b16 %v86
  %v299 = vunpack.c.l.b16 %v87
  %v300 = vunpack.c.l.b16 %v88
  %v301 = vunpack.c.l.b16 %v89
  %v302 = vunpack.c.l.b16 %v90
  %v303 = vunpack.c.l.b16 %v91
  %v304 = vunpack.c.l.b16 %v92
  %v305 = vunpack.c.l.b16 %v93
  %v306 = vunpack.c.l.b16 %v94
  %v307 = vunpack.c.l.b16 %v95
  %v308 = vunpack.c.l.b16 %v96
  %v309 = vunpack.c.l.b16 %v97
  %v310 = vunpack.c.l.b16 %v98
  %v311 = vunpack.c.l.b16 %v99
  %v312 = vunpack.c.l.b16 %v100
  %v313 = vunpack.c.l.b16 %v101
  %v314 = vunpack.c.l.b16 %v102
  %v315 = vunpack.c.l.b16 %v103
  %v316 = vunpack.c.l.b16 %v104
  %v317 = vunpack.c.l.b16 %v105
  %v318 = vunpack.c.l.b16 %v106
  %v319 = vunpack.c.l.b16 %v107
  %v320 = vunpack.c.l.b16 %v108
  %v321 = vunpack.c.l.b16 %v109
  %v322 = vunpack.c.l.b16 %v110
  %v323 = vunpack.c.l.b16 %v111
  %v324 = vunpack.c.l.b16 %v112
  %v325 = vunpack.c.l.b16 %v113
  %v326 = vunpack.c.l.b16 %v114
  %v327 = vunpack.c.l.b16 %v115
  %v328 = vpack.c.b16 %v249, %v248
  %v329 = vpack.c.b16 %v251, %v250
  %v330 = vpack.c.b16 %v253, %v252
  %v331 = vpack.c.b16 %v255, %v254
  %v332 = vpack.c.b16 %v257, %v256
  %v333 = vpack.c.b16 %v259, %v258
  %v334 = vpack.c.b16 %v261, %v260
  %v335 = vpack.c.b16 %v263, %v262
  %v336 = vpack.c.b16 %v265, %v264
  %v337 = vpack.c.b16 %v267, %v266
  %v338 = vpack.c.b16 %v269, %v268
  %v339 = vpack.c.b16 %v271, %v270
  %v340 = vpack.c.b16 %v273, %v272
  %v341 = vpack.c.b16 %v275, %v274
  %v342 = vpack.c.b16 %v277, %v276
  %v343 = vpack.c.b16 %v279, %v278
  %v344 = vpack.c.b16 %v281, %v280
  %v345 = vpack.c.b16 %v283, %v282
  %v346 = vpack.c.b16 %v285, %v284
  %v347 = vpack.c.b16 %v287, %v286
  %v348 = vpack.c.b16 %v289, %v288
  %v349 = vpack.c.b16 %v291, %v290
  %v350 = vpack.c.b16 %v293, %v292
  %v351 = vpack.c.b16 %v295, %v294
  %v352 = vpack.c.b16 %v297, %v296
  %v353 = vpack.c.b16 %v299, %v298
  %v354 = vpack.c.b16 %v301, %v300
  %v355 = vpack.c.b16 %v303, %v302
  %v356 = vpack.c.b16 %v305, %v304
  %v357 = vpack.c.b16 %v307, %v306
  %v358 = vpack.c.b16 %v309, %v308
  %v359 = vpack.c.b16 %v311, %v310
  %v360 = vpack.c.b16 %v313, %v312
  %v361 = vpack.c.b16 %v315, %v314
  %v362 = vpack.c.b16 %v317, %v316
  %v363 = vpack.c.b16 %v319, %v318
  %v364 = vpack.c.b16 %v321, %v320
  %v365 = vpack.c.b16 %v323, %v322
  %v366 = vpack.c.b16 %v325, %v324
  %v367 = vpack.c.b16 %v327, %v326
  %408 = vmatprep.subr.bf16.mxu0 0
  %409 = vmatpush1.bf16.msra.mxu0 %v328
  %410 = vmatprep.subr.bf16.mxu0 0
  %411 = vmatpush1.bf16.msra.mxu0 %v329
  %412 = vmatprep.subr.bf16.mxu0 0
  %413 = vmatpush1.bf16.msra.mxu0 %v330
  %414 = vmatprep.subr.bf16.mxu0 0
  %415 = vmatpush1.bf16.msra.mxu0 %v331
  %416 = vmatprep.subr.bf16.mxu0 0
  %417 = vmatpush1.bf16.msra.mxu0 %v332
  %418 = vmatprep.subr.bf16.mxu0 0
  %419 = vmatpush1.bf16.msra.mxu0 %v333
  %420 = vmatprep.subr.bf16.mxu0 0
  %421 = vmatpush1.bf16.msra.mxu0 %v334
  %422 = vmatprep.subr.bf16.mxu0 0
  %423 = vmatpush1.bf16.msra.mxu0 %v335
  %424 = vmatprep.subr.bf16.mxu0 0
  %425 = vmatpush1.bf16.msra.mxu0 %v336
  %426 = vmatprep.subr.bf16.mxu0 0
  %427 = vmatpush1.bf16.msra.mxu0 %v337
  %428 = vmatprep.subr.bf16.mxu0 0
  %429 = vmatpush1.bf16.msra.mxu0 %v338
  %430 = vmatprep.subr.bf16.mxu0 0
  %431 = vmatpush1.bf16.msra.mxu0 %v339
  %432 = vmatprep.subr.bf16.mxu0 0
  %433 = vmatpush1.bf16.msra.mxu0 %v340
  %434 = vmatprep.subr.bf16.mxu0 0
  %435 = vmatpush1.bf16.msra.mxu0 %v341
  %436 = vmatprep.subr.bf16.mxu0 0
  %437 = vmatpush1.bf16.msra.mxu0 %v342
  %438 = vmatprep.subr.bf16.mxu0 0
  %439 = vmatpush1.bf16.msra.mxu0 %v343
  %440 = vmatprep.mubr.bf16.mxu0 %v149
  %441 = vmatmul.mubr.bf16.gmra.mrb[0].mxu0 %v148
  %v442 = vpop.f32.mrb[0].mxu0
  %v443 = vadd.f32 0.0, %v442
  %v444 = vpop.f32.mrb[0].mxu0
  %v445 = vpop.f32.mrb[0].mxu0
  %v446 = vadd.f32 0.0, %v445
  %v447 = vpop.f32.mrb[0].mxu0
  %448 = vmatprep.mubr.bf16.mxu0 %v154
  %449 = vmatmul.mubr.bf16.gmra.mrb[0].mxu0 %v153
  %v450 = vpop.f32.mrb[0].mxu0
  %v451 = vadd.f32 0.0, %v450
  %v452 = vpop.f32.mrb[0].mxu0
  %v453 = vpop.f32.mrb[0].mxu0
  %v454 = vadd.f32 0.0, %v453
  %v455 = vpop.f32.mrb[0].mxu0
  %456 = vdwg.mxu0
  %457 = vmatprep.subr.bf16.mxu0 0
  %458 = vmatpush1.bf16.msra.mxu0 %v344
  %459 = vmatprep.subr.bf16.mxu0 0
  %460 = vmatpush1.bf16.msra.mxu0 %v345
  %461 = vmatprep.subr.bf16.mxu0 0
  %462 = vmatpush1.bf16.msra.mxu0 %v346
  %463 = vmatprep.subr.bf16.mxu0 0
  %464 = vmatpush1.bf16.msra.mxu0 %v347
  %465 = vmatprep.subr.bf16.mxu0 0
  %466 = vmatpush1.bf16.msra.mxu0 %v348
  %467 = vmatprep.subr.bf16.mxu0 0
  %468 = vmatpush1.bf16.msra.mxu0 %v349
  %469 = vmatprep.subr.bf16.mxu0 0
  %470 = vmatpush1.bf16.msra.mxu0 %v350
  %471 = vmatprep.subr.bf16.mxu0 0
  %472 = vmatpush1.bf16.msra.mxu0 %v351
  %473 = vmatprep.subr.bf16.mxu0 0
  %474 = vmatpush1.bf16.msra.mxu0 %v352
  %475 = vmatprep.subr.bf16.mxu0 0
  %476 = vmatpush1.bf16.msra.mxu0 %v353
  %477 = vmatprep.subr.bf16.mxu0 0
  %478 = vmatpush1.bf16.msra.mxu0 %v354
  %479 = vmatprep.subr.bf16.mxu0 0
  %480 = vmatpush1.bf16.msra.mxu0 %v355
  %481 = vmatprep.subr.bf16.mxu0 0
  %482 = vmatpush1.bf16.msra.mxu0 %v356
  %483 = vmatprep.subr.bf16.mxu0 0
  %484 = vmatpush1.bf16.msra.mxu0 %v357
  %485 = vmatprep.subr.bf16.mxu0 0
  %486 = vmatpush1.bf16.msra.mxu0 %v358
  %487 = vmatprep.subr.bf16.mxu0 0
  %488 = vmatpush1.bf16.msra.mxu0 %v359
  %489 = vmatprep.mubr.bf16.mxu0 %v151
  %490 = vmatmul.mubr.bf16.gmra.mrb[0].mxu0 %v150
  %v491 = vpop.f32.mrb[0].mxu0
  %v492 = vadd.f32 %v443, %v491
  %v493 = vpop.f32.mrb[0].mxu0
  %v494 = vpop.f32.mrb[0].mxu0
  %v495 = vadd.f32 %v446, %v494
  %v496 = vpop.f32.mrb[0].mxu0
  %497 = vmatprep.mubr.bf16.mxu0 %v156
  %498 = vmatmul.mubr.bf16.gmra.mrb[0].mxu0 %v155
  %v499 = vpop.f32.mrb[0].mxu0
  %v500 = vadd.f32 %v451, %v499
  %v501 = vpop.f32.mrb[0].mxu0
  %v502 = vpop.f32.mrb[0].mxu0
  %v503 = vadd.f32 %v454, %v502
  %v504 = vpop.f32.mrb[0].mxu0
  %505 = vdwg.mxu0
  %506 = vmatprep.subr.bf16.mxu0 0
  %507 = vmatpush1.bf16.msra.mxu0 %v360
  %508 = vmatprep.subr.bf16.mxu0 0
  %509 = vmatpush1.bf16.msra.mxu0 %v361
  %510 = vmatprep.subr.bf16.mxu0 0
  %511 = vmatpush1.bf16.msra.mxu0 %v362
  %512 = vmatprep.subr.bf16.mxu0 0
  %513 = vmatpush1.bf16.msra.mxu0 %v363
  %514 = vmatprep.subr.bf16.mxu0 0
  %515 = vmatpush1.bf16.msra.mxu0 %v364
  %516 = vmatprep.subr.bf16.mxu0 0
  %517 = vmatpush1.bf16.msra.mxu0 %v365
  %518 = vmatprep.subr.bf16.mxu0 0
  %519 = vmatpush1.bf16.msra.mxu0 %v366
  %520 = vmatprep.subr.bf16.mxu0 0
  %521 = vmatpush1.bf16.msra.mxu0 %v367
  %522 = vmatprep.subr.bf16.mxu0 0
  %523 = vmatpush1.bf16.msra.mxu0 0
  %524 = vmatprep.subr.bf16.mxu0 0
  %525 = vmatpush1.bf16.msra.mxu0 0
  %526 = vmatprep.subr.bf16.mxu0 0
  %527 = vmatpush1.bf16.msra.mxu0 0
  %528 = vmatprep.subr.bf16.mxu0 0
  %529 = vmatpush1.bf16.msra.mxu0 0
  %530 = vmatprep.subr.bf16.mxu0 0
  %531 = vmatpush1.bf16.msra.mxu0 0
  %532 = vmatprep.subr.bf16.mxu0 0
  %533 = vmatpush1.bf16.msra.mxu0 0
  %534 = vmatprep.subr.bf16.mxu0 0
  %535 = vmatpush1.bf16.msra.mxu0 0
  %536 = vmatprep.subr.bf16.mxu0 0
  %537 = vmatpush1.bf16.msra.mxu0 0
  %538 = vmatprep.mubr.bf16.mxu0 0
  %539 = vmatmul.mubr.bf16.gmra.mrb[0].mxu0 %v152
  %v540 = vpop.f32.mrb[0].mxu0
  %v541 = vadd.f32 %v492, %v540
  %v542 = vpop.f32.mrb[0].mxu0
  %v543 = vpop.f32.mrb[0].mxu0
  %v544 = vadd.f32 %v495, %v543
  %v545 = vpop.f32.mrb[0].mxu0
  %546 = vmatprep.mubr.bf16.mxu0 0
  %547 = vmatmul.mubr.bf16.gmra.mrb[0].mxu0 %v157
  %v548 = vpop.f32.mrb[0].mxu0
  %v549 = vadd.f32 %v500, %v548
  %v550 = vpop.f32.mrb[0].mxu0
  %v551 = vpop.f32.mrb[0].mxu0
  %v552 = vadd.f32 %v503, %v551
  %v553 = vpop.f32.mrb[0].mxu0
  %554 = vdwg.mxu0
  %v555 = vadd.f32 %v20, %v541
  %v556 = vadd.f32 %v21, %v544
  %v557 = vadd.f32 %v22, %v549
  %v558 = vadd.f32 %v23, %v552
  %559 = vst [vmem:[#allocation2] sm:$0xff] %v555
  %560 = vst [vmem:[#allocation2 + $0x8] sm:$0xff] %v556
  %561 = vst [vmem:[#allocation2 + $0x10] sm:$0xff] %v557
  %562 = vst [vmem:[#allocation2 + $0x18] sm:$0xff] %v558
  // Predicated region
  $region14: #{generator_forward.25} parent=0 // pred_check
    %p563 = pneg %p12
  $region15: #{generator_forward.25} parent=0 // pred_check_branch
    %565 = sbr.rel (%p563) target = $region17
  $region16: #{generator_forward.25} parent=0 // pred_region
    %v566 = vld [vmem:[#allocation2] sm:$0xff]
    %v567 = vld [vmem:[#allocation2 + $0x8] sm:$0xff]
    %v568 = vld [vmem:[#allocation2 + $0x10] sm:$0xff]
    %v569 = vld [vmem:[#allocation2 + $0x18] sm:$0xff]
    %v570 = vpack.c.bf16 %v567, %v566
    %v571 = vpack.c.bf16 %v569, %v568
    %v574 = vunpack.c.l.b16 %v570
    %v575 = vunpack.c.h.b16 %v570
    %v576 = vunpack.c.l.b16 %v571
    %v577 = vunpack.c.h.b16 %v571
    %v578 = vpack.c.b16 %v574, %v574
    %v579 = vpack.c.b16 %v575, %v575
    %v580 = vpack.c.b16 %v576, %v576
    %v581 = vpack.c.b16 %v577, %v577
    %586 = vst [vmem:[%s2] sm:$0xf] %v578
    %587 = vst [vmem:[%s2 + $0x4] sm:$0xf] %v579
    %588 = vst [vmem:[%s2 + $0x8] sm:$0xf] %v580
    %589 = vst [vmem:[%s2 + $0xc] sm:$0xf] %v581
  $region17: #{generator_forward.25} parent=0 // pred_fallthru
    _
  // Predicated region
  $region18: #{generator_forward.25} parent=0 // pred_check
    _
  $region19: #{generator_forward.25} parent=0 // pred_check_branch
    %591 = sbr.rel (0) target = $region21
  $region20: #{generator_forward.25} parent=0 // pred_region
    _
  $region21: #{generator_forward.25} parent=0 // pred_fallthru
    _
  // Predicated region
  $region22: #{generator_forward.25} parent=0 // pred_check
    _
  $region23: #{generator_forward.25} parent=0 // pred_check_branch
    %593 = sbr.rel (0) target = $region25
  $region24: #{generator_forward.25} parent=0 // pred_region
    _
  $region25: #{generator_forward.25} parent=0 // pred_fallthru
    _

// kernel: generator_forward.35
$region0: #{generator_forward.35}
  #allocation0 [shape = 'u32[]', space=smem, size = 0x4, offset = 0x4, fixed_abs, tag = 'smem constant byte address 0x4 - core index']
  #allocation1 [shape = 'u32[144,128]{1,0:T(1,128)}', space=vmem, size = 0x12000, scoped, tag = 'internal scratch']
  #allocation2 [shape = 'f32[128,128]{1,0:T(8,128)}', space=vmem, size = 0x10000, scoped, tag = 'scratch operand']
  %s0 = inlined_call_operand.vmem [shape: bf16[128,384], index: 0, kind: input, shape index: {}]
  %s1 = inlined_call_operand.vmem [shape: bf16[384,128], index: 1, kind: input, shape index: {}]
  %s2 = inlined_call_operand.vmem [shape: bf16[128,128], index: 2, kind: output, shape index: {}]
  %s3 = sld [smem:[#allocation0]]
  $region26: #{generator_forward.35} parent=0
    _
  %s5 = ssub.s32 1, %s3
  %s6 = scalar_select 0, %s5, %s3
  // Predicated region
  $region2: #{generator_forward.35} parent=0 // pred_check
    _
  $region3: #{generator_forward.35} parent=0 // pred_check_branch
    %8 = sbr.rel (0) target = $region5
  $region4: #{generator_forward.35} parent=0 // pred_region
    _
  $region5: #{generator_forward.35} parent=0 // pred_fallthru
    _
  // Predicated region
  $region6: #{generator_forward.35} parent=0 // pred_check
    _
  $region7: #{generator_forward.35} parent=0 // pred_check_branch
    %10 = sbr.rel (0) target = $region9
  $region8: #{generator_forward.35} parent=0 // pred_region
    _
  $region9: #{generator_forward.35} parent=0 // pred_fallthru
    _
  %p12 = scmp.eq.s32.totalorder 0, 0
  // Predicated region
  $region10: #{generator_forward.35} parent=0 // pred_check
    %p13 = pneg %p12
  $region11: #{generator_forward.35} parent=0 // pred_check_branch
    %15 = sbr.rel (%p13) target = $region13
  $region12: #{generator_forward.35} parent=0 // pred_region
    %16 = vst [vmem:[#allocation2] sm:$0xff] 0.0
    %17 = vst [vmem:[#allocation2 + $0x8] sm:$0xff] 0.0
    %18 = vst [vmem:[#allocation2 + $0x10] sm:$0xff] 0.0
    %19 = vst [vmem:[#allocation2 + $0x18] sm:$0xff] 0.0
    %20 = vst [vmem:[#allocation2 + $0x20] sm:$0xff] 0.0
    %21 = vst [vmem:[#allocation2 + $0x28] sm:$0xff] 0.0
    %22 = vst [vmem:[#allocation2 + $0x30] sm:$0xff] 0.0
    %23 = vst [vmem:[#allocation2 + $0x38] sm:$0xff] 0.0
    %24 = vst [vmem:[#allocation2 + $0x40] sm:$0xff] 0.0
    %25 = vst [vmem:[#allocation2 + $0x48] sm:$0xff] 0.0
    %26 = vst [vmem:[#allocation2 + $0x50] sm:$0xff] 0.0
    %27 = vst [vmem:[#allocation2 + $0x58] sm:$0xff] 0.0
    %28 = vst [vmem:[#allocation2 + $0x60] sm:$0xff] 0.0
    %29 = vst [vmem:[#allocation2 + $0x68] sm:$0xff] 0.0
    %30 = vst [vmem:[#allocation2 + $0x70] sm:$0xff] 0.0
    %31 = vst [vmem:[#allocation2 + $0x78] sm:$0xff] 0.0
  $region13: #{generator_forward.35} parent=0 // pred_fallthru
    _
  %v32 = vld [vmem:[#allocation2] sm:$0xff]
  %v33 = vld [vmem:[#allocation2 + $0x8] sm:$0xff]
  %v34 = vld [vmem:[#allocation2 + $0x10] sm:$0xff]
  %v35 = vld [vmem:[#allocation2 + $0x18] sm:$0xff]
  %v36 = vld [vmem:[#allocation2 + $0x20] sm:$0xff]
  %v37 = vld [vmem:[#allocation2 + $0x28] sm:$0xff]
  %v38 = vld [vmem:[#allocation2 + $0x30] sm:$0xff]
  %v39 = vld [vmem:[#allocation2 + $0x38] sm:$0xff]
  %v40 = vld [vmem:[#allocation2 + $0x40] sm:$0xff]
  %v41 = vld [vmem:[#allocation2 + $0x48] sm:$0xff]
  %v42 = vld [vmem:[#allocation2 + $0x50] sm:$0xff]
  %v43 = vld [vmem:[#allocation2 + $0x58] sm:$0xff]
  %v44 = vld [vmem:[#allocation2 + $0x60] sm:$0xff]
  %v45 = vld [vmem:[#allocation2 + $0x68] sm:$0xff]
  %v46 = vld [vmem:[#allocation2 + $0x70] sm:$0xff]
  %v47 = vld [vmem:[#allocation2 + $0x78] sm:$0xff]
  %v48 = vld [vmem:[%s0] sm:$0xff]
  %v49 = vld [vmem:[%s0 + $0x8] sm:$0xf]
  %v50 = vld [vmem:[%s0 + $0xc] sm:$0xff]
  %v51 = vld [vmem:[%s0 + $0x14] sm:$0xf]
  %v52 = vld [vmem:[%s0 + $0x18] sm:$0xff]
  %v53 = vld [vmem:[%s0 + $0x20] sm:$0xf]
  %v54 = vld [vmem:[%s0 + $0x24] sm:$0xff]
  %v55 = vld [vmem:[%s0 + $0x2c] sm:$0xf]
  %v56 = vld [vmem:[%s0 + $0x30] sm:$0xff]
  %v57 = vld [vmem:[%s0 + $0x38] sm:$0xf]
  %v58 = vld [vmem:[%s0 + $0x3c] sm:$0xff]
  %v59 = vld [vmem:[%s0 + $0x44] sm:$0xf]
  %v60 = vld [vmem:[%s0 + $0x48] sm:$0xff]
  %v61 = vld [vmem:[%s0 + $0x50] sm:$0xf]
  %v62 = vld [vmem:[%s0 + $0x54] sm:$0xff]
  %v63 = vld [vmem:[%s0 + $0x5c] sm:$0xf]
  %v64 = vld [vmem:[%s0 + $0x60] sm:$0xff]
  %v65 = vld [vmem:[%s0 + $0x68] sm:$0xf]
  %v66 = vld [vmem:[%s0 + $0x6c] sm:$0xff]
  %v67 = vld [vmem:[%s0 + $0x74] sm:$0xf]
  %v68 = vld [vmem:[%s0 + $0x78] sm:$0xff]
  %v69 = vld [vmem:[%s0 + $0x80] sm:$0xf]
  %v70 = vld [vmem:[%s0 + $0x84] sm:$0xff]
  %v71 = vld [vmem:[%s0 + $0x8c] sm:$0xf]
  %v72 = vld [vmem:[%s0 + $0x90] sm:$0xff]
  %v73 = vld [vmem:[%s0 + $0x98] sm:$0xf]
  %v74 = vld [vmem:[%s0 + $0x9c] sm:$0xff]
  %v75 = vld [vmem:[%s0 + $0xa4] sm:$0xf]
  %v76 = vld [vmem:[%s0 + $0xa8] sm:$0xff]
  %v77 = vld [vmem:[%s0 + $0xb0] sm:$0xf]
  %v78 = vld [vmem:[%s0 + $0xb4] sm:$0xff]
  %v79 = vld [vmem:[%s0 + $0xbc] sm:$0xf]
  %v80 = vld [vmem:[%s1] sm:$0xf]
  %v81 = vld [vmem:[%s1 + $0x4] sm:$0xf]
  %v82 = vld [vmem:[%s1 + $0x8] sm:$0xf]
  %v83 = vld [vmem:[%s1 + $0xc] sm:$0xf]
  %v84 = vld [vmem:[%s1 + $0x10] sm:$0xf]
  %v85 = vld [vmem:[%s1 + $0x14] sm:$0xf]
  %v86 = vld [vmem:[%s1 + $0x18] sm:$0xf]
  %v87 = vld [vmem:[%s1 + $0x1c] sm:$0xf]
  %v88 = vld [vmem:[%s1 + $0x20] sm:$0xf]
  %v89 = vld [vmem:[%s1 + $0x24] sm:$0xf]
  %v90 = vld [vmem:[%s1 + $0x28] sm:$0xf]
  %v91 = vld [vmem:[%s1 + $0x2c] sm:$0xf]
  %v92 = vld [vmem:[%s1 + $0x30] sm:$0xf]
  %v93 = vld [vmem:[%s1 + $0x34] sm:$0xf]
  %v94 = vld [vmem:[%s1 + $0x38] sm:$0xf]
  %v95 = vld [vmem:[%s1 + $0x3c] sm:$0xf]
  %v96 = vld [vmem:[%s1 + $0x40] sm:$0xf]
  %v97 = vld [vmem:[%s1 + $0x44] sm:$0xf]
  %v98 = vld [vmem:[%s1 + $0x48] sm:$0xf]
  %v99 = vld [vmem:[%s1 + $0x4c] sm:$0xf]
  %v100 = vld [vmem:[%s1 + $0x50] sm:$0xf]
  %v101 = vld [vmem:[%s1 + $0x54] sm:$0xf]
  %v102 = vld [vmem:[%s1 + $0x58] sm:$0xf]
  %v103 = vld [vmem:[%s1 + $0x5c] sm:$0xf]
  %v104 = vld [vmem:[%s1 + $0x60] sm:$0xf]
  %v105 = vld [vmem:[%s1 + $0x64] sm:$0xf]
  %v106 = vld [vmem:[%s1 + $0x68] sm:$0xf]
  %v107 = vld [vmem:[%s1 + $0x6c] sm:$0xf]
  %v108 = vld [vmem:[%s1 + $0x70] sm:$0xf]
  %v109 = vld [vmem:[%s1 + $0x74] sm:$0xf]
  %v110 = vld [vmem:[%s1 + $0x78] sm:$0xf]
  %v111 = vld [vmem:[%s1 + $0x7c] sm:$0xf]
  %v112 = vld [vmem:[%s1 + $0x80] sm:$0xf]
  %v113 = vld [vmem:[%s1 + $0x84] sm:$0xf]
  %v114 = vld [vmem:[%s1 + $0x88] sm:$0xf]
  %v115 = vld [vmem:[%s1 + $0x8c] sm:$0xf]
  %v116 = vld [vmem:[%s1 + $0x90] sm:$0xf]
  %v117 = vld [vmem:[%s1 + $0x94] sm:$0xf]
  %v118 = vld [vmem:[%s1 + $0x98] sm:$0xf]
  %v119 = vld [vmem:[%s1 + $0x9c] sm:$0xf]
  %v120 = vld [vmem:[%s1 + $0xa0] sm:$0xf]
  %v121 = vld [vmem:[%s1 + $0xa4] sm:$0xf]
  %v122 = vld [vmem:[%s1 + $0xa8] sm:$0xf]
  %v123 = vld [vmem:[%s1 + $0xac] sm:$0xf]
  %v124 = vld [vmem:[%s1 + $0xb0] sm:$0xf]
  %v125 = vld [vmem:[%s1 + $0xb4] sm:$0xf]
  %v126 = vld [vmem:[%s1 + $0xb8] sm:$0xf]
  %v127 = vld [vmem:[%s1 + $0xbc] sm:$0xf]
  %v160 = vunpack.c.l.b16 %v48
  %v161 = vunpack.c.h.b16 %v48
  %v162 = vunpack.c.l.b16 %v49
  %v163 = vunpack.c.l.b16 %v50
  %v164 = vunpack.c.h.b16 %v50
  %v165 = vunpack.c.l.b16 %v51
  %v166 = vunpack.c.l.b16 %v52
  %v167 = vunpack.c.h.b16 %v52
  %v168 = vunpack.c.l.b16 %v53
  %v169 = vunpack.c.l.b16 %v54
  %v170 = vunpack.c.h.b16 %v54
  %v171 = vunpack.c.l.b16 %v55
  %v172 = vunpack.c.l.b16 %v56
  %v173 = vunpack.c.h.b16 %v56
  %v174 = vunpack.c.l.b16 %v57
  %v175 = vunpack.c.l.b16 %v58
  %v176 = vunpack.c.h.b16 %v58
  %v177 = vunpack.c.l.b16 %v59
  %v178 = vunpack.c.l.b16 %v60
  %v179 = vunpack.c.h.b16 %v60
  %v180 = vunpack.c.l.b16 %v61
  %v181 = vunpack.c.l.b16 %v62
  %v182 = vunpack.c.h.b16 %v62
  %v183 = vunpack.c.l.b16 %v63
  %v184 = vunpack.c.l.b16 %v64
  %v185 = vunpack.c.h.b16 %v64
  %v186 = vunpack.c.l.b16 %v65
  %v187 = vunpack.c.l.b16 %v66
  %v188 = vunpack.c.h.b16 %v66
  %v189 = vunpack.c.l.b16 %v67
  %v190 = vunpack.c.l.b16 %v68
  %v191 = vunpack.c.h.b16 %v68
  %v192 = vunpack.c.l.b16 %v69
  %v193 = vunpack.c.l.b16 %v70
  %v194 = vunpack.c.h.b16 %v70
  %v195 = vunpack.c.l.b16 %v71
  %v196 = vunpack.c.l.b16 %v72
  %v197 = vunpack.c.h.b16 %v72
  %v198 = vunpack.c.l.b16 %v73
  %v199 = vunpack.c.l.b16 %v74
  %v200 = vunpack.c.h.b16 %v74
  %v201 = vunpack.c.l.b16 %v75
  %v202 = vunpack.c.l.b16 %v76
  %v203 = vunpack.c.h.b16 %v76
  %v204 = vunpack.c.l.b16 %v77
  %v205 = vunpack.c.l.b16 %v78
  %v206 = vunpack.c.h.b16 %v78
  %v207 = vunpack.c.l.b16 %v79
  %v208 = vpack.c.b16 %v163, %v160
  %v209 = vpack.c.b16 %v164, %v161
  %v210 = vpack.c.b16 %v165, %v162
  %v211 = vpack.c.b16 %v169, %v166
  %v212 = vpack.c.b16 %v170, %v167
  %v213 = vpack.c.b16 %v171, %v168
  %v214 = vpack.c.b16 %v175, %v172
  %v215 = vpack.c.b16 %v176, %v173
  %v216 = vpack.c.b16 %v177, %v174
  %v217 = vpack.c.b16 %v181, %v178
  %v218 = vpack.c.b16 %v182, %v179
  %v219 = vpack.c.b16 %v183, %v180
  %v220 = vpack.c.b16 %v187, %v184
  %v221 = vpack.c.b16 %v188, %v185
  %v222 = vpack.c.b16 %v189, %v186
  %v223 = vpack.c.b16 %v193, %v190
  %v224 = vpack.c.b16 %v194, %v191
  %v225 = vpack.c.b16 %v195, %v192
  %v226 = vpack.c.b16 %v199, %v196
  %v227 = vpack.c.b16 %v200, %v197
  %v228 = vpack.c.b16 %v201, %v198
  %v229 = vpack.c.b16 %v205, %v202
  %v230 = vpack.c.b16 %v206, %v203
  %v231 = vpack.c.b16 %v207, %v204
  %v304 = vunpack.c.l.b16 %v80
  %v305 = vunpack.c.l.b16 %v81
  %v306 = vunpack.c.l.b16 %v82
  %v307 = vunpack.c.l.b16 %v83
  %v308 = vunpack.c.l.b16 %v84
  %v309 = vunpack.c.l.b16 %v85
  %v310 = vunpack.c.l.b16 %v86
  %v311 = vunpack.c.l.b16 %v87
  %v312 = vunpack.c.l.b16 %v88
  %v313 = vunpack.c.l.b16 %v89
  %v314 = vunpack.c.l.b16 %v90
  %v315 = vunpack.c.l.b16 %v91
  %v316 = vunpack.c.l.b16 %v92
  %v317 = vunpack.c.l.b16 %v93
  %v318 = vunpack.c.l.b16 %v94
  %v319 = vunpack.c.l.b16 %v95
  %v320 = vunpack.c.l.b16 %v96
  %v321 = vunpack.c.l.b16 %v97
  %v322 = vunpack.c.l.b16 %v98
  %v323 = vunpack.c.l.b16 %v99
  %v324 = vunpack.c.l.b16 %v100
  %v325 = vunpack.c.l.b16 %v101
  %v326 = vunpack.c.l.b16 %v102
  %v327 = vunpack.c.l.b16 %v103
  %v328 = vunpack.c.l.b16 %v104
  %v329 = vunpack.c.l.b16 %v105
  %v330 = vunpack.c.l.b16 %v106
  %v331 = vunpack.c.l.b16 %v107
  %v332 = vunpack.c.l.b16 %v108
  %v333 = vunpack.c.l.b16 %v109
  %v334 = vunpack.c.l.b16 %v110
  %v335 = vunpack.c.l.b16 %v111
  %v336 = vunpack.c.l.b16 %v112
  %v337 = vunpack.c.l.b16 %v113
  %v338 = vunpack.c.l.b16 %v114
  %v339 = vunpack.c.l.b16 %v115
  %v340 = vunpack.c.l.b16 %v116
  %v341 = vunpack.c.l.b16 %v117
  %v342 = vunpack.c.l.b16 %v118
  %v343 = vunpack.c.l.b16 %v119
  %v344 = vunpack.c.l.b16 %v120
  %v345 = vunpack.c.l.b16 %v121
  %v346 = vunpack.c.l.b16 %v122
  %v347 = vunpack.c.l.b16 %v123
  %v348 = vunpack.c.l.b16 %v124
  %v349 = vunpack.c.l.b16 %v125
  %v350 = vunpack.c.l.b16 %v126
  %v351 = vunpack.c.l.b16 %v127
  %v352 = vpack.c.b16 %v305, %v304
  %v353 = vpack.c.b16 %v307, %v306
  %v354 = vpack.c.b16 %v309, %v308
  %v355 = vpack.c.b16 %v311, %v310
  %v356 = vpack.c.b16 %v313, %v312
  %v357 = vpack.c.b16 %v315, %v314
  %v358 = vpack.c.b16 %v317, %v316
  %v359 = vpack.c.b16 %v319, %v318
  %v360 = vpack.c.b16 %v321, %v320
  %v361 = vpack.c.b16 %v323, %v322
  %v362 = vpack.c.b16 %v325, %v324
  %v363 = vpack.c.b16 %v327, %v326
  %v364 = vpack.c.b16 %v329, %v328
  %v365 = vpack.c.b16 %v331, %v330
  %v366 = vpack.c.b16 %v333, %v332
  %v367 = vpack.c.b16 %v335, %v334
  %v368 = vpack.c.b16 %v337, %v336
  %v369 = vpack.c.b16 %v339, %v338
  %v370 = vpack.c.b16 %v341, %v340
  %v371 = vpack.c.b16 %v343, %v342
  %v372 = vpack.c.b16 %v345, %v344
  %v373 = vpack.c.b16 %v347, %v346
  %v374 = vpack.c.b16 %v349, %v348
  %v375 = vpack.c.b16 %v351, %v350
  %400 = vmatprep.subr.bf16.mxu0 0
  %401 = vmatpush1.bf16.msra.mxu0 %v352
  %402 = vmatprep.subr.bf16.mxu0 0
  %403 = vmatpush1.bf16.msra.mxu0 %v353
  %404 = vmatprep.subr.bf16.mxu0 0
  %405 = vmatpush1.bf16.msra.mxu0 %v354
  %406 = vmatprep.subr.bf16.mxu0 0
  %407 = vmatpush1.bf16.msra.mxu0 %v355
  %408 = vmatprep.subr.bf16.mxu0 0
  %409 = vmatpush1.bf16.msra.mxu0 %v356
  %410 = vmatprep.subr.bf16.mxu0 0
  %411 = vmatpush1.bf16.msra.mxu0 %v357
  %412 = vmatprep.subr.bf16.mxu0 0
  %413 = vmatpush1.bf16.msra.mxu0 %v358
  %414 = vmatprep.subr.bf16.mxu0 0
  %415 = vmatpush1.bf16.msra.mxu0 %v359
  %416 = vmatprep.subr.bf16.mxu0 0
  %417 = vmatpush1.bf16.msra.mxu0 %v360
  %418 = vmatprep.subr.bf16.mxu0 0
  %419 = vmatpush1.bf16.msra.mxu0 %v361
  %420 = vmatprep.subr.bf16.mxu0 0
  %421 = vmatpush1.bf16.msra.mxu0 %v362
  %422 = vmatprep.subr.bf16.mxu0 0
  %423 = vmatpush1.bf16.msra.mxu0 %v363
  %424 = vmatprep.subr.bf16.mxu0 0
  %425 = vmatpush1.bf16.msra.mxu0 %v364
  %426 = vmatprep.subr.bf16.mxu0 0
  %427 = vmatpush1.bf16.msra.mxu0 %v365
  %428 = vmatprep.subr.bf16.mxu0 0
  %429 = vmatpush1.bf16.msra.mxu0 %v366
  %430 = vmatprep.subr.bf16.mxu0 0
  %431 = vmatpush1.bf16.msra.mxu0 %v367
  %432 = vmatprep.mubr.bf16.mxu0 %v209
  %433 = vmatmul.mubr.bf16.gmra.mrb[0].mxu0 %v208
  %v434 = vpop.f32.mrb[0].mxu0
  %v435 = vadd.f32 0.0, %v434
  %v436 = vpop.f32.mrb[0].mxu0
  %v437 = vpop.f32.mrb[0].mxu0
  %v438 = vadd.f32 0.0, %v437
  %v439 = vpop.f32.mrb[0].mxu0
  %440 = vmatprep.mubr.bf16.mxu0 %v212
  %441 = vmatmul.mubr.bf16.gmra.mrb[0].mxu0 %v211
  %v442 = vpop.f32.mrb[0].mxu0
  %v443 = vadd.f32 0.0, %v442
  %v444 = vpop.f32.mrb[0].mxu0
  %v445 = vpop.f32.mrb[0].mxu0
  %v446 = vadd.f32 0.0, %v445
  %v447 = vpop.f32.mrb[0].mxu0
  %448 = vmatprep.mubr.bf16.mxu0 %v215
  %449 = vmatmul.mubr.bf16.gmra.mrb[0].mxu0 %v214
  %v450 = vpop.f32.mrb[0].mxu0
  %v451 = vadd.f32 0.0, %v450
  %v452 = vpop.f32.mrb[0].mxu0
  %v453 = vpop.f32.mrb[0].mxu0
  %v454 = vadd.f32 0.0, %v453
  %v455 = vpop.f32.mrb[0].mxu0
  %456 = vmatprep.mubr.bf16.mxu0 %v218
  %457 = vmatmul.mubr.bf16.gmra.mrb[0].mxu0 %v217
  %v458 = vpop.f32.mrb[0].mxu0
  %v459 = vadd.f32 0.0, %v458
  %v460 = vpop.f32.mrb[0].mxu0
  %v461 = vpop.f32.mrb[0].mxu0
  %v462 = vadd.f32 0.0, %v461
  %v463 = vpop.f32.mrb[0].mxu0
  %464 = vmatprep.mubr.bf16.mxu0 %v221
  %465 = vmatmul.mubr.bf16.gmra.mrb[0].mxu0 %v220
  %v466 = vpop.f32.mrb[0].mxu0
  %v467 = vadd.f32 0.0, %v466
  %v468 = vpop.f32.mrb[0].mxu0
  %v469 = vpop.f32.mrb[0].mxu0
  %v470 = vadd.f32 0.0, %v469
  %v471 = vpop.f32.mrb[0].mxu0
  %472 = vmatprep.mubr.bf16.mxu0 %v224
  %473 = vmatmul.mubr.bf16.gmra.mrb[0].mxu0 %v223
  %v474 = vpop.f32.mrb[0].mxu0
  %v475 = vadd.f32 0.0, %v474
  %v476 = vpop.f32.mrb[0].mxu0
  %v477 = vpop.f32.mrb[0].mxu0
  %v478 = vadd.f32 0.0, %v477
  %v479 = vpop.f32.mrb[0].mxu0
  %480 = vmatprep.mubr.bf16.mxu0 %v227
  %481 = vmatmul.mubr.bf16.gmra.mrb[0].mxu0 %v226
  %v482 = vpop.f32.mrb[0].mxu0
  %v483 = vadd.f32 0.0, %v482
  %v484 = vpop.f32.mrb[0].mxu0
  %v485 = vpop.f32.mrb[0].mxu0
  %v486 = vadd.f32 0.0, %v485
  %v487 = vpop.f32.mrb[0].mxu0
  %488 = vmatprep.mubr.bf16.mxu0 %v230
  %489 = vmatmul.mubr.bf16.gmra.mrb[0].mxu0 %v229
  %v490 = vpop.f32.mrb[0].mxu0
  %v491 = vadd.f32 0.0, %v490
  %v492 = vpop.f32.mrb[0].mxu0
  %v493 = vpop.f32.mrb[0].mxu0
  %v494 = vadd.f32 0.0, %v493
  %v495 = vpop.f32.mrb[0].mxu0
  %496 = vdwg.mxu0
  %497 = vmatprep.subr.bf16.mxu0 0
  %498 = vmatpush1.bf16.msra.mxu0 %v368
  %499 = vmatprep.subr.bf16.mxu0 0
  %500 = vmatpush1.bf16.msra.mxu0 %v369
  %501 = vmatprep.subr.bf16.mxu0 0
  %502 = vmatpush1.bf16.msra.mxu0 %v370
  %503 = vmatprep.subr.bf16.mxu0 0
  %504 = vmatpush1.bf16.msra.mxu0 %v371
  %505 = vmatprep.subr.bf16.mxu0 0
  %506 = vmatpush1.bf16.msra.mxu0 %v372
  %507 = vmatprep.subr.bf16.mxu0 0
  %508 = vmatpush1.bf16.msra.mxu0 %v373
  %509 = vmatprep.subr.bf16.mxu0 0
  %510 = vmatpush1.bf16.msra.mxu0 %v374
  %511 = vmatprep.subr.bf16.mxu0 0
  %512 = vmatpush1.bf16.msra.mxu0 %v375
  %513 = vmatprep.subr.bf16.mxu0 0
  %514 = vmatpush1.bf16.msra.mxu0 0
  %515 = vmatprep.subr.bf16.mxu0 0
  %516 = vmatpush1.bf16.msra.mxu0 0
  %517 = vmatprep.subr.bf16.mxu0 0
  %518 = vmatpush1.bf16.msra.mxu0 0
  %519 = vmatprep.subr.bf16.mxu0 0
  %520 = vmatpush1.bf16.msra.mxu0 0
  %521 = vmatprep.subr.bf16.mxu0 0
  %522 = vmatpush1.bf16.msra.mxu0 0
  %523 = vmatprep.subr.bf16.mxu0 0
  %524 = vmatpush1.bf16.msra.mxu0 0
  %525 = vmatprep.subr.bf16.mxu0 0
  %526 = vmatpush1.bf16.msra.mxu0 0
  %527 = vmatprep.subr.bf16.mxu0 0
  %528 = vmatpush1.bf16.msra.mxu0 0
  %529 = vmatprep.mubr.bf16.mxu0 0
  %530 = vmatmul.mubr.bf16.gmra.mrb[0].mxu0 %v210
  %v531 = vpop.f32.mrb[0].mxu0
  %v532 = vadd.f32 %v435, %v531
  %v533 = vpop.f32.mrb[0].mxu0
  %v534 = vpop.f32.mrb[0].mxu0
  %v535 = vadd.f32 %v438, %v534
  %v536 = vpop.f32.mrb[0].mxu0
  %537 = vmatprep.mubr.bf16.mxu0 0
  %538 = vmatmul.mubr.bf16.gmra.mrb[0].mxu0 %v213
  %v539 = vpop.f32.mrb[0].mxu0
  %v540 = vadd.f32 %v443, %v539
  %v541 = vpop.f32.mrb[0].mxu0
  %v542 = vpop.f32.mrb[0].mxu0
  %v543 = vadd.f32 %v446, %v542
  %v544 = vpop.f32.mrb[0].mxu0
  %545 = vmatprep.mubr.bf16.mxu0 0
  %546 = vmatmul.mubr.bf16.gmra.mrb[0].mxu0 %v216
  %v547 = vpop.f32.mrb[0].mxu0
  %v548 = vadd.f32 %v451, %v547
  %v549 = vpop.f32.mrb[0].mxu0
  %v550 = vpop.f32.mrb[0].mxu0
  %v551 = vadd.f32 %v454, %v550
  %v552 = vpop.f32.mrb[0].mxu0
  %553 = vmatprep.mubr.bf16.mxu0 0
  %554 = vmatmul.mubr.bf16.gmra.mrb[0].mxu0 %v219
  %v555 = vpop.f32.mrb[0].mxu0
  %v556 = vadd.f32 %v459, %v555
  %v557 = vpop.f32.mrb[0].mxu0
  %v558 = vpop.f32.mrb[0].mxu0
  %v559 = vadd.f32 %v462, %v558
  %v560 = vpop.f32.mrb[0].mxu0
  %561 = vmatprep.mubr.bf16.mxu0 0
  %562 = vmatmul.mubr.bf16.gmra.mrb[0].mxu0 %v222
  %v563 = vpop.f32.mrb[0].mxu0
  %v564 = vadd.f32 %v467, %v563
  %v565 = vpop.f32.mrb[0].mxu0
  %v566 = vpop.f32.mrb[0].mxu0
  %v567 = vadd.f32 %v470, %v566
  %v568 = vpop.f32.mrb[0].mxu0
  %569 = vmatprep.mubr.bf16.mxu0 0
  %570 = vmatmul.mubr.bf16.gmra.mrb[0].mxu0 %v225
  %v571 = vpop.f32.mrb[0].mxu0
  %v572 = vadd.f32 %v475, %v571
  %v573 = vpop.f32.mrb[0].mxu0
  %v574 = vpop.f32.mrb[0].mxu0
  %v575 = vadd.f32 %v478, %v574
  %v576 = vpop.f32.mrb[0].mxu0
  %577 = vmatprep.mubr.bf16.mxu0 0
  %578 = vmatmul.mubr.bf16.gmra.mrb[0].mxu0 %v228
  %v579 = vpop.f32.mrb[0].mxu0
  %v580 = vadd.f32 %v483, %v579
  %v581 = vpop.f32.mrb[0].mxu0
  %v582 = vpop.f32.mrb[0].mxu0
  %v583 = vadd.f32 %v486, %v582
  %v584 = vpop.f32.mrb[0].mxu0
  %585 = vmatprep.mubr.bf16.mxu0 0
  %586 = vmatmul.mubr.bf16.gmra.mrb[0].mxu0 %v231
  %v587 = vpop.f32.mrb[0].mxu0
  %v588 = vadd.f32 %v491, %v587
  %v589 = vpop.f32.mrb[0].mxu0
  %v590 = vpop.f32.mrb[0].mxu0
  %v591 = vadd.f32 %v494, %v590
  %v592 = vpop.f32.mrb[0].mxu0
  %593 = vdwg.mxu0
  %v594 = vadd.f32 %v32, %v532
  %v595 = vadd.f32 %v33, %v535
  %v596 = vadd.f32 %v34, %v540
  %v597 = vadd.f32 %v35, %v543
  %v598 = vadd.f32 %v36, %v548
  %v599 = vadd.f32 %v37, %v551
  %v600 = vadd.f32 %v38, %v556
  %v601 = vadd.f32 %v39, %v559
  %v602 = vadd.f32 %v40, %v564
  %v603 = vadd.f32 %v41, %v567
  %v604 = vadd.f32 %v42, %v572
  %v605 = vadd.f32 %v43, %v575
  %v606 = vadd.f32 %v44, %v580
  %v607 = vadd.f32 %v45, %v583
  %v608 = vadd.f32 %v46, %v588
  %v609 = vadd.f32 %v47, %v591
  %610 = vst [vmem:[#allocation2] sm:$0xff] %v594
  %611 = vst [vmem:[#allocation2 + $0x8] sm:$0xff] %v595
  %612 = vst [vmem:[#allocation2 + $0x10] sm:$0xff] %v596
  %613 = vst [vmem:[#allocation2 + $0x18] sm:$0xff] %v597
  %614 = vst [vmem:[#allocation2 + $0x20] sm:$0xff] %v598
  %615 = vst [vmem:[#allocation2 + $0x28] sm:$0xff] %v599
  %616 = vst [vmem:[#allocation2 + $0x30] sm:$0xff] %v600
  %617 = vst [vmem:[#allocation2 + $0x38] sm:$0xff] %v601
  %618 = vst [vmem:[#allocation2 + $0x40] sm:$0xff] %v602
  %619 = vst [vmem:[#allocation2 + $0x48] sm:$0xff] %v603
  %620 = vst [vmem:[#allocation2 + $0x50] sm:$0xff] %v604
  %621 = vst [vmem:[#allocation2 + $0x58] sm:$0xff] %v605
  %622 = vst [vmem:[#allocation2 + $0x60] sm:$0xff] %v606
  %623 = vst [vmem:[#allocation2 + $0x68] sm:$0xff] %v607
  %624 = vst [vmem:[#allocation2 + $0x70] sm:$0xff] %v608
  %625 = vst [vmem:[#allocation2 + $0x78] sm:$0xff] %v609
  // Predicated region
  $region14: #{generator_forward.35} parent=0 // pred_check
    %p626 = pneg %p12
  $region15: #{generator_forward.35} parent=0 // pred_check_branch
    %628 = sbr.rel (%p626) target = $region17
  $region16: #{generator_forward.35} parent=0 // pred_region
    %v629 = vld [vmem:[#allocation2] sm:$0xff]
    %v630 = vld [vmem:[#allocation2 + $0x8] sm:$0xff]
    %v631 = vld [vmem:[#allocation2 + $0x10] sm:$0xff]
    %v632 = vld [vmem:[#allocation2 + $0x18] sm:$0xff]
    %v633 = vld [vmem:[#allocation2 + $0x20] sm:$0xff]
    %v634 = vld [vmem:[#allocation2 + $0x28] sm:$0xff]
    %v635 = vld [vmem:[#allocation2 + $0x30] sm:$0xff]
    %v636 = vld [vmem:[#allocation2 + $0x38] sm:$0xff]
    %v637 = vld [vmem:[#allocation2 + $0x40] sm:$0xff]
    %v638 = vld [vmem:[#allocation2 + $0x48] sm:$0xff]
    %v639 = vld [vmem:[#allocation2 + $0x50] sm:$0xff]
    %v640 = vld [vmem:[#allocation2 + $0x58] sm:$0xff]
    %v641 = vld [vmem:[#allocation2 + $0x60] sm:$0xff]
    %v642 = vld [vmem:[#allocation2 + $0x68] sm:$0xff]
    %v643 = vld [vmem:[#allocation2 + $0x70] sm:$0xff]
    %v644 = vld [vmem:[#allocation2 + $0x78] sm:$0xff]
    %v645 = vpack.c.bf16 %v630, %v629
    %v646 = vpack.c.bf16 %v632, %v631
    %v647 = vpack.c.bf16 %v634, %v633
    %v648 = vpack.c.bf16 %v636, %v635
    %v649 = vpack.c.bf16 %v638, %v637
    %v650 = vpack.c.bf16 %v640, %v639
    %v651 = vpack.c.bf16 %v642, %v641
    %v652 = vpack.c.bf16 %v644, %v643
    %v661 = vunpack.c.l.b16 %v645
    %v662 = vunpack.c.h.b16 %v645
    %v663 = vunpack.c.l.b16 %v646
    %v664 = vunpack.c.h.b16 %v646
    %v665 = vunpack.c.l.b16 %v647
    %v666 = vunpack.c.h.b16 %v647
    %v667 = vunpack.c.l.b16 %v648
    %v668 = vunpack.c.h.b16 %v648
    %v669 = vunpack.c.l.b16 %v649
    %v670 = vunpack.c.h.b16 %v649
    %v671 = vunpack.c.l.b16 %v650
    %v672 = vunpack.c.h.b16 %v650
    %v673 = vunpack.c.l.b16 %v651
    %v674 = vunpack.c.h.b16 %v651
    %v675 = vunpack.c.l.b16 %v652
    %v676 = vunpack.c.h.b16 %v652
    %v677 = vpack.c.b16 %v661, %v661
    %v678 = vpack.c.b16 %v662, %v662
    %v679 = vpack.c.b16 %v663, %v663
    %v680 = vpack.c.b16 %v664, %v664
    %v681 = vpack.c.b16 %v665, %v665
    %v682 = vpack.c.b16 %v666, %v666
    %v683 = vpack.c.b16 %v667, %v667
    %v684 = vpack.c.b16 %v668, %v668
    %v685 = vpack.c.b16 %v669, %v669
    %v686 = vpack.c.b16 %v670, %v670
    %v687 = vpack.c.b16 %v671, %v671
    %v688 = vpack.c.b16 %v672, %v672
    %v689 = vpack.c.b16 %v673, %v673
    %v690 = vpack.c.b16 %v674, %v674
    %v691 = vpack.c.b16 %v675, %v675
    %v692 = vpack.c.b16 %v676, %v676
    %709 = vst [vmem:[%s2] sm:$0xf] %v677
    %710 = vst [vmem:[%s2 + $0x4] sm:$0xf] %v678
    %711 = vst [vmem:[%s2 + $0x8] sm:$0xf] %v679
    %712 = vst [vmem:[%s2 + $0xc] sm:$0xf] %v680
    %713 = vst [vmem:[%s2 + $0x10] sm:$0xf] %v681
    %714 = vst [vmem:[%s2 + $0x14] sm:$0xf] %v682
    %715 = vst [vmem:[%s2 + $0x18] sm:$0xf] %v683
    %716 = vst [vmem:[%s2 + $0x1c] sm:$0xf] %v684
    %717 = vst [vmem:[%s2 + $0x20] sm:$0xf] %v685
    %718 = vst [vmem:[%s2 + $0x24] sm:$0xf] %v686
    %719 = vst [vmem:[%s2 + $0x28] sm:$0xf] %v687
    %720 = vst [vmem:[%s2 + $0x2c] sm:$0xf] %v688
    %721 = vst [vmem:[%s2 + $0x30] sm:$0xf] %v689
    %722 = vst [vmem:[%s2 + $0x34] sm:$0xf] %v690
    %723 = vst [vmem:[%s2 + $0x38] sm:$0xf] %v691
    %724 = vst [vmem:[%s2 + $0x3c] sm:$0xf] %v692
  $region17: #{generator_forward.35} parent=0 // pred_fallthru
    _
  // Predicated region
  $region18: #{generator_forward.35} parent=0 // pred_check
    _
  $region19: #{generator_forward.35} parent=0 // pred_check_branch
    %726 = sbr.rel (0) target = $region21
  $region20: #{generator_forward.35} parent=0 // pred_region
    _
  $region21: #{generator_forward.35} parent=0 // pred_fallthru
    _
  // Predicated region
  $region22: #{generator_forward.35} parent=0 // pred_check
    _
  $region23: #{generator_forward.35} parent=0 // pred_check_branch
    %728 = sbr.rel (0) target = $region25
  $region24: #{generator_forward.35} parent=0 // pred_region
    _
  $region25: #{generator_forward.35} parent=0 // pred_fallthru
    _

// kernel: generator_forward.37
$region0: #{generator_forward.37}
  #allocation0 [shape = 'u32[]', space=smem, size = 0x4, offset = 0x4, fixed_abs, tag = 'smem constant byte address 0x4 - core index']
  #allocation1 [shape = 'u32[144,128]{1,0:T(1,128)}', space=vmem, size = 0x12000, scoped, tag = 'internal scratch']
  #allocation2 [shape = 'f32[512,128]{1,0:T(8,128)}', space=vmem, size = 0x40000, scoped, tag = 'scratch operand']
  %s0 = inlined_call_operand.vmem [shape: bf16[512,896], index: 0, kind: input, shape index: {}]
  %s1 = inlined_call_operand.vmem [shape: bf16[896,128], index: 1, kind: input, shape index: {}]
  %s2 = inlined_call_operand.vmem [shape: bf16[512,128], index: 2, kind: output, shape index: {}]
  %s3 = sld [smem:[#allocation0]]
  $region26: #{generator_forward.37} parent=0
    _
  %s5 = ssub.s32 1, %s3
  %s6 = scalar_select 0, %s5, %s3
  // Predicated region
  $region2: #{generator_forward.37} parent=0 // pred_check
    _
  $region3: #{generator_forward.37} parent=0 // pred_check_branch
    %8 = sbr.rel (0) target = $region5
  $region4: #{generator_forward.37} parent=0 // pred_region
    _
  $region5: #{generator_forward.37} parent=0 // pred_fallthru
    _
  // Predicated region
  $region6: #{generator_forward.37} parent=0 // pred_check
    _
  $region7: #{generator_forward.37} parent=0 // pred_check_branch
    %10 = sbr.rel (0) target = $region9
  $region8: #{generator_forward.37} parent=0 // pred_region
    _
  $region9: #{generator_forward.37} parent=0 // pred_fallthru
    _
  %p12 = scmp.eq.s32.totalorder 0, 0
  // Predicated region
  $region10: #{generator_forward.37} parent=0 // pred_check
    %p13 = pneg %p12
  $region11: #{generator_forward.37} parent=0 // pred_check_branch
    %15 = sbr.rel (%p13) target = $region13
  $region12: #{generator_forward.37} parent=0 // pred_region
    %16 = vst [vmem:[#allocation2] sm:$0xff] 0.0
    %17 = vst [vmem:[#allocation2 + $0x8] sm:$0xff] 0.0
    %18 = vst [vmem:[#allocation2 + $0x10] sm:$0xff] 0.0
    %19 = vst [vmem:[#allocation2 + $0x18] sm:$0xff] 0.0
    %20 = vst [vmem:[#allocation2 + $0x20] sm:$0xff] 0.0
    %21 = vst [vmem:[#allocation2 + $0x28] sm:$0xff] 0.0
    %22 = vst [vmem:[#allocation2 + $0x30] sm:$0xff] 0.0
    %23 = vst [vmem:[#allocation2 + $0x38] sm:$0xff] 0.0
    %24 = vst [vmem:[#allocation2 + $0x40] sm:$0xff] 0.0
    %25 = vst [vmem:[#allocation2 + $0x48] sm:$0xff] 0.0
    %26 = vst [vmem:[#allocation2 + $0x50] sm:$0xff] 0.0
    %27 = vst [vmem:[#allocation2 + $0x58] sm:$0xff] 0.0
    %28 = vst [vmem:[#allocation2 + $0x60] sm:$0xff] 0.0
    %29 = vst [vmem:[#allocation2 + $0x68] sm:$0xff] 0.0
    %30 = vst [vmem:[#allocation2 + $0x70] sm:$0xff] 0.0
    %31 = vst [vmem:[#allocation2 + $0x78] sm:$0xff] 0.0
    %32 = vst [vmem:[#allocation2 + $0x80] sm:$0xff] 0.0
    %33 = vst [vmem:[#allocation2 + $0x88] sm:$0xff] 0.0
    %34 = vst [vmem:[#allocation2 + $0x90] sm:$0xff] 0.0
    %35 = vst [vmem:[#allocation2 + $0x98] sm:$0xff] 0.0
    %36 = vst [vmem:[#allocation2 + $0xa0] sm:$0xff] 0.0
    %37 = vst [vmem:[#allocation2 + $0xa8] sm:$0xff] 0.0
    %38 = vst [vmem:[#allocation2 + $0xb0] sm:$0xff] 0.0
    %39 = vst [vmem:[#allocation2 + $0xb8] sm:$0xff] 0.0
    %40 = vst [vmem:[#allocation2 + $0xc0] sm:$0xff] 0.0
    %41 = vst [vmem:[#allocation2 + $0xc8] sm:$0xff] 0.0
    %42 = vst [vmem:[#allocation2 + $0xd0] sm:$0xff] 0.0
    %43 = vst [vmem:[#allocation2 + $0xd8] sm:$0xff] 0.0
    %44 = vst [vmem:[#allocation2 + $0xe0] sm:$0xff] 0.0
    %45 = vst [vmem:[#allocation2 + $0xe8] sm:$0xff] 0.0
    %46 = vst [vmem:[#allocation2 + $0xf0] sm:$0xff] 0.0
    %47 = vst [vmem:[#allocation2 + $0xf8] sm:$0xff] 0.0
    %48 = vst [vmem:[#allocation2 + $0x100] sm:$0xff] 0.0
    %49 = vst [vmem:[#allocation2 + $0x108] sm:$0xff] 0.0
    %50 = vst [vmem:[#allocation2 + $0x110] sm:$0xff] 0.0
    %51 = vst [vmem:[#allocation2 + $0x118] sm:$0xff] 0.0
    %52 = vst [vmem:[#allocation2 + $0x120] sm:$0xff] 0.0
    %53 = vst [vmem:[#allocation2 + $0x128] sm:$0xff] 0.0
    %54 = vst [vmem:[#allocation2 + $0x130] sm:$0xff] 0.0
    %55 = vst [vmem:[#allocation2 + $0x138] sm:$0xff] 0.0
    %56 = vst [vmem:[#allocation2 + $0x140] sm:$0xff] 0.0
    %57 = vst [vmem:[#allocation2 + $0x148] sm:$0xff] 0.0
    %58 = vst [vmem:[#allocation2 + $0x150] sm:$0xff] 0.0
    %59 = vst [vmem:[#allocation2 + $0x158] sm:$0xff] 0.0
    %60 = vst [vmem:[#allocation2 + $0x160] sm:$0xff] 0.0
    %61 = vst [vmem:[#allocation2 + $0x168] sm:$0xff] 0.0
    %62 = vst [vmem:[#allocation2 + $0x170] sm:$0xff] 0.0
    %63 = vst [vmem:[#allocation2 + $0x178] sm:$0xff] 0.0
    %64 = vst [vmem:[#allocation2 + $0x180] sm:$0xff] 0.0
    %65 = vst [vmem:[#allocation2 + $0x188] sm:$0xff] 0.0
    %66 = vst [vmem:[#allocation2 + $0x190] sm:$0xff] 0.0
    %67 = vst [vmem:[#allocation2 + $0x198] sm:$0xff] 0.0
    %68 = vst [vmem:[#allocation2 + $0x1a0] sm:$0xff] 0.0
    %69 = vst [vmem:[#allocation2 + $0x1a8] sm:$0xff] 0.0
    %70 = vst [vmem:[#allocation2 + $0x1b0] sm:$0xff] 0.0
    %71 = vst [vmem:[#allocation2 + $0x1b8] sm:$0xff] 0.0
    %72 = vst [vmem:[#allocation2 + $0x1c0] sm:$0xff] 0.0
    %73 = vst [vmem:[#allocation2 + $0x1c8] sm:$0xff] 0.0
    %74 = vst [vmem:[#allocation2 + $0x1d0] sm:$0xff] 0.0
    %75 = vst [vmem:[#allocation2 + $0x1d8] sm:$0xff] 0.0
    %76 = vst [vmem:[#allocation2 + $0x1e0] sm:$0xff] 0.0
    %77 = vst [vmem:[#allocation2 + $0x1e8] sm:$0xff] 0.0
    %78 = vst [vmem:[#allocation2 + $0x1f0] sm:$0xff] 0.0
    %79 = vst [vmem:[#allocation2 + $0x1f8] sm:$0xff] 0.0
  $region13: #{generator_forward.37} parent=0 // pred_fallthru
    _
  %v80 = vld [vmem:[#allocation2] sm:$0xff]
  %v81 = vld [vmem:[#allocation2 + $0x8] sm:$0xff]
  %v82 = vld [vmem:[#allocation2 + $0x10] sm:$0xff]
  %v83 = vld [vmem:[#allocation2 + $0x18] sm:$0xff]
  %v84 = vld [vmem:[#allocation2 + $0x20] sm:$0xff]
  %v85 = vld [vmem:[#allocation2 + $0x28] sm:$0xff]
  %v86 = vld [vmem:[#allocation2 + $0x30] sm:$0xff]
  %v87 = vld [vmem:[#allocation2 + $0x38] sm:$0xff]
  %v88 = vld [vmem:[#allocation2 + $0x40] sm:$0xff]
  %v89 = vld [vmem:[#allocation2 + $0x48] sm:$0xff]
  %v90 = vld [vmem:[#allocation2 + $0x50] sm:$0xff]
  %v91 = vld [vmem:[#allocation2 + $0x58] sm:$0xff]
  %v92 = vld [vmem:[#allocation2 + $0x60] sm:$0xff]
  %v93 = vld [vmem:[#allocation2 + $0x68] sm:$0xff]
  %v94 = vld [vmem:[#allocation2 + $0x70] sm:$0xff]
  %v95 = vld [vmem:[#allocation2 + $0x78] sm:$0xff]
  %v96 = vld [vmem:[#allocation2 + $0x80] sm:$0xff]
  %v97 = vld [vmem:[#allocation2 + $0x88] sm:$0xff]
  %v98 = vld [vmem:[#allocation2 + $0x90] sm:$0xff]
  %v99 = vld [vmem:[#allocation2 + $0x98] sm:$0xff]
  %v100 = vld [vmem:[#allocation2 + $0xa0] sm:$0xff]
  %v101 = vld [vmem:[#allocation2 + $0xa8] sm:$0xff]
  %v102 = vld [vmem:[#allocation2 + $0xb0] sm:$0xff]
  %v103 = vld [vmem:[#allocation2 + $0xb8] sm:$0xff]
  %v104 = vld [vmem:[#allocation2 + $0xc0] sm:$0xff]
  %v105 = vld [vmem:[#allocation2 + $0xc8] sm:$0xff]
  %v106 = vld [vmem:[#allocation2 + $0xd0] sm:$0xff]
  %v107 = vld [vmem:[#allocation2 + $0xd8] sm:$0xff]
  %v108 = vld [vmem:[#allocation2 + $0xe0] sm:$0xff]
  %v109 = vld [vmem:[#allocation2 + $0xe8] sm:$0xff]
  %v110 = vld [vmem:[#allocation2 + $0xf0] sm:$0xff]
  %v111 = vld [vmem:[#allocation2 + $0xf8] sm:$0xff]
  %v112 = vld [vmem:[#allocation2 + $0x100] sm:$0xff]
  %v113 = vld [vmem:[#allocation2 + $0x108] sm:$0xff]
  %v114 = vld [vmem:[#allocation2 + $0x110] sm:$0xff]
  %v115 = vld [vmem:[#allocation2 + $0x118] sm:$0xff]
  %v116 = vld [vmem:[#allocation2 + $0x120] sm:$0xff]
  %v117 = vld [vmem:[#allocation2 + $0x128] sm:$0xff]
  %v118 = vld [vmem:[#allocation2 + $0x130] sm:$0xff]
  %v119 = vld [vmem:[#allocation2 + $0x138] sm:$0xff]
  %v120 = vld [vmem:[#allocation2 + $0x140] sm:$0xff]
  %v121 = vld [vmem:[#allocation2 + $0x148] sm:$0xff]
  %v122 = vld [vmem:[#allocation2 + $0x150] sm:$0xff]
  %v123 = vld [vmem:[#allocation2 + $0x158] sm:$0xff]
  %v124 = vld [vmem:[#allocation2 + $0x160] sm:$0xff]
  %v125 = vld [vmem:[#allocation2 + $0x168] sm:$0xff]
  %v126 = vld [vmem:[#allocation2 + $0x170] sm:$0xff]
  %v127 = vld [vmem:[#allocation2 + $0x178] sm:$0xff]
  %v128 = vld [vmem:[#allocation2 + $0x180] sm:$0xff]
  %v129 = vld [vmem:[#allocation2 + $0x188] sm:$0xff]
  %v130 = vld [vmem:[#allocation2 + $0x190] sm:$0xff]
  %v131 = vld [vmem:[#allocation2 + $0x198] sm:$0xff]
  %v132 = vld [vmem:[#allocation2 + $0x1a0] sm:$0xff]
  %v133 = vld [vmem:[#allocation2 + $0x1a8] sm:$0xff]
  %v134 = vld [vmem:[#allocation2 + $0x1b0] sm:$0xff]
  %v135 = vld [vmem:[#allocation2 + $0x1b8] sm:$0xff]
  %v136 = vld [vmem:[#allocation2 + $0x1c0] sm:$0xff]
  %v137 = vld [vmem:[#allocation2 + $0x1c8] sm:$0xff]
  %v138 = vld [vmem:[#allocation2 + $0x1d0] sm:$0xff]
  %v139 = vld [vmem:[#allocation2 + $0x1d8] sm:$0xff]
  %v140 = vld [vmem:[#allocation2 + $0x1e0] sm:$0xff]
  %v141 = vld [vmem:[#allocation2 + $0x1e8] sm:$0xff]
  %v142 = vld [vmem:[#allocation2 + $0x1f0] sm:$0xff]
  %v143 = vld [vmem:[#allocation2 + $0x1f8] sm:$0xff]
  %v144 = vld [vmem:[%s0] sm:$0xff]
  %v145 = vld [vmem:[%s0 + $0x8] sm:$0xff]
  %v146 = vld [vmem:[%s0 + $0x10] sm:$0xff]
  %v147 = vld [vmem:[%s0 + $0x18] sm:$0xf]
  %v148 = vld [vmem:[%s0 + $0x1c] sm:$0xff]
  %v149 = vld [vmem:[%s0 + $0x24] sm:$0xff]
  %v150 = vld [vmem:[%s0 + $0x2c] sm:$0xff]
  %v151 = vld [vmem:[%s0 + $0x34] sm:$0xf]
  %v152 = vld [vmem:[%s0 + $0x38] sm:$0xff]
  %v153 = vld [vmem:[%s0 + $0x40] sm:$0xff]
  %v154 = vld [vmem:[%s0 + $0x48] sm:$0xff]
  %v155 = vld [vmem:[%s0 + $0x50] sm:$0xf]
  %v156 = vld [vmem:[%s0 + $0x54] sm:$0xff]
  %v157 = vld [vmem:[%s0 + $0x5c] sm:$0xff]
  %v158 = vld [vmem:[%s0 + $0x64] sm:$0xff]
  %v159 = vld [vmem:[%s0 + $0x6c] sm:$0xf]
  %v160 = vld [vmem:[%s0 + $0x70] sm:$0xff]
  %v161 = vld [vmem:[%s0 + $0x78] sm:$0xff]
  %v162 = vld [vmem:[%s0 + $0x80] sm:$0xff]
  %v163 = vld [vmem:[%s0 + $0x88] sm:$0xf]
  %v164 = vld [vmem:[%s0 + $0x8c] sm:$0xff]
  %v165 = vld [vmem:[%s0 + $0x94] sm:$0xff]
  %v166 = vld [vmem:[%s0 + $0x9c] sm:$0xff]
  %v167 = vld [vmem:[%s0 + $0xa4] sm:$0xf]
  %v168 = vld [vmem:[%s0 + $0xa8] sm:$0xff]
  %v169 = vld [vmem:[%s0 + $0xb0] sm:$0xff]
  %v170 = vld [vmem:[%s0 + $0xb8] sm:$0xff]
  %v171 = vld [vmem:[%s0 + $0xc0] sm:$0xf]
  %v172 = vld [vmem:[%s0 + $0xc4] sm:$0xff]
  %v173 = vld [vmem:[%s0 + $0xcc] sm:$0xff]
  %v174 = vld [vmem:[%s0 + $0xd4] sm:$0xff]
  %v175 = vld [vmem:[%s0 + $0xdc] sm:$0xf]
  %v176 = vld [vmem:[%s0 + $0xe0] sm:$0xff]
  %v177 = vld [vmem:[%s0 + $0xe8] sm:$0xff]
  %v178 = vld [vmem:[%s0 + $0xf0] sm:$0xff]
  %v179 = vld [vmem:[%s0 + $0xf8] sm:$0xf]
  %v180 = vld [vmem:[%s0 + $0xfc] sm:$0xff]
  %v181 = vld [vmem:[%s0 + $0x104] sm:$0xff]
  %v182 = vld [vmem:[%s0 + $0x10c] sm:$0xff]
  %v183 = vld [vmem:[%s0 + $0x114] sm:$0xf]
  %v184 = vld [vmem:[%s0 + $0x118] sm:$0xff]
  %v185 = vld [vmem:[%s0 + $0x120] sm:$0xff]
  %v186 = vld [vmem:[%s0 + $0x128] sm:$0xff]
  %v187 = vld [vmem:[%s0 + $0x130] sm:$0xf]
  %v188 = vld [vmem:[%s0 + $0x134] sm:$0xff]
  %v189 = vld [vmem:[%s0 + $0x13c] sm:$0xff]
  %v190 = vld [vmem:[%s0 + $0x144] sm:$0xff]
  %v191 = vld [vmem:[%s0 + $0x14c] sm:$0xf]
  %v192 = vld [vmem:[%s0 + $0x150] sm:$0xff]
  %v193 = vld [vmem:[%s0 + $0x158] sm:$0xff]
  %v194 = vld [vmem:[%s0 + $0x160] sm:$0xff]
  %v195 = vld [vmem:[%s0 + $0x168] sm:$0xf]
  %v196 = vld [vmem:[%s0 + $0x16c] sm:$0xff]
  %v197 = vld [vmem:[%s0 + $0x174] sm:$0xff]
  %v198 = vld [vmem:[%s0 + $0x17c] sm:$0xff]
  %v199 = vld [vmem:[%s0 + $0x184] sm:$0xf]
  %v200 = vld [vmem:[%s0 + $0x188] sm:$0xff]
  %v201 = vld [vmem:[%s0 + $0x190] sm:$0xff]
  %v202 = vld [vmem:[%s0 + $0x198] sm:$0xff]
  %v203 = vld [vmem:[%s0 + $0x1a0] sm:$0xf]
  %v204 = vld [vmem:[%s0 + $0x1a4] sm:$0xff]
  %v205 = vld [vmem:[%s0 + $0x1ac] sm:$0xff]
  %v206 = vld [vmem:[%s0 + $0x1b4] sm:$0xff]
  %v207 = vld [vmem:[%s0 + $0x1bc] sm:$0xf]
  %v208 = vld [vmem:[%s0 + $0x1c0] sm:$0xff]
  %v209 = vld [vmem:[%s0 + $0x1c8] sm:$0xff]
  %v210 = vld [vmem:[%s0 + $0x1d0] sm:$0xff]
  %v211 = vld [vmem:[%s0 + $0x1d8] sm:$0xf]
  %v212 = vld [vmem:[%s0 + $0x1dc] sm:$0xff]
  %v213 = vld [vmem:[%s0 + $0x1e4] sm:$0xff]
  %v214 = vld [vmem:[%s0 + $0x1ec] sm:$0xff]
  %v215 = vld [vmem:[%s0 + $0x1f4] sm:$0xf]
  %v216 = vld [vmem:[%s0 + $0x1f8] sm:$0xff]
  %v217 = vld [vmem:[%s0 + $0x200] sm:$0xff]
  %v218 = vld [vmem:[%s0 + $0x208] sm:$0xff]
  %v219 = vld [vmem:[%s0 + $0x210] sm:$0xf]
  %v220 = vld [vmem:[%s0 + $0x214] sm:$0xff]
  %v221 = vld [vmem:[%s0 + $0x21c] sm:$0xff]
  %v222 = vld [vmem:[%s0 + $0x224] sm:$0xff]
  %v223 = vld [vmem:[%s0 + $0x22c] sm:$0xf]
  %v224 = vld [vmem:[%s0 + $0x230] sm:$0xff]
  %v225 = vld [vmem:[%s0 + $0x238] sm:$0xff]
  %v226 = vld [vmem:[%s0 + $0x240] sm:$0xff]
  %v227 = vld [vmem:[%s0 + $0x248] sm:$0xf]
  %v228 = vld [vmem:[%s0 + $0x24c] sm:$0xff]
  %v229 = vld [vmem:[%s0 + $0x254] sm:$0xff]
  %v230 = vld [vmem:[%s0 + $0x25c] sm:$0xff]
  %v231 = vld [vmem:[%s0 + $0x264] sm:$0xf]
  %v232 = vld [vmem:[%s0 + $0x268] sm:$0xff]
  %v233 = vld [vmem:[%s0 + $0x270] sm:$0xff]
  %v234 = vld [vmem:[%s0 + $0x278] sm:$0xff]
  %v235 = vld [vmem:[%s0 + $0x280] sm:$0xf]
  %v236 = vld [vmem:[%s0 + $0x284] sm:$0xff]
  %v237 = vld [vmem:[%s0 + $0x28c] sm:$0xff]
  %v238 = vld [vmem:[%s0 + $0x294] sm:$0xff]
  %v239 = vld [vmem:[%s0 + $0x29c] sm:$0xf]
  %v240 = vld [vmem:[%s0 + $0x2a0] sm:$0xff]
  %v241 = vld [vmem:[%s0 + $0x2a8] sm:$0xff]
  %v242 = vld [vmem:[%s0 + $0x2b0] sm:$0xff]
  %v243 = vld [vmem:[%s0 + $0x2b8] sm:$0xf]
  %v244 = vld [vmem:[%s0 + $0x2bc] sm:$0xff]
  %v245 = vld [vmem:[%s0 + $0x2c4] sm:$0xff]
  %v246 = vld [vmem:[%s0 + $0x2cc] sm:$0xff]
  %v247 = vld [vmem:[%s0 + $0x2d4] sm:$0xf]
  %v248 = vld [vmem:[%s0 + $0x2d8] sm:$0xff]
  %v249 = vld [vmem:[%s0 + $0x2e0] sm:$0xff]
  %v250 = vld [vmem:[%s0 + $0x2e8] sm:$0xff]
  %v251 = vld [vmem:[%s0 + $0x2f0] sm:$0xf]
  %v252 = vld [vmem:[%s0 + $0x2f4] sm:$0xff]
  %v253 = vld [vmem:[%s0 + $0x2fc] sm:$0xff]
  %v254 = vld [vmem:[%s0 + $0x304] sm:$0xff]
  %v255 = vld [vmem:[%s0 + $0x30c] sm:$0xf]
  %v256 = vld [vmem:[%s0 + $0x310] sm:$0xff]
  %v257 = vld [vmem:[%s0 + $0x318] sm:$0xff]
  %v258 = vld [vmem:[%s0 + $0x320] sm:$0xff]
  %v259 = vld [vmem:[%s0 + $0x328] sm:$0xf]
  %v260 = vld [vmem:[%s0 + $0x32c] sm:$0xff]
  %v261 = vld [vmem:[%s0 + $0x334] sm:$0xff]
  %v262 = vld [vmem:[%s0 + $0x33c] sm:$0xff]
  %v263 = vld [vmem:[%s0 + $0x344] sm:$0xf]
  %v264 = vld [vmem:[%s0 + $0x348] sm:$0xff]
  %v265 = vld [vmem:[%s0 + $0x350] sm:$0xff]
  %v266 = vld [vmem:[%s0 + $0x358] sm:$0xff]
  %v267 = vld [vmem:[%s0 + $0x360] sm:$0xf]
  %v268 = vld [vmem:[%s0 + $0x364] sm:$0xff]
  %v269 = vld [vmem:[%s0 + $0x36c] sm:$0xff]
  %v270 = vld [vmem:[%s0 + $0x374] sm:$0xff]
  %v271 = vld [vmem:[%s0 + $0x37c] sm:$0xf]
  %v272 = vld [vmem:[%s0 + $0x380] sm:$0xff]
  %v273 = vld [vmem:[%s0 + $0x388] sm:$0xff]
  %v274 = vld [vmem:[%s0 + $0x390] sm:$0xff]
  %v275 = vld [vmem:[%s0 + $0x398] sm:$0xf]
  %v276 = vld [vmem:[%s0 + $0x39c] sm:$0xff]
  %v277 = vld [vmem:[%s0 + $0x3a4] sm:$0xff]
  %v278 = vld [vmem:[%s0 + $0x3ac] sm:$0xff]
  %v279 = vld [vmem:[%s0 + $0x3b4] sm:$0xf]
  %v280 = vld [vmem:[%s0 + $0x3b8] sm:$0xff]
  %v281 = vld [vmem:[%s0 + $0x3c0] sm:$0xff]
  %v282 = vld [vmem:[%s0 + $0x3c8] sm:$0xff]
  %v283 = vld [vmem:[%s0 + $0x3d0] sm:$0xf]
  %v284 = vld [vmem:[%s0 + $0x3d4] sm:$0xff]
  %v285 = vld [vmem:[%s0 + $0x3dc] sm:$0xff]
  %v286 = vld [vmem:[%s0 + $0x3e4] sm:$0xff]
  %v287 = vld [vmem:[%s0 + $0x3ec] sm:$0xf]
  %v288 = vld [vmem:[%s0 + $0x3f0] sm:$0xff]
  %v289 = vld [vmem:[%s0 + $0x3f8] sm:$0xff]
  %v290 = vld [vmem:[%s0 + $0x400] sm:$0xff]
  %v291 = vld [vmem:[%s0 + $0x408] sm:$0xf]
  %v292 = vld [vmem:[%s0 + $0x40c] sm:$0xff]
  %v293 = vld [vmem:[%s0 + $0x414] sm:$0xff]
  %v294 = vld [vmem:[%s0 + $0x41c] sm:$0xff]
  %v295 = vld [vmem:[%s0 + $0x424] sm:$0xf]
  %v296 = vld [vmem:[%s0 + $0x428] sm:$0xff]
  %v297 = vld [vmem:[%s0 + $0x430] sm:$0xff]
  %v298 = vld [vmem:[%s0 + $0x438] sm:$0xff]
  %v299 = vld [vmem:[%s0 + $0x440] sm:$0xf]
  %v300 = vld [vmem:[%s0 + $0x444] sm:$0xff]
  %v301 = vld [vmem:[%s0 + $0x44c] sm:$0xff]
  %v302 = vld [vmem:[%s0 + $0x454] sm:$0xff]
  %v303 = vld [vmem:[%s0 + $0x45c] sm:$0xf]
  %v304 = vld [vmem:[%s0 + $0x460] sm:$0xff]
  %v305 = vld [vmem:[%s0 + $0x468] sm:$0xff]
  %v306 = vld [vmem:[%s0 + $0x470] sm:$0xff]
  %v307 = vld [vmem:[%s0 + $0x478] sm:$0xf]
  %v308 = vld [vmem:[%s0 + $0x47c] sm:$0xff]
  %v309 = vld [vmem:[%s0 + $0x484] sm:$0xff]
  %v310 = vld [vmem:[%s0 + $0x48c] sm:$0xff]
  %v311 = vld [vmem:[%s0 + $0x494] sm:$0xf]
  %v312 = vld [vmem:[%s0 + $0x498] sm:$0xff]
  %v313 = vld [vmem:[%s0 + $0x4a0] sm:$0xff]
  %v314 = vld [vmem:[%s0 + $0x4a8] sm:$0xff]
  %v315 = vld [vmem:[%s0 + $0x4b0] sm:$0xf]
  %v316 = vld [vmem:[%s0 + $0x4b4] sm:$0xff]
  %v317 = vld [vmem:[%s0 + $0x4bc] sm:$0xff]
  %v318 = vld [vmem:[%s0 + $0x4c4] sm:$0xff]
  %v319 = vld [vmem:[%s0 + $0x4cc] sm:$0xf]
  %v320 = vld [vmem:[%s0 + $0x4d0] sm:$0xff]
  %v321 = vld [vmem:[%s0 + $0x4d8] sm:$0xff]
  %v322 = vld [vmem:[%s0 + $0x4e0] sm:$0xff]
  %v323 = vld [vmem:[%s0 + $0x4e8] sm:$0xf]
  %v324 = vld [vmem:[%s0 + $0x4ec] sm:$0xff]
  %v325 = vld [vmem:[%s0 + $0x4f4] sm:$0xff]
  %v326 = vld [vmem:[%s0 + $0x4fc] sm:$0xff]
  %v327 = vld [vmem:[%s0 + $0x504] sm:$0xf]
  %v328 = vld [vmem:[%s0 + $0x508] sm:$0xff]
  %v329 = vld [vmem:[%s0 + $0x510] sm:$0xff]
  %v330 = vld [vmem:[%s0 + $0x518] sm:$0xff]
  %v331 = vld [vmem:[%s0 + $0x520] sm:$0xf]
  %v332 = vld [vmem:[%s0 + $0x524] sm:$0xff]
  %v333 = vld [vmem:[%s0 + $0x52c] sm:$0xff]
  %v334 = vld [vmem:[%s0 + $0x534] sm:$0xff]
  %v335 = vld [vmem:[%s0 + $0x53c] sm:$0xf]
  %v336 = vld [vmem:[%s0 + $0x540] sm:$0xff]
  %v337 = vld [vmem:[%s0 + $0x548] sm:$0xff]
  %v338 = vld [vmem:[%s0 + $0x550] sm:$0xff]
  %v339 = vld [vmem:[%s0 + $0x558] sm:$0xf]
  %v340 = vld [vmem:[%s0 + $0x55c] sm:$0xff]
  %v341 = vld [vmem:[%s0 + $0x564] sm:$0xff]
  %v342 = vld [vmem:[%s0 + $0x56c] sm:$0xff]
  %v343 = vld [vmem:[%s0 + $0x574] sm:$0xf]
  %v344 = vld [vmem:[%s0 + $0x578] sm:$0xff]
  %v345 = vld [vmem:[%s0 + $0x580] sm:$0xff]
  %v346 = vld [vmem:[%s0 + $0x588] sm:$0xff]
  %v347 = vld [vmem:[%s0 + $0x590] sm:$0xf]
  %v348 = vld [vmem:[%s0 + $0x594] sm:$0xff]
  %v349 = vld [vmem:[%s0 + $0x59c] sm:$0xff]
  %v350 = vld [vmem:[%s0 + $0x5a4] sm:$0xff]
  %v351 = vld [vmem:[%s0 + $0x5ac] sm:$0xf]
  %v352 = vld [vmem:[%s0 + $0x5b0] sm:$0xff]
  %v353 = vld [vmem:[%s0 + $0x5b8] sm:$0xff]
  %v354 = vld [vmem:[%s0 + $0x5c0] sm:$0xff]
  %v355 = vld [vmem:[%s0 + $0x5c8] sm:$0xf]
  %v356 = vld [vmem:[%s0 + $0x5cc] sm:$0xff]
  %v357 = vld [vmem:[%s0 + $0x5d4] sm:$0xff]
  %v358 = vld [vmem:[%s0 + $0x5dc] sm:$0xff]
  %v359 = vld [vmem:[%s0 + $0x5e4] sm:$0xf]
  %v360 = vld [vmem:[%s0 + $0x5e8] sm:$0xff]
  %v361 = vld [vmem:[%s0 + $0x5f0] sm:$0xff]
  %v362 = vld [vmem:[%s0 + $0x5f8] sm:$0xff]
  %v363 = vld [vmem:[%s0 + $0x600] sm:$0xf]
  %v364 = vld [vmem:[%s0 + $0x604] sm:$0xff]
  %v365 = vld [vmem:[%s0 + $0x60c] sm:$0xff]
  %v366 = vld [vmem:[%s0 + $0x614] sm:$0xff]
  %v367 = vld [vmem:[%s0 + $0x61c] sm:$0xf]
  %v368 = vld [vmem:[%s0 + $0x620] sm:$0xff]
  %v369 = vld [vmem:[%s0 + $0x628] sm:$0xff]
  %v370 = vld [vmem:[%s0 + $0x630] sm:$0xff]
  %v371 = vld [vmem:[%s0 + $0x638] sm:$0xf]
  %v372 = vld [vmem:[%s0 + $0x63c] sm:$0xff]
  %v373 = vld [vmem:[%s0 + $0x644] sm:$0xff]
  %v374 = vld [vmem:[%s0 + $0x64c] sm:$0xff]
  %v375 = vld [vmem:[%s0 + $0x654] sm:$0xf]
  %v376 = vld [vmem:[%s0 + $0x658] sm:$0xff]
  %v377 = vld [vmem:[%s0 + $0x660] sm:$0xff]
  %v378 = vld [vmem:[%s0 + $0x668] sm:$0xff]
  %v379 = vld [vmem:[%s0 + $0x670] sm:$0xf]
  %v380 = vld [vmem:[%s0 + $0x674] sm:$0xff]
  %v381 = vld [vmem:[%s0 + $0x67c] sm:$0xff]
  %v382 = vld [vmem:[%s0 + $0x684] sm:$0xff]
  %v383 = vld [vmem:[%s0 + $0x68c] sm:$0xf]
  %v384 = vld [vmem:[%s0 + $0x690] sm:$0xff]
  %v385 = vld [vmem:[%s0 + $0x698] sm:$0xff]
  %v386 = vld [vmem:[%s0 + $0x6a0] sm:$0xff]
  %v387 = vld [vmem:[%s0 + $0x6a8] sm:$0xf]
  %v388 = vld [vmem:[%s0 + $0x6ac] sm:$0xff]
  %v389 = vld [vmem:[%s0 + $0x6b4] sm:$0xff]
  %v390 = vld [vmem:[%s0 + $0x6bc] sm:$0xff]
  %v391 = vld [vmem:[%s0 + $0x6c4] sm:$0xf]
  %v392 = vld [vmem:[%s0 + $0x6c8] sm:$0xff]
  %v393 = vld [vmem:[%s0 + $0x6d0] sm:$0xff]
  %v394 = vld [vmem:[%s0 + $0x6d8] sm:$0xff]
  %v395 = vld [vmem:[%s0 + $0x6e0] sm:$0xf]
  %v396 = vld [vmem:[%s0 + $0x6e4] sm:$0xff]
  %v397 = vld [vmem:[%s0 + $0x6ec] sm:$0xff]
  %v398 = vld [vmem:[%s0 + $0x6f4] sm:$0xff]
  %v399 = vld [vmem:[%s0 + $0x6fc] sm:$0xf]
  %v400 = vld [vmem:[%s1] sm:$0xf]
  %v401 = vld [vmem:[%s1 + $0x4] sm:$0xf]
  %v402 = vld [vmem:[%s1 + $0x8] sm:$0xf]
  %v403 = vld [vmem:[%s1 + $0xc] sm:$0xf]
  %v404 = vld [vmem:[%s1 + $0x10] sm:$0xf]
  %v405 = vld [vmem:[%s1 + $0x14] sm:$0xf]
  %v406 = vld [vmem:[%s1 + $0x18] sm:$0xf]
  %v407 = vld [vmem:[%s1 + $0x1c] sm:$0xf]
  %v408 = vld [vmem:[%s1 + $0x20] sm:$0xf]
  %v409 = vld [vmem:[%s1 + $0x24] sm:$0xf]
  %v410 = vld [vmem:[%s1 + $0x28] sm:$0xf]
  %v411 = vld [vmem:[%s1 + $0x2c] sm:$0xf]
  %v412 = vld [vmem:[%s1 + $0x30] sm:$0xf]
  %v413 = vld [vmem:[%s1 + $0x34] sm:$0xf]
  %v414 = vld [vmem:[%s1 + $0x38] sm:$0xf]
  %v415 = vld [vmem:[%s1 + $0x3c] sm:$0xf]
  %v416 = vld [vmem:[%s1 + $0x40] sm:$0xf]
  %v417 = vld [vmem:[%s1 + $0x44] sm:$0xf]
  %v418 = vld [vmem:[%s1 + $0x48] sm:$0xf]
  %v419 = vld [vmem:[%s1 + $0x4c] sm:$0xf]
  %v420 = vld [vmem:[%s1 + $0x50] sm:$0xf]
  %v421 = vld [vmem:[%s1 + $0x54] sm:$0xf]
  %v422 = vld [vmem:[%s1 + $0x58] sm:$0xf]
  %v423 = vld [vmem:[%s1 + $0x5c] sm:$0xf]
  %v424 = vld [vmem:[%s1 + $0x60] sm:$0xf]
  %v425 = vld [vmem:[%s1 + $0x64] sm:$0xf]
  %v426 = vld [vmem:[%s1 + $0x68] sm:$0xf]
  %v427 = vld [vmem:[%s1 + $0x6c] sm:$0xf]
  %v428 = vld [vmem:[%s1 + $0x70] sm:$0xf]
  %v429 = vld [vmem:[%s1 + $0x74] sm:$0xf]
  %v430 = vld [vmem:[%s1 + $0x78] sm:$0xf]
  %v431 = vld [vmem:[%s1 + $0x7c] sm:$0xf]
  %v432 = vld [vmem:[%s1 + $0x80] sm:$0xf]
  %v433 = vld [vmem:[%s1 + $0x84] sm:$0xf]
  %v434 = vld [vmem:[%s1 + $0x88] sm:$0xf]
  %v435 = vld [vmem:[%s1 + $0x8c] sm:$0xf]
  %v436 = vld [vmem:[%s1 + $0x90] sm:$0xf]
  %v437 = vld [vmem:[%s1 + $0x94] sm:$0xf]
  %v438 = vld [vmem:[%s1 + $0x98] sm:$0xf]
  %v439 = vld [vmem:[%s1 + $0x9c] sm:$0xf]
  %v440 = vld [vmem:[%s1 + $0xa0] sm:$0xf]
  %v441 = vld [vmem:[%s1 + $0xa4] sm:$0xf]
  %v442 = vld [vmem:[%s1 + $0xa8] sm:$0xf]
  %v443 = vld [vmem:[%s1 + $0xac] sm:$0xf]
  %v444 = vld [vmem:[%s1 + $0xb0] sm:$0xf]
  %v445 = vld [vmem:[%s1 + $0xb4] sm:$0xf]
  %v446 = vld [vmem:[%s1 + $0xb8] sm:$0xf]
  %v447 = vld [vmem:[%s1 + $0xbc] sm:$0xf]
  %v448 = vld [vmem:[%s1 + $0xc0] sm:$0xf]
  %v449 = vld [vmem:[%s1 + $0xc4] sm:$0xf]
  %v450 = vld [vmem:[%s1 + $0xc8] sm:$0xf]
  %v451 = vld [vmem:[%s1 + $0xcc] sm:$0xf]
  %v452 = vld [vmem:[%s1 + $0xd0] sm:$0xf]
  %v453 = vld [vmem:[%s1 + $0xd4] sm:$0xf]
  %v454 = vld [vmem:[%s1 + $0xd8] sm:$0xf]
  %v455 = vld [vmem:[%s1 + $0xdc] sm:$0xf]
  %v456 = vld [vmem:[%s1 + $0xe0] sm:$0xf]
  %v457 = vld [vmem:[%s1 + $0xe4] sm:$0xf]
  %v458 = vld [vmem:[%s1 + $0xe8] sm:$0xf]
  %v459 = vld [vmem:[%s1 + $0xec] sm:$0xf]
  %v460 = vld [vmem:[%s1 + $0xf0] sm:$0xf]
  %v461 = vld [vmem:[%s1 + $0xf4] sm:$0xf]
  %v462 = vld [vmem:[%s1 + $0xf8] sm:$0xf]
  %v463 = vld [vmem:[%s1 + $0xfc] sm:$0xf]
  %v464 = vld [vmem:[%s1 + $0x100] sm:$0xf]
  %v465 = vld [vmem:[%s1 + $0x104] sm:$0xf]
  %v466 = vld [vmem:[%s1 + $0x108] sm:$0xf]
  %v467 = vld [vmem:[%s1 + $0x10c] sm:$0xf]
  %v468 = vld [vmem:[%s1 + $0x110] sm:$0xf]
  %v469 = vld [vmem:[%s1 + $0x114] sm:$0xf]
  %v470 = vld [vmem:[%s1 + $0x118] sm:$0xf]
  %v471 = vld [vmem:[%s1 + $0x11c] sm:$0xf]
  %v472 = vld [vmem:[%s1 + $0x120] sm:$0xf]
  %v473 = vld [vmem:[%s1 + $0x124] sm:$0xf]
  %v474 = vld [vmem:[%s1 + $0x128] sm:$0xf]
  %v475 = vld [vmem:[%s1 + $0x12c] sm:$0xf]
  %v476 = vld [vmem:[%s1 + $0x130] sm:$0xf]
  %v477 = vld [vmem:[%s1 + $0x134] sm:$0xf]
  %v478 = vld [vmem:[%s1 + $0x138] sm:$0xf]
  %v479 = vld [vmem:[%s1 + $0x13c] sm:$0xf]
  %v480 = vld [vmem:[%s1 + $0x140] sm:$0xf]
  %v481 = vld [vmem:[%s1 + $0x144] sm:$0xf]
  %v482 = vld [vmem:[%s1 + $0x148] sm:$0xf]
  %v483 = vld [vmem:[%s1 + $0x14c] sm:$0xf]
  %v484 = vld [vmem:[%s1 + $0x150] sm:$0xf]
  %v485 = vld [vmem:[%s1 + $0x154] sm:$0xf]
  %v486 = vld [vmem:[%s1 + $0x158] sm:$0xf]
  %v487 = vld [vmem:[%s1 + $0x15c] sm:$0xf]
  %v488 = vld [vmem:[%s1 + $0x160] sm:$0xf]
  %v489 = vld [vmem:[%s1 + $0x164] sm:$0xf]
  %v490 = vld [vmem:[%s1 + $0x168] sm:$0xf]
  %v491 = vld [vmem:[%s1 + $0x16c] sm:$0xf]
  %v492 = vld [vmem:[%s1 + $0x170] sm:$0xf]
  %v493 = vld [vmem:[%s1 + $0x174] sm:$0xf]
  %v494 = vld [vmem:[%s1 + $0x178] sm:$0xf]
  %v495 = vld [vmem:[%s1 + $0x17c] sm:$0xf]
  %v496 = vld [vmem:[%s1 + $0x180] sm:$0xf]
  %v497 = vld [vmem:[%s1 + $0x184] sm:$0xf]
  %v498 = vld [vmem:[%s1 + $0x188] sm:$0xf]
  %v499 = vld [vmem:[%s1 + $0x18c] sm:$0xf]
  %v500 = vld [vmem:[%s1 + $0x190] sm:$0xf]
  %v501 = vld [vmem:[%s1 + $0x194] sm:$0xf]
  %v502 = vld [vmem:[%s1 + $0x198] sm:$0xf]
  %v503 = vld [vmem:[%s1 + $0x19c] sm:$0xf]
  %v504 = vld [vmem:[%s1 + $0x1a0] sm:$0xf]
  %v505 = vld [vmem:[%s1 + $0x1a4] sm:$0xf]
  %v506 = vld [vmem:[%s1 + $0x1a8] sm:$0xf]
  %v507 = vld [vmem:[%s1 + $0x1ac] sm:$0xf]
  %v508 = vld [vmem:[%s1 + $0x1b0] sm:$0xf]
  %v509 = vld [vmem:[%s1 + $0x1b4] sm:$0xf]
  %v510 = vld [vmem:[%s1 + $0x1b8] sm:$0xf]
  %v511 = vld [vmem:[%s1 + $0x1bc] sm:$0xf]
  %v768 = vunpack.c.l.b16 %v144
  %v769 = vunpack.c.h.b16 %v144
  %v770 = vunpack.c.l.b16 %v145
  %v771 = vunpack.c.h.b16 %v145
  %v772 = vunpack.c.l.b16 %v146
  %v773 = vunpack.c.h.b16 %v146
  %v774 = vunpack.c.l.b16 %v147
  %v775 = vunpack.c.l.b16 %v148
  %v776 = vunpack.c.h.b16 %v148
  %v777 = vunpack.c.l.b16 %v149
  %v778 = vunpack.c.h.b16 %v149
  %v779 = vunpack.c.l.b16 %v150
  %v780 = vunpack.c.h.b16 %v150
  %v781 = vunpack.c.l.b16 %v151
  %v782 = vunpack.c.l.b16 %v152
  %v783 = vunpack.c.h.b16 %v152
  %v784 = vunpack.c.l.b16 %v153
  %v785 = vunpack.c.h.b16 %v153
  %v786 = vunpack.c.l.b16 %v154
  %v787 = vunpack.c.h.b16 %v154
  %v788 = vunpack.c.l.b16 %v155
  %v789 = vunpack.c.l.b16 %v156
  %v790 = vunpack.c.h.b16 %v156
  %v791 = vunpack.c.l.b16 %v157
  %v792 = vunpack.c.h.b16 %v157
  %v793 = vunpack.c.l.b16 %v158
  %v794 = vunpack.c.h.b16 %v158
  %v795 = vunpack.c.l.b16 %v159
  %v796 = vunpack.c.l.b16 %v160
  %v797 = vunpack.c.h.b16 %v160
  %v798 = vunpack.c.l.b16 %v161
  %v799 = vunpack.c.h.b16 %v161
  %v800 = vunpack.c.l.b16 %v162
  %v801 = vunpack.c.h.b16 %v162
  %v802 = vunpack.c.l.b16 %v163
  %v803 = vunpack.c.l.b16 %v164
  %v804 = vunpack.c.h.b16 %v164
  %v805 = vunpack.c.l.b16 %v165
  %v806 = vunpack.c.h.b16 %v165
  %v807 = vunpack.c.l.b16 %v166
  %v808 = vunpack.c.h.b16 %v166
  %v809 = vunpack.c.l.b16 %v167
  %v810 = vunpack.c.l.b16 %v168
  %v811 = vunpack.c.h.b16 %v168
  %v812 = vunpack.c.l.b16 %v169
  %v813 = vunpack.c.h.b16 %v169
  %v814 = vunpack.c.l.b16 %v170
  %v815 = vunpack.c.h.b16 %v170
  %v816 = vunpack.c.l.b16 %v171
  %v817 = vunpack.c.l.b16 %v172
  %v818 = vunpack.c.h.b16 %v172
  %v819 = vunpack.c.l.b16 %v173
  %v820 = vunpack.c.h.b16 %v173
  %v821 = vunpack.c.l.b16 %v174
  %v822 = vunpack.c.h.b16 %v174
  %v823 = vunpack.c.l.b16 %v175
  %v824 = vunpack.c.l.b16 %v176
  %v825 = vunpack.c.h.b16 %v176
  %v826 = vunpack.c.l.b16 %v177
  %v827 = vunpack.c.h.b16 %v177
  %v828 = vunpack.c.l.b16 %v178
  %v829 = vunpack.c.h.b16 %v178
  %v830 = vunpack.c.l.b16 %v179
  %v831 = vunpack.c.l.b16 %v180
  %v832 = vunpack.c.h.b16 %v180
  %v833 = vunpack.c.l.b16 %v181
  %v834 = vunpack.c.h.b16 %v181
  %v835 = vunpack.c.l.b16 %v182
  %v836 = vunpack.c.h.b16 %v182
  %v837 = vunpack.c.l.b16 %v183
  %v838 = vunpack.c.l.b16 %v184
  %v839 = vunpack.c.h.b16 %v184
  %v840 = vunpack.c.l.b16 %v185
  %v841 = vunpack.c.h.b16 %v185
  %v842 = vunpack.c.l.b16 %v186
  %v843 = vunpack.c.h.b16 %v186
  %v844 = vunpack.c.l.b16 %v187
  %v845 = vunpack.c.l.b16 %v188
  %v846 = vunpack.c.h.b16 %v188
  %v847 = vunpack.c.l.b16 %v189
  %v848 = vunpack.c.h.b16 %v189
  %v849 = vunpack.c.l.b16 %v190
  %v850 = vunpack.c.h.b16 %v190
  %v851 = vunpack.c.l.b16 %v191
  %v852 = vunpack.c.l.b16 %v192
  %v853 = vunpack.c.h.b16 %v192
  %v854 = vunpack.c.l.b16 %v193
  %v855 = vunpack.c.h.b16 %v193
  %v856 = vunpack.c.l.b16 %v194
  %v857 = vunpack.c.h.b16 %v194
  %v858 = vunpack.c.l.b16 %v195
  %v859 = vunpack.c.l.b16 %v196
  %v860 = vunpack.c.h.b16 %v196
  %v861 = vunpack.c.l.b16 %v197
  %v862 = vunpack.c.h.b16 %v197
  %v863 = vunpack.c.l.b16 %v198
  %v864 = vunpack.c.h.b16 %v198
  %v865 = vunpack.c.l.b16 %v199
  %v866 = vunpack.c.l.b16 %v200
  %v867 = vunpack.c.h.b16 %v200
  %v868 = vunpack.c.l.b16 %v201
  %v869 = vunpack.c.h.b16 %v201
  %v870 = vunpack.c.l.b16 %v202
  %v871 = vunpack.c.h.b16 %v202
  %v872 = vunpack.c.l.b16 %v203
  %v873 = vunpack.c.l.b16 %v204
  %v874 = vunpack.c.h.b16 %v204
  %v875 = vunpack.c.l.b16 %v205
  %v876 = vunpack.c.h.b16 %v205
  %v877 = vunpack.c.l.b16 %v206
  %v878 = vunpack.c.h.b16 %v206
  %v879 = vunpack.c.l.b16 %v207
  %v880 = vunpack.c.l.b16 %v208
  %v881 = vunpack.c.h.b16 %v208
  %v882 = vunpack.c.l.b16 %v209
  %v883 = vunpack.c.h.b16 %v209
  %v884 = vunpack.c.l.b16 %v210
  %v885 = vunpack.c.h.b16 %v210
  %v886 = vunpack.c.l.b16 %v211
  %v887 = vunpack.c.l.b16 %v212
  %v888 = vunpack.c.h.b16 %v212
  %v889 = vunpack.c.l.b16 %v213
  %v890 = vunpack.c.h.b16 %v213
  %v891 = vunpack.c.l.b16 %v214
  %v892 = vunpack.c.h.b16 %v214
  %v893 = vunpack.c.l.b16 %v215
  %v894 = vunpack.c.l.b16 %v216
  %v895 = vunpack.c.h.b16 %v216
  %v896 = vunpack.c.l.b16 %v217
  %v897 = vunpack.c.h.b16 %v217
  %v898 = vunpack.c.l.b16 %v218
  %v899 = vunpack.c.h.b16 %v218
  %v900 = vunpack.c.l.b16 %v219
  %v901 = vunpack.c.l.b16 %v220
  %v902 = vunpack.c.h.b16 %v220
  %v903 = vunpack.c.l.b16 %v221
  %v904 = vunpack.c.h.b16 %v221
  %v905 = vunpack.c.l.b16 %v222
  %v906 = vunpack.c.h.b16 %v222
  %v907 = vunpack.c.l.b16 %v223
  %v908 = vunpack.c.l.b16 %v224
  %v909 = vunpack.c.h.b16 %v224
  %v910 = vunpack.c.l.b16 %v225
  %v911 = vunpack.c.h.b16 %v225
  %v912 = vunpack.c.l.b16 %v226
  %v913 = vunpack.c.h.b16 %v226
  %v914 = vunpack.c.l.b16 %v227
  %v915 = vunpack.c.l.b16 %v228
  %v916 = vunpack.c.h.b16 %v228
  %v917 = vunpack.c.l.b16 %v229
  %v918 = vunpack.c.h.b16 %v229
  %v919 = vunpack.c.l.b16 %v230
  %v920 = vunpack.c.h.b16 %v230
  %v921 = vunpack.c.l.b16 %v231
  %v922 = vunpack.c.l.b16 %v232
  %v923 = vunpack.c.h.b16 %v232
  %v924 = vunpack.c.l.b16 %v233
  %v925 = vunpack.c.h.b16 %v233
  %v926 = vunpack.c.l.b16 %v234
  %v927 = vunpack.c.h.b16 %v234
  %v928 = vunpack.c.l.b16 %v235
  %v929 = vunpack.c.l.b16 %v236
  %v930 = vunpack.c.h.b16 %v236
  %v931 = vunpack.c.l.b16 %v237
  %v932 = vunpack.c.h.b16 %v237
  %v933 = vunpack.c.l.b16 %v238
  %v934 = vunpack.c.h.b16 %v238
  %v935 = vunpack.c.l.b16 %v239
  %v936 = vunpack.c.l.b16 %v240
  %v937 = vunpack.c.h.b16 %v240
  %v938 = vunpack.c.l.b16 %v241
  %v939 = vunpack.c.h.b16 %v241
  %v940 = vunpack.c.l.b16 %v242
  %v941 = vunpack.c.h.b16 %v242
  %v942 = vunpack.c.l.b16 %v243
  %v943 = vunpack.c.l.b16 %v244
  %v944 = vunpack.c.h.b16 %v244
  %v945 = vunpack.c.l.b16 %v245
  %v946 = vunpack.c.h.b16 %v245
  %v947 = vunpack.c.l.b16 %v246
  %v948 = vunpack.c.h.b16 %v246
  %v949 = vunpack.c.l.b16 %v247
  %v950 = vunpack.c.l.b16 %v248
  %v951 = vunpack.c.h.b16 %v248
  %v952 = vunpack.c.l.b16 %v249
  %v953 = vunpack.c.h.b16 %v249
  %v954 = vunpack.c.l.b16 %v250
  %v955 = vunpack.c.h.b16 %v250
  %v956 = vunpack.c.l.b16 %v251
  %v957 = vunpack.c.l.b16 %v252
  %v958 = vunpack.c.h.b16 %v252
  %v959 = vunpack.c.l.b16 %v253
  %v960 = vunpack.c.h.b16 %v253
  %v961 = vunpack.c.l.b16 %v254
  %v962 = vunpack.c.h.b16 %v254
  %v963 = vunpack.c.l.b16 %v255
  %v964 = vunpack.c.l.b16 %v256
  %v965 = vunpack.c.h.b16 %v256
  %v966 = vunpack.c.l.b16 %v257
  %v967 = vunpack.c.h.b16 %v257
  %v968 = vunpack.c.l.b16 %v258
  %v969 = vunpack.c.h.b16 %v258
  %v970 = vunpack.c.l.b16 %v259
  %v971 = vunpack.c.l.b16 %v260
  %v972 = vunpack.c.h.b16 %v260
  %v973 = vunpack.c.l.b16 %v261
  %v974 = vunpack.c.h.b16 %v261
  %v975 = vunpack.c.l.b16 %v262
  %v976 = vunpack.c.h.b16 %v262
  %v977 = vunpack.c.l.b16 %v263
  %v978 = vunpack.c.l.b16 %v264
  %v979 = vunpack.c.h.b16 %v264
  %v980 = vunpack.c.l.b16 %v265
  %v981 = vunpack.c.h.b16 %v265
  %v982 = vunpack.c.l.b16 %v266
  %v983 = vunpack.c.h.b16 %v266
  %v984 = vunpack.c.l.b16 %v267
  %v985 = vunpack.c.l.b16 %v268
  %v986 = vunpack.c.h.b16 %v268
  %v987 = vunpack.c.l.b16 %v269
  %v988 = vunpack.c.h.b16 %v269
  %v989 = vunpack.c.l.b16 %v270
  %v990 = vunpack.c.h.b16 %v270
  %v991 = vunpack.c.l.b16 %v271
  %v992 = vunpack.c.l.b16 %v272
  %v993 = vunpack.c.h.b16 %v272
  %v994 = vunpack.c.l.b16 %v273
  %v995 = vunpack.c.h.b16 %v273
  %v996 = vunpack.c.l.b16 %v274
  %v997 = vunpack.c.h.b16 %v274
  %v998 = vunpack.c.l.b16 %v275
  %v999 = vunpack.c.l.b16 %v276
  %v1000 = vunpack.c.h.b16 %v276
  %v1001 = vunpack.c.l.b16 %v277
  %v1002 = vunpack.c.h.b16 %v277
  %v1003 = vunpack.c.l.b16 %v278
  %v1004 = vunpack.c.h.b16 %v278
  %v1005 = vunpack.c.l.b16 %v279
  %v1006 = vunpack.c.l.b16 %v280
  %v1007 = vunpack.c.h.b16 %v280
  %v1008 = vunpack.c.l.b16 %v281
  %v1009 = vunpack.c.h.b16 %v281
  %v1010 = vunpack.c.l.b16 %v282
  %v1011 = vunpack.c.h.b16 %v282
  %v1012 = vunpack.c.l.b16 %v283
  %v1013 = vunpack.c.l.b16 %v284
  %v1014 = vunpack.c.h.b16 %v284
  %v1015 = vunpack.c.l.b16 %v285
  %v1016 = vunpack.c.h.b16 %v285
  %v1017 = vunpack.c.l.b16 %v286
  %v1018 = vunpack.c.h.b16 %v286
  %v1019 = vunpack.c.l.b16 %v287
  %v1020 = vunpack.c.l.b16 %v288
  %v1021 = vunpack.c.h.b16 %v288
  %v1022 = vunpack.c.l.b16 %v289
  %v1023 = vunpack.c.h.b16 %v289
  %v1024 = vunpack.c.l.b16 %v290
  %v1025 = vunpack.c.h.b16 %v290
  %v1026 = vunpack.c.l.b16 %v291
  %v1027 = vunpack.c.l.b16 %v292
  %v1028 = vunpack.c.h.b16 %v292
  %v1029 = vunpack.c.l.b16 %v293
  %v1030 = vunpack.c.h.b16 %v293
  %v1031 = vunpack.c.l.b16 %v294
  %v1032 = vunpack.c.h.b16 %v294
  %v1033 = vunpack.c.l.b16 %v295
  %v1034 = vunpack.c.l.b16 %v296
  %v1035 = vunpack.c.h.b16 %v296
  %v1036 = vunpack.c.l.b16 %v297
  %v1037 = vunpack.c.h.b16 %v297
  %v1038 = vunpack.c.l.b16 %v298
  %v1039 = vunpack.c.h.b16 %v298
  %v1040 = vunpack.c.l.b16 %v299
  %v1041 = vunpack.c.l.b16 %v300
  %v1042 = vunpack.c.h.b16 %v300
  %v1043 = vunpack.c.l.b16 %v301
  %v1044 = vunpack.c.h.b16 %v301
  %v1045 = vunpack.c.l.b16 %v302
  %v1046 = vunpack.c.h.b16 %v302
  %v1047 = vunpack.c.l.b16 %v303
  %v1048 = vunpack.c.l.b16 %v304
  %v1049 = vunpack.c.h.b16 %v304
  %v1050 = vunpack.c.l.b16 %v305
  %v1051 = vunpack.c.h.b16 %v305
  %v1052 = vunpack.c.l.b16 %v306
  %v1053 = vunpack.c.h.b16 %v306
  %v1054 = vunpack.c.l.b16 %v307
  %v1055 = vunpack.c.l.b16 %v308
  %v1056 = vunpack.c.h.b16 %v308
  %v1057 = vunpack.c.l.b16 %v309
  %v1058 = vunpack.c.h.b16 %v309
  %v1059 = vunpack.c.l.b16 %v310
  %v1060 = vunpack.c.h.b16 %v310
  %v1061 = vunpack.c.l.b16 %v311
  %v1062 = vunpack.c.l.b16 %v312
  %v1063 = vunpack.c.h.b16 %v312
  %v1064 = vunpack.c.l.b16 %v313
  %v1065 = vunpack.c.h.b16 %v313
  %v1066 = vunpack.c.l.b16 %v314
  %v1067 = vunpack.c.h.b16 %v314
  %v1068 = vunpack.c.l.b16 %v315
  %v1069 = vunpack.c.l.b16 %v316
  %v1070 = vunpack.c.h.b16 %v316
  %v1071 = vunpack.c.l.b16 %v317
  %v1072 = vunpack.c.h.b16 %v317
  %v1073 = vunpack.c.l.b16 %v318
  %v1074 = vunpack.c.h.b16 %v318
  %v1075 = vunpack.c.l.b16 %v319
  %v1076 = vunpack.c.l.b16 %v320
  %v1077 = vunpack.c.h.b16 %v320
  %v1078 = vunpack.c.l.b16 %v321
  %v1079 = vunpack.c.h.b16 %v321
  %v1080 = vunpack.c.l.b16 %v322
  %v1081 = vunpack.c.h.b16 %v322
  %v1082 = vunpack.c.l.b16 %v323
  %v1083 = vunpack.c.l.b16 %v324
  %v1084 = vunpack.c.h.b16 %v324
  %v1085 = vunpack.c.l.b16 %v325
  %v1086 = vunpack.c.h.b16 %v325
  %v1087 = vunpack.c.l.b16 %v326
  %v1088 = vunpack.c.h.b16 %v326
  %v1089 = vunpack.c.l.b16 %v327
  %v1090 = vunpack.c.l.b16 %v328
  %v1091 = vunpack.c.h.b16 %v328
  %v1092 = vunpack.c.l.b16 %v329
  %v1093 = vunpack.c.h.b16 %v329
  %v1094 = vunpack.c.l.b16 %v330
  %v1095 = vunpack.c.h.b16 %v330
  %v1096 = vunpack.c.l.b16 %v331
  %v1097 = vunpack.c.l.b16 %v332
  %v1098 = vunpack.c.h.b16 %v332
  %v1099 = vunpack.c.l.b16 %v333
  %v1100 = vunpack.c.h.b16 %v333
  %v1101 = vunpack.c.l.b16 %v334
  %v1102 = vunpack.c.h.b16 %v334
  %v1103 = vunpack.c.l.b16 %v335
  %v1104 = vunpack.c.l.b16 %v336
  %v1105 = vunpack.c.h.b16 %v336
  %v1106 = vunpack.c.l.b16 %v337
  %v1107 = vunpack.c.h.b16 %v337
  %v1108 = vunpack.c.l.b16 %v338
  %v1109 = vunpack.c.h.b16 %v338
  %v1110 = vunpack.c.l.b16 %v339
  %v1111 = vunpack.c.l.b16 %v340
  %v1112 = vunpack.c.h.b16 %v340
  %v1113 = vunpack.c.l.b16 %v341
  %v1114 = vunpack.c.h.b16 %v341
  %v1115 = vunpack.c.l.b16 %v342
  %v1116 = vunpack.c.h.b16 %v342
  %v1117 = vunpack.c.l.b16 %v343
  %v1118 = vunpack.c.l.b16 %v344
  %v1119 = vunpack.c.h.b16 %v344
  %v1120 = vunpack.c.l.b16 %v345
  %v1121 = vunpack.c.h.b16 %v345
  %v1122 = vunpack.c.l.b16 %v346
  %v1123 = vunpack.c.h.b16 %v346
  %v1124 = vunpack.c.l.b16 %v347
  %v1125 = vunpack.c.l.b16 %v348
  %v1126 = vunpack.c.h.b16 %v348
  %v1127 = vunpack.c.l.b16 %v349
  %v1128 = vunpack.c.h.b16 %v349
  %v1129 = vunpack.c.l.b16 %v350
  %v1130 = vunpack.c.h.b16 %v350
  %v1131 = vunpack.c.l.b16 %v351
  %v1132 = vunpack.c.l.b16 %v352
  %v1133 = vunpack.c.h.b16 %v352
  %v1134 = vunpack.c.l.b16 %v353
  %v1135 = vunpack.c.h.b16 %v353
  %v1136 = vunpack.c.l.b16 %v354
  %v1137 = vunpack.c.h.b16 %v354
  %v1138 = vunpack.c.l.b16 %v355
  %v1139 = vunpack.c.l.b16 %v356
  %v1140 = vunpack.c.h.b16 %v356
  %v1141 = vunpack.c.l.b16 %v357
  %v1142 = vunpack.c.h.b16 %v357
  %v1143 = vunpack.c.l.b16 %v358
  %v1144 = vunpack.c.h.b16 %v358
  %v1145 = vunpack.c.l.b16 %v359
  %v1146 = vunpack.c.l.b16 %v360
  %v1147 = vunpack.c.h.b16 %v360
  %v1148 = vunpack.c.l.b16 %v361
  %v1149 = vunpack.c.h.b16 %v361
  %v1150 = vunpack.c.l.b16 %v362
  %v1151 = vunpack.c.h.b16 %v362
  %v1152 = vunpack.c.l.b16 %v363
  %v1153 = vunpack.c.l.b16 %v364
  %v1154 = vunpack.c.h.b16 %v364
  %v1155 = vunpack.c.l.b16 %v365
  %v1156 = vunpack.c.h.b16 %v365
  %v1157 = vunpack.c.l.b16 %v366
  %v1158 = vunpack.c.h.b16 %v366
  %v1159 = vunpack.c.l.b16 %v367
  %v1160 = vunpack.c.l.b16 %v368
  %v1161 = vunpack.c.h.b16 %v368
  %v1162 = vunpack.c.l.b16 %v369
  %v1163 = vunpack.c.h.b16 %v369
  %v1164 = vunpack.c.l.b16 %v370
  %v1165 = vunpack.c.h.b16 %v370
  %v1166 = vunpack.c.l.b16 %v371
  %v1167 = vunpack.c.l.b16 %v372
  %v1168 = vunpack.c.h.b16 %v372
  %v1169 = vunpack.c.l.b16 %v373
  %v1170 = vunpack.c.h.b16 %v373
  %v1171 = vunpack.c.l.b16 %v374
  %v1172 = vunpack.c.h.b16 %v374
  %v1173 = vunpack.c.l.b16 %v375
  %v1174 = vunpack.c.l.b16 %v376
  %v1175 = vunpack.c.h.b16 %v376
  %v1176 = vunpack.c.l.b16 %v377
  %v1177 = vunpack.c.h.b16 %v377
  %v1178 = vunpack.c.l.b16 %v378
  %v1179 = vunpack.c.h.b16 %v378
  %v1180 = vunpack.c.l.b16 %v379
  %v1181 = vunpack.c.l.b16 %v380
  %v1182 = vunpack.c.h.b16 %v380
  %v1183 = vunpack.c.l.b16 %v381
  %v1184 = vunpack.c.h.b16 %v381
  %v1185 = vunpack.c.l.b16 %v382
  %v1186 = vunpack.c.h.b16 %v382
  %v1187 = vunpack.c.l.b16 %v383
  %v1188 = vunpack.c.l.b16 %v384
  %v1189 = vunpack.c.h.b16 %v384
  %v1190 = vunpack.c.l.b16 %v385
  %v1191 = vunpack.c.h.b16 %v385
  %v1192 = vunpack.c.l.b16 %v386
  %v1193 = vunpack.c.h.b16 %v386
  %v1194 = vunpack.c.l.b16 %v387
  %v1195 = vunpack.c.l.b16 %v388
  %v1196 = vunpack.c.h.b16 %v388
  %v1197 = vunpack.c.l.b16 %v389
  %v1198 = vunpack.c.h.b16 %v389
  %v1199 = vunpack.c.l.b16 %v390
  %v1200 = vunpack.c.h.b16 %v390
  %v1201 = vunpack.c.l.b16 %v391
  %v1202 = vunpack.c.l.b16 %v392
  %v1203 = vunpack.c.h.b16 %v392
  %v1204 = vunpack.c.l.b16 %v393
  %v1205 = vunpack.c.h.b16 %v393
  %v1206 = vunpack.c.l.b16 %v394
  %v1207 = vunpack.c.h.b16 %v394
  %v1208 = vunpack.c.l.b16 %v395
  %v1209 = vunpack.c.l.b16 %v396
  %v1210 = vunpack.c.h.b16 %v396
  %v1211 = vunpack.c.l.b16 %v397
  %v1212 = vunpack.c.h.b16 %v397
  %v1213 = vunpack.c.l.b16 %v398
  %v1214 = vunpack.c.h.b16 %v398
  %v1215 = vunpack.c.l.b16 %v399
  %v1216 = vpack.c.b16 %v775, %v768
  %v1217 = vpack.c.b16 %v776, %v769
  %v1218 = vpack.c.b16 %v777, %v770
  %v1219 = vpack.c.b16 %v778, %v771
  %v1220 = vpack.c.b16 %v779, %v772
  %v1221 = vpack.c.b16 %v780, %v773
  %v1222 = vpack.c.b16 %v781, %v774
  %v1223 = vpack.c.b16 %v789, %v782
  %v1224 = vpack.c.b16 %v790, %v783
  %v1225 = vpack.c.b16 %v791, %v784
  %v1226 = vpack.c.b16 %v792, %v785
  %v1227 = vpack.c.b16 %v793, %v786
  %v1228 = vpack.c.b16 %v794, %v787
  %v1229 = vpack.c.b16 %v795, %v788
  %v1230 = vpack.c.b16 %v803, %v796
  %v1231 = vpack.c.b16 %v804, %v797
  %v1232 = vpack.c.b16 %v805, %v798
  %v1233 = vpack.c.b16 %v806, %v799
  %v1234 = vpack.c.b16 %v807, %v800
  %v1235 = vpack.c.b16 %v808, %v801
  %v1236 = vpack.c.b16 %v809, %v802
  %v1237 = vpack.c.b16 %v817, %v810
  %v1238 = vpack.c.b16 %v818, %v811
  %v1239 = vpack.c.b16 %v819, %v812
  %v1240 = vpack.c.b16 %v820, %v813
  %v1241 = vpack.c.b16 %v821, %v814
  %v1242 = vpack.c.b16 %v822, %v815
  %v1243 = vpack.c.b16 %v823, %v816
  %v1244 = vpack.c.b16 %v831, %v824
  %v1245 = vpack.c.b16 %v832, %v825
  %v1246 = vpack.c.b16 %v833, %v826
  %v1247 = vpack.c.b16 %v834, %v827
  %v1248 = vpack.c.b16 %v835, %v828
  %v1249 = vpack.c.b16 %v836, %v829
  %v1250 = vpack.c.b16 %v837, %v830
  %v1251 = vpack.c.b16 %v845, %v838
  %v1252 = vpack.c.b16 %v846, %v839
  %v1253 = vpack.c.b16 %v847, %v840
  %v1254 = vpack.c.b16 %v848, %v841
  %v1255 = vpack.c.b16 %v849, %v842
  %v1256 = vpack.c.b16 %v850, %v843
  %v1257 = vpack.c.b16 %v851, %v844
  %v1258 = vpack.c.b16 %v859, %v852
  %v1259 = vpack.c.b16 %v860, %v853
  %v1260 = vpack.c.b16 %v861, %v854
  %v1261 = vpack.c.b16 %v862, %v855
  %v1262 = vpack.c.b16 %v863, %v856
  %v1263 = vpack.c.b16 %v864, %v857
  %v1264 = vpack.c.b16 %v865, %v858
  %v1265 = vpack.c.b16 %v873, %v866
  %v1266 = vpack.c.b16 %v874, %v867
  %v1267 = vpack.c.b16 %v875, %v868
  %v1268 = vpack.c.b16 %v876, %v869
  %v1269 = vpack.c.b16 %v877, %v870
  %v1270 = vpack.c.b16 %v878, %v871
  %v1271 = vpack.c.b16 %v879, %v872
  %v1272 = vpack.c.b16 %v887, %v880
  %v1273 = vpack.c.b16 %v888, %v881
  %v1274 = vpack.c.b16 %v889, %v882
  %v1275 = vpack.c.b16 %v890, %v883
  %v1276 = vpack.c.b16 %v891, %v884
  %v1277 = vpack.c.b16 %v892, %v885
  %v1278 = vpack.c.b16 %v893, %v886
  %v1279 = vpack.c.b16 %v901, %v894
  %v1280 = vpack.c.b16 %v902, %v895
  %v1281 = vpack.c.b16 %v903, %v896
  %v1282 = vpack.c.b16 %v904, %v897
  %v1283 = vpack.c.b16 %v905, %v898
  %v1284 = vpack.c.b16 %v906, %v899
  %v1285 = vpack.c.b16 %v907, %v900
  %v1286 = vpack.c.b16 %v915, %v908
  %v1287 = vpack.c.b16 %v916, %v909
  %v1288 = vpack.c.b16 %v917, %v910
  %v1289 = vpack.c.b16 %v918, %v911
  %v1290 = vpack.c.b16 %v919, %v912
  %v1291 = vpack.c.b16 %v920, %v913
  %v1292 = vpack.c.b16 %v921, %v914
  %v1293 = vpack.c.b16 %v929, %v922
  %v1294 = vpack.c.b16 %v930, %v923
  %v1295 = vpack.c.b16 %v931, %v924
  %v1296 = vpack.c.b16 %v932, %v925
  %v1297 = vpack.c.b16 %v933, %v926
  %v1298 = vpack.c.b16 %v934, %v927
  %v1299 = vpack.c.b16 %v935, %v928
  %v1300 = vpack.c.b16 %v943, %v936
  %v1301 = vpack.c.b16 %v944, %v937
  %v1302 = vpack.c.b16 %v945, %v938
  %v1303 = vpack.c.b16 %v946, %v939
  %v1304 = vpack.c.b16 %v947, %v940
  %v1305 = vpack.c.b16 %v948, %v941
  %v1306 = vpack.c.b16 %v949, %v942
  %v1307 = vpack.c.b16 %v957, %v950
  %v1308 = vpack.c.b16 %v958, %v951
  %v1309 = vpack.c.b16 %v959, %v952
  %v1310 = vpack.c.b16 %v960, %v953
  %v1311 = vpack.c.b16 %v961, %v954
  %v1312 = vpack.c.b16 %v962, %v955
  %v1313 = vpack.c.b16 %v963, %v956
  %v1314 = vpack.c.b16 %v971, %v964
  %v1315 = vpack.c.b16 %v972, %v965
  %v1316 = vpack.c.b16 %v973, %v966
  %v1317 = vpack.c.b16 %v974, %v967
  %v1318 = vpack.c.b16 %v975, %v968
  %v1319 = vpack.c.b16 %v976, %v969
  %v1320 = vpack.c.b16 %v977, %v970
  %v1321 = vpack.c.b16 %v985, %v978
  %v1322 = vpack.c.b16 %v986, %v979
  %v1323 = vpack.c.b16 %v987, %v980
  %v1324 = vpack.c.b16 %v988, %v981
  %v1325 = vpack.c.b16 %v989, %v982
  %v1326 = vpack.c.b16 %v990, %v983
  %v1327 = vpack.c.b16 %v991, %v984
  %v1328 = vpack.c.b16 %v999, %v992
  %v1329 = vpack.c.b16 %v1000, %v993
  %v1330 = vpack.c.b16 %v1001, %v994
  %v1331 = vpack.c.b16 %v1002, %v995
  %v1332 = vpack.c.b16 %v1003, %v996
  %v1333 = vpack.c.b16 %v1004, %v997
  %v1334 = vpack.c.b16 %v1005, %v998
  %v1335 = vpack.c.b16 %v1013, %v1006
  %v1336 = vpack.c.b16 %v1014, %v1007
  %v1337 = vpack.c.b16 %v1015, %v1008
  %v1338 = vpack.c.b16 %v1016, %v1009
  %v1339 = vpack.c.b16 %v1017, %v1010
  %v1340 = vpack.c.b16 %v1018, %v1011
  %v1341 = vpack.c.b16 %v1019, %v1012
  %v1342 = vpack.c.b16 %v1027, %v1020
  %v1343 = vpack.c.b16 %v1028, %v1021
  %v1344 = vpack.c.b16 %v1029, %v1022
  %v1345 = vpack.c.b16 %v1030, %v1023
  %v1346 = vpack.c.b16 %v1031, %v1024
  %v1347 = vpack.c.b16 %v1032, %v1025
  %v1348 = vpack.c.b16 %v1033, %v1026
  %v1349 = vpack.c.b16 %v1041, %v1034
  %v1350 = vpack.c.b16 %v1042, %v1035
  %v1351 = vpack.c.b16 %v1043, %v1036
  %v1352 = vpack.c.b16 %v1044, %v1037
  %v1353 = vpack.c.b16 %v1045, %v1038
  %v1354 = vpack.c.b16 %v1046, %v1039
  %v1355 = vpack.c.b16 %v1047, %v1040
  %v1356 = vpack.c.b16 %v1055, %v1048
  %v1357 = vpack.c.b16 %v1056, %v1049
  %v1358 = vpack.c.b16 %v1057, %v1050
  %v1359 = vpack.c.b16 %v1058, %v1051
  %v1360 = vpack.c.b16 %v1059, %v1052
  %v1361 = vpack.c.b16 %v1060, %v1053
  %v1362 = vpack.c.b16 %v1061, %v1054
  %v1363 = vpack.c.b16 %v1069, %v1062
  %v1364 = vpack.c.b16 %v1070, %v1063
  %v1365 = vpack.c.b16 %v1071, %v1064
  %v1366 = vpack.c.b16 %v1072, %v1065
  %v1367 = vpack.c.b16 %v1073, %v1066
  %v1368 = vpack.c.b16 %v1074, %v1067
  %v1369 = vpack.c.b16 %v1075, %v1068
  %v1370 = vpack.c.b16 %v1083, %v1076
  %v1371 = vpack.c.b16 %v1084, %v1077
  %v1372 = vpack.c.b16 %v1085, %v1078
  %v1373 = vpack.c.b16 %v1086, %v1079
  %v1374 = vpack.c.b16 %v1087, %v1080
  %v1375 = vpack.c.b16 %v1088, %v1081
  %v1376 = vpack.c.b16 %v1089, %v1082
  %v1377 = vpack.c.b16 %v1097, %v1090
  %v1378 = vpack.c.b16 %v1098, %v1091
  %v1379 = vpack.c.b16 %v1099, %v1092
  %v1380 = vpack.c.b16 %v1100, %v1093
  %v1381 = vpack.c.b16 %v1101, %v1094
  %v1382 = vpack.c.b16 %v1102, %v1095
  %v1383 = vpack.c.b16 %v1103, %v1096
  %v1384 = vpack.c.b16 %v1111, %v1104
  %v1385 = vpack.c.b16 %v1112, %v1105
  %v1386 = vpack.c.b16 %v1113, %v1106
  %v1387 = vpack.c.b16 %v1114, %v1107
  %v1388 = vpack.c.b16 %v1115, %v1108
  %v1389 = vpack.c.b16 %v1116, %v1109
  %v1390 = vpack.c.b16 %v1117, %v1110
  %v1391 = vpack.c.b16 %v1125, %v1118
  %v1392 = vpack.c.b16 %v1126, %v1119
  %v1393 = vpack.c.b16 %v1127, %v1120
  %v1394 = vpack.c.b16 %v1128, %v1121
  %v1395 = vpack.c.b16 %v1129, %v1122
  %v1396 = vpack.c.b16 %v1130, %v1123
  %v1397 = vpack.c.b16 %v1131, %v1124
  %v1398 = vpack.c.b16 %v1139, %v1132
  %v1399 = vpack.c.b16 %v1140, %v1133
  %v1400 = vpack.c.b16 %v1141, %v1134
  %v1401 = vpack.c.b16 %v1142, %v1135
  %v1402 = vpack.c.b16 %v1143, %v1136
  %v1403 = vpack.c.b16 %v1144, %v1137
  %v1404 = vpack.c.b16 %v1145, %v1138
  %v1405 = vpack.c.b16 %v1153, %v1146
  %v1406 = vpack.c.b16 %v1154, %v1147
  %v1407 = vpack.c.b16 %v1155, %v1148
  %v1408 = vpack.c.b16 %v1156, %v1149
  %v1409 = vpack.c.b16 %v1157, %v1150
  %v1410 = vpack.c.b16 %v1158, %v1151
  %v1411 = vpack.c.b16 %v1159, %v1152
  %v1412 = vpack.c.b16 %v1167, %v1160
  %v1413 = vpack.c.b16 %v1168, %v1161
  %v1414 = vpack.c.b16 %v1169, %v1162
  %v1415 = vpack.c.b16 %v1170, %v1163
  %v1416 = vpack.c.b16 %v1171, %v1164
  %v1417 = vpack.c.b16 %v1172, %v1165
  %v1418 = vpack.c.b16 %v1173, %v1166
  %v1419 = vpack.c.b16 %v1181, %v1174
  %v1420 = vpack.c.b16 %v1182, %v1175
  %v1421 = vpack.c.b16 %v1183, %v1176
  %v1422 = vpack.c.b16 %v1184, %v1177
  %v1423 = vpack.c.b16 %v1185, %v1178
  %v1424 = vpack.c.b16 %v1186, %v1179
  %v1425 = vpack.c.b16 %v1187, %v1180
  %v1426 = vpack.c.b16 %v1195, %v1188
  %v1427 = vpack.c.b16 %v1196, %v1189
  %v1428 = vpack.c.b16 %v1197, %v1190
  %v1429 = vpack.c.b16 %v1198, %v1191
  %v1430 = vpack.c.b16 %v1199, %v1192
  %v1431 = vpack.c.b16 %v1200, %v1193
  %v1432 = vpack.c.b16 %v1201, %v1194
  %v1433 = vpack.c.b16 %v1209, %v1202
  %v1434 = vpack.c.b16 %v1210, %v1203
  %v1435 = vpack.c.b16 %v1211, %v1204
  %v1436 = vpack.c.b16 %v1212, %v1205
  %v1437 = vpack.c.b16 %v1213, %v1206
  %v1438 = vpack.c.b16 %v1214, %v1207
  %v1439 = vpack.c.b16 %v1215, %v1208
  %v1776 = vunpack.c.l.b16 %v400
  %v1777 = vunpack.c.l.b16 %v401
  %v1778 = vunpack.c.l.b16 %v402
  %v1779 = vunpack.c.l.b16 %v403
  %v1780 = vunpack.c.l.b16 %v404
  %v1781 = vunpack.c.l.b16 %v405
  %v1782 = vunpack.c.l.b16 %v406
  %v1783 = vunpack.c.l.b16 %v407
  %v1784 = vunpack.c.l.b16 %v408
  %v1785 = vunpack.c.l.b16 %v409
  %v1786 = vunpack.c.l.b16 %v410
  %v1787 = vunpack.c.l.b16 %v411
  %v1788 = vunpack.c.l.b16 %v412
  %v1789 = vunpack.c.l.b16 %v413
  %v1790 = vunpack.c.l.b16 %v414
  %v1791 = vunpack.c.l.b16 %v415
  %v1792 = vunpack.c.l.b16 %v416
  %v1793 = vunpack.c.l.b16 %v417
  %v1794 = vunpack.c.l.b16 %v418
  %v1795 = vunpack.c.l.b16 %v419
  %v1796 = vunpack.c.l.b16 %v420
  %v1797 = vunpack.c.l.b16 %v421
  %v1798 = vunpack.c.l.b16 %v422
  %v1799 = vunpack.c.l.b16 %v423
  %v1800 = vunpack.c.l.b16 %v424
  %v1801 = vunpack.c.l.b16 %v425
  %v1802 = vunpack.c.l.b16 %v426
  %v1803 = vunpack.c.l.b16 %v427
  %v1804 = vunpack.c.l.b16 %v428
  %v1805 = vunpack.c.l.b16 %v429
  %v1806 = vunpack.c.l.b16 %v430
  %v1807 = vunpack.c.l.b16 %v431
  %v1808 = vunpack.c.l.b16 %v432
  %v1809 = vunpack.c.l.b16 %v433
  %v1810 = vunpack.c.l.b16 %v434
  %v1811 = vunpack.c.l.b16 %v435
  %v1812 = vunpack.c.l.b16 %v436
  %v1813 = vunpack.c.l.b16 %v437
  %v1814 = vunpack.c.l.b16 %v438
  %v1815 = vunpack.c.l.b16 %v439
  %v1816 = vunpack.c.l.b16 %v440
  %v1817 = vunpack.c.l.b16 %v441
  %v1818 = vunpack.c.l.b16 %v442
  %v1819 = vunpack.c.l.b16 %v443
  %v1820 = vunpack.c.l.b16 %v444
  %v1821 = vunpack.c.l.b16 %v445
  %v1822 = vunpack.c.l.b16 %v446
  %v1823 = vunpack.c.l.b16 %v447
  %v1824 = vunpack.c.l.b16 %v448
  %v1825 = vunpack.c.l.b16 %v449
  %v1826 = vunpack.c.l.b16 %v450
  %v1827 = vunpack.c.l.b16 %v451
  %v1828 = vunpack.c.l.b16 %v452
  %v1829 = vunpack.c.l.b16 %v453
  %v1830 = vunpack.c.l.b16 %v454
  %v1831 = vunpack.c.l.b16 %v455
  %v1832 = vunpack.c.l.b16 %v456
  %v1833 = vunpack.c.l.b16 %v457
  %v1834 = vunpack.c.l.b16 %v458
  %v1835 = vunpack.c.l.b16 %v459
  %v1836 = vunpack.c.l.b16 %v460
  %v1837 = vunpack.c.l.b16 %v461
  %v1838 = vunpack.c.l.b16 %v462
  %v1839 = vunpack.c.l.b16 %v463
  %v1840 = vunpack.c.l.b16 %v464
  %v1841 = vunpack.c.l.b16 %v465
  %v1842 = vunpack.c.l.b16 %v466
  %v1843 = vunpack.c.l.b16 %v467
  %v1844 = vunpack.c.l.b16 %v468
  %v1845 = vunpack.c.l.b16 %v469
  %v1846 = vunpack.c.l.b16 %v470
  %v1847 = vunpack.c.l.b16 %v471
  %v1848 = vunpack.c.l.b16 %v472
  %v1849 = vunpack.c.l.b16 %v473
  %v1850 = vunpack.c.l.b16 %v474
  %v1851 = vunpack.c.l.b16 %v475
  %v1852 = vunpack.c.l.b16 %v476
  %v1853 = vunpack.c.l.b16 %v477
  %v1854 = vunpack.c.l.b16 %v478
  %v1855 = vunpack.c.l.b16 %v479
  %v1856 = vunpack.c.l.b16 %v480
  %v1857 = vunpack.c.l.b16 %v481
  %v1858 = vunpack.c.l.b16 %v482
  %v1859 = vunpack.c.l.b16 %v483
  %v1860 = vunpack.c.l.b16 %v484
  %v1861 = vunpack.c.l.b16 %v485
  %v1862 = vunpack.c.l.b16 %v486
  %v1863 = vunpack.c.l.b16 %v487
  %v1864 = vunpack.c.l.b16 %v488
  %v1865 = vunpack.c.l.b16 %v489
  %v1866 = vunpack.c.l.b16 %v490
  %v1867 = vunpack.c.l.b16 %v491
  %v1868 = vunpack.c.l.b16 %v492
  %v1869 = vunpack.c.l.b16 %v493
  %v1870 = vunpack.c.l.b16 %v494
  %v1871 = vunpack.c.l.b16 %v495
  %v1872 = vunpack.c.l.b16 %v496
  %v1873 = vunpack.c.l.b16 %v497
  %v1874 = vunpack.c.l.b16 %v498
  %v1875 = vunpack.c.l.b16 %v499
  %v1876 = vunpack.c.l.b16 %v500
  %v1877 = vunpack.c.l.b16 %v501
  %v1878 = vunpack.c.l.b16 %v502
  %v1879 = vunpack.c.l.b16 %v503
  %v1880 = vunpack.c.l.b16 %v504
  %v1881 = vunpack.c.l.b16 %v505
  %v1882 = vunpack.c.l.b16 %v506
  %v1883 = vunpack.c.l.b16 %v507
  %v1884 = vunpack.c.l.b16 %v508
  %v1885 = vunpack.c.l.b16 %v509
  %v1886 = vunpack.c.l.b16 %v510
  %v1887 = vunpack.c.l.b16 %v511
  %v1888 = vpack.c.b16 %v1777, %v1776
  %v1889 = vpack.c.b16 %v1779, %v1778
  %v1890 = vpack.c.b16 %v1781, %v1780
  %v1891 = vpack.c.b16 %v1783, %v1782
  %v1892 = vpack.c.b16 %v1785, %v1784
  %v1893 = vpack.c.b16 %v1787, %v1786
  %v1894 = vpack.c.b16 %v1789, %v1788
  %v1895 = vpack.c.b16 %v1791, %v1790
  %v1896 = vpack.c.b16 %v1793, %v1792
  %v1897 = vpack.c.b16 %v1795, %v1794
  %v1898 = vpack.c.b16 %v1797, %v1796
  %v1899 = vpack.c.b16 %v1799, %v1798
  %v1900 = vpack.c.b16 %v1801, %v1800
  %v1901 = vpack.c.b16 %v1803, %v1802
  %v1902 = vpack.c.b16 %v1805, %v1804
  %v1903 = vpack.c.b16 %v1807, %v1806
  %v1904 = vpack.c.b16 %v1809, %v1808
  %v1905 = vpack.c.b16 %v1811, %v1810
  %v1906 = vpack.c.b16 %v1813, %v1812
  %v1907 = vpack.c.b16 %v1815, %v1814
  %v1908 = vpack.c.b16 %v1817, %v1816
  %v1909 = vpack.c.b16 %v1819, %v1818
  %v1910 = vpack.c.b16 %v1821, %v1820
  %v1911 = vpack.c.b16 %v1823, %v1822
  %v1912 = vpack.c.b16 %v1825, %v1824
  %v1913 = vpack.c.b16 %v1827, %v1826
  %v1914 = vpack.c.b16 %v1829, %v1828
  %v1915 = vpack.c.b16 %v1831, %v1830
  %v1916 = vpack.c.b16 %v1833, %v1832
  %v1917 = vpack.c.b16 %v1835, %v1834
  %v1918 = vpack.c.b16 %v1837, %v1836
  %v1919 = vpack.c.b16 %v1839, %v1838
  %v1920 = vpack.c.b16 %v1841, %v1840
  %v1921 = vpack.c.b16 %v1843, %v1842
  %v1922 = vpack.c.b16 %v1845, %v1844
  %v1923 = vpack.c.b16 %v1847, %v1846
  %v1924 = vpack.c.b16 %v1849, %v1848
  %v1925 = vpack.c.b16 %v1851, %v1850
  %v1926 = vpack.c.b16 %v1853, %v1852
  %v1927 = vpack.c.b16 %v1855, %v1854
  %v1928 = vpack.c.b16 %v1857, %v1856
  %v1929 = vpack.c.b16 %v1859, %v1858
  %v1930 = vpack.c.b16 %v1861, %v1860
  %v1931 = vpack.c.b16 %v1863, %v1862
  %v1932 = vpack.c.b16 %v1865, %v1864
  %v1933 = vpack.c.b16 %v1867, %v1866
  %v1934 = vpack.c.b16 %v1869, %v1868
  %v1935 = vpack.c.b16 %v1871, %v1870
  %v1936 = vpack.c.b16 %v1873, %v1872
  %v1937 = vpack.c.b16 %v1875, %v1874
  %v1938 = vpack.c.b16 %v1877, %v1876
  %v1939 = vpack.c.b16 %v1879, %v1878
  %v1940 = vpack.c.b16 %v1881, %v1880
  %v1941 = vpack.c.b16 %v1883, %v1882
  %v1942 = vpack.c.b16 %v1885, %v1884
  %v1943 = vpack.c.b16 %v1887, %v1886
  %2000 = vmatprep.subr.bf16.mxu0 0
  %2001 = vmatpush1.bf16.msra.mxu0 %v1888
  %2002 = vmatprep.subr.bf16.mxu0 0
  %2003 = vmatpush1.bf16.msra.mxu0 %v1889
  %2004 = vmatprep.subr.bf16.mxu0 0
  %2005 = vmatpush1.bf16.msra.mxu0 %v1890
  %2006 = vmatprep.subr.bf16.mxu0 0
  %2007 = vmatpush1.bf16.msra.mxu0 %v1891
  %2008 = vmatprep.subr.bf16.mxu0 0
  %2009 = vmatpush1.bf16.msra.mxu0 %v1892
  %2010 = vmatprep.subr.bf16.mxu0 0
  %2011 = vmatpush1.bf16.msra.mxu0 %v1893
  %2012 = vmatprep.subr.bf16.mxu0 0
  %2013 = vmatpush1.bf16.msra.mxu0 %v1894
  %2014 = vmatprep.subr.bf16.mxu0 0
  %2015 = vmatpush1.bf16.msra.mxu0 %v1895
  %2016 = vmatprep.subr.bf16.mxu0 0
  %2017 = vmatpush1.bf16.msra.mxu0 %v1896
  %2018 = vmatprep.subr.bf16.mxu0 0
  %2019 = vmatpush1.bf16.msra.mxu0 %v1897
  %2020 = vmatprep.subr.bf16.mxu0 0
  %2021 = vmatpush1.bf16.msra.mxu0 %v1898
  %2022 = vmatprep.subr.bf16.mxu0 0
  %2023 = vmatpush1.bf16.msra.mxu0 %v1899
  %2024 = vmatprep.subr.bf16.mxu0 0
  %2025 = vmatpush1.bf16.msra.mxu0 %v1900
  %2026 = vmatprep.subr.bf16.mxu0 0
  %2027 = vmatpush1.bf16.msra.mxu0 %v1901
  %2028 = vmatprep.subr.bf16.mxu0 0
  %2029 = vmatpush1.bf16.msra.mxu0 %v1902
  %2030 = vmatprep.subr.bf16.mxu0 0
  %2031 = vmatpush1.bf16.msra.mxu0 %v1903
  %2032 = vmatprep.mubr.bf16.mxu0 %v1217
  %2033 = vmatmul.mubr.bf16.gmra.mrb[0].mxu0 %v1216
  %v2034 = vpop.f32.mrb[0].mxu0
  %v2035 = vadd.f32 0.0, %v2034
  %v2036 = vpop.f32.mrb[0].mxu0
  %v2037 = vpop.f32.mrb[0].mxu0
  %v2038 = vadd.f32 0.0, %v2037
  %v2039 = vpop.f32.mrb[0].mxu0
  %2040 = vmatprep.mubr.bf16.mxu0 %v1224
  %2041 = vmatmul.mubr.bf16.gmra.mrb[0].mxu0 %v1223
  %v2042 = vpop.f32.mrb[0].mxu0
  %v2043 = vadd.f32 0.0, %v2042
  %v2044 = vpop.f32.mrb[0].mxu0
  %v2045 = vpop.f32.mrb[0].mxu0
  %v2046 = vadd.f32 0.0, %v2045
  %v2047 = vpop.f32.mrb[0].mxu0
  %2048 = vmatprep.mubr.bf16.mxu0 %v1231
  %2049 = vmatmul.mubr.bf16.gmra.mrb[0].mxu0 %v1230
  %v2050 = vpop.f32.mrb[0].mxu0
  %v2051 = vadd.f32 0.0, %v2050
  %v2052 = vpop.f32.mrb[0].mxu0
  %v2053 = vpop.f32.mrb[0].mxu0
  %v2054 = vadd.f32 0.0, %v2053
  %v2055 = vpop.f32.mrb[0].mxu0
  %2056 = vmatprep.mubr.bf16.mxu0 %v1238
  %2057 = vmatmul.mubr.bf16.gmra.mrb[0].mxu0 %v1237
  %v2058 = vpop.f32.mrb[0].mxu0
  %v2059 = vadd.f32 0.0, %v2058
  %v2060 = vpop.f32.mrb[0].mxu0
  %v2061 = vpop.f32.mrb[0].mxu0
  %v2062 = vadd.f32 0.0, %v2061
  %v2063 = vpop.f32.mrb[0].mxu0
  %2064 = vmatprep.mubr.bf16.mxu0 %v1245
  %2065 = vmatmul.mubr.bf16.gmra.mrb[0].mxu0 %v1244
  %v2066 = vpop.f32.mrb[0].mxu0
  %v2067 = vadd.f32 0.0, %v2066
  %v2068 = vpop.f32.mrb[0].mxu0
  %v2069 = vpop.f32.mrb[0].mxu0
  %v2070 = vadd.f32 0.0, %v2069
  %v2071 = vpop.f32.mrb[0].mxu0
  %2072 = vmatprep.mubr.bf16.mxu0 %v1252
  %2073 = vmatmul.mubr.bf16.gmra.mrb[0].mxu0 %v1251
  %v2074 = vpop.f32.mrb[0].mxu0
  %v2075 = vadd.f32 0.0, %v2074
  %v2076 = vpop.f32.mrb[0].mxu0
  %v2077 = vpop.f32.mrb[0].mxu0
  %v2078 = vadd.f32 0.0, %v2077
  %v2079 = vpop.f32.mrb[0].mxu0
  %2080 = vmatprep.mubr.bf16.mxu0 %v1259
  %2081 = vmatmul.mubr.bf16.gmra.mrb[0].mxu0 %v1258
  %v2082 = vpop.f32.mrb[0].mxu0
  %v2083 = vadd.f32 0.0, %v2082
  %v2084 = vpop.f32.mrb[0].mxu0
  %v2085 = vpop.f32.mrb[0].mxu0
  %v2086 = vadd.f32 0.0, %v2085
  %v2087 = vpop.f32.mrb[0].mxu0
  %2088 = vmatprep.mubr.bf16.mxu0 %v1266
  %2089 = vmatmul.mubr.bf16.gmra.mrb[0].mxu0 %v1265
  %v2090 = vpop.f32.mrb[0].mxu0
  %v2091 = vadd.f32 0.0, %v2090
  %v2092 = vpop.f32.mrb[0].mxu0
  %v2093 = vpop.f32.mrb[0].mxu0
  %v2094 = vadd.f32 0.0, %v2093
  %v2095 = vpop.f32.mrb[0].mxu0
  %2096 = vmatprep.mubr.bf16.mxu0 %v1273
  %2097 = vmatmul.mubr.bf16.gmra.mrb[0].mxu0 %v1272
  %v2098 = vpop.f32.mrb[0].mxu0
  %v2099 = vadd.f32 0.0, %v2098
  %v2100 = vpop.f32.mrb[0].mxu0
  %v2101 = vpop.f32.mrb[0].mxu0
  %v2102 = vadd.f32 0.0, %v2101
  %v2103 = vpop.f32.mrb[0].mxu0
  %2104 = vmatprep.mubr.bf16.mxu0 %v1280
  %2105 = vmatmul.mubr.bf16.gmra.mrb[0].mxu0 %v1279
  %v2106 = vpop.f32.mrb[0].mxu0
  %v2107 = vadd.f32 0.0, %v2106
  %v2108 = vpop.f32.mrb[0].mxu0
  %v2109 = vpop.f32.mrb[0].mxu0
  %v2110 = vadd.f32 0.0, %v2109
  %v2111 = vpop.f32.mrb[0].mxu0
  %2112 = vmatprep.mubr.bf16.mxu0 %v1287
  %2113 = vmatmul.mubr.bf16.gmra.mrb[0].mxu0 %v1286
  %v2114 = vpop.f32.mrb[0].mxu0
  %v2115 = vadd.f32 0.0, %v2114
  %v2116 = vpop.f32.mrb[0].mxu0
  %v2117 = vpop.f32.mrb[0].mxu0
  %v2118 = vadd.f32 0.0, %v2117
  %v2119 = vpop.f32.mrb[0].mxu0
  %2120 = vmatprep.mubr.bf16.mxu0 %v1294
  %2121 = vmatmul.mubr.bf16.gmra.mrb[0].mxu0 %v1293
  %v2122 = vpop.f32.mrb[0].mxu0
  %v2123 = vadd.f32 0.0, %v2122
  %v2124 = vpop.f32.mrb[0].mxu0
  %v2125 = vpop.f32.mrb[0].mxu0
  %v2126 = vadd.f32 0.0, %v2125
  %v2127 = vpop.f32.mrb[0].mxu0
  %2128 = vmatprep.mubr.bf16.mxu0 %v1301
  %2129 = vmatmul.mubr.bf16.gmra.mrb[0].mxu0 %v1300
  %v2130 = vpop.f32.mrb[0].mxu0
  %v2131 = vadd.f32 0.0, %v2130
  %v2132 = vpop.f32.mrb[0].mxu0
  %v2133 = vpop.f32.mrb[0].mxu0
  %v2134 = vadd.f32 0.0, %v2133
  %v2135 = vpop.f32.mrb[0].mxu0
  %2136 = vmatprep.mubr.bf16.mxu0 %v1308
  %2137 = vmatmul.mubr.bf16.gmra.mrb[0].mxu0 %v1307
  %v2138 = vpop.f32.mrb[0].mxu0
  %v2139 = vadd.f32 0.0, %v2138
  %v2140 = vpop.f32.mrb[0].mxu0
  %v2141 = vpop.f32.mrb[0].mxu0
  %v2142 = vadd.f32 0.0, %v2141
  %v2143 = vpop.f32.mrb[0].mxu0
  %2144 = vmatprep.mubr.bf16.mxu0 %v1315
  %2145 = vmatmul.mubr.bf16.gmra.mrb[0].mxu0 %v1314
  %v2146 = vpop.f32.mrb[0].mxu0
  %v2147 = vadd.f32 0.0, %v2146
  %v2148 = vpop.f32.mrb[0].mxu0
  %v2149 = vpop.f32.mrb[0].mxu0
  %v2150 = vadd.f32 0.0, %v2149
  %v2151 = vpop.f32.mrb[0].mxu0
  %2152 = vmatprep.mubr.bf16.mxu0 %v1322
  %2153 = vmatmul.mubr.bf16.gmra.mrb[0].mxu0 %v1321
  %v2154 = vpop.f32.mrb[0].mxu0
  %v2155 = vadd.f32 0.0, %v2154
  %v2156 = vpop.f32.mrb[0].mxu0
  %v2157 = vpop.f32.mrb[0].mxu0
  %v2158 = vadd.f32 0.0, %v2157
  %v2159 = vpop.f32.mrb[0].mxu0
  %2160 = vmatprep.mubr.bf16.mxu0 %v1329
  %2161 = vmatmul.mubr.bf16.gmra.mrb[0].mxu0 %v1328
  %v2162 = vpop.f32.mrb[0].mxu0
  %v2163 = vadd.f32 0.0, %v2162
  %v2164 = vpop.f32.mrb[0].mxu0
  %v2165 = vpop.f32.mrb[0].mxu0
  %v2166 = vadd.f32 0.0, %v2165
  %v2167 = vpop.f32.mrb[0].mxu0
  %2168 = vmatprep.mubr.bf16.mxu0 %v1336
  %2169 = vmatmul.mubr.bf16.gmra.mrb[0].mxu0 %v1335
  %v2170 = vpop.f32.mrb[0].mxu0
  %v2171 = vadd.f32 0.0, %v2170
  %v2172 = vpop.f32.mrb[0].mxu0
  %v2173 = vpop.f32.mrb[0].mxu0
  %v2174 = vadd.f32 0.0, %v2173
  %v2175 = vpop.f32.mrb[0].mxu0
  %2176 = vmatprep.mubr.bf16.mxu0 %v1343
  %2177 = vmatmul.mubr.bf16.gmra.mrb[0].mxu0 %v1342
  %v2178 = vpop.f32.mrb[0].mxu0
  %v2179 = vadd.f32 0.0, %v2178
  %v2180 = vpop.f32.mrb[0].mxu0
  %v2181 = vpop.f32.mrb[0].mxu0
  %v2182 = vadd.f32 0.0, %v2181
  %v2183 = vpop.f32.mrb[0].mxu0
  %2184 = vmatprep.mubr.bf16.mxu0 %v1350
  %2185 = vmatmul.mubr.bf16.gmra.mrb[0].mxu0 %v1349
  %v2186 = vpop.f32.mrb[0].mxu0
  %v2187 = vadd.f32 0.0, %v2186
  %v2188 = vpop.f32.mrb[0].mxu0
  %v2189 = vpop.f32.mrb[0].mxu0
  %v2190 = vadd.f32 0.0, %v2189
  %v2191 = vpop.f32.mrb[0].mxu0
  %2192 = vmatprep.mubr.bf16.mxu0 %v1357
  %2193 = vmatmul.mubr.bf16.gmra.mrb[0].mxu0 %v1356
  %v2194 = vpop.f32.mrb[0].mxu0
  %v2195 = vadd.f32 0.0, %v2194
  %v2196 = vpop.f32.mrb[0].mxu0
  %v2197 = vpop.f32.mrb[0].mxu0
  %v2198 = vadd.f32 0.0, %v2197
  %v2199 = vpop.f32.mrb[0].mxu0
  %2200 = vmatprep.mubr.bf16.mxu0 %v1364
  %2201 = vmatmul.mubr.bf16.gmra.mrb[0].mxu0 %v1363
  %v2202 = vpop.f32.mrb[0].mxu0
  %v2203 = vadd.f32 0.0, %v2202
  %v2204 = vpop.f32.mrb[0].mxu0
  %v2205 = vpop.f32.mrb[0].mxu0
  %v2206 = vadd.f32 0.0, %v2205
  %v2207 = vpop.f32.mrb[0].mxu0
  %2208 = vmatprep.mubr.bf16.mxu0 %v1371
  %2209 = vmatmul.mubr.bf16.gmra.mrb[0].mxu0 %v1370
  %v2210 = vpop.f32.mrb[0].mxu0
  %v2211 = vadd.f32 0.0, %v2210
  %v2212 = vpop.f32.mrb[0].mxu0
  %v2213 = vpop.f32.mrb[0].mxu0
  %v2214 = vadd.f32 0.0, %v2213
  %v2215 = vpop.f32.mrb[0].mxu0
  %2216 = vmatprep.mubr.bf16.mxu0 %v1378
  %2217 = vmatmul.mubr.bf16.gmra.mrb[0].mxu0 %v1377
  %v2218 = vpop.f32.mrb[0].mxu0
  %v2219 = vadd.f32 0.0, %v2218
  %v2220 = vpop.f32.mrb[0].mxu0
  %v2221 = vpop.f32.mrb[0].mxu0
  %v2222 = vadd.f32 0.0, %v2221
  %v2223 = vpop.f32.mrb[0].mxu0
  %2224 = vmatprep.mubr.bf16.mxu0 %v1385
  %2225 = vmatmul.mubr.bf16.gmra.mrb[0].mxu0 %v1384
  %v2226 = vpop.f32.mrb[0].mxu0
  %v2227 = vadd.f32 0.0, %v2226
  %v2228 = vpop.f32.mrb[0].mxu0
  %v2229 = vpop.f32.mrb[0].mxu0
  %v2230 = vadd.f32 0.0, %v2229
  %v2231 = vpop.f32.mrb[0].mxu0
  %2232 = vmatprep.mubr.bf16.mxu0 %v1392
  %2233 = vmatmul.mubr.bf16.gmra.mrb[0].mxu0 %v1391
  %v2234 = vpop.f32.mrb[0].mxu0
  %v2235 = vadd.f32 0.0, %v2234
  %v2236 = vpop.f32.mrb[0].mxu0
  %v2237 = vpop.f32.mrb[0].mxu0
  %v2238 = vadd.f32 0.0, %v2237
  %v2239 = vpop.f32.mrb[0].mxu0
  %2240 = vmatprep.mubr.bf16.mxu0 %v1399
  %2241 = vmatmul.mubr.bf16.gmra.mrb[0].mxu0 %v1398
  %v2242 = vpop.f32.mrb[0].mxu0
  %v2243 = vadd.f32 0.0, %v2242
  %v2244 = vpop.f32.mrb[0].mxu0
  %v2245 = vpop.f32.mrb[0].mxu0
  %v2246 = vadd.f32 0.0, %v2245
  %v2247 = vpop.f32.mrb[0].mxu0
  %2248 = vmatprep.mubr.bf16.mxu0 %v1406
  %2249 = vmatmul.mubr.bf16.gmra.mrb[0].mxu0 %v1405
  %v2250 = vpop.f32.mrb[0].mxu0
  %v2251 = vadd.f32 0.0, %v2250
  %v2252 = vpop.f32.mrb[0].mxu0
  %v2253 = vpop.f32.mrb[0].mxu0
  %v2254 = vadd.f32 0.0, %v2253
  %v2255 = vpop.f32.mrb[0].mxu0
  %2256 = vmatprep.mubr.bf16.mxu0 %v1413
  %2257 = vmatmul.mubr.bf16.gmra.mrb[0].mxu0 %v1412
  %v2258 = vpop.f32.mrb[0].mxu0
  %v2259 = vadd.f32 0.0, %v2258
  %v2260 = vpop.f32.mrb[0].mxu0
  %v2261 = vpop.f32.mrb[0].mxu0
  %v2262 = vadd.f32 0.0, %v2261
  %v2263 = vpop.f32.mrb[0].mxu0
  %2264 = vmatprep.mubr.bf16.mxu0 %v1420
  %2265 = vmatmul.mubr.bf16.gmra.mrb[0].mxu0 %v1419
  %v2266 = vpop.f32.mrb[0].mxu0
  %v2267 = vadd.f32 0.0, %v2266
  %v2268 = vpop.f32.mrb[0].mxu0
  %v2269 = vpop.f32.mrb[0].mxu0
  %v2270 = vadd.f32 0.0, %v2269
  %v2271 = vpop.f32.mrb[0].mxu0
  %2272 = vmatprep.mubr.bf16.mxu0 %v1427
  %2273 = vmatmul.mubr.bf16.gmra.mrb[0].mxu0 %v1426
  %v2274 = vpop.f32.mrb[0].mxu0
  %v2275 = vadd.f32 0.0, %v2274
  %v2276 = vpop.f32.mrb[0].mxu0
  %v2277 = vpop.f32.mrb[0].mxu0
  %v2278 = vadd.f32 0.0, %v2277
  %v2279 = vpop.f32.mrb[0].mxu0
  %2280 = vmatprep.mubr.bf16.mxu0 %v1434
  %2281 = vmatmul.mubr.bf16.gmra.mrb[0].mxu0 %v1433
  %v2282 = vpop.f32.mrb[0].mxu0
  %v2283 = vadd.f32 0.0, %v2282
  %v2284 = vpop.f32.mrb[0].mxu0
  %v2285 = vpop.f32.mrb[0].mxu0
  %v2286 = vadd.f32 0.0, %v2285
  %v2287 = vpop.f32.mrb[0].mxu0
  %2288 = vdwg.mxu0
  %2289 = vmatprep.subr.bf16.mxu0 0
  %2290 = vmatpush1.bf16.msra.mxu0 %v1904
  %2291 = vmatprep.subr.bf16.mxu0 0
  %2292 = vmatpush1.bf16.msra.mxu0 %v1905
  %2293 = vmatprep.subr.bf16.mxu0 0
  %2294 = vmatpush1.bf16.msra.mxu0 %v1906
  %2295 = vmatprep.subr.bf16.mxu0 0
  %2296 = vmatpush1.bf16.msra.mxu0 %v1907
  %2297 = vmatprep.subr.bf16.mxu0 0
  %2298 = vmatpush1.bf16.msra.mxu0 %v1908
  %2299 = vmatprep.subr.bf16.mxu0 0
  %2300 = vmatpush1.bf16.msra.mxu0 %v1909
  %2301 = vmatprep.subr.bf16.mxu0 0
  %2302 = vmatpush1.bf16.msra.mxu0 %v1910
  %2303 = vmatprep.subr.bf16.mxu0 0
  %2304 = vmatpush1.bf16.msra.mxu0 %v1911
  %2305 = vmatprep.subr.bf16.mxu0 0
  %2306 = vmatpush1.bf16.msra.mxu0 %v1912
  %2307 = vmatprep.subr.bf16.mxu0 0
  %2308 = vmatpush1.bf16.msra.mxu0 %v1913
  %2309 = vmatprep.subr.bf16.mxu0 0
  %2310 = vmatpush1.bf16.msra.mxu0 %v1914
  %2311 = vmatprep.subr.bf16.mxu0 0
  %2312 = vmatpush1.bf16.msra.mxu0 %v1915
  %2313 = vmatprep.subr.bf16.mxu0 0
  %2314 = vmatpush1.bf16.msra.mxu0 %v1916
  %2315 = vmatprep.subr.bf16.mxu0 0
  %2316 = vmatpush1.bf16.msra.mxu0 %v1917
  %2317 = vmatprep.subr.bf16.mxu0 0
  %2318 = vmatpush1.bf16.msra.mxu0 %v1918
  %2319 = vmatprep.subr.bf16.mxu0 0
  %2320 = vmatpush1.bf16.msra.mxu0 %v1919
  %2321 = vmatprep.mubr.bf16.mxu0 %v1219
  %2322 = vmatmul.mubr.bf16.gmra.mrb[0].mxu0 %v1218
  %v2323 = vpop.f32.mrb[0].mxu0
  %v2324 = vadd.f32 %v2035, %v2323
  %v2325 = vpop.f32.mrb[0].mxu0
  %v2326 = vpop.f32.mrb[0].mxu0
  %v2327 = vadd.f32 %v2038, %v2326
  %v2328 = vpop.f32.mrb[0].mxu0
  %2329 = vmatprep.mubr.bf16.mxu0 %v1226
  %2330 = vmatmul.mubr.bf16.gmra.mrb[0].mxu0 %v1225
  %v2331 = vpop.f32.mrb[0].mxu0
  %v2332 = vadd.f32 %v2043, %v2331
  %v2333 = vpop.f32.mrb[0].mxu0
  %v2334 = vpop.f32.mrb[0].mxu0
  %v2335 = vadd.f32 %v2046, %v2334
  %v2336 = vpop.f32.mrb[0].mxu0
  %2337 = vmatprep.mubr.bf16.mxu0 %v1233
  %2338 = vmatmul.mubr.bf16.gmra.mrb[0].mxu0 %v1232
  %v2339 = vpop.f32.mrb[0].mxu0
  %v2340 = vadd.f32 %v2051, %v2339
  %v2341 = vpop.f32.mrb[0].mxu0
  %v2342 = vpop.f32.mrb[0].mxu0
  %v2343 = vadd.f32 %v2054, %v2342
  %v2344 = vpop.f32.mrb[0].mxu0
  %2345 = vmatprep.mubr.bf16.mxu0 %v1240
  %2346 = vmatmul.mubr.bf16.gmra.mrb[0].mxu0 %v1239
  %v2347 = vpop.f32.mrb[0].mxu0
  %v2348 = vadd.f32 %v2059, %v2347
  %v2349 = vpop.f32.mrb[0].mxu0
  %v2350 = vpop.f32.mrb[0].mxu0
  %v2351 = vadd.f32 %v2062, %v2350
  %v2352 = vpop.f32.mrb[0].mxu0
  %2353 = vmatprep.mubr.bf16.mxu0 %v1247
  %2354 = vmatmul.mubr.bf16.gmra.mrb[0].mxu0 %v1246
  %v2355 = vpop.f32.mrb[0].mxu0
  %v2356 = vadd.f32 %v2067, %v2355
  %v2357 = vpop.f32.mrb[0].mxu0
  %v2358 = vpop.f32.mrb[0].mxu0
  %v2359 = vadd.f32 %v2070, %v2358
  %v2360 = vpop.f32.mrb[0].mxu0
  %2361 = vmatprep.mubr.bf16.mxu0 %v1254
  %2362 = vmatmul.mubr.bf16.gmra.mrb[0].mxu0 %v1253
  %v2363 = vpop.f32.mrb[0].mxu0
  %v2364 = vadd.f32 %v2075, %v2363
  %v2365 = vpop.f32.mrb[0].mxu0
  %v2366 = vpop.f32.mrb[0].mxu0
  %v2367 = vadd.f32 %v2078, %v2366
  %v2368 = vpop.f32.mrb[0].mxu0
  %2369 = vmatprep.mubr.bf16.mxu0 %v1261
  %2370 = vmatmul.mubr.bf16.gmra.mrb[0].mxu0 %v1260
  %v2371 = vpop.f32.mrb[0].mxu0
  %v2372 = vadd.f32 %v2083, %v2371
  %v2373 = vpop.f32.mrb[0].mxu0
  %v2374 = vpop.f32.mrb[0].mxu0
  %v2375 = vadd.f32 %v2086, %v2374
  %v2376 = vpop.f32.mrb[0].mxu0
  %2377 = vmatprep.mubr.bf16.mxu0 %v1268
  %2378 = vmatmul.mubr.bf16.gmra.mrb[0].mxu0 %v1267
  %v2379 = vpop.f32.mrb[0].mxu0
  %v2380 = vadd.f32 %v2091, %v2379
  %v2381 = vpop.f32.mrb[0].mxu0
  %v2382 = vpop.f32.mrb[0].mxu0
  %v2383 = vadd.f32 %v2094, %v2382
  %v2384 = vpop.f32.mrb[0].mxu0
  %2385 = vmatprep.mubr.bf16.mxu0 %v1275
  %2386 = vmatmul.mubr.bf16.gmra.mrb[0].mxu0 %v1274
  %v2387 = vpop.f32.mrb[0].mxu0
  %v2388 = vadd.f32 %v2099, %v2387
  %v2389 = vpop.f32.mrb[0].mxu0
  %v2390 = vpop.f32.mrb[0].mxu0
  %v2391 = vadd.f32 %v2102, %v2390
  %v2392 = vpop.f32.mrb[0].mxu0
  %2393 = vmatprep.mubr.bf16.mxu0 %v1282
  %2394 = vmatmul.mubr.bf16.gmra.mrb[0].mxu0 %v1281
  %v2395 = vpop.f32.mrb[0].mxu0
  %v2396 = vadd.f32 %v2107, %v2395
  %v2397 = vpop.f32.mrb[0].mxu0
  %v2398 = vpop.f32.mrb[0].mxu0
  %v2399 = vadd.f32 %v2110, %v2398
  %v2400 = vpop.f32.mrb[0].mxu0
  %2401 = vmatprep.mubr.bf16.mxu0 %v1289
  %2402 = vmatmul.mubr.bf16.gmra.mrb[0].mxu0 %v1288
  %v2403 = vpop.f32.mrb[0].mxu0
  %v2404 = vadd.f32 %v2115, %v2403
  %v2405 = vpop.f32.mrb[0].mxu0
  %v2406 = vpop.f32.mrb[0].mxu0
  %v2407 = vadd.f32 %v2118, %v2406
  %v2408 = vpop.f32.mrb[0].mxu0
  %2409 = vmatprep.mubr.bf16.mxu0 %v1296
  %2410 = vmatmul.mubr.bf16.gmra.mrb[0].mxu0 %v1295
  %v2411 = vpop.f32.mrb[0].mxu0
  %v2412 = vadd.f32 %v2123, %v2411
  %v2413 = vpop.f32.mrb[0].mxu0
  %v2414 = vpop.f32.mrb[0].mxu0
  %v2415 = vadd.f32 %v2126, %v2414
  %v2416 = vpop.f32.mrb[0].mxu0
  %2417 = vmatprep.mubr.bf16.mxu0 %v1303
  %2418 = vmatmul.mubr.bf16.gmra.mrb[0].mxu0 %v1302
  %v2419 = vpop.f32.mrb[0].mxu0
  %v2420 = vadd.f32 %v2131, %v2419
  %v2421 = vpop.f32.mrb[0].mxu0
  %v2422 = vpop.f32.mrb[0].mxu0
  %v2423 = vadd.f32 %v2134, %v2422
  %v2424 = vpop.f32.mrb[0].mxu0
  %2425 = vmatprep.mubr.bf16.mxu0 %v1310
  %2426 = vmatmul.mubr.bf16.gmra.mrb[0].mxu0 %v1309
  %v2427 = vpop.f32.mrb[0].mxu0
  %v2428 = vadd.f32 %v2139, %v2427
  %v2429 = vpop.f32.mrb[0].mxu0
  %v2430 = vpop.f32.mrb[0].mxu0
  %v2431 = vadd.f32 %v2142, %v2430
  %v2432 = vpop.f32.mrb[0].mxu0
  %2433 = vmatprep.mubr.bf16.mxu0 %v1317
  %2434 = vmatmul.mubr.bf16.gmra.mrb[0].mxu0 %v1316
  %v2435 = vpop.f32.mrb[0].mxu0
  %v2436 = vadd.f32 %v2147, %v2435
  %v2437 = vpop.f32.mrb[0].mxu0
  %v2438 = vpop.f32.mrb[0].mxu0
  %v2439 = vadd.f32 %v2150, %v2438
  %v2440 = vpop.f32.mrb[0].mxu0
  %2441 = vmatprep.mubr.bf16.mxu0 %v1324
  %2442 = vmatmul.mubr.bf16.gmra.mrb[0].mxu0 %v1323
  %v2443 = vpop.f32.mrb[0].mxu0
  %v2444 = vadd.f32 %v2155, %v2443
  %v2445 = vpop.f32.mrb[0].mxu0
  %v2446 = vpop.f32.mrb[0].mxu0
  %v2447 = vadd.f32 %v2158, %v2446
  %v2448 = vpop.f32.mrb[0].mxu0
  %2449 = vmatprep.mubr.bf16.mxu0 %v1331
  %2450 = vmatmul.mubr.bf16.gmra.mrb[0].mxu0 %v1330
  %v2451 = vpop.f32.mrb[0].mxu0
  %v2452 = vadd.f32 %v2163, %v2451
  %v2453 = vpop.f32.mrb[0].mxu0
  %v2454 = vpop.f32.mrb[0].mxu0
  %v2455 = vadd.f32 %v2166, %v2454
  %v2456 = vpop.f32.mrb[0].mxu0
  %2457 = vmatprep.mubr.bf16.mxu0 %v1338
  %2458 = vmatmul.mubr.bf16.gmra.mrb[0].mxu0 %v1337
  %v2459 = vpop.f32.mrb[0].mxu0
  %v2460 = vadd.f32 %v2171, %v2459
  %v2461 = vpop.f32.mrb[0].mxu0
  %v2462 = vpop.f32.mrb[0].mxu0
  %v2463 = vadd.f32 %v2174, %v2462
  %v2464 = vpop.f32.mrb[0].mxu0
  %2465 = vmatprep.mubr.bf16.mxu0 %v1345
  %2466 = vmatmul.mubr.bf16.gmra.mrb[0].mxu0 %v1344
  %v2467 = vpop.f32.mrb[0].mxu0
  %v2468 = vadd.f32 %v2179, %v2467
  %v2469 = vpop.f32.mrb[0].mxu0
  %v2470 = vpop.f32.mrb[0].mxu0
  %v2471 = vadd.f32 %v2182, %v2470
  %v2472 = vpop.f32.mrb[0].mxu0
  %2473 = vmatprep.mubr.bf16.mxu0 %v1352
  %2474 = vmatmul.mubr.bf16.gmra.mrb[0].mxu0 %v1351
  %v2475 = vpop.f32.mrb[0].mxu0
  %v2476 = vadd.f32 %v2187, %v2475
  %v2477 = vpop.f32.mrb[0].mxu0
  %v2478 = vpop.f32.mrb[0].mxu0
  %v2479 = vadd.f32 %v2190, %v2478
  %v2480 = vpop.f32.mrb[0].mxu0
  %2481 = vmatprep.mubr.bf16.mxu0 %v1359
  %2482 = vmatmul.mubr.bf16.gmra.mrb[0].mxu0 %v1358
  %v2483 = vpop.f32.mrb[0].mxu0
  %v2484 = vadd.f32 %v2195, %v2483
  %v2485 = vpop.f32.mrb[0].mxu0
  %v2486 = vpop.f32.mrb[0].mxu0
  %v2487 = vadd.f32 %v2198, %v2486
  %v2488 = vpop.f32.mrb[0].mxu0
  %2489 = vmatprep.mubr.bf16.mxu0 %v1366
  %2490 = vmatmul.mubr.bf16.gmra.mrb[0].mxu0 %v1365
  %v2491 = vpop.f32.mrb[0].mxu0
  %v2492 = vadd.f32 %v2203, %v2491
  %v2493 = vpop.f32.mrb[0].mxu0
  %v2494 = vpop.f32.mrb[0].mxu0
  %v2495 = vadd.f32 %v2206, %v2494
  %v2496 = vpop.f32.mrb[0].mxu0
  %2497 = vmatprep.mubr.bf16.mxu0 %v1373
  %2498 = vmatmul.mubr.bf16.gmra.mrb[0].mxu0 %v1372
  %v2499 = vpop.f32.mrb[0].mxu0
  %v2500 = vadd.f32 %v2211, %v2499
  %v2501 = vpop.f32.mrb[0].mxu0
  %v2502 = vpop.f32.mrb[0].mxu0
  %v2503 = vadd.f32 %v2214, %v2502
  %v2504 = vpop.f32.mrb[0].mxu0
  %2505 = vmatprep.mubr.bf16.mxu0 %v1380
  %2506 = vmatmul.mubr.bf16.gmra.mrb[0].mxu0 %v1379
  %v2507 = vpop.f32.mrb[0].mxu0
  %v2508 = vadd.f32 %v2219, %v2507
  %v2509 = vpop.f32.mrb[0].mxu0
  %v2510 = vpop.f32.mrb[0].mxu0
  %v2511 = vadd.f32 %v2222, %v2510
  %v2512 = vpop.f32.mrb[0].mxu0
  %2513 = vmatprep.mubr.bf16.mxu0 %v1387
  %2514 = vmatmul.mubr.bf16.gmra.mrb[0].mxu0 %v1386
  %v2515 = vpop.f32.mrb[0].mxu0
  %v2516 = vadd.f32 %v2227, %v2515
  %v2517 = vpop.f32.mrb[0].mxu0
  %v2518 = vpop.f32.mrb[0].mxu0
  %v2519 = vadd.f32 %v2230, %v2518
  %v2520 = vpop.f32.mrb[0].mxu0
  %2521 = vmatprep.mubr.bf16.mxu0 %v1394
  %2522 = vmatmul.mubr.bf16.gmra.mrb[0].mxu0 %v1393
  %v2523 = vpop.f32.mrb[0].mxu0
  %v2524 = vadd.f32 %v2235, %v2523
  %v2525 = vpop.f32.mrb[0].mxu0
  %v2526 = vpop.f32.mrb[0].mxu0
  %v2527 = vadd.f32 %v2238, %v2526
  %v2528 = vpop.f32.mrb[0].mxu0
  %2529 = vmatprep.mubr.bf16.mxu0 %v1401
  %2530 = vmatmul.mubr.bf16.gmra.mrb[0].mxu0 %v1400
  %v2531 = vpop.f32.mrb[0].mxu0
  %v2532 = vadd.f32 %v2243, %v2531
  %v2533 = vpop.f32.mrb[0].mxu0
  %v2534 = vpop.f32.mrb[0].mxu0
  %v2535 = vadd.f32 %v2246, %v2534
  %v2536 = vpop.f32.mrb[0].mxu0
  %2537 = vmatprep.mubr.bf16.mxu0 %v1408
  %2538 = vmatmul.mubr.bf16.gmra.mrb[0].mxu0 %v1407
  %v2539 = vpop.f32.mrb[0].mxu0
  %v2540 = vadd.f32 %v2251, %v2539
  %v2541 = vpop.f32.mrb[0].mxu0
  %v2542 = vpop.f32.mrb[0].mxu0
  %v2543 = vadd.f32 %v2254, %v2542
  %v2544 = vpop.f32.mrb[0].mxu0
  %2545 = vmatprep.mubr.bf16.mxu0 %v1415
  %2546 = vmatmul.mubr.bf16.gmra.mrb[0].mxu0 %v1414
  %v2547 = vpop.f32.mrb[0].mxu0
  %v2548 = vadd.f32 %v2259, %v2547
  %v2549 = vpop.f32.mrb[0].mxu0
  %v2550 = vpop.f32.mrb[0].mxu0
  %v2551 = vadd.f32 %v2262, %v2550
  %v2552 = vpop.f32.mrb[0].mxu0
  %2553 = vmatprep.mubr.bf16.mxu0 %v1422
  %2554 = vmatmul.mubr.bf16.gmra.mrb[0].mxu0 %v1421
  %v2555 = vpop.f32.mrb[0].mxu0
  %v2556 = vadd.f32 %v2267, %v2555
  %v2557 = vpop.f32.mrb[0].mxu0
  %v2558 = vpop.f32.mrb[0].mxu0
  %v2559 = vadd.f32 %v2270, %v2558
  %v2560 = vpop.f32.mrb[0].mxu0
  %2561 = vmatprep.mubr.bf16.mxu0 %v1429
  %2562 = vmatmul.mubr.bf16.gmra.mrb[0].mxu0 %v1428
  %v2563 = vpop.f32.mrb[0].mxu0
  %v2564 = vadd.f32 %v2275, %v2563
  %v2565 = vpop.f32.mrb[0].mxu0
  %v2566 = vpop.f32.mrb[0].mxu0
  %v2567 = vadd.f32 %v2278, %v2566
  %v2568 = vpop.f32.mrb[0].mxu0
  %2569 = vmatprep.mubr.bf16.mxu0 %v1436
  %2570 = vmatmul.mubr.bf16.gmra.mrb[0].mxu0 %v1435
  %v2571 = vpop.f32.mrb[0].mxu0
  %v2572 = vadd.f32 %v2283, %v2571
  %v2573 = vpop.f32.mrb[0].mxu0
  %v2574 = vpop.f32.mrb[0].mxu0
  %v2575 = vadd.f32 %v2286, %v2574
  %v2576 = vpop.f32.mrb[0].mxu0
  %2577 = vdwg.mxu0
  %2578 = vmatprep.subr.bf16.mxu0 0
  %2579 = vmatpush1.bf16.msra.mxu0 %v1920
  %2580 = vmatprep.subr.bf16.mxu0 0
  %2581 = vmatpush1.bf16.msra.mxu0 %v1921
  %2582 = vmatprep.subr.bf16.mxu0 0
  %2583 = vmatpush1.bf16.msra.mxu0 %v1922
  %2584 = vmatprep.subr.bf16.mxu0 0
  %2585 = vmatpush1.bf16.msra.mxu0 %v1923
  %2586 = vmatprep.subr.bf16.mxu0 0
  %2587 = vmatpush1.bf16.msra.mxu0 %v1924
  %2588 = vmatprep.subr.bf16.mxu0 0
  %2589 = vmatpush1.bf16.msra.mxu0 %v1925
  %2590 = vmatprep.subr.bf16.mxu0 0
  %2591 = vmatpush1.bf16.msra.mxu0 %v1926
  %2592 = vmatprep.subr.bf16.mxu0 0
  %2593 = vmatpush1.bf16.msra.mxu0 %v1927
  %2594 = vmatprep.subr.bf16.mxu0 0
  %2595 = vmatpush1.bf16.msra.mxu0 %v1928
  %2596 = vmatprep.subr.bf16.mxu0 0
  %2597 = vmatpush1.bf16.msra.mxu0 %v1929
  %2598 = vmatprep.subr.bf16.mxu0 0
  %2599 = vmatpush1.bf16.msra.mxu0 %v1930
  %2600 = vmatprep.subr.bf16.mxu0 0
  %2601 = vmatpush1.bf16.msra.mxu0 %v1931
  %2602 = vmatprep.subr.bf16.mxu0 0
  %2603 = vmatpush1.bf16.msra.mxu0 %v1932
  %2604 = vmatprep.subr.bf16.mxu0 0
  %2605 = vmatpush1.bf16.msra.mxu0 %v1933
  %2606 = vmatprep.subr.bf16.mxu0 0
  %2607 = vmatpush1.bf16.msra.mxu0 %v1934
  %2608 = vmatprep.subr.bf16.mxu0 0
  %2609 = vmatpush1.bf16.msra.mxu0 %v1935
  %2610 = vmatprep.mubr.bf16.mxu0 %v1221
  %2611 = vmatmul.mubr.bf16.gmra.mrb[0].mxu0 %v1220
  %v2612 = vpop.f32.mrb[0].mxu0
  %v2613 = vadd.f32 %v2324, %v2612
  %v2614 = vpop.f32.mrb[0].mxu0
  %v2615 = vpop.f32.mrb[0].mxu0
  %v2616 = vadd.f32 %v2327, %v2615
  %v2617 = vpop.f32.mrb[0].mxu0
  %2618 = vmatprep.mubr.bf16.mxu0 %v1228
  %2619 = vmatmul.mubr.bf16.gmra.mrb[0].mxu0 %v1227
  %v2620 = vpop.f32.mrb[0].mxu0
  %v2621 = vadd.f32 %v2332, %v2620
  %v2622 = vpop.f32.mrb[0].mxu0
  %v2623 = vpop.f32.mrb[0].mxu0
  %v2624 = vadd.f32 %v2335, %v2623
  %v2625 = vpop.f32.mrb[0].mxu0
  %2626 = vmatprep.mubr.bf16.mxu0 %v1235
  %2627 = vmatmul.mubr.bf16.gmra.mrb[0].mxu0 %v1234
  %v2628 = vpop.f32.mrb[0].mxu0
  %v2629 = vadd.f32 %v2340, %v2628
  %v2630 = vpop.f32.mrb[0].mxu0
  %v2631 = vpop.f32.mrb[0].mxu0
  %v2632 = vadd.f32 %v2343, %v2631
  %v2633 = vpop.f32.mrb[0].mxu0
  %2634 = vmatprep.mubr.bf16.mxu0 %v1242
  %2635 = vmatmul.mubr.bf16.gmra.mrb[0].mxu0 %v1241
  %v2636 = vpop.f32.mrb[0].mxu0
  %v2637 = vadd.f32 %v2348, %v2636
  %v2638 = vpop.f32.mrb[0].mxu0
  %v2639 = vpop.f32.mrb[0].mxu0
  %v2640 = vadd.f32 %v2351, %v2639
  %v2641 = vpop.f32.mrb[0].mxu0
  %2642 = vmatprep.mubr.bf16.mxu0 %v1249
  %2643 = vmatmul.mubr.bf16.gmra.mrb[0].mxu0 %v1248
  %v2644 = vpop.f32.mrb[0].mxu0
  %v2645 = vadd.f32 %v2356, %v2644
  %v2646 = vpop.f32.mrb[0].mxu0
  %v2647 = vpop.f32.mrb[0].mxu0
  %v2648 = vadd.f32 %v2359, %v2647
  %v2649 = vpop.f32.mrb[0].mxu0
  %2650 = vmatprep.mubr.bf16.mxu0 %v1256
  %2651 = vmatmul.mubr.bf16.gmra.mrb[0].mxu0 %v1255
  %v2652 = vpop.f32.mrb[0].mxu0
  %v2653 = vadd.f32 %v2364, %v2652
  %v2654 = vpop.f32.mrb[0].mxu0
  %v2655 = vpop.f32.mrb[0].mxu0
  %v2656 = vadd.f32 %v2367, %v2655
  %v2657 = vpop.f32.mrb[0].mxu0
  %2658 = vmatprep.mubr.bf16.mxu0 %v1263
  %2659 = vmatmul.mubr.bf16.gmra.mrb[0].mxu0 %v1262
  %v2660 = vpop.f32.mrb[0].mxu0
  %v2661 = vadd.f32 %v2372, %v2660
  %v2662 = vpop.f32.mrb[0].mxu0
  %v2663 = vpop.f32.mrb[0].mxu0
  %v2664 = vadd.f32 %v2375, %v2663
  %v2665 = vpop.f32.mrb[0].mxu0
  %2666 = vmatprep.mubr.bf16.mxu0 %v1270
  %2667 = vmatmul.mubr.bf16.gmra.mrb[0].mxu0 %v1269
  %v2668 = vpop.f32.mrb[0].mxu0
  %v2669 = vadd.f32 %v2380, %v2668
  %v2670 = vpop.f32.mrb[0].mxu0
  %v2671 = vpop.f32.mrb[0].mxu0
  %v2672 = vadd.f32 %v2383, %v2671
  %v2673 = vpop.f32.mrb[0].mxu0
  %2674 = vmatprep.mubr.bf16.mxu0 %v1277
  %2675 = vmatmul.mubr.bf16.gmra.mrb[0].mxu0 %v1276
  %v2676 = vpop.f32.mrb[0].mxu0
  %v2677 = vadd.f32 %v2388, %v2676
  %v2678 = vpop.f32.mrb[0].mxu0
  %v2679 = vpop.f32.mrb[0].mxu0
  %v2680 = vadd.f32 %v2391, %v2679
  %v2681 = vpop.f32.mrb[0].mxu0
  %2682 = vmatprep.mubr.bf16.mxu0 %v1284
  %2683 = vmatmul.mubr.bf16.gmra.mrb[0].mxu0 %v1283
  %v2684 = vpop.f32.mrb[0].mxu0
  %v2685 = vadd.f32 %v2396, %v2684
  %v2686 = vpop.f32.mrb[0].mxu0
  %v2687 = vpop.f32.mrb[0].mxu0
  %v2688 = vadd.f32 %v2399, %v2687
  %v2689 = vpop.f32.mrb[0].mxu0
  %2690 = vmatprep.mubr.bf16.mxu0 %v1291
  %2691 = vmatmul.mubr.bf16.gmra.mrb[0].mxu0 %v1290
  %v2692 = vpop.f32.mrb[0].mxu0
  %v2693 = vadd.f32 %v2404, %v2692
  %v2694 = vpop.f32.mrb[0].mxu0
  %v2695 = vpop.f32.mrb[0].mxu0
  %v2696 = vadd.f32 %v2407, %v2695
  %v2697 = vpop.f32.mrb[0].mxu0
  %2698 = vmatprep.mubr.bf16.mxu0 %v1298
  %2699 = vmatmul.mubr.bf16.gmra.mrb[0].mxu0 %v1297
  %v2700 = vpop.f32.mrb[0].mxu0
  %v2701 = vadd.f32 %v2412, %v2700
  %v2702 = vpop.f32.mrb[0].mxu0
  %v2703 = vpop.f32.mrb[0].mxu0
  %v2704 = vadd.f32 %v2415, %v2703
  %v2705 = vpop.f32.mrb[0].mxu0
  %2706 = vmatprep.mubr.bf16.mxu0 %v1305
  %2707 = vmatmul.mubr.bf16.gmra.mrb[0].mxu0 %v1304
  %v2708 = vpop.f32.mrb[0].mxu0
  %v2709 = vadd.f32 %v2420, %v2708
  %v2710 = vpop.f32.mrb[0].mxu0
  %v2711 = vpop.f32.mrb[0].mxu0
  %v2712 = vadd.f32 %v2423, %v2711
  %v2713 = vpop.f32.mrb[0].mxu0
  %2714 = vmatprep.mubr.bf16.mxu0 %v1312
  %2715 = vmatmul.mubr.bf16.gmra.mrb[0].mxu0 %v1311
  %v2716 = vpop.f32.mrb[0].mxu0
  %v2717 = vadd.f32 %v2428, %v2716
  %v2718 = vpop.f32.mrb[0].mxu0
  %v2719 = vpop.f32.mrb[0].mxu0
  %v2720 = vadd.f32 %v2431, %v2719
  %v2721 = vpop.f32.mrb[0].mxu0
  %2722 = vmatprep.mubr.bf16.mxu0 %v1319
  %2723 = vmatmul.mubr.bf16.gmra.mrb[0].mxu0 %v1318
  %v2724 = vpop.f32.mrb[0].mxu0
  %v2725 = vadd.f32 %v2436, %v2724
  %v2726 = vpop.f32.mrb[0].mxu0
  %v2727 = vpop.f32.mrb[0].mxu0
  %v2728 = vadd.f32 %v2439, %v2727
  %v2729 = vpop.f32.mrb[0].mxu0
  %2730 = vmatprep.mubr.bf16.mxu0 %v1326
  %2731 = vmatmul.mubr.bf16.gmra.mrb[0].mxu0 %v1325
  %v2732 = vpop.f32.mrb[0].mxu0
  %v2733 = vadd.f32 %v2444, %v2732
  %v2734 = vpop.f32.mrb[0].mxu0
  %v2735 = vpop.f32.mrb[0].mxu0
  %v2736 = vadd.f32 %v2447, %v2735
  %v2737 = vpop.f32.mrb[0].mxu0
  %2738 = vmatprep.mubr.bf16.mxu0 %v1333
  %2739 = vmatmul.mubr.bf16.gmra.mrb[0].mxu0 %v1332
  %v2740 = vpop.f32.mrb[0].mxu0
  %v2741 = vadd.f32 %v2452, %v2740
  %v2742 = vpop.f32.mrb[0].mxu0
  %v2743 = vpop.f32.mrb[0].mxu0
  %v2744 = vadd.f32 %v2455, %v2743
  %v2745 = vpop.f32.mrb[0].mxu0
  %2746 = vmatprep.mubr.bf16.mxu0 %v1340
  %2747 = vmatmul.mubr.bf16.gmra.mrb[0].mxu0 %v1339
  %v2748 = vpop.f32.mrb[0].mxu0
  %v2749 = vadd.f32 %v2460, %v2748
  %v2750 = vpop.f32.mrb[0].mxu0
  %v2751 = vpop.f32.mrb[0].mxu0
  %v2752 = vadd.f32 %v2463, %v2751
  %v2753 = vpop.f32.mrb[0].mxu0
  %2754 = vmatprep.mubr.bf16.mxu0 %v1347
  %2755 = vmatmul.mubr.bf16.gmra.mrb[0].mxu0 %v1346
  %v2756 = vpop.f32.mrb[0].mxu0
  %v2757 = vadd.f32 %v2468, %v2756
  %v2758 = vpop.f32.mrb[0].mxu0
  %v2759 = vpop.f32.mrb[0].mxu0
  %v2760 = vadd.f32 %v2471, %v2759
  %v2761 = vpop.f32.mrb[0].mxu0
  %2762 = vmatprep.mubr.bf16.mxu0 %v1354
  %2763 = vmatmul.mubr.bf16.gmra.mrb[0].mxu0 %v1353
  %v2764 = vpop.f32.mrb[0].mxu0
  %v2765 = vadd.f32 %v2476, %v2764
  %v2766 = vpop.f32.mrb[0].mxu0
  %v2767 = vpop.f32.mrb[0].mxu0
  %v2768 = vadd.f32 %v2479, %v2767
  %v2769 = vpop.f32.mrb[0].mxu0
  %2770 = vmatprep.mubr.bf16.mxu0 %v1361
  %2771 = vmatmul.mubr.bf16.gmra.mrb[0].mxu0 %v1360
  %v2772 = vpop.f32.mrb[0].mxu0
  %v2773 = vadd.f32 %v2484, %v2772
  %v2774 = vpop.f32.mrb[0].mxu0
  %v2775 = vpop.f32.mrb[0].mxu0
  %v2776 = vadd.f32 %v2487, %v2775
  %v2777 = vpop.f32.mrb[0].mxu0
  %2778 = vmatprep.mubr.bf16.mxu0 %v1368
  %2779 = vmatmul.mubr.bf16.gmra.mrb[0].mxu0 %v1367
  %v2780 = vpop.f32.mrb[0].mxu0
  %v2781 = vadd.f32 %v2492, %v2780
  %v2782 = vpop.f32.mrb[0].mxu0
  %v2783 = vpop.f32.mrb[0].mxu0
  %v2784 = vadd.f32 %v2495, %v2783
  %v2785 = vpop.f32.mrb[0].mxu0
  %2786 = vmatprep.mubr.bf16.mxu0 %v1375
  %2787 = vmatmul.mubr.bf16.gmra.mrb[0].mxu0 %v1374
  %v2788 = vpop.f32.mrb[0].mxu0
  %v2789 = vadd.f32 %v2500, %v2788
  %v2790 = vpop.f32.mrb[0].mxu0
  %v2791 = vpop.f32.mrb[0].mxu0
  %v2792 = vadd.f32 %v2503, %v2791
  %v2793 = vpop.f32.mrb[0].mxu0
  %2794 = vmatprep.mubr.bf16.mxu0 %v1382
  %2795 = vmatmul.mubr.bf16.gmra.mrb[0].mxu0 %v1381
  %v2796 = vpop.f32.mrb[0].mxu0
  %v2797 = vadd.f32 %v2508, %v2796
  %v2798 = vpop.f32.mrb[0].mxu0
  %v2799 = vpop.f32.mrb[0].mxu0
  %v2800 = vadd.f32 %v2511, %v2799
  %v2801 = vpop.f32.mrb[0].mxu0
  %2802 = vmatprep.mubr.bf16.mxu0 %v1389
  %2803 = vmatmul.mubr.bf16.gmra.mrb[0].mxu0 %v1388
  %v2804 = vpop.f32.mrb[0].mxu0
  %v2805 = vadd.f32 %v2516, %v2804
  %v2806 = vpop.f32.mrb[0].mxu0
  %v2807 = vpop.f32.mrb[0].mxu0
  %v2808 = vadd.f32 %v2519, %v2807
  %v2809 = vpop.f32.mrb[0].mxu0
  %2810 = vmatprep.mubr.bf16.mxu0 %v1396
  %2811 = vmatmul.mubr.bf16.gmra.mrb[0].mxu0 %v1395
  %v2812 = vpop.f32.mrb[0].mxu0
  %v2813 = vadd.f32 %v2524, %v2812
  %v2814 = vpop.f32.mrb[0].mxu0
  %v2815 = vpop.f32.mrb[0].mxu0
  %v2816 = vadd.f32 %v2527, %v2815
  %v2817 = vpop.f32.mrb[0].mxu0
  %2818 = vmatprep.mubr.bf16.mxu0 %v1403
  %2819 = vmatmul.mubr.bf16.gmra.mrb[0].mxu0 %v1402
  %v2820 = vpop.f32.mrb[0].mxu0
  %v2821 = vadd.f32 %v2532, %v2820
  %v2822 = vpop.f32.mrb[0].mxu0
  %v2823 = vpop.f32.mrb[0].mxu0
  %v2824 = vadd.f32 %v2535, %v2823
  %v2825 = vpop.f32.mrb[0].mxu0
  %2826 = vmatprep.mubr.bf16.mxu0 %v1410
  %2827 = vmatmul.mubr.bf16.gmra.mrb[0].mxu0 %v1409
  %v2828 = vpop.f32.mrb[0].mxu0
  %v2829 = vadd.f32 %v2540, %v2828
  %v2830 = vpop.f32.mrb[0].mxu0
  %v2831 = vpop.f32.mrb[0].mxu0
  %v2832 = vadd.f32 %v2543, %v2831
  %v2833 = vpop.f32.mrb[0].mxu0
  %2834 = vmatprep.mubr.bf16.mxu0 %v1417
  %2835 = vmatmul.mubr.bf16.gmra.mrb[0].mxu0 %v1416
  %v2836 = vpop.f32.mrb[0].mxu0
  %v2837 = vadd.f32 %v2548, %v2836
  %v2838 = vpop.f32.mrb[0].mxu0
  %v2839 = vpop.f32.mrb[0].mxu0
  %v2840 = vadd.f32 %v2551, %v2839
  %v2841 = vpop.f32.mrb[0].mxu0
  %2842 = vmatprep.mubr.bf16.mxu0 %v1424
  %2843 = vmatmul.mubr.bf16.gmra.mrb[0].mxu0 %v1423
  %v2844 = vpop.f32.mrb[0].mxu0
  %v2845 = vadd.f32 %v2556, %v2844
  %v2846 = vpop.f32.mrb[0].mxu0
  %v2847 = vpop.f32.mrb[0].mxu0
  %v2848 = vadd.f32 %v2559, %v2847
  %v2849 = vpop.f32.mrb[0].mxu0
  %2850 = vmatprep.mubr.bf16.mxu0 %v1431
  %2851 = vmatmul.mubr.bf16.gmra.mrb[0].mxu0 %v1430
  %v2852 = vpop.f32.mrb[0].mxu0
  %v2853 = vadd.f32 %v2564, %v2852
  %v2854 = vpop.f32.mrb[0].mxu0
  %v2855 = vpop.f32.mrb[0].mxu0
  %v2856 = vadd.f32 %v2567, %v2855
  %v2857 = vpop.f32.mrb[0].mxu0
  %2858 = vmatprep.mubr.bf16.mxu0 %v1438
  %2859 = vmatmul.mubr.bf16.gmra.mrb[0].mxu0 %v1437
  %v2860 = vpop.f32.mrb[0].mxu0
  %v2861 = vadd.f32 %v2572, %v2860
  %v2862 = vpop.f32.mrb[0].mxu0
  %v2863 = vpop.f32.mrb[0].mxu0
  %v2864 = vadd.f32 %v2575, %v2863
  %v2865 = vpop.f32.mrb[0].mxu0
  %2866 = vdwg.mxu0
  %2867 = vmatprep.subr.bf16.mxu0 0
  %2868 = vmatpush1.bf16.msra.mxu0 %v1936
  %2869 = vmatprep.subr.bf16.mxu0 0
  %2870 = vmatpush1.bf16.msra.mxu0 %v1937
  %2871 = vmatprep.subr.bf16.mxu0 0
  %2872 = vmatpush1.bf16.msra.mxu0 %v1938
  %2873 = vmatprep.subr.bf16.mxu0 0
  %2874 = vmatpush1.bf16.msra.mxu0 %v1939
  %2875 = vmatprep.subr.bf16.mxu0 0
  %2876 = vmatpush1.bf16.msra.mxu0 %v1940
  %2877 = vmatprep.subr.bf16.mxu0 0
  %2878 = vmatpush1.bf16.msra.mxu0 %v1941
  %2879 = vmatprep.subr.bf16.mxu0 0
  %2880 = vmatpush1.bf16.msra.mxu0 %v1942
  %2881 = vmatprep.subr.bf16.mxu0 0
  %2882 = vmatpush1.bf16.msra.mxu0 %v1943
  %2883 = vmatprep.subr.bf16.mxu0 0
  %2884 = vmatpush1.bf16.msra.mxu0 0
  %2885 = vmatprep.subr.bf16.mxu0 0
  %2886 = vmatpush1.bf16.msra.mxu0 0
  %2887 = vmatprep.subr.bf16.mxu0 0
  %2888 = vmatpush1.bf16.msra.mxu0 0
  %2889 = vmatprep.subr.bf16.mxu0 0
  %2890 = vmatpush1.bf16.msra.mxu0 0
  %2891 = vmatprep.subr.bf16.mxu0 0
  %2892 = vmatpush1.bf16.msra.mxu0 0
  %2893 = vmatprep.subr.bf16.mxu0 0
  %2894 = vmatpush1.bf16.msra.mxu0 0
  %2895 = vmatprep.subr.bf16.mxu0 0
  %2896 = vmatpush1.bf16.msra.mxu0 0
  %2897 = vmatprep.subr.bf16.mxu0 0
  %2898 = vmatpush1.bf16.msra.mxu0 0
  %2899 = vmatprep.mubr.bf16.mxu0 0
  %2900 = vmatmul.mubr.bf16.gmra.mrb[0].mxu0 %v1222
  %v2901 = vpop.f32.mrb[0].mxu0
  %v2902 = vadd.f32 %v2613, %v2901
  %v2903 = vpop.f32.mrb[0].mxu0
  %v2904 = vpop.f32.mrb[0].mxu0
  %v2905 = vadd.f32 %v2616, %v2904
  %v2906 = vpop.f32.mrb[0].mxu0
  %2907 = vmatprep.mubr.bf16.mxu0 0
  %2908 = vmatmul.mubr.bf16.gmra.mrb[0].mxu0 %v1229
  %v2909 = vpop.f32.mrb[0].mxu0
  %v2910 = vadd.f32 %v2621, %v2909
  %v2911 = vpop.f32.mrb[0].mxu0
  %v2912 = vpop.f32.mrb[0].mxu0
  %v2913 = vadd.f32 %v2624, %v2912
  %v2914 = vpop.f32.mrb[0].mxu0
  %2915 = vmatprep.mubr.bf16.mxu0 0
  %2916 = vmatmul.mubr.bf16.gmra.mrb[0].mxu0 %v1236
  %v2917 = vpop.f32.mrb[0].mxu0
  %v2918 = vadd.f32 %v2629, %v2917
  %v2919 = vpop.f32.mrb[0].mxu0
  %v2920 = vpop.f32.mrb[0].mxu0
  %v2921 = vadd.f32 %v2632, %v2920
  %v2922 = vpop.f32.mrb[0].mxu0
  %2923 = vmatprep.mubr.bf16.mxu0 0
  %2924 = vmatmul.mubr.bf16.gmra.mrb[0].mxu0 %v1243
  %v2925 = vpop.f32.mrb[0].mxu0
  %v2926 = vadd.f32 %v2637, %v2925
  %v2927 = vpop.f32.mrb[0].mxu0
  %v2928 = vpop.f32.mrb[0].mxu0
  %v2929 = vadd.f32 %v2640, %v2928
  %v2930 = vpop.f32.mrb[0].mxu0
  %2931 = vmatprep.mubr.bf16.mxu0 0
  %2932 = vmatmul.mubr.bf16.gmra.mrb[0].mxu0 %v1250
  %v2933 = vpop.f32.mrb[0].mxu0
  %v2934 = vadd.f32 %v2645, %v2933
  %v2935 = vpop.f32.mrb[0].mxu0
  %v2936 = vpop.f32.mrb[0].mxu0
  %v2937 = vadd.f32 %v2648, %v2936
  %v2938 = vpop.f32.mrb[0].mxu0
  %2939 = vmatprep.mubr.bf16.mxu0 0
  %2940 = vmatmul.mubr.bf16.gmra.mrb[0].mxu0 %v1257
  %v2941 = vpop.f32.mrb[0].mxu0
  %v2942 = vadd.f32 %v2653, %v2941
  %v2943 = vpop.f32.mrb[0].mxu0
  %v2944 = vpop.f32.mrb[0].mxu0
  %v2945 = vadd.f32 %v2656, %v2944
  %v2946 = vpop.f32.mrb[0].mxu0
  %2947 = vmatprep.mubr.bf16.mxu0 0
  %2948 = vmatmul.mubr.bf16.gmra.mrb[0].mxu0 %v1264
  %v2949 = vpop.f32.mrb[0].mxu0
  %v2950 = vadd.f32 %v2661, %v2949
  %v2951 = vpop.f32.mrb[0].mxu0
  %v2952 = vpop.f32.mrb[0].mxu0
  %v2953 = vadd.f32 %v2664, %v2952
  %v2954 = vpop.f32.mrb[0].mxu0
  %2955 = vmatprep.mubr.bf16.mxu0 0
  %2956 = vmatmul.mubr.bf16.gmra.mrb[0].mxu0 %v1271
  %v2957 = vpop.f32.mrb[0].mxu0
  %v2958 = vadd.f32 %v2669, %v2957
  %v2959 = vpop.f32.mrb[0].mxu0
  %v2960 = vpop.f32.mrb[0].mxu0
  %v2961 = vadd.f32 %v2672, %v2960
  %v2962 = vpop.f32.mrb[0].mxu0
  %2963 = vmatprep.mubr.bf16.mxu0 0
  %2964 = vmatmul.mubr.bf16.gmra.mrb[0].mxu0 %v1278
  %v2965 = vpop.f32.mrb[0].mxu0
  %v2966 = vadd.f32 %v2677, %v2965
  %v2967 = vpop.f32.mrb[0].mxu0
  %v2968 = vpop.f32.mrb[0].mxu0
  %v2969 = vadd.f32 %v2680, %v2968
  %v2970 = vpop.f32.mrb[0].mxu0
  %2971 = vmatprep.mubr.bf16.mxu0 0
  %2972 = vmatmul.mubr.bf16.gmra.mrb[0].mxu0 %v1285
  %v2973 = vpop.f32.mrb[0].mxu0
  %v2974 = vadd.f32 %v2685, %v2973
  %v2975 = vpop.f32.mrb[0].mxu0
  %v2976 = vpop.f32.mrb[0].mxu0
  %v2977 = vadd.f32 %v2688, %v2976
  %v2978 = vpop.f32.mrb[0].mxu0
  %2979 = vmatprep.mubr.bf16.mxu0 0
  %2980 = vmatmul.mubr.bf16.gmra.mrb[0].mxu0 %v1292
  %v2981 = vpop.f32.mrb[0].mxu0
  %v2982 = vadd.f32 %v2693, %v2981
  %v2983 = vpop.f32.mrb[0].mxu0
  %v2984 = vpop.f32.mrb[0].mxu0
  %v2985 = vadd.f32 %v2696, %v2984
  %v2986 = vpop.f32.mrb[0].mxu0
  %2987 = vmatprep.mubr.bf16.mxu0 0
  %2988 = vmatmul.mubr.bf16.gmra.mrb[0].mxu0 %v1299
  %v2989 = vpop.f32.mrb[0].mxu0
  %v2990 = vadd.f32 %v2701, %v2989
  %v2991 = vpop.f32.mrb[0].mxu0
  %v2992 = vpop.f32.mrb[0].mxu0
  %v2993 = vadd.f32 %v2704, %v2992
  %v2994 = vpop.f32.mrb[0].mxu0
  %2995 = vmatprep.mubr.bf16.mxu0 0
  %2996 = vmatmul.mubr.bf16.gmra.mrb[0].mxu0 %v1306
  %v2997 = vpop.f32.mrb[0].mxu0
  %v2998 = vadd.f32 %v2709, %v2997
  %v2999 = vpop.f32.mrb[0].mxu0
  %v3000 = vpop.f32.mrb[0].mxu0
  %v3001 = vadd.f32 %v2712, %v3000
  %v3002 = vpop.f32.mrb[0].mxu0
  %3003 = vmatprep.mubr.bf16.mxu0 0
  %3004 = vmatmul.mubr.bf16.gmra.mrb[0].mxu0 %v1313
  %v3005 = vpop.f32.mrb[0].mxu0
  %v3006 = vadd.f32 %v2717, %v3005
  %v3007 = vpop.f32.mrb[0].mxu0
  %v3008 = vpop.f32.mrb[0].mxu0
  %v3009 = vadd.f32 %v2720, %v3008
  %v3010 = vpop.f32.mrb[0].mxu0
  %3011 = vmatprep.mubr.bf16.mxu0 0
  %3012 = vmatmul.mubr.bf16.gmra.mrb[0].mxu0 %v1320
  %v3013 = vpop.f32.mrb[0].mxu0
  %v3014 = vadd.f32 %v2725, %v3013
  %v3015 = vpop.f32.mrb[0].mxu0
  %v3016 = vpop.f32.mrb[0].mxu0
  %v3017 = vadd.f32 %v2728, %v3016
  %v3018 = vpop.f32.mrb[0].mxu0
  %3019 = vmatprep.mubr.bf16.mxu0 0
  %3020 = vmatmul.mubr.bf16.gmra.mrb[0].mxu0 %v1327
  %v3021 = vpop.f32.mrb[0].mxu0
  %v3022 = vadd.f32 %v2733, %v3021
  %v3023 = vpop.f32.mrb[0].mxu0
  %v3024 = vpop.f32.mrb[0].mxu0
  %v3025 = vadd.f32 %v2736, %v3024
  %v3026 = vpop.f32.mrb[0].mxu0
  %3027 = vmatprep.mubr.bf16.mxu0 0
  %3028 = vmatmul.mubr.bf16.gmra.mrb[0].mxu0 %v1334
  %v3029 = vpop.f32.mrb[0].mxu0
  %v3030 = vadd.f32 %v2741, %v3029
  %v3031 = vpop.f32.mrb[0].mxu0
  %v3032 = vpop.f32.mrb[0].mxu0
  %v3033 = vadd.f32 %v2744, %v3032
  %v3034 = vpop.f32.mrb[0].mxu0
  %3035 = vmatprep.mubr.bf16.mxu0 0
  %3036 = vmatmul.mubr.bf16.gmra.mrb[0].mxu0 %v1341
  %v3037 = vpop.f32.mrb[0].mxu0
  %v3038 = vadd.f32 %v2749, %v3037
  %v3039 = vpop.f32.mrb[0].mxu0
  %v3040 = vpop.f32.mrb[0].mxu0
  %v3041 = vadd.f32 %v2752, %v3040
  %v3042 = vpop.f32.mrb[0].mxu0
  %3043 = vmatprep.mubr.bf16.mxu0 0
  %3044 = vmatmul.mubr.bf16.gmra.mrb[0].mxu0 %v1348
  %v3045 = vpop.f32.mrb[0].mxu0
  %v3046 = vadd.f32 %v2757, %v3045
  %v3047 = vpop.f32.mrb[0].mxu0
  %v3048 = vpop.f32.mrb[0].mxu0
  %v3049 = vadd.f32 %v2760, %v3048
  %v3050 = vpop.f32.mrb[0].mxu0
  %3051 = vmatprep.mubr.bf16.mxu0 0
  %3052 = vmatmul.mubr.bf16.gmra.mrb[0].mxu0 %v1355
  %v3053 = vpop.f32.mrb[0].mxu0
  %v3054 = vadd.f32 %v2765, %v3053
  %v3055 = vpop.f32.mrb[0].mxu0
  %v3056 = vpop.f32.mrb[0].mxu0
  %v3057 = vadd.f32 %v2768, %v3056
  %v3058 = vpop.f32.mrb[0].mxu0
  %3059 = vmatprep.mubr.bf16.mxu0 0
  %3060 = vmatmul.mubr.bf16.gmra.mrb[0].mxu0 %v1362
  %v3061 = vpop.f32.mrb[0].mxu0
  %v3062 = vadd.f32 %v2773, %v3061
  %v3063 = vpop.f32.mrb[0].mxu0
  %v3064 = vpop.f32.mrb[0].mxu0
  %v3065 = vadd.f32 %v2776, %v3064
  %v3066 = vpop.f32.mrb[0].mxu0
  %3067 = vmatprep.mubr.bf16.mxu0 0
  %3068 = vmatmul.mubr.bf16.gmra.mrb[0].mxu0 %v1369
  %v3069 = vpop.f32.mrb[0].mxu0
  %v3070 = vadd.f32 %v2781, %v3069
  %v3071 = vpop.f32.mrb[0].mxu0
  %v3072 = vpop.f32.mrb[0].mxu0
  %v3073 = vadd.f32 %v2784, %v3072
  %v3074 = vpop.f32.mrb[0].mxu0
  %3075 = vmatprep.mubr.bf16.mxu0 0
  %3076 = vmatmul.mubr.bf16.gmra.mrb[0].mxu0 %v1376
  %v3077 = vpop.f32.mrb[0].mxu0
  %v3078 = vadd.f32 %v2789, %v3077
  %v3079 = vpop.f32.mrb[0].mxu0
  %v3080 = vpop.f32.mrb[0].mxu0
  %v3081 = vadd.f32 %v2792, %v3080
  %v3082 = vpop.f32.mrb[0].mxu0
  %3083 = vmatprep.mubr.bf16.mxu0 0
  %3084 = vmatmul.mubr.bf16.gmra.mrb[0].mxu0 %v1383
  %v3085 = vpop.f32.mrb[0].mxu0
  %v3086 = vadd.f32 %v2797, %v3085
  %v3087 = vpop.f32.mrb[0].mxu0
  %v3088 = vpop.f32.mrb[0].mxu0
  %v3089 = vadd.f32 %v2800, %v3088
  %v3090 = vpop.f32.mrb[0].mxu0
  %3091 = vmatprep.mubr.bf16.mxu0 0
  %3092 = vmatmul.mubr.bf16.gmra.mrb[0].mxu0 %v1390
  %v3093 = vpop.f32.mrb[0].mxu0
  %v3094 = vadd.f32 %v2805, %v3093
  %v3095 = vpop.f32.mrb[0].mxu0
  %v3096 = vpop.f32.mrb[0].mxu0
  %v3097 = vadd.f32 %v2808, %v3096
  %v3098 = vpop.f32.mrb[0].mxu0
  %3099 = vmatprep.mubr.bf16.mxu0 0
  %3100 = vmatmul.mubr.bf16.gmra.mrb[0].mxu0 %v1397
  %v3101 = vpop.f32.mrb[0].mxu0
  %v3102 = vadd.f32 %v2813, %v3101
  %v3103 = vpop.f32.mrb[0].mxu0
  %v3104 = vpop.f32.mrb[0].mxu0
  %v3105 = vadd.f32 %v2816, %v3104
  %v3106 = vpop.f32.mrb[0].mxu0
  %3107 = vmatprep.mubr.bf16.mxu0 0
  %3108 = vmatmul.mubr.bf16.gmra.mrb[0].mxu0 %v1404
  %v3109 = vpop.f32.mrb[0].mxu0
  %v3110 = vadd.f32 %v2821, %v3109
  %v3111 = vpop.f32.mrb[0].mxu0
  %v3112 = vpop.f32.mrb[0].mxu0
  %v3113 = vadd.f32 %v2824, %v3112
  %v3114 = vpop.f32.mrb[0].mxu0
  %3115 = vmatprep.mubr.bf16.mxu0 0
  %3116 = vmatmul.mubr.bf16.gmra.mrb[0].mxu0 %v1411
  %v3117 = vpop.f32.mrb[0].mxu0
  %v3118 = vadd.f32 %v2829, %v3117
  %v3119 = vpop.f32.mrb[0].mxu0
  %v3120 = vpop.f32.mrb[0].mxu0
  %v3121 = vadd.f32 %v2832, %v3120
  %v3122 = vpop.f32.mrb[0].mxu0
  %3123 = vmatprep.mubr.bf16.mxu0 0
  %3124 = vmatmul.mubr.bf16.gmra.mrb[0].mxu0 %v1418
  %v3125 = vpop.f32.mrb[0].mxu0
  %v3126 = vadd.f32 %v2837, %v3125
  %v3127 = vpop.f32.mrb[0].mxu0
  %v3128 = vpop.f32.mrb[0].mxu0
  %v3129 = vadd.f32 %v2840, %v3128
  %v3130 = vpop.f32.mrb[0].mxu0
  %3131 = vmatprep.mubr.bf16.mxu0 0
  %3132 = vmatmul.mubr.bf16.gmra.mrb[0].mxu0 %v1425
  %v3133 = vpop.f32.mrb[0].mxu0
  %v3134 = vadd.f32 %v2845, %v3133
  %v3135 = vpop.f32.mrb[0].mxu0
  %v3136 = vpop.f32.mrb[0].mxu0
  %v3137 = vadd.f32 %v2848, %v3136
  %v3138 = vpop.f32.mrb[0].mxu0
  %3139 = vmatprep.mubr.bf16.mxu0 0
  %3140 = vmatmul.mubr.bf16.gmra.mrb[0].mxu0 %v1432
  %v3141 = vpop.f32.mrb[0].mxu0
  %v3142 = vadd.f32 %v2853, %v3141
  %v3143 = vpop.f32.mrb[0].mxu0
  %v3144 = vpop.f32.mrb[0].mxu0
  %v3145 = vadd.f32 %v2856, %v3144
  %v3146 = vpop.f32.mrb[0].mxu0
  %3147 = vmatprep.mubr.bf16.mxu0 0
  %3148 = vmatmul.mubr.bf16.gmra.mrb[0].mxu0 %v1439
  %v3149 = vpop.f32.mrb[0].mxu0
  %v3150 = vadd.f32 %v2861, %v3149
  %v3151 = vpop.f32.mrb[0].mxu0
  %v3152 = vpop.f32.mrb[0].mxu0
  %v3153 = vadd.f32 %v2864, %v3152
  %v3154 = vpop.f32.mrb[0].mxu0
  %3155 = vdwg.mxu0
  %v3156 = vadd.f32 %v80, %v2902
  %v3157 = vadd.f32 %v81, %v2905
  %v3158 = vadd.f32 %v82, %v2910
  %v3159 = vadd.f32 %v83, %v2913
  %v3160 = vadd.f32 %v84, %v2918
  %v3161 = vadd.f32 %v85, %v2921
  %v3162 = vadd.f32 %v86, %v2926
  %v3163 = vadd.f32 %v87, %v2929
  %v3164 = vadd.f32 %v88, %v2934
  %v3165 = vadd.f32 %v89, %v2937
  %v3166 = vadd.f32 %v90, %v2942
  %v3167 = vadd.f32 %v91, %v2945
  %v3168 = vadd.f32 %v92, %v2950
  %v3169 = vadd.f32 %v93, %v2953
  %v3170 = vadd.f32 %v94, %v2958
  %v3171 = vadd.f32 %v95, %v2961
  %v3172 = vadd.f32 %v96, %v2966
  %v3173 = vadd.f32 %v97, %v2969
  %v3174 = vadd.f32 %v98, %v2974
  %v3175 = vadd.f32 %v99, %v2977
  %v3176 = vadd.f32 %v100, %v2982
  %v3177 = vadd.f32 %v101, %v2985
  %v3178 = vadd.f32 %v102, %v2990
  %v3179 = vadd.f32 %v103, %v2993
  %v3180 = vadd.f32 %v104, %v2998
  %v3181 = vadd.f32 %v105, %v3001
  %v3182 = vadd.f32 %v106, %v3006
  %v3183 = vadd.f32 %v107, %v3009
  %v3184 = vadd.f32 %v108, %v3014
  %v3185 = vadd.f32 %v109, %v3017
  %v3186 = vadd.f32 %v110, %v3022
  %v3187 = vadd.f32 %v111, %v3025
  %v3188 = vadd.f32 %v112, %v3030
  %v3189 = vadd.f32 %v113, %v3033
  %v3190 = vadd.f32 %v114, %v3038
  %v3191 = vadd.f32 %v115, %v3041
  %v3192 = vadd.f32 %v116, %v3046
  %v3193 = vadd.f32 %v117, %v3049
  %v3194 = vadd.f32 %v118, %v3054
  %v3195 = vadd.f32 %v119, %v3057
  %v3196 = vadd.f32 %v120, %v3062
  %v3197 = vadd.f32 %v121, %v3065
  %v3198 = vadd.f32 %v122, %v3070
  %v3199 = vadd.f32 %v123, %v3073
  %v3200 = vadd.f32 %v124, %v3078
  %v3201 = vadd.f32 %v125, %v3081
  %v3202 = vadd.f32 %v126, %v3086
  %v3203 = vadd.f32 %v127, %v3089
  %v3204 = vadd.f32 %v128, %v3094
  %v3205 = vadd.f32 %v129, %v3097
  %v3206 = vadd.f32 %v130, %v3102
  %v3207 = vadd.f32 %v131, %v3105
  %v3208 = vadd.f32 %v132, %v3110
  %v3209 = vadd.f32 %v133, %v3113
  %v3210 = vadd.f32 %v134, %v3118
  %v3211 = vadd.f32 %v135, %v3121
  %v3212 = vadd.f32 %v136, %v3126
  %v3213 = vadd.f32 %v137, %v3129
  %v3214 = vadd.f32 %v138, %v3134
  %v3215 = vadd.f32 %v139, %v3137
  %v3216 = vadd.f32 %v140, %v3142
  %v3217 = vadd.f32 %v141, %v3145
  %v3218 = vadd.f32 %v142, %v3150
  %v3219 = vadd.f32 %v143, %v3153
  %3220 = vst [vmem:[#allocation2] sm:$0xff] %v3156
  %3221 = vst [vmem:[#allocation2 + $0x8] sm:$0xff] %v3157
  %3222 = vst [vmem:[#allocation2 + $0x10] sm:$0xff] %v3158
  %3223 = vst [vmem:[#allocation2 + $0x18] sm:$0xff] %v3159
  %3224 = vst [vmem:[#allocation2 + $0x20] sm:$0xff] %v3160
  %3225 = vst [vmem:[#allocation2 + $0x28] sm:$0xff] %v3161
  %3226 = vst [vmem:[#allocation2 + $0x30] sm:$0xff] %v3162
  %3227 = vst [vmem:[#allocation2 + $0x38] sm:$0xff] %v3163
  %3228 = vst [vmem:[#allocation2 + $0x40] sm:$0xff] %v3164
  %3229 = vst [vmem:[#allocation2 + $0x48] sm:$0xff] %v3165
  %3230 = vst [vmem:[#allocation2 + $0x50] sm:$0xff] %v3166
  %3231 = vst [vmem:[#allocation2 + $0x58] sm:$0xff] %v3167
  %3232 = vst [vmem:[#allocation2 + $0x60] sm:$0xff] %v3168
  %3233 = vst [vmem:[#allocation2 + $0x68] sm:$0xff] %v3169
  %3234 = vst [vmem:[#allocation2 + $0x70] sm:$0xff] %v3170
  %3235 = vst [vmem:[#allocation2 + $0x78] sm:$0xff] %v3171
  %3236 = vst [vmem:[#allocation2 + $0x80] sm:$0xff] %v3172
  %3237 = vst [vmem:[#allocation2 + $0x88] sm:$0xff] %v3173
  %3238 = vst [vmem:[#allocation2 + $0x90] sm:$0xff] %v3174
  %3239 = vst [vmem:[#allocation2 + $0x98] sm:$0xff] %v3175
  %3240 = vst [vmem:[#allocation2 + $0xa0] sm:$0xff] %v3176
  %3241 = vst [vmem:[#allocation2 + $0xa8] sm:$0xff] %v3177
  %3242 = vst [vmem:[#allocation2 + $0xb0] sm:$0xff] %v3178
  %3243 = vst [vmem:[#allocation2 + $0xb8] sm:$0xff] %v3179
  %3244 = vst [vmem:[#allocation2 + $0xc0] sm:$0xff] %v3180
  %3245 = vst [vmem:[#allocation2 + $0xc8] sm:$0xff] %v3181
  %3246 = vst [vmem:[#allocation2 + $0xd0] sm:$0xff] %v3182
  %3247 = vst [vmem:[#allocation2 + $0xd8] sm:$0xff] %v3183
  %3248 = vst [vmem:[#allocation2 + $0xe0] sm:$0xff] %v3184
  %3249 = vst [vmem:[#allocation2 + $0xe8] sm:$0xff] %v3185
  %3250 = vst [vmem:[#allocation2 + $0xf0] sm:$0xff] %v3186
  %3251 = vst [vmem:[#allocation2 + $0xf8] sm:$0xff] %v3187
  %3252 = vst [vmem:[#allocation2 + $0x100] sm:$0xff] %v3188
  %3253 = vst [vmem:[#allocation2 + $0x108] sm:$0xff] %v3189
  %3254 = vst [vmem:[#allocation2 + $0x110] sm:$0xff] %v3190
  %3255 = vst [vmem:[#allocation2 + $0x118] sm:$0xff] %v3191
  %3256 = vst [vmem:[#allocation2 + $0x120] sm:$0xff] %v3192
  %3257 = vst [vmem:[#allocation2 + $0x128] sm:$0xff] %v3193
  %3258 = vst [vmem:[#allocation2 + $0x130] sm:$0xff] %v3194
  %3259 = vst [vmem:[#allocation2 + $0x138] sm:$0xff] %v3195
  %3260 = vst [vmem:[#allocation2 + $0x140] sm:$0xff] %v3196
  %3261 = vst [vmem:[#allocation2 + $0x148] sm:$0xff] %v3197
  %3262 = vst [vmem:[#allocation2 + $0x150] sm:$0xff] %v3198
  %3263 = vst [vmem:[#allocation2 + $0x158] sm:$0xff] %v3199
  %3264 = vst [vmem:[#allocation2 + $0x160] sm:$0xff] %v3200
  %3265 = vst [vmem:[#allocation2 + $0x168] sm:$0xff] %v3201
  %3266 = vst [vmem:[#allocation2 + $0x170] sm:$0xff] %v3202
  %3267 = vst [vmem:[#allocation2 + $0x178] sm:$0xff] %v3203
  %3268 = vst [vmem:[#allocation2 + $0x180] sm:$0xff] %v3204
  %3269 = vst [vmem:[#allocation2 + $0x188] sm:$0xff] %v3205
  %3270 = vst [vmem:[#allocation2 + $0x190] sm:$0xff] %v3206
  %3271 = vst [vmem:[#allocation2 + $0x198] sm:$0xff] %v3207
  %3272 = vst [vmem:[#allocation2 + $0x1a0] sm:$0xff] %v3208
  %3273 = vst [vmem:[#allocation2 + $0x1a8] sm:$0xff] %v3209
  %3274 = vst [vmem:[#allocation2 + $0x1b0] sm:$0xff] %v3210
  %3275 = vst [vmem:[#allocation2 + $0x1b8] sm:$0xff] %v3211
  %3276 = vst [vmem:[#allocation2 + $0x1c0] sm:$0xff] %v3212
  %3277 = vst [vmem:[#allocation2 + $0x1c8] sm:$0xff] %v3213
  %3278 = vst [vmem:[#allocation2 + $0x1d0] sm:$0xff] %v3214
  %3279 = vst [vmem:[#allocation2 + $0x1d8] sm:$0xff] %v3215
  %3280 = vst [vmem:[#allocation2 + $0x1e0] sm:$0xff] %v3216
  %3281 = vst [vmem:[#allocation2 + $0x1e8] sm:$0xff] %v3217
  %3282 = vst [vmem:[#allocation2 + $0x1f0] sm:$0xff] %v3218
  %3283 = vst [vmem:[#allocation2 + $0x1f8] sm:$0xff] %v3219
  // Predicated region
  $region14: #{generator_forward.37} parent=0 // pred_check
    %p3284 = pneg %p12
  $region15: #{generator_forward.37} parent=0 // pred_check_branch
    %3286 = sbr.rel (%p3284) target = $region17
  $region16: #{generator_forward.37} parent=0 // pred_region
    %v3287 = vld [vmem:[#allocation2] sm:$0xff]
    %v3288 = vld [vmem:[#allocation2 + $0x8] sm:$0xff]
    %v3289 = vld [vmem:[#allocation2 + $0x10] sm:$0xff]
    %v3290 = vld [vmem:[#allocation2 + $0x18] sm:$0xff]
    %v3291 = vld [vmem:[#allocation2 + $0x20] sm:$0xff]
    %v3292 = vld [vmem:[#allocation2 + $0x28] sm:$0xff]
    %v3293 = vld [vmem:[#allocation2 + $0x30] sm:$0xff]
    %v3294 = vld [vmem:[#allocation2 + $0x38] sm:$0xff]
    %v3295 = vld [vmem:[#allocation2 + $0x40] sm:$0xff]
    %v3296 = vld [vmem:[#allocation2 + $0x48] sm:$0xff]
    %v3297 = vld [vmem:[#allocation2 + $0x50] sm:$0xff]
    %v3298 = vld [vmem:[#allocation2 + $0x58] sm:$0xff]
    %v3299 = vld [vmem:[#allocation2 + $0x60] sm:$0xff]
    %v3300 = vld [vmem:[#allocation2 + $0x68] sm:$0xff]
    %v3301 = vld [vmem:[#allocation2 + $0x70] sm:$0xff]
    %v3302 = vld [vmem:[#allocation2 + $0x78] sm:$0xff]
    %v3303 = vld [vmem:[#allocation2 + $0x80] sm:$0xff]
    %v3304 = vld [vmem:[#allocation2 + $0x88] sm:$0xff]
    %v3305 = vld [vmem:[#allocation2 + $0x90] sm:$0xff]
    %v3306 = vld [vmem:[#allocation2 + $0x98] sm:$0xff]
    %v3307 = vld [vmem:[#allocation2 + $0xa0] sm:$0xff]
    %v3308 = vld [vmem:[#allocation2 + $0xa8] sm:$0xff]
    %v3309 = vld [vmem:[#allocation2 + $0xb0] sm:$0xff]
    %v3310 = vld [vmem:[#allocation2 + $0xb8] sm:$0xff]
    %v3311 = vld [vmem:[#allocation2 + $0xc0] sm:$0xff]
    %v3312 = vld [vmem:[#allocation2 + $0xc8] sm:$0xff]
    %v3313 = vld [vmem:[#allocation2 + $0xd0] sm:$0xff]
    %v3314 = vld [vmem:[#allocation2 + $0xd8] sm:$0xff]
    %v3315 = vld [vmem:[#allocation2 + $0xe0] sm:$0xff]
    %v3316 = vld [vmem:[#allocation2 + $0xe8] sm:$0xff]
    %v3317 = vld [vmem:[#allocation2 + $0xf0] sm:$0xff]
    %v3318 = vld [vmem:[#allocation2 + $0xf8] sm:$0xff]
    %v3319 = vld [vmem:[#allocation2 + $0x100] sm:$0xff]
    %v3320 = vld [vmem:[#allocation2 + $0x108] sm:$0xff]
    %v3321 = vld [vmem:[#allocation2 + $0x110] sm:$0xff]
    %v3322 = vld [vmem:[#allocation2 + $0x118] sm:$0xff]
    %v3323 = vld [vmem:[#allocation2 + $0x120] sm:$0xff]
    %v3324 = vld [vmem:[#allocation2 + $0x128] sm:$0xff]
    %v3325 = vld [vmem:[#allocation2 + $0x130] sm:$0xff]
    %v3326 = vld [vmem:[#allocation2 + $0x138] sm:$0xff]
    %v3327 = vld [vmem:[#allocation2 + $0x140] sm:$0xff]
    %v3328 = vld [vmem:[#allocation2 + $0x148] sm:$0xff]
    %v3329 = vld [vmem:[#allocation2 + $0x150] sm:$0xff]
    %v3330 = vld [vmem:[#allocation2 + $0x158] sm:$0xff]
    %v3331 = vld [vmem:[#allocation2 + $0x160] sm:$0xff]
    %v3332 = vld [vmem:[#allocation2 + $0x168] sm:$0xff]
    %v3333 = vld [vmem:[#allocation2 + $0x170] sm:$0xff]
    %v3334 = vld [vmem:[#allocation2 + $0x178] sm:$0xff]
    %v3335 = vld [vmem:[#allocation2 + $0x180] sm:$0xff]
    %v3336 = vld [vmem:[#allocation2 + $0x188] sm:$0xff]
    %v3337 = vld [vmem:[#allocation2 + $0x190] sm:$0xff]
    %v3338 = vld [vmem:[#allocation2 + $0x198] sm:$0xff]
    %v3339 = vld [vmem:[#allocation2 + $0x1a0] sm:$0xff]
    %v3340 = vld [vmem:[#allocation2 + $0x1a8] sm:$0xff]
    %v3341 = vld [vmem:[#allocation2 + $0x1b0] sm:$0xff]
    %v3342 = vld [vmem:[#allocation2 + $0x1b8] sm:$0xff]
    %v3343 = vld [vmem:[#allocation2 + $0x1c0] sm:$0xff]
    %v3344 = vld [vmem:[#allocation2 + $0x1c8] sm:$0xff]
    %v3345 = vld [vmem:[#allocation2 + $0x1d0] sm:$0xff]
    %v3346 = vld [vmem:[#allocation2 + $0x1d8] sm:$0xff]
    %v3347 = vld [vmem:[#allocation2 + $0x1e0] sm:$0xff]
    %v3348 = vld [vmem:[#allocation2 + $0x1e8] sm:$0xff]
    %v3349 = vld [vmem:[#allocation2 + $0x1f0] sm:$0xff]
    %v3350 = vld [vmem:[#allocation2 + $0x1f8] sm:$0xff]
    %v3351 = vtanh.pop %v3287
    %v3352 = vtanh.pop %v3288
    %v3353 = vtanh.pop %v3289
    %v3354 = vtanh.pop %v3290
    %v3355 = vtanh.pop %v3291
    %v3356 = vtanh.pop %v3292
    %v3357 = vtanh.pop %v3293
    %v3358 = vtanh.pop %v3294
    %v3359 = vtanh.pop %v3295
    %v3360 = vtanh.pop %v3296
    %v3361 = vtanh.pop %v3297
    %v3362 = vtanh.pop %v3298
    %v3363 = vtanh.pop %v3299
    %v3364 = vtanh.pop %v3300
    %v3365 = vtanh.pop %v3301
    %v3366 = vtanh.pop %v3302
    %v3367 = vtanh.pop %v3303
    %v3368 = vtanh.pop %v3304
    %v3369 = vtanh.pop %v3305
    %v3370 = vtanh.pop %v3306
    %v3371 = vtanh.pop %v3307
    %v3372 = vtanh.pop %v3308
    %v3373 = vtanh.pop %v3309
    %v3374 = vtanh.pop %v3310
    %v3375 = vtanh.pop %v3311
    %v3376 = vtanh.pop %v3312
    %v3377 = vtanh.pop %v3313
    %v3378 = vtanh.pop %v3314
    %v3379 = vtanh.pop %v3315
    %v3380 = vtanh.pop %v3316
    %v3381 = vtanh.pop %v3317
    %v3382 = vtanh.pop %v3318
    %v3383 = vtanh.pop %v3319
    %v3384 = vtanh.pop %v3320
    %v3385 = vtanh.pop %v3321
    %v3386 = vtanh.pop %v3322
    %v3387 = vtanh.pop %v3323
    %v3388 = vtanh.pop %v3324
    %v3389 = vtanh.pop %v3325
    %v3390 = vtanh.pop %v3326
    %v3391 = vtanh.pop %v3327
    %v3392 = vtanh.pop %v3328
    %v3393 = vtanh.pop %v3329
    %v3394 = vtanh.pop %v3330
    %v3395 = vtanh.pop %v3331
    %v3396 = vtanh.pop %v3332
    %v3397 = vtanh.pop %v3333
    %v3398 = vtanh.pop %v3334
    %v3399 = vtanh.pop %v3335
    %v3400 = vtanh.pop %v3336
    %v3401 = vtanh.pop %v3337
    %v3402 = vtanh.pop %v3338
    %v3403 = vtanh.pop %v3339
    %v3404 = vtanh.pop %v3340
    %v3405 = vtanh.pop %v3341
    %v3406 = vtanh.pop %v3342
    %v3407 = vtanh.pop %v3343
    %v3408 = vtanh.pop %v3344
    %v3409 = vtanh.pop %v3345
    %v3410 = vtanh.pop %v3346
    %v3411 = vtanh.pop %v3347
    %v3412 = vtanh.pop %v3348
    %v3413 = vtanh.pop %v3349
    %v3414 = vtanh.pop %v3350
    %v3415 = vpack.c.bf16 %v3352, %v3351
    %v3416 = vpack.c.bf16 %v3354, %v3353
    %v3417 = vpack.c.bf16 %v3356, %v3355
    %v3418 = vpack.c.bf16 %v3358, %v3357
    %v3419 = vpack.c.bf16 %v3360, %v3359
    %v3420 = vpack.c.bf16 %v3362, %v3361
    %v3421 = vpack.c.bf16 %v3364, %v3363
    %v3422 = vpack.c.bf16 %v3366, %v3365
    %v3423 = vpack.c.bf16 %v3368, %v3367
    %v3424 = vpack.c.bf16 %v3370, %v3369
    %v3425 = vpack.c.bf16 %v3372, %v3371
    %v3426 = vpack.c.bf16 %v3374, %v3373
    %v3427 = vpack.c.bf16 %v3376, %v3375
    %v3428 = vpack.c.bf16 %v3378, %v3377
    %v3429 = vpack.c.bf16 %v3380, %v3379
    %v3430 = vpack.c.bf16 %v3382, %v3381
    %v3431 = vpack.c.bf16 %v3384, %v3383
    %v3432 = vpack.c.bf16 %v3386, %v3385
    %v3433 = vpack.c.bf16 %v3388, %v3387
    %v3434 = vpack.c.bf16 %v3390, %v3389
    %v3435 = vpack.c.bf16 %v3392, %v3391
    %v3436 = vpack.c.bf16 %v3394, %v3393
    %v3437 = vpack.c.bf16 %v3396, %v3395
    %v3438 = vpack.c.bf16 %v3398, %v3397
    %v3439 = vpack.c.bf16 %v3400, %v3399
    %v3440 = vpack.c.bf16 %v3402, %v3401
    %v3441 = vpack.c.bf16 %v3404, %v3403
    %v3442 = vpack.c.bf16 %v3406, %v3405
    %v3443 = vpack.c.bf16 %v3408, %v3407
    %v3444 = vpack.c.bf16 %v3410, %v3409
    %v3445 = vpack.c.bf16 %v3412, %v3411
    %v3446 = vpack.c.bf16 %v3414, %v3413
    %v3479 = vunpack.c.l.b16 %v3415
    %v3480 = vunpack.c.h.b16 %v3415
    %v3481 = vunpack.c.l.b16 %v3416
    %v3482 = vunpack.c.h.b16 %v3416
    %v3483 = vunpack.c.l.b16 %v3417
    %v3484 = vunpack.c.h.b16 %v3417
    %v3485 = vunpack.c.l.b16 %v3418
    %v3486 = vunpack.c.h.b16 %v3418
    %v3487 = vunpack.c.l.b16 %v3419
    %v3488 = vunpack.c.h.b16 %v3419
    %v3489 = vunpack.c.l.b16 %v3420
    %v3490 = vunpack.c.h.b16 %v3420
    %v3491 = vunpack.c.l.b16 %v3421
    %v3492 = vunpack.c.h.b16 %v3421
    %v3493 = vunpack.c.l.b16 %v3422
    %v3494 = vunpack.c.h.b16 %v3422
    %v3495 = vunpack.c.l.b16 %v3423
    %v3496 = vunpack.c.h.b16 %v3423
    %v3497 = vunpack.c.l.b16 %v3424
    %v3498 = vunpack.c.h.b16 %v3424
    %v3499 = vunpack.c.l.b16 %v3425
    %v3500 = vunpack.c.h.b16 %v3425
    %v3501 = vunpack.c.l.b16 %v3426
    %v3502 = vunpack.c.h.b16 %v3426
    %v3503 = vunpack.c.l.b16 %v3427
    %v3504 = vunpack.c.h.b16 %v3427
    %v3505 = vunpack.c.l.b16 %v3428
    %v3506 = vunpack.c.h.b16 %v3428
    %v3507 = vunpack.c.l.b16 %v3429
    %v3508 = vunpack.c.h.b16 %v3429
    %v3509 = vunpack.c.l.b16 %v3430
    %v3510 = vunpack.c.h.b16 %v3430
    %v3511 = vunpack.c.l.b16 %v3431
    %v3512 = vunpack.c.h.b16 %v3431
    %v3513 = vunpack.c.l.b16 %v3432
    %v3514 = vunpack.c.h.b16 %v3432
    %v3515 = vunpack.c.l.b16 %v3433
    %v3516 = vunpack.c.h.b16 %v3433
    %v3517 = vunpack.c.l.b16 %v3434
    %v3518 = vunpack.c.h.b16 %v3434
    %v3519 = vunpack.c.l.b16 %v3435
    %v3520 = vunpack.c.h.b16 %v3435
    %v3521 = vunpack.c.l.b16 %v3436
    %v3522 = vunpack.c.h.b16 %v3436
    %v3523 = vunpack.c.l.b16 %v3437
    %v3524 = vunpack.c.h.b16 %v3437
    %v3525 = vunpack.c.l.b16 %v3438
    %v3526 = vunpack.c.h.b16 %v3438
    %v3527 = vunpack.c.l.b16 %v3439
    %v3528 = vunpack.c.h.b16 %v3439
    %v3529 = vunpack.c.l.b16 %v3440
    %v3530 = vunpack.c.h.b16 %v3440
    %v3531 = vunpack.c.l.b16 %v3441
    %v3532 = vunpack.c.h.b16 %v3441
    %v3533 = vunpack.c.l.b16 %v3442
    %v3534 = vunpack.c.h.b16 %v3442
    %v3535 = vunpack.c.l.b16 %v3443
    %v3536 = vunpack.c.h.b16 %v3443
    %v3537 = vunpack.c.l.b16 %v3444
    %v3538 = vunpack.c.h.b16 %v3444
    %v3539 = vunpack.c.l.b16 %v3445
    %v3540 = vunpack.c.h.b16 %v3445
    %v3541 = vunpack.c.l.b16 %v3446
    %v3542 = vunpack.c.h.b16 %v3446
    %v3543 = vpack.c.b16 %v3479, %v3479
    %v3544 = vpack.c.b16 %v3480, %v3480
    %v3545 = vpack.c.b16 %v3481, %v3481
    %v3546 = vpack.c.b16 %v3482, %v3482
    %v3547 = vpack.c.b16 %v3483, %v3483
    %v3548 = vpack.c.b16 %v3484, %v3484
    %v3549 = vpack.c.b16 %v3485, %v3485
    %v3550 = vpack.c.b16 %v3486, %v3486
    %v3551 = vpack.c.b16 %v3487, %v3487
    %v3552 = vpack.c.b16 %v3488, %v3488
    %v3553 = vpack.c.b16 %v3489, %v3489
    %v3554 = vpack.c.b16 %v3490, %v3490
    %v3555 = vpack.c.b16 %v3491, %v3491
    %v3556 = vpack.c.b16 %v3492, %v3492
    %v3557 = vpack.c.b16 %v3493, %v3493
    %v3558 = vpack.c.b16 %v3494, %v3494
    %v3559 = vpack.c.b16 %v3495, %v3495
    %v3560 = vpack.c.b16 %v3496, %v3496
    %v3561 = vpack.c.b16 %v3497, %v3497
    %v3562 = vpack.c.b16 %v3498, %v3498
    %v3563 = vpack.c.b16 %v3499, %v3499
    %v3564 = vpack.c.b16 %v3500, %v3500
    %v3565 = vpack.c.b16 %v3501, %v3501
    %v3566 = vpack.c.b16 %v3502, %v3502
    %v3567 = vpack.c.b16 %v3503, %v3503
    %v3568 = vpack.c.b16 %v3504, %v3504
    %v3569 = vpack.c.b16 %v3505, %v3505
    %v3570 = vpack.c.b16 %v3506, %v3506
    %v3571 = vpack.c.b16 %v3507, %v3507
    %v3572 = vpack.c.b16 %v3508, %v3508
    %v3573 = vpack.c.b16 %v3509, %v3509
    %v3574 = vpack.c.b16 %v3510, %v3510
    %v3575 = vpack.c.b16 %v3511, %v3511
    %v3576 = vpack.c.b16 %v3512, %v3512
    %v3577 = vpack.c.b16 %v3513, %v3513
    %v3578 = vpack.c.b16 %v3514, %v3514
    %v3579 = vpack.c.b16 %v3515, %v3515
    %v3580 = vpack.c.b16 %v3516, %v3516
    %v3581 = vpack.c.b16 %v3517, %v3517
    %v3582 = vpack.c.b16 %v3518, %v3518
    %v3583 = vpack.c.b16 %v3519, %v3519
    %v3584 = vpack.c.b16 %v3520, %v3520
    %v3585 = vpack.c.b16 %v3521, %v3521
    %v3586 = vpack.c.b16 %v3522, %v3522
    %v3587 = vpack.c.b16 %v3523, %v3523
    %v3588 = vpack.c.b16 %v3524, %v3524
    %v3589 = vpack.c.b16 %v3525, %v3525
    %v3590 = vpack.c.b16 %v3526, %v3526
    %v3591 = vpack.c.b16 %v3527, %v3527
    %v3592 = vpack.c.b16 %v3528, %v3528
    %v3593 = vpack.c.b16 %v3529, %v3529
    %v3594 = vpack.c.b16 %v3530, %v3530
    %v3595 = vpack.c.b16 %v3531, %v3531
    %v3596 = vpack.c.b16 %v3532, %v3532
    %v3597 = vpack.c.b16 %v3533, %v3533
    %v3598 = vpack.c.b16 %v3534, %v3534
    %v3599 = vpack.c.b16 %v3535, %v3535
    %v3600 = vpack.c.b16 %v3536, %v3536
    %v3601 = vpack.c.b16 %v3537, %v3537
    %v3602 = vpack.c.b16 %v3538, %v3538
    %v3603 = vpack.c.b16 %v3539, %v3539
    %v3604 = vpack.c.b16 %v3540, %v3540
    %v3605 = vpack.c.b16 %v3541, %v3541
    %v3606 = vpack.c.b16 %v3542, %v3542
    %3671 = vst [vmem:[%s2] sm:$0xf] %v3543
    %3672 = vst [vmem:[%s2 + $0x4] sm:$0xf] %v3544
    %3673 = vst [vmem:[%s2 + $0x8] sm:$0xf] %v3545
    %3674 = vst [vmem:[%s2 + $0xc] sm:$0xf] %v3546
    %3675 = vst [vmem:[%s2 + $0x10] sm:$0xf] %v3547
    %3676 = vst [vmem:[%s2 + $0x14] sm:$0xf] %v3548
    %3677 = vst [vmem:[%s2 + $0x18] sm:$0xf] %v3549
    %3678 = vst [vmem:[%s2 + $0x1c] sm:$0xf] %v3550
    %3679 = vst [vmem:[%s2 + $0x20] sm:$0xf] %v3551
    %3680 = vst [vmem:[%s2 + $0x24] sm:$0xf] %v3552
    %3681 = vst [vmem:[%s2 + $0x28] sm:$0xf] %v3553
    %3682 = vst [vmem:[%s2 + $0x2c] sm:$0xf] %v3554
    %3683 = vst [vmem:[%s2 + $0x30] sm:$0xf] %v3555
    %3684 = vst [vmem:[%s2 + $0x34] sm:$0xf] %v3556
    %3685 = vst [vmem:[%s2 + $0x38] sm:$0xf] %v3557
    %3686 = vst [vmem:[%s2 + $0x3c] sm:$0xf] %v3558
    %3687 = vst [vmem:[%s2 + $0x40] sm:$0xf] %v3559
    %3688 = vst [vmem:[%s2 + $0x44] sm:$0xf] %v3560
    %3689 = vst [vmem:[%s2 + $0x48] sm:$0xf] %v3561
    %3690 = vst [vmem:[%s2 + $0x4c] sm:$0xf] %v3562
    %3691 = vst [vmem:[%s2 + $0x50] sm:$0xf] %v3563
    %3692 = vst [vmem:[%s2 + $0x54] sm:$0xf] %v3564
    %3693 = vst [vmem:[%s2 + $0x58] sm:$0xf] %v3565
    %3694 = vst [vmem:[%s2 + $0x5c] sm:$0xf] %v3566
    %3695 = vst [vmem:[%s2 + $0x60] sm:$0xf] %v3567
    %3696 = vst [vmem:[%s2 + $0x64] sm:$0xf] %v3568
    %3697 = vst [vmem:[%s2 + $0x68] sm:$0xf] %v3569
    %3698 = vst [vmem:[%s2 + $0x6c] sm:$0xf] %v3570
    %3699 = vst [vmem:[%s2 + $0x70] sm:$0xf] %v3571
    %3700 = vst [vmem:[%s2 + $0x74] sm:$0xf] %v3572
    %3701 = vst [vmem:[%s2 + $0x78] sm:$0xf] %v3573
    %3702 = vst [vmem:[%s2 + $0x7c] sm:$0xf] %v3574
    %3703 = vst [vmem:[%s2 + $0x80] sm:$0xf] %v3575
    %3704 = vst [vmem:[%s2 + $0x84] sm:$0xf] %v3576
    %3705 = vst [vmem:[%s2 + $0x88] sm:$0xf] %v3577
    %3706 = vst [vmem:[%s2 + $0x8c] sm:$0xf] %v3578
    %3707 = vst [vmem:[%s2 + $0x90] sm:$0xf] %v3579
    %3708 = vst [vmem:[%s2 + $0x94] sm:$0xf] %v3580
    %3709 = vst [vmem:[%s2 + $0x98] sm:$0xf] %v3581
    %3710 = vst [vmem:[%s2 + $0x9c] sm:$0xf] %v3582
    %3711 = vst [vmem:[%s2 + $0xa0] sm:$0xf] %v3583
    %3712 = vst [vmem:[%s2 + $0xa4] sm:$0xf] %v3584
    %3713 = vst [vmem:[%s2 + $0xa8] sm:$0xf] %v3585
    %3714 = vst [vmem:[%s2 + $0xac] sm:$0xf] %v3586
    %3715 = vst [vmem:[%s2 + $0xb0] sm:$0xf] %v3587
    %3716 = vst [vmem:[%s2 + $0xb4] sm:$0xf] %v3588
    %3717 = vst [vmem:[%s2 + $0xb8] sm:$0xf] %v3589
    %3718 = vst [vmem:[%s2 + $0xbc] sm:$0xf] %v3590
    %3719 = vst [vmem:[%s2 + $0xc0] sm:$0xf] %v3591
    %3720 = vst [vmem:[%s2 + $0xc4] sm:$0xf] %v3592
    %3721 = vst [vmem:[%s2 + $0xc8] sm:$0xf] %v3593
    %3722 = vst [vmem:[%s2 + $0xcc] sm:$0xf] %v3594
    %3723 = vst [vmem:[%s2 + $0xd0] sm:$0xf] %v3595
    %3724 = vst [vmem:[%s2 + $0xd4] sm:$0xf] %v3596
    %3725 = vst [vmem:[%s2 + $0xd8] sm:$0xf] %v3597
    %3726 = vst [vmem:[%s2 + $0xdc] sm:$0xf] %v3598
    %3727 = vst [vmem:[%s2 + $0xe0] sm:$0xf] %v3599
    %3728 = vst [vmem:[%s2 + $0xe4] sm:$0xf] %v3600
    %3729 = vst [vmem:[%s2 + $0xe8] sm:$0xf] %v3601
    %3730 = vst [vmem:[%s2 + $0xec] sm:$0xf] %v3602
    %3731 = vst [vmem:[%s2 + $0xf0] sm:$0xf] %v3603
    %3732 = vst [vmem:[%s2 + $0xf4] sm:$0xf] %v3604
    %3733 = vst [vmem:[%s2 + $0xf8] sm:$0xf] %v3605
    %3734 = vst [vmem:[%s2 + $0xfc] sm:$0xf] %v3606
  $region17: #{generator_forward.37} parent=0 // pred_fallthru
    _
  // Predicated region
  $region18: #{generator_forward.37} parent=0 // pred_check
    _
  $region19: #{generator_forward.37} parent=0 // pred_check_branch
    %3736 = sbr.rel (0) target = $region21
  $region20: #{generator_forward.37} parent=0 // pred_region
    _
  $region21: #{generator_forward.37} parent=0 // pred_fallthru
    _
  // Predicated region
  $region22: #{generator_forward.37} parent=0 // pred_check
    _
  $region23: #{generator_forward.37} parent=0 // pred_check_branch
    %3738 = sbr.rel (0) target = $region25
  $region24: #{generator_forward.37} parent=0 // pred_region
    _
  $region25: #{generator_forward.37} parent=0 // pred_fallthru
    _

</llo_original>
